<compile_context>
chip_gen: v7x
topology: tpu7x:2x2x1
jax: 0.10.0
libtpu: 0.0.40
codegen_flags: <defaults>
</compile_context>

<pallas_src>
import math

import jax
import jax.numpy as jnp
import numpy as np
from jax.experimental import pallas as pl
from jax.experimental.pallas import tpu as pltpu


def _resblock_kernel(x_ref, w_ref, b_ref, out_ref, pad_ref):
    # x_ref:   [Bt, H, W, C]      input tile (NHWC, C lane-dense)
    # w_ref:   [2, 9, C, C]       bf16 weights, k = kh*3 + kw (HWIO order)
    # b_ref:   [2, 1, C]          f32 biases
    # pad_ref: [Bt, H+2, W, C]    f32 scratch, padded along H only
    Bt, H, W, C = x_ref.shape
    M = Bt * H * W

    # Zero only the two H-halo rows; the interior is fully overwritten by each
    # conv below and there is no W halo.  Re-zeroing every step is cheap and
    # stays correct under megacore 'parallel' splitting.
    zrow = jnp.zeros((Bt, 1, W, C), jnp.float32)
    pad_ref[:, 0:1, :, :] = zrow
    pad_ref[:, H + 1:H + 2, :, :] = zrow

    # Column-validity masks for the +/-1 W shifts, hoisted once and reused by
    # both convs.  mask_l zeroes column j==0 (dx=-1 taps), mask_r zeroes
    # column j==W-1 (dx=+1 taps).  They also kill the roll wrap-around across
    # rows / images / the slab ends.
    col = jax.lax.broadcasted_iota(jnp.int32, (W, C), 0)
    mask_l = jnp.broadcast_to(jnp.where(col >= 1, 1.0, 0.0),
                              (Bt * H, W, C)).reshape(M, C)
    mask_r = jnp.broadcast_to(jnp.where(col <= W - 2, 1.0, 0.0),
                              (Bt * H, W, C)).reshape(M, C)

    def conv3x3(src4, conv_idx):
        """3x3 SAME conv of src4 [Bt,H,W,C] f32 -> [M,C] f32 (bias added)."""
        # One aligned full-tile store; slicing along H (a major dim) below is
        # sublane-aligned, so there are no masked vst/vld.
        pad_ref[:, 1:H + 1, :, :] = src4
        acc = None
        for dy in range(3):                                  # static unroll
            hs = pad_ref[:, dy:dy + H, :, :].reshape(M, C)   # aligned load
            for dx in (-1, 0, 1):
                if dx == 0:
                    tap = hs
                elif dx == 1:
                    # tap[p] = hs[p+1]; invalid (j == W-1) positions masked.
                    tap = pltpu.roll(hs, M - 1, axis=0) * mask_r
                else:
                    # tap[p] = hs[p-1]; invalid (j == 0) positions masked.
                    tap = pltpu.roll(hs, 1, axis=0) * mask_l
                k = dy * 3 + (dx + 1)                        # HWIO tap index
                # One MXU matmul per tap: bf16 operands, f32 accumulation.
                d = jnp.dot(tap.astype(jnp.bfloat16), w_ref[conv_idx, k],
                            preferred_element_type=jnp.float32)
                acc = d if acc is None else acc + d
        return acc + b_ref[conv_idx]                         # [1, C] broadcast

    x4 = x_ref[...].astype(jnp.float32)
    h = conv3x3(x4, 0)
    h = jnp.maximum(h, 0.1 * h)                              # LeakyReLU(0.1)
    y = conv3x3(h.reshape(Bt, H, W, C), 1)                   # reshape is layout-free
    out_ref[...] = (y.reshape(Bt, H, W, C) + x4).astype(out_ref.dtype)


def resblock_forward(x, w, b, *, block_b=None):
    """Fused Resblock forward.

    x: [B, H, W, C] NHWC activations.
    w: [2, 3, 3, C, C] HWIO weights for conv1 / conv2.
    b: [2, C] biases for conv1 / conv2.
    """
    B, H, W, C = x.shape
    if C % 128 != 0:
        raise ValueError("n_feat (C) must be a multiple of 128 for the "
                         "lane-dense layout used by this kernel")
    assert w.shape == (2, 3, 3, C, C) and b.shape == (2, C)

    if block_b is None:
        # Largest batch tile with M = block_b*H*W <= 2048 that keeps the grid
        # even-length (v7x: 2 TensorCores share the 'parallel' grid axis).
        divs = [d for d in range(1, B + 1) if B % d == 0 and d * H * W <= 2048]
        if not divs:
            divs = [1]
        even = [d for d in divs if (B // d) % 2 == 0]
        block_b = max(even) if even else max(divs)
    assert B % block_b == 0, "block_b must divide the batch size"

    # bf16 weights: ~2-3x MXU throughput on v6e/v7x, halves resident VMEM and
    # the one-time weight DMA; accumulation stays f32 in the kernel.
    w_packed = w.reshape(2, 9, C, C).astype(jnp.bfloat16)
    b_packed = b.reshape(2, 1, C).astype(jnp.float32)

    # Explicit VMEM budget: x/out double-buffered + resident weights + pad
    # scratch + f32 temporaries (masks / acc / taps), clamped to 64 MiB so the
    # limit is valid on v7x (64 MiB physical) as well as v5e/v6e (128 MiB).
    m = block_b * H * W
    io_block = block_b * H * W * C * x.dtype.itemsize
    est = (4 * io_block
           + 2 * int(w_packed.size) * 2 + int(b_packed.size) * 4
           + block_b * (H + 2) * W * C * 4
           + 10 * m * C * 4)
    vmem_limit = int(min(64 * 2 ** 20, max(32 * 2 ** 20, 2 * est)))

    grid = (B // block_b,)
    return pl.pallas_call(
        _resblock_kernel,
        out_shape=jax.ShapeDtypeStruct((B, H, W, C), x.dtype),
        grid=grid,
        in_specs=[
            pl.BlockSpec((block_b, H, W, C), lambda i: (i, 0, 0, 0)),
            pl.BlockSpec((2, 9, C, C), lambda i: (0, 0, 0, 0)),   # resident
            pl.BlockSpec((2, 1, C), lambda i: (0, 0, 0)),         # resident
        ],
        out_specs=pl.BlockSpec((block_b, H, W, C), lambda i: (i, 0, 0, 0)),
        scratch_shapes=[pltpu.VMEM((block_b, H + 2, W, C), jnp.float32)],
        compiler_params=pltpu.CompilerParams(
            dimension_semantics=("parallel",),
            vmem_limit_bytes=vmem_limit),
    )(x, w_packed, b_packed)


def reference_forward(x, w, b):
    # Pure-JAX reference mirroring the PyTorch Resblock (NHWC / HWIO).
    C = x.shape[-1]

    def conv(v, wk, bk):
        y = jax.lax.conv_general_dilated(
            v, wk, window_strides=(1, 1), padding="SAME",
            dimension_numbers=("NHWC", "HWIO", "NHWC"),
            precision=jax.lax.Precision.HIGHEST)
        return y + bk.reshape(1, 1, 1, C)

    h = conv(x, w[0], b[0])
    h = jnp.where(h > 0, h, 0.1 * h)
    y = conv(h, w[1], b[1])
    return y + x


if __name__ == "__main__":
    # Small shapes consistent with the module: batch=2, spatial 16x16,
    # n_feat=128 (lane-dense channel dim).  Grid length is 2 (block_b=1).
    B, H, W, C = 2, 16, 16, 128
    key = jax.random.PRNGKey(0)
    kx, kw, kb = jax.random.split(key, 3)
    x = jax.random.normal(kx, (B, H, W, C), jnp.float32)
    w = jax.random.normal(kw, (2, 3, 3, C, C), jnp.float32) / math.sqrt(9 * C)
    b = 0.01 * jax.random.normal(kb, (2, C), jnp.float32)

    out = jax.block_until_ready(resblock_forward(x, w, b))
    assert out.shape == (B, H, W, C)

    ref = reference_forward(x, w, b)
    # bf16 matmul operands with f32 accumulation -> looser tolerances than a
    # Precision.HIGHEST f32 reference.
    np.testing.assert_allclose(np.asarray(out), np.asarray(ref),
                               rtol=2e-2, atol=3e-2)
    print("KERNEL_OK")
</pallas_src>

<mosaic_0001>
module attributes {stable_mosaic.version = 11 : i64} {
  func.func @_resblock_kernel(%arg0: i32, %arg1: memref<1x16x16x128xf32, #tpu.memory_space<vmem>>, %arg2: memref<2x9x128x128xbf16, #tpu.memory_space<vmem>>, %arg3: memref<2x1x128xf32, #tpu.memory_space<vmem>>, %arg4: memref<1x16x16x128xf32, #tpu.memory_space<vmem>>, %arg5: memref<1x18x16x128xf32, #tpu.memory_space<vmem>>) attributes {dimension_semantics = [#tpu.dimension_semantics<parallel>], iteration_bounds = array<i64: 2>, scalar_prefetch = 0 : i64, scratch_operands = 1 : i64, tpu.core_type = #tpu.core_type<tc>, window_params = [{transform_indices = @transform_0, window_bounds = array<i64: 1, 16, 16, 128>}, {pipeline_mode = #tpu.pipeline_mode<synchronous>, transform_indices = @transform_1, window_bounds = array<i64: 2, 9, 128, 128>}, {pipeline_mode = #tpu.pipeline_mode<synchronous>, transform_indices = @transform_2, window_bounds = array<i64: 2, 1, 128>}, {transform_indices = @transform_3, window_bounds = array<i64: 1, 16, 16, 128>}]} {
    %cst = arith.constant 0.000000e+00 : f32
    %0 = vector.broadcast %cst : f32 to vector<1x1x16x128xf32>
    %c0 = arith.constant 0 : index
    %c0_0 = arith.constant 0 : index
    %c0_1 = arith.constant 0 : index
    %c0_2 = arith.constant 0 : index
    %1 = vector.load %arg5[%c0, %c0_0, %c0_1, %c0_2] : memref<1x18x16x128xf32, #tpu.memory_space<vmem>>, vector<1x1x16x128xf32>
    tpu.vector_store %arg5[%c0, %c0_0, %c0_1, %c0_2], %0 {strides = array<i32>} : memref<1x18x16x128xf32, #tpu.memory_space<vmem>>, vector<1x1x16x128xf32>,
    %c0_3 = arith.constant 0 : index
    %c17 = arith.constant 17 : index
    %c0_4 = arith.constant 0 : index
    %c0_5 = arith.constant 0 : index
    %2 = vector.load %arg5[%c0_3, %c17, %c0_4, %c0_5] : memref<1x18x16x128xf32, #tpu.memory_space<vmem>>, vector<1x1x16x128xf32>
    tpu.vector_store %arg5[%c0_3, %c17, %c0_4, %c0_5], %0 {strides = array<i32>} : memref<1x18x16x128xf32, #tpu.memory_space<vmem>>, vector<1x1x16x128xf32>,
    %3 = tpu.iota {dimensions = array<i32: 0>} : vector<16x128xi32>
    %c1_i32 = arith.constant 1 : i32
    %4 = vector.broadcast %c1_i32 : i32 to vector<16x128xi32>
    %5 = arith.cmpi sge, %3, %4 : vector<16x128xi32>
    %cst_6 = arith.constant 1.000000e+00 : f32
    %cst_7 = arith.constant 0.000000e+00 : f32
    %6 = vector.broadcast %cst_6 : f32 to vector<16x128xf32>
    %7 = vector.broadcast %cst_7 : f32 to vector<16x128xf32>
    %8 = arith.select %5, %6, %7 : vector<16x128xi1>, vector<16x128xf32>
    %9 = vector.shape_cast %8 : vector<16x128xf32> to vector<1x16x128xf32>
    %10 = vector.broadcast %9 : vector<1x16x128xf32> to vector<16x16x128xf32>
    %11 = vector.shape_cast %10 : vector<16x16x128xf32> to vector<256x128xf32>
    %c14_i32 = arith.constant 14 : i32
    %12 = vector.broadcast %c14_i32 : i32 to vector<16x128xi32>
    %13 = arith.cmpi sle, %3, %12 : vector<16x128xi32>
    %cst_8 = arith.constant 1.000000e+00 : f32
    %cst_9 = arith.constant 0.000000e+00 : f32
    %14 = vector.broadcast %cst_8 : f32 to vector<16x128xf32>
    %15 = vector.broadcast %cst_9 : f32 to vector<16x128xf32>
    %16 = arith.select %13, %14, %15 : vector<16x128xi1>, vector<16x128xf32>
    %17 = vector.shape_cast %16 : vector<16x128xf32> to vector<1x16x128xf32>
    %18 = vector.broadcast %17 : vector<1x16x128xf32> to vector<16x16x128xf32>
    %19 = vector.shape_cast %18 : vector<16x16x128xf32> to vector<256x128xf32>
    %c0_10 = arith.constant 0 : index
    %c0_11 = arith.constant 0 : index
    %c0_12 = arith.constant 0 : index
    %c0_13 = arith.constant 0 : index
    %20 = vector.load %arg1[%c0_10, %c0_11, %c0_12, %c0_13] : memref<1x16x16x128xf32, #tpu.memory_space<vmem>>, vector<1x16x16x128xf32>
    %c0_14 = arith.constant 0 : index
    %c1 = arith.constant 1 : index
    %c0_15 = arith.constant 0 : index
    %c0_16 = arith.constant 0 : index
    %21 = vector.load %arg5[%c0_14, %c1, %c0_15, %c0_16] : memref<1x18x16x128xf32, #tpu.memory_space<vmem>>, vector<1x16x16x128xf32>
    tpu.vector_store %arg5[%c0_14, %c1, %c0_15, %c0_16], %20 {strides = array<i32>} : memref<1x18x16x128xf32, #tpu.memory_space<vmem>>, vector<1x16x16x128xf32>,
    %c0_17 = arith.constant 0 : index
    %c0_18 = arith.constant 0 : index
    %c0_19 = arith.constant 0 : index
    %c0_20 = arith.constant 0 : index
    %22 = vector.load %arg5[%c0_17, %c0_18, %c0_19, %c0_20] : memref<1x18x16x128xf32, #tpu.memory_space<vmem>>, vector<1x16x16x128xf32>
    %23 = vector.shape_cast %22 : vector<1x16x16x128xf32> to vector<256x128xf32>
    %c1_i32_21 = arith.constant 1 : i32
    %24 = tpu.dynamic_rotate %23 by %c1_i32_21 dim 0 : vector<256x128xf32>, i32 -> vector<256x128xf32>
    %25 = arith.mulf %24, %11 : vector<256x128xf32>
    %26 = arith.truncf %25 : vector<256x128xf32> to vector<256x128xbf16>
    %c0_22 = arith.constant 0 : index
    %c0_23 = arith.constant 0 : index
    %c0_24 = arith.constant 0 : index
    %c0_25 = arith.constant 0 : index
    %27 = vector.load %arg2[%c0_22, %c0_23, %c0_24, %c0_25] : memref<2x9x128x128xbf16, #tpu.memory_space<vmem>>, vector<1x1x128x128xbf16>
    %28 = vector.shape_cast %27 : vector<1x1x128x128xbf16> to vector<128x128xbf16>
    %cst_26 = arith.constant dense<0.000000e+00> : vector<256x128xf32>
    %29 = tpu.matmul %26, %28, %cst_26 {dimension_numbers = #tpu.dot_dimension_numbers<[1], [0], [0], [1], [0, 0, 1, 1], [], []>} : vector<256x128xbf16>, vector<128x128xbf16>, vector<256x128xf32> -> vector<256x128xf32>
    %30 = arith.truncf %23 : vector<256x128xf32> to vector<256x128xbf16>
    %c0_27 = arith.constant 0 : index
    %c1_28 = arith.constant 1 : index
    %c0_29 = arith.constant 0 : index
    %c0_30 = arith.constant 0 : index
    %31 = vector.load %arg2[%c0_27, %c1_28, %c0_29, %c0_30] : memref<2x9x128x128xbf16, #tpu.memory_space<vmem>>, vector<1x1x128x128xbf16>
    %32 = vector.shape_cast %31 : vector<1x1x128x128xbf16> to vector<128x128xbf16>
    %cst_31 = arith.constant dense<0.000000e+00> : vector<256x128xf32>
    %33 = tpu.matmul %30, %32, %cst_31 {dimension_numbers = #tpu.dot_dimension_numbers<[1], [0], [0], [1], [0, 0, 1, 1], [], []>} : vector<256x128xbf16>, vector<128x128xbf16>, vector<256x128xf32> -> vector<256x128xf32>
    %34 = arith.addf %29, %33 : vector<256x128xf32>
    %c255_i32 = arith.constant 255 : i32
    %35 = tpu.dynamic_rotate %23 by %c255_i32 dim 0 : vector<256x128xf32>, i32 -> vector<256x128xf32>
    %36 = arith.mulf %35, %19 : vector<256x128xf32>
    %37 = arith.truncf %36 : vector<256x128xf32> to vector<256x128xbf16>
    %c0_32 = arith.constant 0 : index
    %c2 = arith.constant 2 : index
    %c0_33 = arith.constant 0 : index
    %c0_34 = arith.constant 0 : index
    %38 = vector.load %arg2[%c0_32, %c2, %c0_33, %c0_34] : memref<2x9x128x128xbf16, #tpu.memory_space<vmem>>, vector<1x1x128x128xbf16>
    %39 = vector.shape_cast %38 : vector<1x1x128x128xbf16> to vector<128x128xbf16>
    %cst_35 = arith.constant dense<0.000000e+00> : vector<256x128xf32>
    %40 = tpu.matmul %37, %39, %cst_35 {dimension_numbers = #tpu.dot_dimension_numbers<[1], [0], [0], [1], [0, 0, 1, 1], [], []>} : vector<256x128xbf16>, vector<128x128xbf16>, vector<256x128xf32> -> vector<256x128xf32>
    %41 = arith.addf %34, %40 : vector<256x128xf32>
    %c0_36 = arith.constant 0 : index
    %c1_37 = arith.constant 1 : index
    %c0_38 = arith.constant 0 : index
    %c0_39 = arith.constant 0 : index
    %42 = vector.load %arg5[%c0_36, %c1_37, %c0_38, %c0_39] : memref<1x18x16x128xf32, #tpu.memory_space<vmem>>, vector<1x16x16x128xf32>
    %43 = vector.shape_cast %42 : vector<1x16x16x128xf32> to vector<256x128xf32>
    %c1_i32_40 = arith.constant 1 : i32
    %44 = tpu.dynamic_rotate %43 by %c1_i32_40 dim 0 : vector<256x128xf32>, i32 -> vector<256x128xf32>
    %45 = arith.mulf %44, %11 : vector<256x128xf32>
    %46 = arith.truncf %45 : vector<256x128xf32> to vector<256x128xbf16>
    %c0_41 = arith.constant 0 : index
    %c3 = arith.constant 3 : index
    %c0_42 = arith.constant 0 : index
    %c0_43 = arith.constant 0 : index
    %47 = vector.load %arg2[%c0_41, %c3, %c0_42, %c0_43] : memref<2x9x128x128xbf16, #tpu.memory_space<vmem>>, vector<1x1x128x128xbf16>
    %48 = vector.shape_cast %47 : vector<1x1x128x128xbf16> to vector<128x128xbf16>
    %cst_44 = arith.constant dense<0.000000e+00> : vector<256x128xf32>
    %49 = tpu.matmul %46, %48, %cst_44 {dimension_numbers = #tpu.dot_dimension_numbers<[1], [0], [0], [1], [0, 0, 1, 1], [], []>} : vector<256x128xbf16>, vector<128x128xbf16>, vector<256x128xf32> -> vector<256x128xf32>
    %50 = arith.addf %41, %49 : vector<256x128xf32>
    %51 = arith.truncf %43 : vector<256x128xf32> to vector<256x128xbf16>
    %c0_45 = arith.constant 0 : index
    %c4 = arith.constant 4 : index
    %c0_46 = arith.constant 0 : index
    %c0_47 = arith.constant 0 : index
    %52 = vector.load %arg2[%c0_45, %c4, %c0_46, %c0_47] : memref<2x9x128x128xbf16, #tpu.memory_space<vmem>>, vector<1x1x128x128xbf16>
    %53 = vector.shape_cast %52 : vector<1x1x128x128xbf16> to vector<128x128xbf16>
    %cst_48 = arith.constant dense<0.000000e+00> : vector<256x128xf32>
    %54 = tpu.matmul %51, %53, %cst_48 {dimension_numbers = #tpu.dot_dimension_numbers<[1], [0], [0], [1], [0, 0, 1, 1], [], []>} : vector<256x128xbf16>, vector<128x128xbf16>, vector<256x128xf32> -> vector<256x128xf32>
    %55 = arith.addf %50, %54 : vector<256x128xf32>
    %c255_i32_49 = arith.constant 255 : i32
    %56 = tpu.dynamic_rotate %43 by %c255_i32_49 dim 0 : vector<256x128xf32>, i32 -> vector<256x128xf32>
    %57 = arith.mulf %56, %19 : vector<256x128xf32>
    %58 = arith.truncf %57 : vector<256x128xf32> to vector<256x128xbf16>
    %c0_50 = arith.constant 0 : index
    %c5 = arith.constant 5 : index
    %c0_51 = arith.constant 0 : index
    %c0_52 = arith.constant 0 : index
    %59 = vector.load %arg2[%c0_50, %c5, %c0_51, %c0_52] : memref<2x9x128x128xbf16, #tpu.memory_space<vmem>>, vector<1x1x128x128xbf16>
    %60 = vector.shape_cast %59 : vector<1x1x128x128xbf16> to vector<128x128xbf16>
    %cst_53 = arith.constant dense<0.000000e+00> : vector<256x128xf32>
    %61 = tpu.matmul %58, %60, %cst_53 {dimension_numbers = #tpu.dot_dimension_numbers<[1], [0], [0], [1], [0, 0, 1, 1], [], []>} : vector<256x128xbf16>, vector<128x128xbf16>, vector<256x128xf32> -> vector<256x128xf32>
    %62 = arith.addf %55, %61 : vector<256x128xf32>
    %c0_54 = arith.constant 0 : index
    %c2_55 = arith.constant 2 : index
    %c0_56 = arith.constant 0 : index
    %c0_57 = arith.constant 0 : index
    %63 = vector.load %arg5[%c0_54, %c2_55, %c0_56, %c0_57] : memref<1x18x16x128xf32, #tpu.memory_space<vmem>>, vector<1x16x16x128xf32>
    %64 = vector.shape_cast %63 : vector<1x16x16x128xf32> to vector<256x128xf32>
    %c1_i32_58 = arith.constant 1 : i32
    %65 = tpu.dynamic_rotate %64 by %c1_i32_58 dim 0 : vector<256x128xf32>, i32 -> vector<256x128xf32>
    %66 = arith.mulf %65, %11 : vector<256x128xf32>
    %67 = arith.truncf %66 : vector<256x128xf32> to vector<256x128xbf16>
    %c0_59 = arith.constant 0 : index
    %c6 = arith.constant 6 : index
    %c0_60 = arith.constant 0 : index
    %c0_61 = arith.constant 0 : index
    %68 = vector.load %arg2[%c0_59, %c6, %c0_60, %c0_61] : memref<2x9x128x128xbf16, #tpu.memory_space<vmem>>, vector<1x1x128x128xbf16>
    %69 = vector.shape_cast %68 : vector<1x1x128x128xbf16> to vector<128x128xbf16>
    %cst_62 = arith.constant dense<0.000000e+00> : vector<256x128xf32>
    %70 = tpu.matmul %67, %69, %cst_62 {dimension_numbers = #tpu.dot_dimension_numbers<[1], [0], [0], [1], [0, 0, 1, 1], [], []>} : vector<256x128xbf16>, vector<128x128xbf16>, vector<256x128xf32> -> vector<256x128xf32>
    %71 = arith.addf %62, %70 : vector<256x128xf32>
    %72 = arith.truncf %64 : vector<256x128xf32> to vector<256x128xbf16>
    %c0_63 = arith.constant 0 : index
    %c7 = arith.constant 7 : index
    %c0_64 = arith.constant 0 : index
    %c0_65 = arith.constant 0 : index
    %73 = vector.load %arg2[%c0_63, %c7, %c0_64, %c0_65] : memref<2x9x128x128xbf16, #tpu.memory_space<vmem>>, vector<1x1x128x128xbf16>
    %74 = vector.shape_cast %73 : vector<1x1x128x128xbf16> to vector<128x128xbf16>
    %cst_66 = arith.constant dense<0.000000e+00> : vector<256x128xf32>
    %75 = tpu.matmul %72, %74, %cst_66 {dimension_numbers = #tpu.dot_dimension_numbers<[1], [0], [0], [1], [0, 0, 1, 1], [], []>} : vector<256x128xbf16>, vector<128x128xbf16>, vector<256x128xf32> -> vector<256x128xf32>
    %76 = arith.addf %71, %75 : vector<256x128xf32>
    %c255_i32_67 = arith.constant 255 : i32
    %77 = tpu.dynamic_rotate %64 by %c255_i32_67 dim 0 : vector<256x128xf32>, i32 -> vector<256x128xf32>
    %78 = arith.mulf %77, %19 : vector<256x128xf32>
    %79 = arith.truncf %78 : vector<256x128xf32> to vector<256x128xbf16>
    %c0_68 = arith.constant 0 : index
    %c8 = arith.constant 8 : index
    %c0_69 = arith.constant 0 : index
    %c0_70 = arith.constant 0 : index
    %80 = vector.load %arg2[%c0_68, %c8, %c0_69, %c0_70] : memref<2x9x128x128xbf16, #tpu.memory_space<vmem>>, vector<1x1x128x128xbf16>
    %81 = vector.shape_cast %80 : vector<1x1x128x128xbf16> to vector<128x128xbf16>
    %cst_71 = arith.constant dense<0.000000e+00> : vector<256x128xf32>
    %82 = tpu.matmul %79, %81, %cst_71 {dimension_numbers = #tpu.dot_dimension_numbers<[1], [0], [0], [1], [0, 0, 1, 1], [], []>} : vector<256x128xbf16>, vector<128x128xbf16>, vector<256x128xf32> -> vector<256x128xf32>
    %83 = arith.addf %76, %82 : vector<256x128xf32>
    %c0_72 = arith.constant 0 : index
    %c0_73 = arith.constant 0 : index
    %c0_74 = arith.constant 0 : index
    %84 = vector.load %arg3[%c0_72, %c0_73, %c0_74] : memref<2x1x128xf32, #tpu.memory_space<vmem>>, vector<1x1x128xf32>
    %85 = vector.shape_cast %84 : vector<1x1x128xf32> to vector<1x128xf32>
    %86 = vector.broadcast %85 : vector<1x128xf32> to vector<256x128xf32>
    %87 = arith.addf %83, %86 : vector<256x128xf32>
    %cst_75 = arith.constant 1.000000e-01 : f32
    %88 = vector.broadcast %cst_75 : f32 to vector<256x128xf32>
    %89 = arith.mulf %88, %87 : vector<256x128xf32>
    %90 = arith.maximumf %87, %89 : vector<256x128xf32>
    %91 = vector.shape_cast %90 : vector<256x128xf32> to vector<1x16x16x128xf32>
    %c0_76 = arith.constant 0 : index
    %c1_77 = arith.constant 1 : index
    %c0_78 = arith.constant 0 : index
    %c0_79 = arith.constant 0 : index
    %92 = vector.load %arg5[%c0_76, %c1_77, %c0_78, %c0_79] : memref<1x18x16x128xf32, #tpu.memory_space<vmem>>, vector<1x16x16x128xf32>
    tpu.vector_store %arg5[%c0_76, %c1_77, %c0_78, %c0_79], %91 {strides = array<i32>} : memref<1x18x16x128xf32, #tpu.memory_space<vmem>>, vector<1x16x16x128xf32>,
    %c0_80 = arith.constant 0 : index
    %c0_81 = arith.constant 0 : index
    %c0_82 = arith.constant 0 : index
    %c0_83 = arith.constant 0 : index
    %93 = vector.load %arg5[%c0_80, %c0_81, %c0_82, %c0_83] : memref<1x18x16x128xf32, #tpu.memory_space<vmem>>, vector<1x16x16x128xf32>
    %94 = vector.shape_cast %93 : vector<1x16x16x128xf32> to vector<256x128xf32>
    %c1_i32_84 = arith.constant 1 : i32
    %95 = tpu.dynamic_rotate %94 by %c1_i32_84 dim 0 : vector<256x128xf32>, i32 -> vector<256x128xf32>
    %96 = arith.mulf %95, %11 : vector<256x128xf32>
    %97 = arith.truncf %96 : vector<256x128xf32> to vector<256x128xbf16>
    %c1_85 = arith.constant 1 : index
    %c0_86 = arith.constant 0 : index
    %c0_87 = arith.constant 0 : index
    %c0_88 = arith.constant 0 : index
    %98 = vector.load %arg2[%c1_85, %c0_86, %c0_87, %c0_88] : memref<2x9x128x128xbf16, #tpu.memory_space<vmem>>, vector<1x1x128x128xbf16>
    %99 = vector.shape_cast %98 : vector<1x1x128x128xbf16> to vector<128x128xbf16>
    %cst_89 = arith.constant dense<0.000000e+00> : vector<256x128xf32>
    %100 = tpu.matmul %97, %99, %cst_89 {dimension_numbers = #tpu.dot_dimension_numbers<[1], [0], [0], [1], [0, 0, 1, 1], [], []>} : vector<256x128xbf16>, vector<128x128xbf16>, vector<256x128xf32> -> vector<256x128xf32>
    %101 = arith.truncf %94 : vector<256x128xf32> to vector<256x128xbf16>
    %c1_90 = arith.constant 1 : index
    %c1_91 = arith.constant 1 : index
    %c0_92 = arith.constant 0 : index
    %c0_93 = arith.constant 0 : index
    %102 = vector.load %arg2[%c1_90, %c1_91, %c0_92, %c0_93] : memref<2x9x128x128xbf16, #tpu.memory_space<vmem>>, vector<1x1x128x128xbf16>
    %103 = vector.shape_cast %102 : vector<1x1x128x128xbf16> to vector<128x128xbf16>
    %cst_94 = arith.constant dense<0.000000e+00> : vector<256x128xf32>
    %104 = tpu.matmul %101, %103, %cst_94 {dimension_numbers = #tpu.dot_dimension_numbers<[1], [0], [0], [1], [0, 0, 1, 1], [], []>} : vector<256x128xbf16>, vector<128x128xbf16>, vector<256x128xf32> -> vector<256x128xf32>
    %105 = arith.addf %100, %104 : vector<256x128xf32>
    %c255_i32_95 = arith.constant 255 : i32
    %106 = tpu.dynamic_rotate %94 by %c255_i32_95 dim 0 : vector<256x128xf32>, i32 -> vector<256x128xf32>
    %107 = arith.mulf %106, %19 : vector<256x128xf32>
    %108 = arith.truncf %107 : vector<256x128xf32> to vector<256x128xbf16>
    %c1_96 = arith.constant 1 : index
    %c2_97 = arith.constant 2 : index
    %c0_98 = arith.constant 0 : index
    %c0_99 = arith.constant 0 : index
    %109 = vector.load %arg2[%c1_96, %c2_97, %c0_98, %c0_99] : memref<2x9x128x128xbf16, #tpu.memory_space<vmem>>, vector<1x1x128x128xbf16>
    %110 = vector.shape_cast %109 : vector<1x1x128x128xbf16> to vector<128x128xbf16>
    %cst_100 = arith.constant dense<0.000000e+00> : vector<256x128xf32>
    %111 = tpu.matmul %108, %110, %cst_100 {dimension_numbers = #tpu.dot_dimension_numbers<[1], [0], [0], [1], [0, 0, 1, 1], [], []>} : vector<256x128xbf16>, vector<128x128xbf16>, vector<256x128xf32> -> vector<256x128xf32>
    %112 = arith.addf %105, %111 : vector<256x128xf32>
    %c0_101 = arith.constant 0 : index
    %c1_102 = arith.constant 1 : index
    %c0_103 = arith.constant 0 : index
    %c0_104 = arith.constant 0 : index
    %113 = vector.load %arg5[%c0_101, %c1_102, %c0_103, %c0_104] : memref<1x18x16x128xf32, #tpu.memory_space<vmem>>, vector<1x16x16x128xf32>
    %114 = vector.shape_cast %113 : vector<1x16x16x128xf32> to vector<256x128xf32>
    %c1_i32_105 = arith.constant 1 : i32
    %115 = tpu.dynamic_rotate %114 by %c1_i32_105 dim 0 : vector<256x128xf32>, i32 -> vector<256x128xf32>
    %116 = arith.mulf %115, %11 : vector<256x128xf32>
    %117 = arith.truncf %116 : vector<256x128xf32> to vector<256x128xbf16>
    %c1_106 = arith.constant 1 : index
    %c3_107 = arith.constant 3 : index
    %c0_108 = arith.constant 0 : index
    %c0_109 = arith.constant 0 : index
    %118 = vector.load %arg2[%c1_106, %c3_107, %c0_108, %c0_109] : memref<2x9x128x128xbf16, #tpu.memory_space<vmem>>, vector<1x1x128x128xbf16>
    %119 = vector.shape_cast %118 : vector<1x1x128x128xbf16> to vector<128x128xbf16>
    %cst_110 = arith.constant dense<0.000000e+00> : vector<256x128xf32>
    %120 = tpu.matmul %117, %119, %cst_110 {dimension_numbers = #tpu.dot_dimension_numbers<[1], [0], [0], [1], [0, 0, 1, 1], [], []>} : vector<256x128xbf16>, vector<128x128xbf16>, vector<256x128xf32> -> vector<256x128xf32>
    %121 = arith.addf %112, %120 : vector<256x128xf32>
    %122 = arith.truncf %114 : vector<256x128xf32> to vector<256x128xbf16>
    %c1_111 = arith.constant 1 : index
    %c4_112 = arith.constant 4 : index
    %c0_113 = arith.constant 0 : index
    %c0_114 = arith.constant 0 : index
    %123 = vector.load %arg2[%c1_111, %c4_112, %c0_113, %c0_114] : memref<2x9x128x128xbf16, #tpu.memory_space<vmem>>, vector<1x1x128x128xbf16>
    %124 = vector.shape_cast %123 : vector<1x1x128x128xbf16> to vector<128x128xbf16>
    %cst_115 = arith.constant dense<0.000000e+00> : vector<256x128xf32>
    %125 = tpu.matmul %122, %124, %cst_115 {dimension_numbers = #tpu.dot_dimension_numbers<[1], [0], [0], [1], [0, 0, 1, 1], [], []>} : vector<256x128xbf16>, vector<128x128xbf16>, vector<256x128xf32> -> vector<256x128xf32>
    %126 = arith.addf %121, %125 : vector<256x128xf32>
    %c255_i32_116 = arith.constant 255 : i32
    %127 = tpu.dynamic_rotate %114 by %c255_i32_116 dim 0 : vector<256x128xf32>, i32 -> vector<256x128xf32>
    %128 = arith.mulf %127, %19 : vector<256x128xf32>
    %129 = arith.truncf %128 : vector<256x128xf32> to vector<256x128xbf16>
    %c1_117 = arith.constant 1 : index
    %c5_118 = arith.constant 5 : index
    %c0_119 = arith.constant 0 : index
    %c0_120 = arith.constant 0 : index
    %130 = vector.load %arg2[%c1_117, %c5_118, %c0_119, %c0_120] : memref<2x9x128x128xbf16, #tpu.memory_space<vmem>>, vector<1x1x128x128xbf16>
    %131 = vector.shape_cast %130 : vector<1x1x128x128xbf16> to vector<128x128xbf16>
    %cst_121 = arith.constant dense<0.000000e+00> : vector<256x128xf32>
    %132 = tpu.matmul %129, %131, %cst_121 {dimension_numbers = #tpu.dot_dimension_numbers<[1], [0], [0], [1], [0, 0, 1, 1], [], []>} : vector<256x128xbf16>, vector<128x128xbf16>, vector<256x128xf32> -> vector<256x128xf32>
    %133 = arith.addf %126, %132 : vector<256x128xf32>
    %c0_122 = arith.constant 0 : index
    %c2_123 = arith.constant 2 : index
    %c0_124 = arith.constant 0 : index
    %c0_125 = arith.constant 0 : index
    %134 = vector.load %arg5[%c0_122, %c2_123, %c0_124, %c0_125] : memref<1x18x16x128xf32, #tpu.memory_space<vmem>>, vector<1x16x16x128xf32>
    %135 = vector.shape_cast %134 : vector<1x16x16x128xf32> to vector<256x128xf32>
    %c1_i32_126 = arith.constant 1 : i32
    %136 = tpu.dynamic_rotate %135 by %c1_i32_126 dim 0 : vector<256x128xf32>, i32 -> vector<256x128xf32>
    %137 = arith.mulf %136, %11 : vector<256x128xf32>
    %138 = arith.truncf %137 : vector<256x128xf32> to vector<256x128xbf16>
    %c1_127 = arith.constant 1 : index
    %c6_128 = arith.constant 6 : index
    %c0_129 = arith.constant 0 : index
    %c0_130 = arith.constant 0 : index
    %139 = vector.load %arg2[%c1_127, %c6_128, %c0_129, %c0_130] : memref<2x9x128x128xbf16, #tpu.memory_space<vmem>>, vector<1x1x128x128xbf16>
    %140 = vector.shape_cast %139 : vector<1x1x128x128xbf16> to vector<128x128xbf16>
    %cst_131 = arith.constant dense<0.000000e+00> : vector<256x128xf32>
    %141 = tpu.matmul %138, %140, %cst_131 {dimension_numbers = #tpu.dot_dimension_numbers<[1], [0], [0], [1], [0, 0, 1, 1], [], []>} : vector<256x128xbf16>, vector<128x128xbf16>, vector<256x128xf32> -> vector<256x128xf32>
    %142 = arith.addf %133, %141 : vector<256x128xf32>
    %143 = arith.truncf %135 : vector<256x128xf32> to vector<256x128xbf16>
    %c1_132 = arith.constant 1 : index
    %c7_133 = arith.constant 7 : index
    %c0_134 = arith.constant 0 : index
    %c0_135 = arith.constant 0 : index
    %144 = vector.load %arg2[%c1_132, %c7_133, %c0_134, %c0_135] : memref<2x9x128x128xbf16, #tpu.memory_space<vmem>>, vector<1x1x128x128xbf16>
    %145 = vector.shape_cast %144 : vector<1x1x128x128xbf16> to vector<128x128xbf16>
    %cst_136 = arith.constant dense<0.000000e+00> : vector<256x128xf32>
    %146 = tpu.matmul %143, %145, %cst_136 {dimension_numbers = #tpu.dot_dimension_numbers<[1], [0], [0], [1], [0, 0, 1, 1], [], []>} : vector<256x128xbf16>, vector<128x128xbf16>, vector<256x128xf32> -> vector<256x128xf32>
    %147 = arith.addf %142, %146 : vector<256x128xf32>
    %c255_i32_137 = arith.constant 255 : i32
    %148 = tpu.dynamic_rotate %135 by %c255_i32_137 dim 0 : vector<256x128xf32>, i32 -> vector<256x128xf32>
    %149 = arith.mulf %148, %19 : vector<256x128xf32>
    %150 = arith.truncf %149 : vector<256x128xf32> to vector<256x128xbf16>
    %c1_138 = arith.constant 1 : index
    %c8_139 = arith.constant 8 : index
    %c0_140 = arith.constant 0 : index
    %c0_141 = arith.constant 0 : index
    %151 = vector.load %arg2[%c1_138, %c8_139, %c0_140, %c0_141] : memref<2x9x128x128xbf16, #tpu.memory_space<vmem>>, vector<1x1x128x128xbf16>
    %152 = vector.shape_cast %151 : vector<1x1x128x128xbf16> to vector<128x128xbf16>
    %cst_142 = arith.constant dense<0.000000e+00> : vector<256x128xf32>
    %153 = tpu.matmul %150, %152, %cst_142 {dimension_numbers = #tpu.dot_dimension_numbers<[1], [0], [0], [1], [0, 0, 1, 1], [], []>} : vector<256x128xbf16>, vector<128x128xbf16>, vector<256x128xf32> -> vector<256x128xf32>
    %154 = arith.addf %147, %153 : vector<256x128xf32>
    %c1_143 = arith.constant 1 : index
    %c0_144 = arith.constant 0 : index
    %c0_145 = arith.constant 0 : index
    %155 = vector.load %arg3[%c1_143, %c0_144, %c0_145] : memref<2x1x128xf32, #tpu.memory_space<vmem>>, vector<1x1x128xf32>
    %156 = vector.shape_cast %155 : vector<1x1x128xf32> to vector<1x128xf32>
    %157 = vector.broadcast %156 : vector<1x128xf32> to vector<256x128xf32>
    %158 = arith.addf %154, %157 : vector<256x128xf32>
    %159 = vector.shape_cast %158 : vector<256x128xf32> to vector<1x16x16x128xf32>
    %160 = arith.addf %159, %20 : vector<1x16x16x128xf32>
    %c0_146 = arith.constant 0 : index
    %c0_147 = arith.constant 0 : index
    %c0_148 = arith.constant 0 : index
    %c0_149 = arith.constant 0 : index
    %161 = vector.load %arg4[%c0_146, %c0_147, %c0_148, %c0_149] : memref<1x16x16x128xf32, #tpu.memory_space<vmem>>, vector<1x16x16x128xf32>
    tpu.vector_store %arg4[%c0_146, %c0_147, %c0_148, %c0_149], %160 {strides = array<i32>} : memref<1x16x16x128xf32, #tpu.memory_space<vmem>>, vector<1x16x16x128xf32>,
    return
  }
  func.func @transform_0(%arg0: i32) -> (i32, i32, i32, i32) {
    %c0_i32 = arith.constant 0 : i32
    %c0_i32_0 = arith.constant 0 : i32
    %c0_i32_1 = arith.constant 0 : i32
    %c0_i32_2 = arith.constant 0 : i32
    return %arg0, %c0_i32, %c0_i32_0, %c0_i32_1 : i32, i32, i32, i32
  }
  func.func @transform_1(%arg0: i32) -> (i32, i32, i32, i32) {
    %c0_i32 = arith.constant 0 : i32
    %c0_i32_0 = arith.constant 0 : i32
    %c0_i32_1 = arith.constant 0 : i32
    %c0_i32_2 = arith.constant 0 : i32
    %c0_i32_3 = arith.constant 0 : i32
    return %c0_i32, %c0_i32_0, %c0_i32_1, %c0_i32_2 : i32, i32, i32, i32
  }
  func.func @transform_2(%arg0: i32) -> (i32, i32, i32) {
    %c0_i32 = arith.constant 0 : i32
    %c0_i32_0 = arith.constant 0 : i32
    %c0_i32_1 = arith.constant 0 : i32
    %c0_i32_2 = arith.constant 0 : i32
    return %c0_i32, %c0_i32_0, %c0_i32_1 : i32, i32, i32
  }
  func.func @transform_3(%arg0: i32) -> (i32, i32, i32, i32) {
    %c0_i32 = arith.constant 0 : i32
    %c0_i32_0 = arith.constant 0 : i32
    %c0_i32_1 = arith.constant 0 : i32
    %c0_i32_2 = arith.constant 0 : i32
    return %arg0, %c0_i32, %c0_i32_0, %c0_i32_1 : i32, i32, i32, i32
  }
}

</mosaic_0001>

<llo_original>
// kernel: tpu_custom_call.1
$region0: #{tpu_custom_call.1}
  #allocation0 [shape = 'u32[]', space=smem, size = 0x4, offset = 0x4, fixed_abs, tag = 'smem constant byte address 0x4 - core index']
  #allocation1 [shape = 'u32[144,128]{1,0:T(1,128)}', space=vmem, size = 0x12000, scoped, tag = 'internal scratch']
  #allocation2 [shape = 'f32[1,18,16,128]{3,2,1,0:T(8,128)}', space=vmem, size = 0x24000, scoped, tag = 'scratch operand']
  %s0 = inlined_call_operand.hbm [shape: f32[2,16,16,128], index: 0, kind: input, shape index: {}]
  %s1 = inlined_call_operand.hbm [shape: bf16[2,9,128,128], index: 1, kind: input, shape index: {}]
  %s2 = inlined_call_operand.vmem [shape: f32[2,1,128], index: 2, kind: input, shape index: {}]
  %s3 = inlined_call_operand.hbm [shape: f32[2,16,16,128], index: 3, kind: output, shape index: {}]
  %s4 = sld [smem:[#allocation0]]
  $region53: #{tpu_custom_call.1} parent=0
    _
  %s6 = ssub.s32 1, %s4
  %s7 = scalar_select 0, %s6, %s4
  $region1: #{tpu_custom_call.1} parent=0
    #allocation3 [shape = 'u8[262144]{0}', space=vmem, size = 0x40000, scoped, tag = 'input window, operand 0']
    #allocation4 [shape = 's32[2]{0}', space=sflag, size = 0x8, scoped, tag = 'scoped memory for tpu_custom_call.1']
    #allocation5 [shape = 's32[2]{0}', space=sflag, size = 0x8, scoped, tag = 'scoped memory for tpu_custom_call.1']
    #allocation6 [shape = 'u8[589824]{0}', space=vmem, size = 0x90000, scoped, tag = 'input window, operand 1, single buffered']
    #allocation7 [shape = 's32[1]{0}', space=sflag, size = 0x4, scoped, tag = 'scoped memory for tpu_custom_call.1']
    #allocation8 [shape = 'u8[262144]{0}', space=vmem, size = 0x40000, scoped, tag = 'output window, operand 0']
    %8 = vsyncpa [#allocation4], 0
    %s9 = scalar_lea.sflag [#allocation4], 1
    %10 = vsyncpa %s9, 0
    %11 = vsyncpa [#allocation7], 0
    %12 = vsyncpa [#allocation5], 0
    %s13 = scalar_lea.sflag [#allocation5], 1
    %14 = vsyncpa %s13, 0
    loop: start=0, step=1, limit=4
    $region2: #{tpu_custom_call.1} parent=1 // loop_pre_header
      _
    $region3: #{tpu_custom_call.1} parent=1 // loop_header
      %s16 = sphi 0, %s20
      %p17 = scmp.ge.s32.totalorder %s16, 4
      %s26 = sphi 0, %s28
      %s29 = sphi 0, %s26
      %s30 = sphi 0, %s29
      %s46 = sphi 0, %s30
      %s50 = sphi 0, %s50
      %s52 = sphi 0, %s50
      %s53 = sphi 0, %s52
      %s67 = sphi 0, %s53
      %s71 = sphi 0, %s71
      %s73 = sphi 0, %s71
      %s74 = sphi 0, %s73
      %s88 = sphi 0, %s74
      %s94 = sphi 0, %s96
      %s97 = sphi 0, %s94
      %s98 = sphi 0, %s97
      %s114 = sphi 0, %s98
    $region4: #{tpu_custom_call.1} parent=1 // loop_header_branch
      %19 = sbr.rel (%p17) target = $region8
    $region5: #{tpu_custom_call.1} parent=1 // loop_body
      %s21 = ssub.s32 %s16, 1
      %s22 = ssub.s32 %s16, 2
      %s23 = sadd.s32 %s16, 1
      %s24 = ssub.s32 %s16, %s23
      %p25 = scmp.eq.s32.totalorder %s24, 0
      %s27 = sadd.s32 %s26, 1
      %s28 = scalar_select %p25, %s26, %s27
      %p31 = pneg %p25
      %p32 = scmp.eq.s32.totalorder %s16, 1
      %p33 = por %p31, %p32
      %p34 = scmp.ne.s32.totalorder %s26, %s29
      %p35 = scmp.eq.s32.totalorder %s16, 0
      %p36 = por %p34, %p35
      %p37 = scmp.ne.s32.totalorder %s26, %s29
      %p38 = scmp.eq.s32.totalorder %s21, 1
      %p39 = por %p37, %p38
      %p40 = scmp.ne.s32.totalorder %s29, %s30
      %p41 = scmp.eq.s32.totalorder %s21, 0
      %p42 = por %p40, %p41
      %p43 = scmp.ne.s32.totalorder %s29, %s30
      %p44 = scmp.eq.s32.totalorder %s22, 1
      %p45 = por %p43, %p44
      %p47 = scmp.ne.s32.totalorder %s30, %s46
      %p48 = scmp.eq.s32.totalorder %s22, 0
      %p49 = por %p47, %p48
      %s51 = sadd.s32 %s50, 1
      %p54 = scmp.eq.s32.totalorder %s16, 1
      %p55 = scmp.ne.s32.totalorder %s50, %s52
      %p56 = scmp.eq.s32.totalorder %s16, 0
      %p57 = por %p55, %p56
      %p58 = scmp.ne.s32.totalorder %s50, %s52
      %p59 = scmp.eq.s32.totalorder %s21, 1
      %p60 = por %p58, %p59
      %p61 = scmp.ne.s32.totalorder %s52, %s53
      %p62 = scmp.eq.s32.totalorder %s21, 0
      %p63 = por %p61, %p62
      %p64 = scmp.ne.s32.totalorder %s52, %s53
      %p65 = scmp.eq.s32.totalorder %s22, 1
      %p66 = por %p64, %p65
      %p68 = scmp.ne.s32.totalorder %s53, %s67
      %p69 = scmp.eq.s32.totalorder %s22, 0
      %p70 = por %p68, %p69
      %s72 = sadd.s32 %s71, 1
      %p75 = scmp.eq.s32.totalorder %s16, 1
      %p76 = scmp.ne.s32.totalorder %s71, %s73
      %p77 = scmp.eq.s32.totalorder %s16, 0
      %p78 = por %p76, %p77
      %p79 = scmp.ne.s32.totalorder %s71, %s73
      %p80 = scmp.eq.s32.totalorder %s21, 1
      %p81 = por %p79, %p80
      %p82 = scmp.ne.s32.totalorder %s73, %s74
      %p83 = scmp.eq.s32.totalorder %s21, 0
      %p84 = por %p82, %p83
      %p85 = scmp.ne.s32.totalorder %s73, %s74
      %p86 = scmp.eq.s32.totalorder %s22, 1
      %p87 = por %p85, %p86
      %p89 = scmp.ne.s32.totalorder %s74, %s88
      %p90 = scmp.eq.s32.totalorder %s22, 0
      %p91 = por %p89, %p90
      %s92 = ssub.s32 %s16, %s23
      %p93 = scmp.eq.s32.totalorder %s92, 0
      %s95 = sadd.s32 %s94, 1
      %s96 = scalar_select %p93, %s94, %s95
      %p99 = pneg %p93
      %p100 = scmp.eq.s32.totalorder %s16, 1
      %p101 = por %p99, %p100
      %p102 = scmp.ne.s32.totalorder %s94, %s97
      %p103 = scmp.eq.s32.totalorder %s16, 0
      %p104 = por %p102, %p103
      %p105 = scmp.ne.s32.totalorder %s94, %s97
      %p106 = scmp.eq.s32.totalorder %s21, 1
      %p107 = por %p105, %p106
      %p108 = scmp.ne.s32.totalorder %s97, %s98
      %p109 = scmp.eq.s32.totalorder %s21, 0
      %p110 = por %p108, %p109
      %p111 = scmp.ne.s32.totalorder %s97, %s98
      %p112 = scmp.eq.s32.totalorder %s22, 1
      %p113 = por %p111, %p112
      %p115 = scmp.ne.s32.totalorder %s98, %s114
      %p116 = scmp.eq.s32.totalorder %s22, 0
      %p117 = por %p115, %p116
      %p118 = scmp.le.s32.totalorder 1, %s16
      %p119 = scmp.lt.s32.totalorder %s16, 3
      %p120 = pnand %p118, %p119
      %p121 = pneg %p120
      // Predicated region
      $region9: #{tpu_custom_call.1} parent=5 // pred_check
        _
      $region10: #{tpu_custom_call.1} parent=5 // pred_check_branch
        %123 = sbr.rel (%p120) target = $region12
      $region11: #{tpu_custom_call.1} parent=5 // pred_region
        %s124 = ssub.s32 %s16, 1
        // Predicated region
        $region13: #{tpu_custom_call.1} parent=11 // pred_check
          %p125 = pneg %p63
        $region14: #{tpu_custom_call.1} parent=11 // pred_check_branch
          %127 = sbr.rel (%p125) target = $region16
        $region15: #{tpu_custom_call.1} parent=11 // pred_region
          %s129 = ssub.s32 18432, 18432
          %130 = vsyncadd [#allocation7], %s129
          %s131 = sshll.u32 [#allocation6], 4
          %s132 = int_to_ptr.vmem [resolvable:$true] %s131
          %137 = dma.hbm_to_vmem [thread:$0]  %s1, 18432, %s132, [#allocation7], 64, 64, 4
        $region16: #{tpu_custom_call.1} parent=11 // pred_fallthru
          _
        // Predicated region
        $region17: #{tpu_custom_call.1} parent=11 // pred_check
          %p138 = pneg %p84
        $region18: #{tpu_custom_call.1} parent=11 // pred_check_branch
          %140 = sbr.rel (%p138) target = $region20
        $region19: #{tpu_custom_call.1} parent=11 // pred_region
          _
        $region20: #{tpu_custom_call.1} parent=11 // pred_fallthru
          _
      $region12: #{tpu_custom_call.1} parent=5 // pred_fallthru
        _
      %p141 = scmp.lt.s32.totalorder %s16, 2
      // Predicated region
      $region21: #{tpu_custom_call.1} parent=5 // pred_check
        %p142 = pneg %p141
      $region22: #{tpu_custom_call.1} parent=5 // pred_check_branch
        %144 = sbr.rel (%p142) target = $region24
      $region23: #{tpu_custom_call.1} parent=5 // pred_region
        // Predicated region
        $region25: #{tpu_custom_call.1} parent=23 // pred_check
          %p145 = pneg %p36
        $region26: #{tpu_custom_call.1} parent=23 // pred_check_branch
          %147 = sbr.rel (%p145) target = $region28
        $region27: #{tpu_custom_call.1} parent=23 // pred_region
          %s148 = sand.u32 %s26, 1
          %s149 = scalar_lea.sflag [#allocation4], %s148
          %s150 = sand.u32 %s26, 1
          %s151 = smul.addr %s150, 256
          %s152 = scalar_lea.vmem [#allocation3], %s151
          %s154 = ssub.s32 4096, 4096
          %155 = vsyncadd %s149, %s154
          %s156 = smul.addr %s16, 32
          %s157 = smul.addr %s156, 128
          %s158 = scalar_lea.hbm %s0, %s157
          %s159 = sshll.u32 %s152, 4
          %s160 = int_to_ptr.vmem [resolvable:$true] %s159
          %165 = dma.hbm_to_vmem [thread:$0]  %s158, 4096, %s160, %s149, 128, 128, 8
        $region28: #{tpu_custom_call.1} parent=23 // pred_fallthru
          _
      $region24: #{tpu_custom_call.1} parent=5 // pred_fallthru
        _
      %p166 = scmp.le.s32.totalorder 1, %s16
      %p167 = scmp.lt.s32.totalorder %s16, 3
      %p168 = pnand %p166, %p167
      %p169 = pneg %p168
      // Predicated region
      $region29: #{tpu_custom_call.1} parent=5 // pred_check
        _
      $region30: #{tpu_custom_call.1} parent=5 // pred_check_branch
        %171 = sbr.rel (%p168) target = $region32
      $region31: #{tpu_custom_call.1} parent=5 // pred_region
        %s172 = ssub.s32 %s16, 1
        %s173 = sand.u32 %s29, 1
        %s174 = scalar_lea.sflag [#allocation4], %s173
        %s175 = sand.u32 %s29, 1
        %s176 = smul.addr %s175, 256
        %s177 = scalar_lea.vmem [#allocation3], %s176
        // Predicated region
        $region33: #{tpu_custom_call.1} parent=31 // pred_check
          %p178 = pneg %p42
        $region34: #{tpu_custom_call.1} parent=31 // pred_check_branch
          %180 = sbr.rel (%p178) target = $region36
        $region35: #{tpu_custom_call.1} parent=31 // pred_region
          %181 = dma.done %s174, 4096
        $region36: #{tpu_custom_call.1} parent=31 // pred_fallthru
          _
        // Predicated region
        $region37: #{tpu_custom_call.1} parent=31 // pred_check
          %p182 = pneg %p63
        $region38: #{tpu_custom_call.1} parent=31 // pred_check_branch
          %184 = sbr.rel (%p182) target = $region40
        $region39: #{tpu_custom_call.1} parent=31 // pred_region
          %185 = dma.done [#allocation7], 18432
        $region40: #{tpu_custom_call.1} parent=31 // pred_fallthru
          _
        %s186 = sand.u32 %s29, 1
        %s187 = scalar_lea.sflag [#allocation4], %s186
        %s188 = sand.u32 %s29, 1
        %s189 = smul.addr %s188, 256
        %s190 = scalar_lea.vmem [#allocation3], %s189
        %p191 = pneg %p42
        %p192 = pneg %p39
        %p193 = pneg %p63
        %p194 = pneg %p60
        %p195 = pneg %p84
        %p196 = pneg %p81
        %p197 = pneg %p110
        %p198 = pneg %p107
        %s199 = sand.u32 %s97, 1
        %s200 = scalar_lea.sflag [#allocation5], %s199
        %s201 = sand.u32 %s97, 1
        %s202 = smul.addr %s201, 256
        %s203 = scalar_lea.vmem [#allocation8], %s202
        %205 = vst [vmem:[#allocation2] sm:$0xff] 0.0
        %206 = vst [vmem:[#allocation2 + $0x8] sm:$0xff] 0.0
        %s207 = scalar_lea.vmem [#allocation2], 272
        %208 = vst [vmem:[%s207] sm:$0xff] 0.0
        %209 = vst [vmem:[%s207 + $0x8] sm:$0xff] 0.0
        %v210 = vlaneseq
        %v211 = vshrl.u32 %v210, 7
        %v212 = vadd.s32 %v211, 8
        %vm213 = vcmp.ge.s32.totalorder %v211, 1
        %vm214 = vcmp.ge.s32.totalorder %v212, 1
        %v215 = vsel %vm213, 1.0, 0.0
        %v216 = vsel %vm214, 1.0, 0.0
        %vm217 = vcmp.le.s32.totalorder %v211, 14
        %vm218 = vcmp.le.s32.totalorder %v212, 14
        %v219 = vsel %vm217, 1.0, 0.0
        %v220 = vsel %vm218, 1.0, 0.0
        %v221 = vld [vmem:[%s177] sm:$0xff]
        %v222 = vld [vmem:[%s177 + $0x8] sm:$0xff]
        %v223 = vld [vmem:[%s177 + $0x10] sm:$0xff]
        %v224 = vld [vmem:[%s177 + $0x18] sm:$0xff]
        %v225 = vld [vmem:[%s177 + $0x20] sm:$0xff]
        %v226 = vld [vmem:[%s177 + $0x28] sm:$0xff]
        %v227 = vld [vmem:[%s177 + $0x30] sm:$0xff]
        %v228 = vld [vmem:[%s177 + $0x38] sm:$0xff]
        %v229 = vld [vmem:[%s177 + $0x40] sm:$0xff]
        %v230 = vld [vmem:[%s177 + $0x48] sm:$0xff]
        %v231 = vld [vmem:[%s177 + $0x50] sm:$0xff]
        %v232 = vld [vmem:[%s177 + $0x58] sm:$0xff]
        %v233 = vld [vmem:[%s177 + $0x60] sm:$0xff]
        %v234 = vld [vmem:[%s177 + $0x68] sm:$0xff]
        %v235 = vld [vmem:[%s177 + $0x70] sm:$0xff]
        %v236 = vld [vmem:[%s177 + $0x78] sm:$0xff]
        %v237 = vld [vmem:[%s177 + $0x80] sm:$0xff]
        %v238 = vld [vmem:[%s177 + $0x88] sm:$0xff]
        %v239 = vld [vmem:[%s177 + $0x90] sm:$0xff]
        %v240 = vld [vmem:[%s177 + $0x98] sm:$0xff]
        %v241 = vld [vmem:[%s177 + $0xa0] sm:$0xff]
        %v242 = vld [vmem:[%s177 + $0xa8] sm:$0xff]
        %v243 = vld [vmem:[%s177 + $0xb0] sm:$0xff]
        %v244 = vld [vmem:[%s177 + $0xb8] sm:$0xff]
        %v245 = vld [vmem:[%s177 + $0xc0] sm:$0xff]
        %v246 = vld [vmem:[%s177 + $0xc8] sm:$0xff]
        %v247 = vld [vmem:[%s177 + $0xd0] sm:$0xff]
        %v248 = vld [vmem:[%s177 + $0xd8] sm:$0xff]
        %v249 = vld [vmem:[%s177 + $0xe0] sm:$0xff]
        %v250 = vld [vmem:[%s177 + $0xe8] sm:$0xff]
        %v251 = vld [vmem:[%s177 + $0xf0] sm:$0xff]
        %v252 = vld [vmem:[%s177 + $0xf8] sm:$0xff]
        %s253 = scalar_lea.vmem [#allocation2], 16
        %254 = vst [vmem:[%s253] sm:$0xff] %v221
        %255 = vst [vmem:[%s253 + $0x8] sm:$0xff] %v222
        %256 = vst [vmem:[%s253 + $0x10] sm:$0xff] %v223
        %257 = vst [vmem:[%s253 + $0x18] sm:$0xff] %v224
        %258 = vst [vmem:[%s253 + $0x20] sm:$0xff] %v225
        %259 = vst [vmem:[%s253 + $0x28] sm:$0xff] %v226
        %260 = vst [vmem:[%s253 + $0x30] sm:$0xff] %v227
        %261 = vst [vmem:[%s253 + $0x38] sm:$0xff] %v228
        %262 = vst [vmem:[%s253 + $0x40] sm:$0xff] %v229
        %263 = vst [vmem:[%s253 + $0x48] sm:$0xff] %v230
        %264 = vst [vmem:[%s253 + $0x50] sm:$0xff] %v231
        %265 = vst [vmem:[%s253 + $0x58] sm:$0xff] %v232
        %266 = vst [vmem:[%s253 + $0x60] sm:$0xff] %v233
        %267 = vst [vmem:[%s253 + $0x68] sm:$0xff] %v234
        %268 = vst [vmem:[%s253 + $0x70] sm:$0xff] %v235
        %269 = vst [vmem:[%s253 + $0x78] sm:$0xff] %v236
        %270 = vst [vmem:[%s253 + $0x80] sm:$0xff] %v237
        %271 = vst [vmem:[%s253 + $0x88] sm:$0xff] %v238
        %272 = vst [vmem:[%s253 + $0x90] sm:$0xff] %v239
        %273 = vst [vmem:[%s253 + $0x98] sm:$0xff] %v240
        %274 = vst [vmem:[%s253 + $0xa0] sm:$0xff] %v241
        %275 = vst [vmem:[%s253 + $0xa8] sm:$0xff] %v242
        %276 = vst [vmem:[%s253 + $0xb0] sm:$0xff] %v243
        %277 = vst [vmem:[%s253 + $0xb8] sm:$0xff] %v244
        %278 = vst [vmem:[%s253 + $0xc0] sm:$0xff] %v245
        %279 = vst [vmem:[%s253 + $0xc8] sm:$0xff] %v246
        %280 = vst [vmem:[%s253 + $0xd0] sm:$0xff] %v247
        %281 = vst [vmem:[%s253 + $0xd8] sm:$0xff] %v248
        %282 = vst [vmem:[%s253 + $0xe0] sm:$0xff] %v249
        %283 = vst [vmem:[%s253 + $0xe8] sm:$0xff] %v250
        %284 = vst [vmem:[%s253 + $0xf0] sm:$0xff] %v251
        %285 = vst [vmem:[%s253 + $0xf8] sm:$0xff] %v252
        %v286 = vld [vmem:[#allocation2] sm:$0xff]
        %v287 = vld [vmem:[#allocation2 + $0x8] sm:$0xff]
        %v288 = vld [vmem:[#allocation2 + $0x10] sm:$0xff]
        %v289 = vld [vmem:[#allocation2 + $0x18] sm:$0xff]
        %v290 = vld [vmem:[#allocation2 + $0x20] sm:$0xff]
        %v291 = vld [vmem:[#allocation2 + $0x28] sm:$0xff]
        %v292 = vld [vmem:[#allocation2 + $0x30] sm:$0xff]
        %v293 = vld [vmem:[#allocation2 + $0x38] sm:$0xff]
        %v294 = vld [vmem:[#allocation2 + $0x40] sm:$0xff]
        %v295 = vld [vmem:[#allocation2 + $0x48] sm:$0xff]
        %v296 = vld [vmem:[#allocation2 + $0x50] sm:$0xff]
        %v297 = vld [vmem:[#allocation2 + $0x58] sm:$0xff]
        %v298 = vld [vmem:[#allocation2 + $0x60] sm:$0xff]
        %v299 = vld [vmem:[#allocation2 + $0x68] sm:$0xff]
        %v300 = vld [vmem:[#allocation2 + $0x70] sm:$0xff]
        %v301 = vld [vmem:[#allocation2 + $0x78] sm:$0xff]
        %v302 = vld [vmem:[#allocation2 + $0x80] sm:$0xff]
        %v303 = vld [vmem:[#allocation2 + $0x88] sm:$0xff]
        %v304 = vld [vmem:[#allocation2 + $0x90] sm:$0xff]
        %v305 = vld [vmem:[#allocation2 + $0x98] sm:$0xff]
        %v306 = vld [vmem:[#allocation2 + $0xa0] sm:$0xff]
        %v307 = vld [vmem:[#allocation2 + $0xa8] sm:$0xff]
        %v308 = vld [vmem:[#allocation2 + $0xb0] sm:$0xff]
        %v309 = vld [vmem:[#allocation2 + $0xb8] sm:$0xff]
        %v310 = vld [vmem:[#allocation2 + $0xc0] sm:$0xff]
        %v311 = vld [vmem:[#allocation2 + $0xc8] sm:$0xff]
        %v312 = vld [vmem:[#allocation2 + $0xd0] sm:$0xff]
        %v313 = vld [vmem:[#allocation2 + $0xd8] sm:$0xff]
        %v314 = vld [vmem:[#allocation2 + $0xe0] sm:$0xff]
        %v315 = vld [vmem:[#allocation2 + $0xe8] sm:$0xff]
        %v316 = vld [vmem:[#allocation2 + $0xf0] sm:$0xff]
        %v317 = vld [vmem:[#allocation2 + $0xf8] sm:$0xff]
        %v318 = vrot.slane %v286, 7
        %v319 = vrot.slane %v287, 7
        %v320 = vrot.slane %v288, 7
        %v321 = vrot.slane %v289, 7
        %v322 = vrot.slane %v290, 7
        %v323 = vrot.slane %v291, 7
        %v324 = vrot.slane %v292, 7
        %v325 = vrot.slane %v293, 7
        %v326 = vrot.slane %v294, 7
        %v327 = vrot.slane %v295, 7
        %v328 = vrot.slane %v296, 7
        %v329 = vrot.slane %v297, 7
        %v330 = vrot.slane %v298, 7
        %v331 = vrot.slane %v299, 7
        %v332 = vrot.slane %v300, 7
        %v333 = vrot.slane %v301, 7
        %v334 = vrot.slane %v302, 7
        %v335 = vrot.slane %v303, 7
        %v336 = vrot.slane %v304, 7
        %v337 = vrot.slane %v305, 7
        %v338 = vrot.slane %v306, 7
        %v339 = vrot.slane %v307, 7
        %v340 = vrot.slane %v308, 7
        %v341 = vrot.slane %v309, 7
        %v342 = vrot.slane %v310, 7
        %v343 = vrot.slane %v311, 7
        %v344 = vrot.slane %v312, 7
        %v345 = vrot.slane %v313, 7
        %v346 = vrot.slane %v314, 7
        %v347 = vrot.slane %v315, 7
        %v348 = vrot.slane %v316, 7
        %v349 = vrot.slane %v317, 7
        %vm350 = vcmp.lt.s32.totalorder %v211, 1
        %v351 = vsel %vm350, %v348, %v349
        %v352 = vsel %vm350, %v347, %v348
        %v353 = vsel %vm350, %v346, %v347
        %v354 = vsel %vm350, %v345, %v346
        %v355 = vsel %vm350, %v344, %v345
        %v356 = vsel %vm350, %v343, %v344
        %v357 = vsel %vm350, %v342, %v343
        %v358 = vsel %vm350, %v341, %v342
        %v359 = vsel %vm350, %v340, %v341
        %v360 = vsel %vm350, %v339, %v340
        %v361 = vsel %vm350, %v338, %v339
        %v362 = vsel %vm350, %v337, %v338
        %v363 = vsel %vm350, %v336, %v337
        %v364 = vsel %vm350, %v335, %v336
        %v365 = vsel %vm350, %v334, %v335
        %v366 = vsel %vm350, %v333, %v334
        %v367 = vsel %vm350, %v332, %v333
        %v368 = vsel %vm350, %v331, %v332
        %v369 = vsel %vm350, %v330, %v331
        %v370 = vsel %vm350, %v329, %v330
        %v371 = vsel %vm350, %v328, %v329
        %v372 = vsel %vm350, %v327, %v328
        %v373 = vsel %vm350, %v326, %v327
        %v374 = vsel %vm350, %v325, %v326
        %v375 = vsel %vm350, %v324, %v325
        %v376 = vsel %vm350, %v323, %v324
        %v377 = vsel %vm350, %v322, %v323
        %v378 = vsel %vm350, %v321, %v322
        %v379 = vsel %vm350, %v320, %v321
        %v380 = vsel %vm350, %v319, %v320
        %v381 = vsel %vm350, %v318, %v319
        %v382 = vsel %vm350, %v349, %v318
        %v383 = vmul.f32 %v382, %v215
        %v384 = vmul.f32 %v381, %v216
        %v385 = vmul.f32 %v380, %v215
        %v386 = vmul.f32 %v379, %v216
        %v387 = vmul.f32 %v378, %v215
        %v388 = vmul.f32 %v377, %v216
        %v389 = vmul.f32 %v376, %v215
        %v390 = vmul.f32 %v375, %v216
        %v391 = vmul.f32 %v374, %v215
        %v392 = vmul.f32 %v373, %v216
        %v393 = vmul.f32 %v372, %v215
        %v394 = vmul.f32 %v371, %v216
        %v395 = vmul.f32 %v370, %v215
        %v396 = vmul.f32 %v369, %v216
        %v397 = vmul.f32 %v368, %v215
        %v398 = vmul.f32 %v367, %v216
        %v399 = vmul.f32 %v366, %v215
        %v400 = vmul.f32 %v365, %v216
        %v401 = vmul.f32 %v364, %v215
        %v402 = vmul.f32 %v363, %v216
        %v403 = vmul.f32 %v362, %v215
        %v404 = vmul.f32 %v361, %v216
        %v405 = vmul.f32 %v360, %v215
        %v406 = vmul.f32 %v359, %v216
        %v407 = vmul.f32 %v358, %v215
        %v408 = vmul.f32 %v357, %v216
        %v409 = vmul.f32 %v356, %v215
        %v410 = vmul.f32 %v355, %v216
        %v411 = vmul.f32 %v354, %v215
        %v412 = vmul.f32 %v353, %v216
        %v413 = vmul.f32 %v352, %v215
        %v414 = vmul.f32 %v351, %v216
        %v415 = vpack.c.bf16 %v384, %v383
        %v416 = vpack.c.bf16 %v386, %v385
        %v417 = vpack.c.bf16 %v388, %v387
        %v418 = vpack.c.bf16 %v390, %v389
        %v419 = vpack.c.bf16 %v392, %v391
        %v420 = vpack.c.bf16 %v394, %v393
        %v421 = vpack.c.bf16 %v396, %v395
        %v422 = vpack.c.bf16 %v398, %v397
        %v423 = vpack.c.bf16 %v400, %v399
        %v424 = vpack.c.bf16 %v402, %v401
        %v425 = vpack.c.bf16 %v404, %v403
        %v426 = vpack.c.bf16 %v406, %v405
        %v427 = vpack.c.bf16 %v408, %v407
        %v428 = vpack.c.bf16 %v410, %v409
        %v429 = vpack.c.bf16 %v412, %v411
        %v430 = vpack.c.bf16 %v414, %v413
        %v431 = vld [vmem:[#allocation6] sm:$0xf]
        %v432 = vld [vmem:[#allocation6 + $0x4] sm:$0xf]
        %v433 = vld [vmem:[#allocation6 + $0x8] sm:$0xf]
        %v434 = vld [vmem:[#allocation6 + $0xc] sm:$0xf]
        %v435 = vld [vmem:[#allocation6 + $0x10] sm:$0xf]
        %v436 = vld [vmem:[#allocation6 + $0x14] sm:$0xf]
        %v437 = vld [vmem:[#allocation6 + $0x18] sm:$0xf]
        %v438 = vld [vmem:[#allocation6 + $0x1c] sm:$0xf]
        %v439 = vld [vmem:[#allocation6 + $0x20] sm:$0xf]
        %v440 = vld [vmem:[#allocation6 + $0x24] sm:$0xf]
        %v441 = vld [vmem:[#allocation6 + $0x28] sm:$0xf]
        %v442 = vld [vmem:[#allocation6 + $0x2c] sm:$0xf]
        %v443 = vld [vmem:[#allocation6 + $0x30] sm:$0xf]
        %v444 = vld [vmem:[#allocation6 + $0x34] sm:$0xf]
        %v445 = vld [vmem:[#allocation6 + $0x38] sm:$0xf]
        %v446 = vld [vmem:[#allocation6 + $0x3c] sm:$0xf]
        %v447 = vpack.c.bf16 %v287, %v286
        %v448 = vpack.c.bf16 %v289, %v288
        %v449 = vpack.c.bf16 %v291, %v290
        %v450 = vpack.c.bf16 %v293, %v292
        %v451 = vpack.c.bf16 %v295, %v294
        %v452 = vpack.c.bf16 %v297, %v296
        %v453 = vpack.c.bf16 %v299, %v298
        %v454 = vpack.c.bf16 %v301, %v300
        %v455 = vpack.c.bf16 %v303, %v302
        %v456 = vpack.c.bf16 %v305, %v304
        %v457 = vpack.c.bf16 %v307, %v306
        %v458 = vpack.c.bf16 %v309, %v308
        %v459 = vpack.c.bf16 %v311, %v310
        %v460 = vpack.c.bf16 %v313, %v312
        %v461 = vpack.c.bf16 %v315, %v314
        %v462 = vpack.c.bf16 %v317, %v316
        %s463 = scalar_lea.vmem [#allocation6], 64
        %v464 = vld [vmem:[%s463] sm:$0xf]
        %v465 = vld [vmem:[%s463 + $0x4] sm:$0xf]
        %v466 = vld [vmem:[%s463 + $0x8] sm:$0xf]
        %v467 = vld [vmem:[%s463 + $0xc] sm:$0xf]
        %v468 = vld [vmem:[%s463 + $0x10] sm:$0xf]
        %v469 = vld [vmem:[%s463 + $0x14] sm:$0xf]
        %v470 = vld [vmem:[%s463 + $0x18] sm:$0xf]
        %v471 = vld [vmem:[%s463 + $0x1c] sm:$0xf]
        %v472 = vld [vmem:[%s463 + $0x20] sm:$0xf]
        %v473 = vld [vmem:[%s463 + $0x24] sm:$0xf]
        %v474 = vld [vmem:[%s463 + $0x28] sm:$0xf]
        %v475 = vld [vmem:[%s463 + $0x2c] sm:$0xf]
        %v476 = vld [vmem:[%s463 + $0x30] sm:$0xf]
        %v477 = vld [vmem:[%s463 + $0x34] sm:$0xf]
        %v478 = vld [vmem:[%s463 + $0x38] sm:$0xf]
        %v479 = vld [vmem:[%s463 + $0x3c] sm:$0xf]
        %v496 = vunpack.c.l.b16 %v464
        %v497 = vunpack.c.l.b16 %v465
        %v498 = vunpack.c.l.b16 %v466
        %v499 = vunpack.c.l.b16 %v467
        %v500 = vunpack.c.l.b16 %v468
        %v501 = vunpack.c.l.b16 %v469
        %v502 = vunpack.c.l.b16 %v470
        %v503 = vunpack.c.l.b16 %v471
        %v504 = vunpack.c.l.b16 %v472
        %v505 = vunpack.c.l.b16 %v473
        %v506 = vunpack.c.l.b16 %v474
        %v507 = vunpack.c.l.b16 %v475
        %v508 = vunpack.c.l.b16 %v476
        %v509 = vunpack.c.l.b16 %v477
        %v510 = vunpack.c.l.b16 %v478
        %v511 = vunpack.c.l.b16 %v479
        %v512 = vpack.c.b16 %v497, %v496
        %v513 = vpack.c.b16 %v499, %v498
        %v514 = vpack.c.b16 %v501, %v500
        %v515 = vpack.c.b16 %v503, %v502
        %v516 = vpack.c.b16 %v505, %v504
        %v517 = vpack.c.b16 %v507, %v506
        %v518 = vpack.c.b16 %v509, %v508
        %v519 = vpack.c.b16 %v511, %v510
        %528 = vmatprep.subr.bf16.mxu0 0
        %529 = vmatpush1.bf16.msra.mxu0 %v512
        %530 = vmatprep.subr.bf16.mxu0 0
        %531 = vmatpush1.bf16.msra.mxu0 %v513
        %532 = vmatprep.subr.bf16.mxu0 0
        %533 = vmatpush1.bf16.msra.mxu0 %v514
        %534 = vmatprep.subr.bf16.mxu0 0
        %535 = vmatpush1.bf16.msra.mxu0 %v515
        %536 = vmatprep.subr.bf16.mxu0 0
        %537 = vmatpush1.bf16.msra.mxu0 %v516
        %538 = vmatprep.subr.bf16.mxu0 0
        %539 = vmatpush1.bf16.msra.mxu0 %v517
        %540 = vmatprep.subr.bf16.mxu0 0
        %541 = vmatpush1.bf16.msra.mxu0 %v518
        %542 = vmatprep.subr.bf16.mxu0 0
        %543 = vmatpush1.bf16.msra.mxu0 %v519
        %544 = vmatprep.subr.bf16.mxu0 0
        %545 = vmatpush1.bf16.msra.mxu0 0
        %546 = vmatprep.subr.bf16.mxu0 0
        %547 = vmatpush1.bf16.msra.mxu0 0
        %548 = vmatprep.subr.bf16.mxu0 0
        %549 = vmatpush1.bf16.msra.mxu0 0
        %550 = vmatprep.subr.bf16.mxu0 0
        %551 = vmatpush1.bf16.msra.mxu0 0
        %552 = vmatprep.subr.bf16.mxu0 0
        %553 = vmatpush1.bf16.msra.mxu0 0
        %554 = vmatprep.subr.bf16.mxu0 0
        %555 = vmatpush1.bf16.msra.mxu0 0
        %556 = vmatprep.subr.bf16.mxu0 0
        %557 = vmatpush1.bf16.msra.mxu0 0
        %558 = vmatprep.subr.bf16.mxu0 0
        %559 = vmatpush1.bf16.msra.mxu0 0
        %560 = vmatprep.mubr.bf16.mxu0 0
        %561 = vmatmul.mubr.bf16.gmra.mrb[0].mxu0 %v447
        %v562 = vpop.f32.mrb[0].mxu0
        %v563 = vadd.f32 0.0, %v562
        %v564 = vpop.f32.mrb[0].mxu0
        %v565 = vpop.f32.mrb[0].mxu0
        %v566 = vadd.f32 0.0, %v565
        %v567 = vpop.f32.mrb[0].mxu0
        %568 = vmatprep.mubr.bf16.mxu0 0
        %569 = vmatmul.mubr.bf16.gmra.mrb[0].mxu0 %v448
        %v570 = vpop.f32.mrb[0].mxu0
        %v571 = vadd.f32 0.0, %v570
        %v572 = vpop.f32.mrb[0].mxu0
        %v573 = vpop.f32.mrb[0].mxu0
        %v574 = vadd.f32 0.0, %v573
        %v575 = vpop.f32.mrb[0].mxu0
        %576 = vmatprep.mubr.bf16.mxu0 0
        %577 = vmatmul.mubr.bf16.gmra.mrb[0].mxu0 %v449
        %v578 = vpop.f32.mrb[0].mxu0
        %v579 = vadd.f32 0.0, %v578
        %v580 = vpop.f32.mrb[0].mxu0
        %v581 = vpop.f32.mrb[0].mxu0
        %v582 = vadd.f32 0.0, %v581
        %v583 = vpop.f32.mrb[0].mxu0
        %584 = vmatprep.mubr.bf16.mxu0 0
        %585 = vmatmul.mubr.bf16.gmra.mrb[0].mxu0 %v450
        %v586 = vpop.f32.mrb[0].mxu0
        %v587 = vadd.f32 0.0, %v586
        %v588 = vpop.f32.mrb[0].mxu0
        %v589 = vpop.f32.mrb[0].mxu0
        %v590 = vadd.f32 0.0, %v589
        %v591 = vpop.f32.mrb[0].mxu0
        %592 = vmatprep.mubr.bf16.mxu0 0
        %593 = vmatmul.mubr.bf16.gmra.mrb[0].mxu0 %v451
        %v594 = vpop.f32.mrb[0].mxu0
        %v595 = vadd.f32 0.0, %v594
        %v596 = vpop.f32.mrb[0].mxu0
        %v597 = vpop.f32.mrb[0].mxu0
        %v598 = vadd.f32 0.0, %v597
        %v599 = vpop.f32.mrb[0].mxu0
        %600 = vmatprep.mubr.bf16.mxu0 0
        %601 = vmatmul.mubr.bf16.gmra.mrb[0].mxu0 %v452
        %v602 = vpop.f32.mrb[0].mxu0
        %v603 = vadd.f32 0.0, %v602
        %v604 = vpop.f32.mrb[0].mxu0
        %v605 = vpop.f32.mrb[0].mxu0
        %v606 = vadd.f32 0.0, %v605
        %v607 = vpop.f32.mrb[0].mxu0
        %608 = vmatprep.mubr.bf16.mxu0 0
        %609 = vmatmul.mubr.bf16.gmra.mrb[0].mxu0 %v453
        %v610 = vpop.f32.mrb[0].mxu0
        %v611 = vadd.f32 0.0, %v610
        %v612 = vpop.f32.mrb[0].mxu0
        %v613 = vpop.f32.mrb[0].mxu0
        %v614 = vadd.f32 0.0, %v613
        %v615 = vpop.f32.mrb[0].mxu0
        %616 = vmatprep.mubr.bf16.mxu0 0
        %617 = vmatmul.mubr.bf16.gmra.mrb[0].mxu0 %v454
        %v618 = vpop.f32.mrb[0].mxu0
        %v619 = vadd.f32 0.0, %v618
        %v620 = vpop.f32.mrb[0].mxu0
        %v621 = vpop.f32.mrb[0].mxu0
        %v622 = vadd.f32 0.0, %v621
        %v623 = vpop.f32.mrb[0].mxu0
        %624 = vmatprep.mubr.bf16.mxu0 0
        %625 = vmatmul.mubr.bf16.gmra.mrb[0].mxu0 %v455
        %v626 = vpop.f32.mrb[0].mxu0
        %v627 = vadd.f32 0.0, %v626
        %v628 = vpop.f32.mrb[0].mxu0
        %v629 = vpop.f32.mrb[0].mxu0
        %v630 = vadd.f32 0.0, %v629
        %v631 = vpop.f32.mrb[0].mxu0
        %632 = vmatprep.mubr.bf16.mxu0 0
        %633 = vmatmul.mubr.bf16.gmra.mrb[0].mxu0 %v456
        %v634 = vpop.f32.mrb[0].mxu0
        %v635 = vadd.f32 0.0, %v634
        %v636 = vpop.f32.mrb[0].mxu0
        %v637 = vpop.f32.mrb[0].mxu0
        %v638 = vadd.f32 0.0, %v637
        %v639 = vpop.f32.mrb[0].mxu0
        %640 = vmatprep.mubr.bf16.mxu0 0
        %641 = vmatmul.mubr.bf16.gmra.mrb[0].mxu0 %v457
        %v642 = vpop.f32.mrb[0].mxu0
        %v643 = vadd.f32 0.0, %v642
        %v644 = vpop.f32.mrb[0].mxu0
        %v645 = vpop.f32.mrb[0].mxu0
        %v646 = vadd.f32 0.0, %v645
        %v647 = vpop.f32.mrb[0].mxu0
        %648 = vmatprep.mubr.bf16.mxu0 0
        %649 = vmatmul.mubr.bf16.gmra.mrb[0].mxu0 %v458
        %v650 = vpop.f32.mrb[0].mxu0
        %v651 = vadd.f32 0.0, %v650
        %v652 = vpop.f32.mrb[0].mxu0
        %v653 = vpop.f32.mrb[0].mxu0
        %v654 = vadd.f32 0.0, %v653
        %v655 = vpop.f32.mrb[0].mxu0
        %656 = vmatprep.mubr.bf16.mxu0 0
        %657 = vmatmul.mubr.bf16.gmra.mrb[0].mxu0 %v459
        %v658 = vpop.f32.mrb[0].mxu0
        %v659 = vadd.f32 0.0, %v658
        %v660 = vpop.f32.mrb[0].mxu0
        %v661 = vpop.f32.mrb[0].mxu0
        %v662 = vadd.f32 0.0, %v661
        %v663 = vpop.f32.mrb[0].mxu0
        %664 = vmatprep.mubr.bf16.mxu0 0
        %665 = vmatmul.mubr.bf16.gmra.mrb[0].mxu0 %v460
        %v666 = vpop.f32.mrb[0].mxu0
        %v667 = vadd.f32 0.0, %v666
        %v668 = vpop.f32.mrb[0].mxu0
        %v669 = vpop.f32.mrb[0].mxu0
        %v670 = vadd.f32 0.0, %v669
        %v671 = vpop.f32.mrb[0].mxu0
        %672 = vmatprep.mubr.bf16.mxu0 0
        %673 = vmatmul.mubr.bf16.gmra.mrb[0].mxu0 %v461
        %v674 = vpop.f32.mrb[0].mxu0
        %v675 = vadd.f32 0.0, %v674
        %v676 = vpop.f32.mrb[0].mxu0
        %v677 = vpop.f32.mrb[0].mxu0
        %v678 = vadd.f32 0.0, %v677
        %v679 = vpop.f32.mrb[0].mxu0
        %680 = vmatprep.mubr.bf16.mxu0 0
        %681 = vmatmul.mubr.bf16.gmra.mrb[0].mxu0 %v462
        %v682 = vpop.f32.mrb[0].mxu0
        %v683 = vadd.f32 0.0, %v682
        %v684 = vpop.f32.mrb[0].mxu0
        %v685 = vpop.f32.mrb[0].mxu0
        %v686 = vadd.f32 0.0, %v685
        %v687 = vpop.f32.mrb[0].mxu0
        %688 = vdwg.mxu0
        %v705 = vunpack.c.l.b16 %v431
        %v706 = vunpack.c.l.b16 %v432
        %v707 = vunpack.c.l.b16 %v433
        %v708 = vunpack.c.l.b16 %v434
        %v709 = vunpack.c.l.b16 %v435
        %v710 = vunpack.c.l.b16 %v436
        %v711 = vunpack.c.l.b16 %v437
        %v712 = vunpack.c.l.b16 %v438
        %v713 = vunpack.c.l.b16 %v439
        %v714 = vunpack.c.l.b16 %v440
        %v715 = vunpack.c.l.b16 %v441
        %v716 = vunpack.c.l.b16 %v442
        %v717 = vunpack.c.l.b16 %v443
        %v718 = vunpack.c.l.b16 %v444
        %v719 = vunpack.c.l.b16 %v445
        %v720 = vunpack.c.l.b16 %v446
        %v721 = vpack.c.b16 %v706, %v705
        %v722 = vpack.c.b16 %v708, %v707
        %v723 = vpack.c.b16 %v710, %v709
        %v724 = vpack.c.b16 %v712, %v711
        %v725 = vpack.c.b16 %v714, %v713
        %v726 = vpack.c.b16 %v716, %v715
        %v727 = vpack.c.b16 %v718, %v717
        %v728 = vpack.c.b16 %v720, %v719
        %737 = vmatprep.subr.bf16.mxu0 0
        %738 = vmatpush1.bf16.msra.mxu0 %v721
        %739 = vmatprep.subr.bf16.mxu0 0
        %740 = vmatpush1.bf16.msra.mxu0 %v722
        %741 = vmatprep.subr.bf16.mxu0 0
        %742 = vmatpush1.bf16.msra.mxu0 %v723
        %743 = vmatprep.subr.bf16.mxu0 0
        %744 = vmatpush1.bf16.msra.mxu0 %v724
        %745 = vmatprep.subr.bf16.mxu0 0
        %746 = vmatpush1.bf16.msra.mxu0 %v725
        %747 = vmatprep.subr.bf16.mxu0 0
        %748 = vmatpush1.bf16.msra.mxu0 %v726
        %749 = vmatprep.subr.bf16.mxu0 0
        %750 = vmatpush1.bf16.msra.mxu0 %v727
        %751 = vmatprep.subr.bf16.mxu0 0
        %752 = vmatpush1.bf16.msra.mxu0 %v728
        %753 = vmatprep.subr.bf16.mxu0 0
        %754 = vmatpush1.bf16.msra.mxu0 0
        %755 = vmatprep.subr.bf16.mxu0 0
        %756 = vmatpush1.bf16.msra.mxu0 0
        %757 = vmatprep.subr.bf16.mxu0 0
        %758 = vmatpush1.bf16.msra.mxu0 0
        %759 = vmatprep.subr.bf16.mxu0 0
        %760 = vmatpush1.bf16.msra.mxu0 0
        %761 = vmatprep.subr.bf16.mxu0 0
        %762 = vmatpush1.bf16.msra.mxu0 0
        %763 = vmatprep.subr.bf16.mxu0 0
        %764 = vmatpush1.bf16.msra.mxu0 0
        %765 = vmatprep.subr.bf16.mxu0 0
        %766 = vmatpush1.bf16.msra.mxu0 0
        %767 = vmatprep.subr.bf16.mxu0 0
        %768 = vmatpush1.bf16.msra.mxu0 0
        %769 = vmatprep.mubr.bf16.mxu0 0
        %770 = vmatmul.mubr.bf16.gmra.mrb[0].mxu0 %v415
        %v771 = vpop.f32.mrb[0].mxu0
        %v772 = vadd.f32 %v563, %v771
        %v773 = vpop.f32.mrb[0].mxu0
        %v774 = vpop.f32.mrb[0].mxu0
        %v775 = vadd.f32 %v566, %v774
        %v776 = vpop.f32.mrb[0].mxu0
        %777 = vmatprep.mubr.bf16.mxu0 0
        %778 = vmatmul.mubr.bf16.gmra.mrb[0].mxu0 %v416
        %v779 = vpop.f32.mrb[0].mxu0
        %v780 = vadd.f32 %v571, %v779
        %v781 = vpop.f32.mrb[0].mxu0
        %v782 = vpop.f32.mrb[0].mxu0
        %v783 = vadd.f32 %v574, %v782
        %v784 = vpop.f32.mrb[0].mxu0
        %785 = vmatprep.mubr.bf16.mxu0 0
        %786 = vmatmul.mubr.bf16.gmra.mrb[0].mxu0 %v417
        %v787 = vpop.f32.mrb[0].mxu0
        %v788 = vadd.f32 %v579, %v787
        %v789 = vpop.f32.mrb[0].mxu0
        %v790 = vpop.f32.mrb[0].mxu0
        %v791 = vadd.f32 %v582, %v790
        %v792 = vpop.f32.mrb[0].mxu0
        %793 = vmatprep.mubr.bf16.mxu0 0
        %794 = vmatmul.mubr.bf16.gmra.mrb[0].mxu0 %v418
        %v795 = vpop.f32.mrb[0].mxu0
        %v796 = vadd.f32 %v587, %v795
        %v797 = vpop.f32.mrb[0].mxu0
        %v798 = vpop.f32.mrb[0].mxu0
        %v799 = vadd.f32 %v590, %v798
        %v800 = vpop.f32.mrb[0].mxu0
        %801 = vmatprep.mubr.bf16.mxu0 0
        %802 = vmatmul.mubr.bf16.gmra.mrb[0].mxu0 %v419
        %v803 = vpop.f32.mrb[0].mxu0
        %v804 = vadd.f32 %v595, %v803
        %v805 = vpop.f32.mrb[0].mxu0
        %v806 = vpop.f32.mrb[0].mxu0
        %v807 = vadd.f32 %v598, %v806
        %v808 = vpop.f32.mrb[0].mxu0
        %809 = vmatprep.mubr.bf16.mxu0 0
        %810 = vmatmul.mubr.bf16.gmra.mrb[0].mxu0 %v420
        %v811 = vpop.f32.mrb[0].mxu0
        %v812 = vadd.f32 %v603, %v811
        %v813 = vpop.f32.mrb[0].mxu0
        %v814 = vpop.f32.mrb[0].mxu0
        %v815 = vadd.f32 %v606, %v814
        %v816 = vpop.f32.mrb[0].mxu0
        %817 = vmatprep.mubr.bf16.mxu0 0
        %818 = vmatmul.mubr.bf16.gmra.mrb[0].mxu0 %v421
        %v819 = vpop.f32.mrb[0].mxu0
        %v820 = vadd.f32 %v611, %v819
        %v821 = vpop.f32.mrb[0].mxu0
        %v822 = vpop.f32.mrb[0].mxu0
        %v823 = vadd.f32 %v614, %v822
        %v824 = vpop.f32.mrb[0].mxu0
        %825 = vmatprep.mubr.bf16.mxu0 0
        %826 = vmatmul.mubr.bf16.gmra.mrb[0].mxu0 %v422
        %v827 = vpop.f32.mrb[0].mxu0
        %v828 = vadd.f32 %v619, %v827
        %v829 = vpop.f32.mrb[0].mxu0
        %v830 = vpop.f32.mrb[0].mxu0
        %v831 = vadd.f32 %v622, %v830
        %v832 = vpop.f32.mrb[0].mxu0
        %833 = vmatprep.mubr.bf16.mxu0 0
        %834 = vmatmul.mubr.bf16.gmra.mrb[0].mxu0 %v423
        %v835 = vpop.f32.mrb[0].mxu0
        %v836 = vadd.f32 %v627, %v835
        %v837 = vpop.f32.mrb[0].mxu0
        %v838 = vpop.f32.mrb[0].mxu0
        %v839 = vadd.f32 %v630, %v838
        %v840 = vpop.f32.mrb[0].mxu0
        %841 = vmatprep.mubr.bf16.mxu0 0
        %842 = vmatmul.mubr.bf16.gmra.mrb[0].mxu0 %v424
        %v843 = vpop.f32.mrb[0].mxu0
        %v844 = vadd.f32 %v635, %v843
        %v845 = vpop.f32.mrb[0].mxu0
        %v846 = vpop.f32.mrb[0].mxu0
        %v847 = vadd.f32 %v638, %v846
        %v848 = vpop.f32.mrb[0].mxu0
        %849 = vmatprep.mubr.bf16.mxu0 0
        %850 = vmatmul.mubr.bf16.gmra.mrb[0].mxu0 %v425
        %v851 = vpop.f32.mrb[0].mxu0
        %v852 = vadd.f32 %v643, %v851
        %v853 = vpop.f32.mrb[0].mxu0
        %v854 = vpop.f32.mrb[0].mxu0
        %v855 = vadd.f32 %v646, %v854
        %v856 = vpop.f32.mrb[0].mxu0
        %857 = vmatprep.mubr.bf16.mxu0 0
        %858 = vmatmul.mubr.bf16.gmra.mrb[0].mxu0 %v426
        %v859 = vpop.f32.mrb[0].mxu0
        %v860 = vadd.f32 %v651, %v859
        %v861 = vpop.f32.mrb[0].mxu0
        %v862 = vpop.f32.mrb[0].mxu0
        %v863 = vadd.f32 %v654, %v862
        %v864 = vpop.f32.mrb[0].mxu0
        %865 = vmatprep.mubr.bf16.mxu0 0
        %866 = vmatmul.mubr.bf16.gmra.mrb[0].mxu0 %v427
        %v867 = vpop.f32.mrb[0].mxu0
        %v868 = vadd.f32 %v659, %v867
        %v869 = vpop.f32.mrb[0].mxu0
        %v870 = vpop.f32.mrb[0].mxu0
        %v871 = vadd.f32 %v662, %v870
        %v872 = vpop.f32.mrb[0].mxu0
        %873 = vmatprep.mubr.bf16.mxu0 0
        %874 = vmatmul.mubr.bf16.gmra.mrb[0].mxu0 %v428
        %v875 = vpop.f32.mrb[0].mxu0
        %v876 = vadd.f32 %v667, %v875
        %v877 = vpop.f32.mrb[0].mxu0
        %v878 = vpop.f32.mrb[0].mxu0
        %v879 = vadd.f32 %v670, %v878
        %v880 = vpop.f32.mrb[0].mxu0
        %881 = vmatprep.mubr.bf16.mxu0 0
        %882 = vmatmul.mubr.bf16.gmra.mrb[0].mxu0 %v429
        %v883 = vpop.f32.mrb[0].mxu0
        %v884 = vadd.f32 %v675, %v883
        %v885 = vpop.f32.mrb[0].mxu0
        %v886 = vpop.f32.mrb[0].mxu0
        %v887 = vadd.f32 %v678, %v886
        %v888 = vpop.f32.mrb[0].mxu0
        %889 = vmatprep.mubr.bf16.mxu0 0
        %890 = vmatmul.mubr.bf16.gmra.mrb[0].mxu0 %v430
        %v891 = vpop.f32.mrb[0].mxu0
        %v892 = vadd.f32 %v683, %v891
        %v893 = vpop.f32.mrb[0].mxu0
        %v894 = vpop.f32.mrb[0].mxu0
        %v895 = vadd.f32 %v686, %v894
        %v896 = vpop.f32.mrb[0].mxu0
        %897 = vdwg.mxu0
        %v898 = vrot.slane %v286, 1
        %v899 = vrot.slane %v287, 1
        %v900 = vrot.slane %v288, 1
        %v901 = vrot.slane %v289, 1
        %v902 = vrot.slane %v290, 1
        %v903 = vrot.slane %v291, 1
        %v904 = vrot.slane %v292, 1
        %v905 = vrot.slane %v293, 1
        %v906 = vrot.slane %v294, 1
        %v907 = vrot.slane %v295, 1
        %v908 = vrot.slane %v296, 1
        %v909 = vrot.slane %v297, 1
        %v910 = vrot.slane %v298, 1
        %v911 = vrot.slane %v299, 1
        %v912 = vrot.slane %v300, 1
        %v913 = vrot.slane %v301, 1
        %v914 = vrot.slane %v302, 1
        %v915 = vrot.slane %v303, 1
        %v916 = vrot.slane %v304, 1
        %v917 = vrot.slane %v305, 1
        %v918 = vrot.slane %v306, 1
        %v919 = vrot.slane %v307, 1
        %v920 = vrot.slane %v308, 1
        %v921 = vrot.slane %v309, 1
        %v922 = vrot.slane %v310, 1
        %v923 = vrot.slane %v311, 1
        %v924 = vrot.slane %v312, 1
        %v925 = vrot.slane %v313, 1
        %v926 = vrot.slane %v314, 1
        %v927 = vrot.slane %v315, 1
        %v928 = vrot.slane %v316, 1
        %v929 = vrot.slane %v317, 1
        %vm930 = vcmp.lt.s32.totalorder %v211, 7
        %v931 = vsel %vm930, %v928, %v929
        %v932 = vsel %vm930, %v927, %v928
        %v933 = vsel %vm930, %v926, %v927
        %v934 = vsel %vm930, %v925, %v926
        %v935 = vsel %vm930, %v924, %v925
        %v936 = vsel %vm930, %v923, %v924
        %v937 = vsel %vm930, %v922, %v923
        %v938 = vsel %vm930, %v921, %v922
        %v939 = vsel %vm930, %v920, %v921
        %v940 = vsel %vm930, %v919, %v920
        %v941 = vsel %vm930, %v918, %v919
        %v942 = vsel %vm930, %v917, %v918
        %v943 = vsel %vm930, %v916, %v917
        %v944 = vsel %vm930, %v915, %v916
        %v945 = vsel %vm930, %v914, %v915
        %v946 = vsel %vm930, %v913, %v914
        %v947 = vsel %vm930, %v912, %v913
        %v948 = vsel %vm930, %v911, %v912
        %v949 = vsel %vm930, %v910, %v911
        %v950 = vsel %vm930, %v909, %v910
        %v951 = vsel %vm930, %v908, %v909
        %v952 = vsel %vm930, %v907, %v908
        %v953 = vsel %vm930, %v906, %v907
        %v954 = vsel %vm930, %v905, %v906
        %v955 = vsel %vm930, %v904, %v905
        %v956 = vsel %vm930, %v903, %v904
        %v957 = vsel %vm930, %v902, %v903
        %v958 = vsel %vm930, %v901, %v902
        %v959 = vsel %vm930, %v900, %v901
        %v960 = vsel %vm930, %v899, %v900
        %v961 = vsel %vm930, %v898, %v899
        %v962 = vsel %vm930, %v929, %v898
        %v963 = vmul.f32 %v961, %v219
        %v964 = vmul.f32 %v960, %v220
        %v965 = vmul.f32 %v959, %v219
        %v966 = vmul.f32 %v958, %v220
        %v967 = vmul.f32 %v957, %v219
        %v968 = vmul.f32 %v956, %v220
        %v969 = vmul.f32 %v955, %v219
        %v970 = vmul.f32 %v954, %v220
        %v971 = vmul.f32 %v953, %v219
        %v972 = vmul.f32 %v952, %v220
        %v973 = vmul.f32 %v951, %v219
        %v974 = vmul.f32 %v950, %v220
        %v975 = vmul.f32 %v949, %v219
        %v976 = vmul.f32 %v948, %v220
        %v977 = vmul.f32 %v947, %v219
        %v978 = vmul.f32 %v946, %v220
        %v979 = vmul.f32 %v945, %v219
        %v980 = vmul.f32 %v944, %v220
        %v981 = vmul.f32 %v943, %v219
        %v982 = vmul.f32 %v942, %v220
        %v983 = vmul.f32 %v941, %v219
        %v984 = vmul.f32 %v940, %v220
        %v985 = vmul.f32 %v939, %v219
        %v986 = vmul.f32 %v938, %v220
        %v987 = vmul.f32 %v937, %v219
        %v988 = vmul.f32 %v936, %v220
        %v989 = vmul.f32 %v935, %v219
        %v990 = vmul.f32 %v934, %v220
        %v991 = vmul.f32 %v933, %v219
        %v992 = vmul.f32 %v932, %v220
        %v993 = vmul.f32 %v931, %v219
        %v994 = vmul.f32 %v962, %v220
        %v995 = vpack.c.bf16 %v964, %v963
        %v996 = vpack.c.bf16 %v966, %v965
        %v997 = vpack.c.bf16 %v968, %v967
        %v998 = vpack.c.bf16 %v970, %v969
        %v999 = vpack.c.bf16 %v972, %v971
        %v1000 = vpack.c.bf16 %v974, %v973
        %v1001 = vpack.c.bf16 %v976, %v975
        %v1002 = vpack.c.bf16 %v978, %v977
        %v1003 = vpack.c.bf16 %v980, %v979
        %v1004 = vpack.c.bf16 %v982, %v981
        %v1005 = vpack.c.bf16 %v984, %v983
        %v1006 = vpack.c.bf16 %v986, %v985
        %v1007 = vpack.c.bf16 %v988, %v987
        %v1008 = vpack.c.bf16 %v990, %v989
        %v1009 = vpack.c.bf16 %v992, %v991
        %v1010 = vpack.c.bf16 %v994, %v993
        %s1011 = scalar_lea.vmem [#allocation6], 128
        %v1012 = vld [vmem:[%s1011] sm:$0xf]
        %v1013 = vld [vmem:[%s1011 + $0x4] sm:$0xf]
        %v1014 = vld [vmem:[%s1011 + $0x8] sm:$0xf]
        %v1015 = vld [vmem:[%s1011 + $0xc] sm:$0xf]
        %v1016 = vld [vmem:[%s1011 + $0x10] sm:$0xf]
        %v1017 = vld [vmem:[%s1011 + $0x14] sm:$0xf]
        %v1018 = vld [vmem:[%s1011 + $0x18] sm:$0xf]
        %v1019 = vld [vmem:[%s1011 + $0x1c] sm:$0xf]
        %v1020 = vld [vmem:[%s1011 + $0x20] sm:$0xf]
        %v1021 = vld [vmem:[%s1011 + $0x24] sm:$0xf]
        %v1022 = vld [vmem:[%s1011 + $0x28] sm:$0xf]
        %v1023 = vld [vmem:[%s1011 + $0x2c] sm:$0xf]
        %v1024 = vld [vmem:[%s1011 + $0x30] sm:$0xf]
        %v1025 = vld [vmem:[%s1011 + $0x34] sm:$0xf]
        %v1026 = vld [vmem:[%s1011 + $0x38] sm:$0xf]
        %v1027 = vld [vmem:[%s1011 + $0x3c] sm:$0xf]
        %v1044 = vunpack.c.l.b16 %v1012
        %v1045 = vunpack.c.l.b16 %v1013
        %v1046 = vunpack.c.l.b16 %v1014
        %v1047 = vunpack.c.l.b16 %v1015
        %v1048 = vunpack.c.l.b16 %v1016
        %v1049 = vunpack.c.l.b16 %v1017
        %v1050 = vunpack.c.l.b16 %v1018
        %v1051 = vunpack.c.l.b16 %v1019
        %v1052 = vunpack.c.l.b16 %v1020
        %v1053 = vunpack.c.l.b16 %v1021
        %v1054 = vunpack.c.l.b16 %v1022
        %v1055 = vunpack.c.l.b16 %v1023
        %v1056 = vunpack.c.l.b16 %v1024
        %v1057 = vunpack.c.l.b16 %v1025
        %v1058 = vunpack.c.l.b16 %v1026
        %v1059 = vunpack.c.l.b16 %v1027
        %v1060 = vpack.c.b16 %v1045, %v1044
        %v1061 = vpack.c.b16 %v1047, %v1046
        %v1062 = vpack.c.b16 %v1049, %v1048
        %v1063 = vpack.c.b16 %v1051, %v1050
        %v1064 = vpack.c.b16 %v1053, %v1052
        %v1065 = vpack.c.b16 %v1055, %v1054
        %v1066 = vpack.c.b16 %v1057, %v1056
        %v1067 = vpack.c.b16 %v1059, %v1058
        %1076 = vmatprep.subr.bf16.mxu0 0
        %1077 = vmatpush1.bf16.msra.mxu0 %v1060
        %1078 = vmatprep.subr.bf16.mxu0 0
        %1079 = vmatpush1.bf16.msra.mxu0 %v1061
        %1080 = vmatprep.subr.bf16.mxu0 0
        %1081 = vmatpush1.bf16.msra.mxu0 %v1062
        %1082 = vmatprep.subr.bf16.mxu0 0
        %1083 = vmatpush1.bf16.msra.mxu0 %v1063
        %1084 = vmatprep.subr.bf16.mxu0 0
        %1085 = vmatpush1.bf16.msra.mxu0 %v1064
        %1086 = vmatprep.subr.bf16.mxu0 0
        %1087 = vmatpush1.bf16.msra.mxu0 %v1065
        %1088 = vmatprep.subr.bf16.mxu0 0
        %1089 = vmatpush1.bf16.msra.mxu0 %v1066
        %1090 = vmatprep.subr.bf16.mxu0 0
        %1091 = vmatpush1.bf16.msra.mxu0 %v1067
        %1092 = vmatprep.subr.bf16.mxu0 0
        %1093 = vmatpush1.bf16.msra.mxu0 0
        %1094 = vmatprep.subr.bf16.mxu0 0
        %1095 = vmatpush1.bf16.msra.mxu0 0
        %1096 = vmatprep.subr.bf16.mxu0 0
        %1097 = vmatpush1.bf16.msra.mxu0 0
        %1098 = vmatprep.subr.bf16.mxu0 0
        %1099 = vmatpush1.bf16.msra.mxu0 0
        %1100 = vmatprep.subr.bf16.mxu0 0
        %1101 = vmatpush1.bf16.msra.mxu0 0
        %1102 = vmatprep.subr.bf16.mxu0 0
        %1103 = vmatpush1.bf16.msra.mxu0 0
        %1104 = vmatprep.subr.bf16.mxu0 0
        %1105 = vmatpush1.bf16.msra.mxu0 0
        %1106 = vmatprep.subr.bf16.mxu0 0
        %1107 = vmatpush1.bf16.msra.mxu0 0
        %1108 = vmatprep.mubr.bf16.mxu0 0
        %1109 = vmatmul.mubr.bf16.gmra.mrb[0].mxu0 %v995
        %v1110 = vpop.f32.mrb[0].mxu0
        %v1111 = vadd.f32 0.0, %v1110
        %v1112 = vpop.f32.mrb[0].mxu0
        %v1113 = vpop.f32.mrb[0].mxu0
        %v1114 = vadd.f32 0.0, %v1113
        %v1115 = vpop.f32.mrb[0].mxu0
        %1116 = vmatprep.mubr.bf16.mxu0 0
        %1117 = vmatmul.mubr.bf16.gmra.mrb[0].mxu0 %v996
        %v1118 = vpop.f32.mrb[0].mxu0
        %v1119 = vadd.f32 0.0, %v1118
        %v1120 = vpop.f32.mrb[0].mxu0
        %v1121 = vpop.f32.mrb[0].mxu0
        %v1122 = vadd.f32 0.0, %v1121
        %v1123 = vpop.f32.mrb[0].mxu0
        %1124 = vmatprep.mubr.bf16.mxu0 0
        %1125 = vmatmul.mubr.bf16.gmra.mrb[0].mxu0 %v997
        %v1126 = vpop.f32.mrb[0].mxu0
        %v1127 = vadd.f32 0.0, %v1126
        %v1128 = vpop.f32.mrb[0].mxu0
        %v1129 = vpop.f32.mrb[0].mxu0
        %v1130 = vadd.f32 0.0, %v1129
        %v1131 = vpop.f32.mrb[0].mxu0
        %1132 = vmatprep.mubr.bf16.mxu0 0
        %1133 = vmatmul.mubr.bf16.gmra.mrb[0].mxu0 %v998
        %v1134 = vpop.f32.mrb[0].mxu0
        %v1135 = vadd.f32 0.0, %v1134
        %v1136 = vpop.f32.mrb[0].mxu0
        %v1137 = vpop.f32.mrb[0].mxu0
        %v1138 = vadd.f32 0.0, %v1137
        %v1139 = vpop.f32.mrb[0].mxu0
        %1140 = vmatprep.mubr.bf16.mxu0 0
        %1141 = vmatmul.mubr.bf16.gmra.mrb[0].mxu0 %v999
        %v1142 = vpop.f32.mrb[0].mxu0
        %v1143 = vadd.f32 0.0, %v1142
        %v1144 = vpop.f32.mrb[0].mxu0
        %v1145 = vpop.f32.mrb[0].mxu0
        %v1146 = vadd.f32 0.0, %v1145
        %v1147 = vpop.f32.mrb[0].mxu0
        %1148 = vmatprep.mubr.bf16.mxu0 0
        %1149 = vmatmul.mubr.bf16.gmra.mrb[0].mxu0 %v1000
        %v1150 = vpop.f32.mrb[0].mxu0
        %v1151 = vadd.f32 0.0, %v1150
        %v1152 = vpop.f32.mrb[0].mxu0
        %v1153 = vpop.f32.mrb[0].mxu0
        %v1154 = vadd.f32 0.0, %v1153
        %v1155 = vpop.f32.mrb[0].mxu0
        %1156 = vmatprep.mubr.bf16.mxu0 0
        %1157 = vmatmul.mubr.bf16.gmra.mrb[0].mxu0 %v1001
        %v1158 = vpop.f32.mrb[0].mxu0
        %v1159 = vadd.f32 0.0, %v1158
        %v1160 = vpop.f32.mrb[0].mxu0
        %v1161 = vpop.f32.mrb[0].mxu0
        %v1162 = vadd.f32 0.0, %v1161
        %v1163 = vpop.f32.mrb[0].mxu0
        %1164 = vmatprep.mubr.bf16.mxu0 0
        %1165 = vmatmul.mubr.bf16.gmra.mrb[0].mxu0 %v1002
        %v1166 = vpop.f32.mrb[0].mxu0
        %v1167 = vadd.f32 0.0, %v1166
        %v1168 = vpop.f32.mrb[0].mxu0
        %v1169 = vpop.f32.mrb[0].mxu0
        %v1170 = vadd.f32 0.0, %v1169
        %v1171 = vpop.f32.mrb[0].mxu0
        %1172 = vmatprep.mubr.bf16.mxu0 0
        %1173 = vmatmul.mubr.bf16.gmra.mrb[0].mxu0 %v1003
        %v1174 = vpop.f32.mrb[0].mxu0
        %v1175 = vadd.f32 0.0, %v1174
        %v1176 = vpop.f32.mrb[0].mxu0
        %v1177 = vpop.f32.mrb[0].mxu0
        %v1178 = vadd.f32 0.0, %v1177
        %v1179 = vpop.f32.mrb[0].mxu0
        %1180 = vmatprep.mubr.bf16.mxu0 0
        %1181 = vmatmul.mubr.bf16.gmra.mrb[0].mxu0 %v1004
        %v1182 = vpop.f32.mrb[0].mxu0
        %v1183 = vadd.f32 0.0, %v1182
        %v1184 = vpop.f32.mrb[0].mxu0
        %v1185 = vpop.f32.mrb[0].mxu0
        %v1186 = vadd.f32 0.0, %v1185
        %v1187 = vpop.f32.mrb[0].mxu0
        %1188 = vmatprep.mubr.bf16.mxu0 0
        %1189 = vmatmul.mubr.bf16.gmra.mrb[0].mxu0 %v1005
        %v1190 = vpop.f32.mrb[0].mxu0
        %v1191 = vadd.f32 0.0, %v1190
        %v1192 = vpop.f32.mrb[0].mxu0
        %v1193 = vpop.f32.mrb[0].mxu0
        %v1194 = vadd.f32 0.0, %v1193
        %v1195 = vpop.f32.mrb[0].mxu0
        %1196 = vmatprep.mubr.bf16.mxu0 0
        %1197 = vmatmul.mubr.bf16.gmra.mrb[0].mxu0 %v1006
        %v1198 = vpop.f32.mrb[0].mxu0
        %v1199 = vadd.f32 0.0, %v1198
        %v1200 = vpop.f32.mrb[0].mxu0
        %v1201 = vpop.f32.mrb[0].mxu0
        %v1202 = vadd.f32 0.0, %v1201
        %v1203 = vpop.f32.mrb[0].mxu0
        %1204 = vmatprep.mubr.bf16.mxu0 0
        %1205 = vmatmul.mubr.bf16.gmra.mrb[0].mxu0 %v1007
        %v1206 = vpop.f32.mrb[0].mxu0
        %v1207 = vadd.f32 0.0, %v1206
        %v1208 = vpop.f32.mrb[0].mxu0
        %v1209 = vpop.f32.mrb[0].mxu0
        %v1210 = vadd.f32 0.0, %v1209
        %v1211 = vpop.f32.mrb[0].mxu0
        %1212 = vmatprep.mubr.bf16.mxu0 0
        %1213 = vmatmul.mubr.bf16.gmra.mrb[0].mxu0 %v1008
        %v1214 = vpop.f32.mrb[0].mxu0
        %v1215 = vadd.f32 0.0, %v1214
        %v1216 = vpop.f32.mrb[0].mxu0
        %v1217 = vpop.f32.mrb[0].mxu0
        %v1218 = vadd.f32 0.0, %v1217
        %v1219 = vpop.f32.mrb[0].mxu0
        %1220 = vmatprep.mubr.bf16.mxu0 0
        %1221 = vmatmul.mubr.bf16.gmra.mrb[0].mxu0 %v1009
        %v1222 = vpop.f32.mrb[0].mxu0
        %v1223 = vadd.f32 0.0, %v1222
        %v1224 = vpop.f32.mrb[0].mxu0
        %v1225 = vpop.f32.mrb[0].mxu0
        %v1226 = vadd.f32 0.0, %v1225
        %v1227 = vpop.f32.mrb[0].mxu0
        %1228 = vmatprep.mubr.bf16.mxu0 0
        %1229 = vmatmul.mubr.bf16.gmra.mrb[0].mxu0 %v1010
        %v1230 = vpop.f32.mrb[0].mxu0
        %v1231 = vadd.f32 0.0, %v1230
        %v1232 = vpop.f32.mrb[0].mxu0
        %v1233 = vpop.f32.mrb[0].mxu0
        %v1234 = vadd.f32 0.0, %v1233
        %v1235 = vpop.f32.mrb[0].mxu0
        %1236 = vdwg.mxu0
        %v1237 = vadd.f32 %v772, %v1111
        %v1238 = vadd.f32 %v775, %v1114
        %v1239 = vadd.f32 %v780, %v1119
        %v1240 = vadd.f32 %v783, %v1122
        %v1241 = vadd.f32 %v788, %v1127
        %v1242 = vadd.f32 %v791, %v1130
        %v1243 = vadd.f32 %v796, %v1135
        %v1244 = vadd.f32 %v799, %v1138
        %v1245 = vadd.f32 %v804, %v1143
        %v1246 = vadd.f32 %v807, %v1146
        %v1247 = vadd.f32 %v812, %v1151
        %v1248 = vadd.f32 %v815, %v1154
        %v1249 = vadd.f32 %v820, %v1159
        %v1250 = vadd.f32 %v823, %v1162
        %v1251 = vadd.f32 %v828, %v1167
        %v1252 = vadd.f32 %v831, %v1170
        %v1253 = vadd.f32 %v836, %v1175
        %v1254 = vadd.f32 %v839, %v1178
        %v1255 = vadd.f32 %v844, %v1183
        %v1256 = vadd.f32 %v847, %v1186
        %v1257 = vadd.f32 %v852, %v1191
        %v1258 = vadd.f32 %v855, %v1194
        %v1259 = vadd.f32 %v860, %v1199
        %v1260 = vadd.f32 %v863, %v1202
        %v1261 = vadd.f32 %v868, %v1207
        %v1262 = vadd.f32 %v871, %v1210
        %v1263 = vadd.f32 %v876, %v1215
        %v1264 = vadd.f32 %v879, %v1218
        %v1265 = vadd.f32 %v884, %v1223
        %v1266 = vadd.f32 %v887, %v1226
        %v1267 = vadd.f32 %v892, %v1231
        %v1268 = vadd.f32 %v895, %v1234
        %v1269 = vld [vmem:[%s253] sm:$0xff]
        %v1270 = vld [vmem:[%s253 + $0x8] sm:$0xff]
        %v1271 = vld [vmem:[%s253 + $0x10] sm:$0xff]
        %v1272 = vld [vmem:[%s253 + $0x18] sm:$0xff]
        %v1273 = vld [vmem:[%s253 + $0x20] sm:$0xff]
        %v1274 = vld [vmem:[%s253 + $0x28] sm:$0xff]
        %v1275 = vld [vmem:[%s253 + $0x30] sm:$0xff]
        %v1276 = vld [vmem:[%s253 + $0x38] sm:$0xff]
        %v1277 = vld [vmem:[%s253 + $0x40] sm:$0xff]
        %v1278 = vld [vmem:[%s253 + $0x48] sm:$0xff]
        %v1279 = vld [vmem:[%s253 + $0x50] sm:$0xff]
        %v1280 = vld [vmem:[%s253 + $0x58] sm:$0xff]
        %v1281 = vld [vmem:[%s253 + $0x60] sm:$0xff]
        %v1282 = vld [vmem:[%s253 + $0x68] sm:$0xff]
        %v1283 = vld [vmem:[%s253 + $0x70] sm:$0xff]
        %v1284 = vld [vmem:[%s253 + $0x78] sm:$0xff]
        %v1285 = vld [vmem:[%s253 + $0x80] sm:$0xff]
        %v1286 = vld [vmem:[%s253 + $0x88] sm:$0xff]
        %v1287 = vld [vmem:[%s253 + $0x90] sm:$0xff]
        %v1288 = vld [vmem:[%s253 + $0x98] sm:$0xff]
        %v1289 = vld [vmem:[%s253 + $0xa0] sm:$0xff]
        %v1290 = vld [vmem:[%s253 + $0xa8] sm:$0xff]
        %v1291 = vld [vmem:[%s253 + $0xb0] sm:$0xff]
        %v1292 = vld [vmem:[%s253 + $0xb8] sm:$0xff]
        %v1293 = vld [vmem:[%s253 + $0xc0] sm:$0xff]
        %v1294 = vld [vmem:[%s253 + $0xc8] sm:$0xff]
        %v1295 = vld [vmem:[%s253 + $0xd0] sm:$0xff]
        %v1296 = vld [vmem:[%s253 + $0xd8] sm:$0xff]
        %v1297 = vld [vmem:[%s253 + $0xe0] sm:$0xff]
        %v1298 = vld [vmem:[%s253 + $0xe8] sm:$0xff]
        %v1299 = vld [vmem:[%s253 + $0xf0] sm:$0xff]
        %v1300 = vld [vmem:[%s253 + $0xf8] sm:$0xff]
        %v1301 = vrot.slane %v1269, 7
        %v1302 = vrot.slane %v1270, 7
        %v1303 = vrot.slane %v1271, 7
        %v1304 = vrot.slane %v1272, 7
        %v1305 = vrot.slane %v1273, 7
        %v1306 = vrot.slane %v1274, 7
        %v1307 = vrot.slane %v1275, 7
        %v1308 = vrot.slane %v1276, 7
        %v1309 = vrot.slane %v1277, 7
        %v1310 = vrot.slane %v1278, 7
        %v1311 = vrot.slane %v1279, 7
        %v1312 = vrot.slane %v1280, 7
        %v1313 = vrot.slane %v1281, 7
        %v1314 = vrot.slane %v1282, 7
        %v1315 = vrot.slane %v1283, 7
        %v1316 = vrot.slane %v1284, 7
        %v1317 = vrot.slane %v1285, 7
        %v1318 = vrot.slane %v1286, 7
        %v1319 = vrot.slane %v1287, 7
        %v1320 = vrot.slane %v1288, 7
        %v1321 = vrot.slane %v1289, 7
        %v1322 = vrot.slane %v1290, 7
        %v1323 = vrot.slane %v1291, 7
        %v1324 = vrot.slane %v1292, 7
        %v1325 = vrot.slane %v1293, 7
        %v1326 = vrot.slane %v1294, 7
        %v1327 = vrot.slane %v1295, 7
        %v1328 = vrot.slane %v1296, 7
        %v1329 = vrot.slane %v1297, 7
        %v1330 = vrot.slane %v1298, 7
        %v1331 = vrot.slane %v1299, 7
        %v1332 = vrot.slane %v1300, 7
        %v1333 = vsel %vm350, %v1331, %v1332
        %v1334 = vsel %vm350, %v1330, %v1331
        %v1335 = vsel %vm350, %v1329, %v1330
        %v1336 = vsel %vm350, %v1328, %v1329
        %v1337 = vsel %vm350, %v1327, %v1328
        %v1338 = vsel %vm350, %v1326, %v1327
        %v1339 = vsel %vm350, %v1325, %v1326
        %v1340 = vsel %vm350, %v1324, %v1325
        %v1341 = vsel %vm350, %v1323, %v1324
        %v1342 = vsel %vm350, %v1322, %v1323
        %v1343 = vsel %vm350, %v1321, %v1322
        %v1344 = vsel %vm350, %v1320, %v1321
        %v1345 = vsel %vm350, %v1319, %v1320
        %v1346 = vsel %vm350, %v1318, %v1319
        %v1347 = vsel %vm350, %v1317, %v1318
        %v1348 = vsel %vm350, %v1316, %v1317
        %v1349 = vsel %vm350, %v1315, %v1316
        %v1350 = vsel %vm350, %v1314, %v1315
        %v1351 = vsel %vm350, %v1313, %v1314
        %v1352 = vsel %vm350, %v1312, %v1313
        %v1353 = vsel %vm350, %v1311, %v1312
        %v1354 = vsel %vm350, %v1310, %v1311
        %v1355 = vsel %vm350, %v1309, %v1310
        %v1356 = vsel %vm350, %v1308, %v1309
        %v1357 = vsel %vm350, %v1307, %v1308
        %v1358 = vsel %vm350, %v1306, %v1307
        %v1359 = vsel %vm350, %v1305, %v1306
        %v1360 = vsel %vm350, %v1304, %v1305
        %v1361 = vsel %vm350, %v1303, %v1304
        %v1362 = vsel %vm350, %v1302, %v1303
        %v1363 = vsel %vm350, %v1301, %v1302
        %v1364 = vsel %vm350, %v1332, %v1301
        %v1365 = vmul.f32 %v1364, %v215
        %v1366 = vmul.f32 %v1363, %v216
        %v1367 = vmul.f32 %v1362, %v215
        %v1368 = vmul.f32 %v1361, %v216
        %v1369 = vmul.f32 %v1360, %v215
        %v1370 = vmul.f32 %v1359, %v216
        %v1371 = vmul.f32 %v1358, %v215
        %v1372 = vmul.f32 %v1357, %v216
        %v1373 = vmul.f32 %v1356, %v215
        %v1374 = vmul.f32 %v1355, %v216
        %v1375 = vmul.f32 %v1354, %v215
        %v1376 = vmul.f32 %v1353, %v216
        %v1377 = vmul.f32 %v1352, %v215
        %v1378 = vmul.f32 %v1351, %v216
        %v1379 = vmul.f32 %v1350, %v215
        %v1380 = vmul.f32 %v1349, %v216
        %v1381 = vmul.f32 %v1348, %v215
        %v1382 = vmul.f32 %v1347, %v216
        %v1383 = vmul.f32 %v1346, %v215
        %v1384 = vmul.f32 %v1345, %v216
        %v1385 = vmul.f32 %v1344, %v215
        %v1386 = vmul.f32 %v1343, %v216
        %v1387 = vmul.f32 %v1342, %v215
        %v1388 = vmul.f32 %v1341, %v216
        %v1389 = vmul.f32 %v1340, %v215
        %v1390 = vmul.f32 %v1339, %v216
        %v1391 = vmul.f32 %v1338, %v215
        %v1392 = vmul.f32 %v1337, %v216
        %v1393 = vmul.f32 %v1336, %v215
        %v1394 = vmul.f32 %v1335, %v216
        %v1395 = vmul.f32 %v1334, %v215
        %v1396 = vmul.f32 %v1333, %v216
        %v1397 = vpack.c.bf16 %v1366, %v1365
        %v1398 = vpack.c.bf16 %v1368, %v1367
        %v1399 = vpack.c.bf16 %v1370, %v1369
        %v1400 = vpack.c.bf16 %v1372, %v1371
        %v1401 = vpack.c.bf16 %v1374, %v1373
        %v1402 = vpack.c.bf16 %v1376, %v1375
        %v1403 = vpack.c.bf16 %v1378, %v1377
        %v1404 = vpack.c.bf16 %v1380, %v1379
        %v1405 = vpack.c.bf16 %v1382, %v1381
        %v1406 = vpack.c.bf16 %v1384, %v1383
        %v1407 = vpack.c.bf16 %v1386, %v1385
        %v1408 = vpack.c.bf16 %v1388, %v1387
        %v1409 = vpack.c.bf16 %v1390, %v1389
        %v1410 = vpack.c.bf16 %v1392, %v1391
        %v1411 = vpack.c.bf16 %v1394, %v1393
        %v1412 = vpack.c.bf16 %v1396, %v1395
        %s1413 = scalar_lea.vmem [#allocation6], 192
        %v1414 = vld [vmem:[%s1413] sm:$0xf]
        %v1415 = vld [vmem:[%s1413 + $0x4] sm:$0xf]
        %v1416 = vld [vmem:[%s1413 + $0x8] sm:$0xf]
        %v1417 = vld [vmem:[%s1413 + $0xc] sm:$0xf]
        %v1418 = vld [vmem:[%s1413 + $0x10] sm:$0xf]
        %v1419 = vld [vmem:[%s1413 + $0x14] sm:$0xf]
        %v1420 = vld [vmem:[%s1413 + $0x18] sm:$0xf]
        %v1421 = vld [vmem:[%s1413 + $0x1c] sm:$0xf]
        %v1422 = vld [vmem:[%s1413 + $0x20] sm:$0xf]
        %v1423 = vld [vmem:[%s1413 + $0x24] sm:$0xf]
        %v1424 = vld [vmem:[%s1413 + $0x28] sm:$0xf]
        %v1425 = vld [vmem:[%s1413 + $0x2c] sm:$0xf]
        %v1426 = vld [vmem:[%s1413 + $0x30] sm:$0xf]
        %v1427 = vld [vmem:[%s1413 + $0x34] sm:$0xf]
        %v1428 = vld [vmem:[%s1413 + $0x38] sm:$0xf]
        %v1429 = vld [vmem:[%s1413 + $0x3c] sm:$0xf]
        %v1446 = vunpack.c.l.b16 %v1414
        %v1447 = vunpack.c.l.b16 %v1415
        %v1448 = vunpack.c.l.b16 %v1416
        %v1449 = vunpack.c.l.b16 %v1417
        %v1450 = vunpack.c.l.b16 %v1418
        %v1451 = vunpack.c.l.b16 %v1419
        %v1452 = vunpack.c.l.b16 %v1420
        %v1453 = vunpack.c.l.b16 %v1421
        %v1454 = vunpack.c.l.b16 %v1422
        %v1455 = vunpack.c.l.b16 %v1423
        %v1456 = vunpack.c.l.b16 %v1424
        %v1457 = vunpack.c.l.b16 %v1425
        %v1458 = vunpack.c.l.b16 %v1426
        %v1459 = vunpack.c.l.b16 %v1427
        %v1460 = vunpack.c.l.b16 %v1428
        %v1461 = vunpack.c.l.b16 %v1429
        %v1462 = vpack.c.b16 %v1447, %v1446
        %v1463 = vpack.c.b16 %v1449, %v1448
        %v1464 = vpack.c.b16 %v1451, %v1450
        %v1465 = vpack.c.b16 %v1453, %v1452
        %v1466 = vpack.c.b16 %v1455, %v1454
        %v1467 = vpack.c.b16 %v1457, %v1456
        %v1468 = vpack.c.b16 %v1459, %v1458
        %v1469 = vpack.c.b16 %v1461, %v1460
        %1478 = vmatprep.subr.bf16.mxu0 0
        %1479 = vmatpush1.bf16.msra.mxu0 %v1462
        %1480 = vmatprep.subr.bf16.mxu0 0
        %1481 = vmatpush1.bf16.msra.mxu0 %v1463
        %1482 = vmatprep.subr.bf16.mxu0 0
        %1483 = vmatpush1.bf16.msra.mxu0 %v1464
        %1484 = vmatprep.subr.bf16.mxu0 0
        %1485 = vmatpush1.bf16.msra.mxu0 %v1465
        %1486 = vmatprep.subr.bf16.mxu0 0
        %1487 = vmatpush1.bf16.msra.mxu0 %v1466
        %1488 = vmatprep.subr.bf16.mxu0 0
        %1489 = vmatpush1.bf16.msra.mxu0 %v1467
        %1490 = vmatprep.subr.bf16.mxu0 0
        %1491 = vmatpush1.bf16.msra.mxu0 %v1468
        %1492 = vmatprep.subr.bf16.mxu0 0
        %1493 = vmatpush1.bf16.msra.mxu0 %v1469
        %1494 = vmatprep.subr.bf16.mxu0 0
        %1495 = vmatpush1.bf16.msra.mxu0 0
        %1496 = vmatprep.subr.bf16.mxu0 0
        %1497 = vmatpush1.bf16.msra.mxu0 0
        %1498 = vmatprep.subr.bf16.mxu0 0
        %1499 = vmatpush1.bf16.msra.mxu0 0
        %1500 = vmatprep.subr.bf16.mxu0 0
        %1501 = vmatpush1.bf16.msra.mxu0 0
        %1502 = vmatprep.subr.bf16.mxu0 0
        %1503 = vmatpush1.bf16.msra.mxu0 0
        %1504 = vmatprep.subr.bf16.mxu0 0
        %1505 = vmatpush1.bf16.msra.mxu0 0
        %1506 = vmatprep.subr.bf16.mxu0 0
        %1507 = vmatpush1.bf16.msra.mxu0 0
        %1508 = vmatprep.subr.bf16.mxu0 0
        %1509 = vmatpush1.bf16.msra.mxu0 0
        %1510 = vmatprep.mubr.bf16.mxu0 0
        %1511 = vmatmul.mubr.bf16.gmra.mrb[0].mxu0 %v1397
        %v1512 = vpop.f32.mrb[0].mxu0
        %v1513 = vadd.f32 0.0, %v1512
        %v1514 = vpop.f32.mrb[0].mxu0
        %v1515 = vpop.f32.mrb[0].mxu0
        %v1516 = vadd.f32 0.0, %v1515
        %v1517 = vpop.f32.mrb[0].mxu0
        %1518 = vmatprep.mubr.bf16.mxu0 0
        %1519 = vmatmul.mubr.bf16.gmra.mrb[0].mxu0 %v1398
        %v1520 = vpop.f32.mrb[0].mxu0
        %v1521 = vadd.f32 0.0, %v1520
        %v1522 = vpop.f32.mrb[0].mxu0
        %v1523 = vpop.f32.mrb[0].mxu0
        %v1524 = vadd.f32 0.0, %v1523
        %v1525 = vpop.f32.mrb[0].mxu0
        %1526 = vmatprep.mubr.bf16.mxu0 0
        %1527 = vmatmul.mubr.bf16.gmra.mrb[0].mxu0 %v1399
        %v1528 = vpop.f32.mrb[0].mxu0
        %v1529 = vadd.f32 0.0, %v1528
        %v1530 = vpop.f32.mrb[0].mxu0
        %v1531 = vpop.f32.mrb[0].mxu0
        %v1532 = vadd.f32 0.0, %v1531
        %v1533 = vpop.f32.mrb[0].mxu0
        %1534 = vmatprep.mubr.bf16.mxu0 0
        %1535 = vmatmul.mubr.bf16.gmra.mrb[0].mxu0 %v1400
        %v1536 = vpop.f32.mrb[0].mxu0
        %v1537 = vadd.f32 0.0, %v1536
        %v1538 = vpop.f32.mrb[0].mxu0
        %v1539 = vpop.f32.mrb[0].mxu0
        %v1540 = vadd.f32 0.0, %v1539
        %v1541 = vpop.f32.mrb[0].mxu0
        %1542 = vmatprep.mubr.bf16.mxu0 0
        %1543 = vmatmul.mubr.bf16.gmra.mrb[0].mxu0 %v1401
        %v1544 = vpop.f32.mrb[0].mxu0
        %v1545 = vadd.f32 0.0, %v1544
        %v1546 = vpop.f32.mrb[0].mxu0
        %v1547 = vpop.f32.mrb[0].mxu0
        %v1548 = vadd.f32 0.0, %v1547
        %v1549 = vpop.f32.mrb[0].mxu0
        %1550 = vmatprep.mubr.bf16.mxu0 0
        %1551 = vmatmul.mubr.bf16.gmra.mrb[0].mxu0 %v1402
        %v1552 = vpop.f32.mrb[0].mxu0
        %v1553 = vadd.f32 0.0, %v1552
        %v1554 = vpop.f32.mrb[0].mxu0
        %v1555 = vpop.f32.mrb[0].mxu0
        %v1556 = vadd.f32 0.0, %v1555
        %v1557 = vpop.f32.mrb[0].mxu0
        %1558 = vmatprep.mubr.bf16.mxu0 0
        %1559 = vmatmul.mubr.bf16.gmra.mrb[0].mxu0 %v1403
        %v1560 = vpop.f32.mrb[0].mxu0
        %v1561 = vadd.f32 0.0, %v1560
        %v1562 = vpop.f32.mrb[0].mxu0
        %v1563 = vpop.f32.mrb[0].mxu0
        %v1564 = vadd.f32 0.0, %v1563
        %v1565 = vpop.f32.mrb[0].mxu0
        %1566 = vmatprep.mubr.bf16.mxu0 0
        %1567 = vmatmul.mubr.bf16.gmra.mrb[0].mxu0 %v1404
        %v1568 = vpop.f32.mrb[0].mxu0
        %v1569 = vadd.f32 0.0, %v1568
        %v1570 = vpop.f32.mrb[0].mxu0
        %v1571 = vpop.f32.mrb[0].mxu0
        %v1572 = vadd.f32 0.0, %v1571
        %v1573 = vpop.f32.mrb[0].mxu0
        %1574 = vmatprep.mubr.bf16.mxu0 0
        %1575 = vmatmul.mubr.bf16.gmra.mrb[0].mxu0 %v1405
        %v1576 = vpop.f32.mrb[0].mxu0
        %v1577 = vadd.f32 0.0, %v1576
        %v1578 = vpop.f32.mrb[0].mxu0
        %v1579 = vpop.f32.mrb[0].mxu0
        %v1580 = vadd.f32 0.0, %v1579
        %v1581 = vpop.f32.mrb[0].mxu0
        %1582 = vmatprep.mubr.bf16.mxu0 0
        %1583 = vmatmul.mubr.bf16.gmra.mrb[0].mxu0 %v1406
        %v1584 = vpop.f32.mrb[0].mxu0
        %v1585 = vadd.f32 0.0, %v1584
        %v1586 = vpop.f32.mrb[0].mxu0
        %v1587 = vpop.f32.mrb[0].mxu0
        %v1588 = vadd.f32 0.0, %v1587
        %v1589 = vpop.f32.mrb[0].mxu0
        %1590 = vmatprep.mubr.bf16.mxu0 0
        %1591 = vmatmul.mubr.bf16.gmra.mrb[0].mxu0 %v1407
        %v1592 = vpop.f32.mrb[0].mxu0
        %v1593 = vadd.f32 0.0, %v1592
        %v1594 = vpop.f32.mrb[0].mxu0
        %v1595 = vpop.f32.mrb[0].mxu0
        %v1596 = vadd.f32 0.0, %v1595
        %v1597 = vpop.f32.mrb[0].mxu0
        %1598 = vmatprep.mubr.bf16.mxu0 0
        %1599 = vmatmul.mubr.bf16.gmra.mrb[0].mxu0 %v1408
        %v1600 = vpop.f32.mrb[0].mxu0
        %v1601 = vadd.f32 0.0, %v1600
        %v1602 = vpop.f32.mrb[0].mxu0
        %v1603 = vpop.f32.mrb[0].mxu0
        %v1604 = vadd.f32 0.0, %v1603
        %v1605 = vpop.f32.mrb[0].mxu0
        %1606 = vmatprep.mubr.bf16.mxu0 0
        %1607 = vmatmul.mubr.bf16.gmra.mrb[0].mxu0 %v1409
        %v1608 = vpop.f32.mrb[0].mxu0
        %v1609 = vadd.f32 0.0, %v1608
        %v1610 = vpop.f32.mrb[0].mxu0
        %v1611 = vpop.f32.mrb[0].mxu0
        %v1612 = vadd.f32 0.0, %v1611
        %v1613 = vpop.f32.mrb[0].mxu0
        %1614 = vmatprep.mubr.bf16.mxu0 0
        %1615 = vmatmul.mubr.bf16.gmra.mrb[0].mxu0 %v1410
        %v1616 = vpop.f32.mrb[0].mxu0
        %v1617 = vadd.f32 0.0, %v1616
        %v1618 = vpop.f32.mrb[0].mxu0
        %v1619 = vpop.f32.mrb[0].mxu0
        %v1620 = vadd.f32 0.0, %v1619
        %v1621 = vpop.f32.mrb[0].mxu0
        %1622 = vmatprep.mubr.bf16.mxu0 0
        %1623 = vmatmul.mubr.bf16.gmra.mrb[0].mxu0 %v1411
        %v1624 = vpop.f32.mrb[0].mxu0
        %v1625 = vadd.f32 0.0, %v1624
        %v1626 = vpop.f32.mrb[0].mxu0
        %v1627 = vpop.f32.mrb[0].mxu0
        %v1628 = vadd.f32 0.0, %v1627
        %v1629 = vpop.f32.mrb[0].mxu0
        %1630 = vmatprep.mubr.bf16.mxu0 0
        %1631 = vmatmul.mubr.bf16.gmra.mrb[0].mxu0 %v1412
        %v1632 = vpop.f32.mrb[0].mxu0
        %v1633 = vadd.f32 0.0, %v1632
        %v1634 = vpop.f32.mrb[0].mxu0
        %v1635 = vpop.f32.mrb[0].mxu0
        %v1636 = vadd.f32 0.0, %v1635
        %v1637 = vpop.f32.mrb[0].mxu0
        %1638 = vdwg.mxu0
        %v1639 = vadd.f32 %v1237, %v1513
        %v1640 = vadd.f32 %v1238, %v1516
        %v1641 = vadd.f32 %v1239, %v1521
        %v1642 = vadd.f32 %v1240, %v1524
        %v1643 = vadd.f32 %v1241, %v1529
        %v1644 = vadd.f32 %v1242, %v1532
        %v1645 = vadd.f32 %v1243, %v1537
        %v1646 = vadd.f32 %v1244, %v1540
        %v1647 = vadd.f32 %v1245, %v1545
        %v1648 = vadd.f32 %v1246, %v1548
        %v1649 = vadd.f32 %v1247, %v1553
        %v1650 = vadd.f32 %v1248, %v1556
        %v1651 = vadd.f32 %v1249, %v1561
        %v1652 = vadd.f32 %v1250, %v1564
        %v1653 = vadd.f32 %v1251, %v1569
        %v1654 = vadd.f32 %v1252, %v1572
        %v1655 = vadd.f32 %v1253, %v1577
        %v1656 = vadd.f32 %v1254, %v1580
        %v1657 = vadd.f32 %v1255, %v1585
        %v1658 = vadd.f32 %v1256, %v1588
        %v1659 = vadd.f32 %v1257, %v1593
        %v1660 = vadd.f32 %v1258, %v1596
        %v1661 = vadd.f32 %v1259, %v1601
        %v1662 = vadd.f32 %v1260, %v1604
        %v1663 = vadd.f32 %v1261, %v1609
        %v1664 = vadd.f32 %v1262, %v1612
        %v1665 = vadd.f32 %v1263, %v1617
        %v1666 = vadd.f32 %v1264, %v1620
        %v1667 = vadd.f32 %v1265, %v1625
        %v1668 = vadd.f32 %v1266, %v1628
        %v1669 = vadd.f32 %v1267, %v1633
        %v1670 = vadd.f32 %v1268, %v1636
        %v1671 = vpack.c.bf16 %v1270, %v1269
        %v1672 = vpack.c.bf16 %v1272, %v1271
        %v1673 = vpack.c.bf16 %v1274, %v1273
        %v1674 = vpack.c.bf16 %v1276, %v1275
        %v1675 = vpack.c.bf16 %v1278, %v1277
        %v1676 = vpack.c.bf16 %v1280, %v1279
        %v1677 = vpack.c.bf16 %v1282, %v1281
        %v1678 = vpack.c.bf16 %v1284, %v1283
        %v1679 = vpack.c.bf16 %v1286, %v1285
        %v1680 = vpack.c.bf16 %v1288, %v1287
        %v1681 = vpack.c.bf16 %v1290, %v1289
        %v1682 = vpack.c.bf16 %v1292, %v1291
        %v1683 = vpack.c.bf16 %v1294, %v1293
        %v1684 = vpack.c.bf16 %v1296, %v1295
        %v1685 = vpack.c.bf16 %v1298, %v1297
        %v1686 = vpack.c.bf16 %v1300, %v1299
        %s1687 = scalar_lea.vmem [#allocation6], 256
        %v1688 = vld [vmem:[%s1687] sm:$0xf]
        %v1689 = vld [vmem:[%s1687 + $0x4] sm:$0xf]
        %v1690 = vld [vmem:[%s1687 + $0x8] sm:$0xf]
        %v1691 = vld [vmem:[%s1687 + $0xc] sm:$0xf]
        %v1692 = vld [vmem:[%s1687 + $0x10] sm:$0xf]
        %v1693 = vld [vmem:[%s1687 + $0x14] sm:$0xf]
        %v1694 = vld [vmem:[%s1687 + $0x18] sm:$0xf]
        %v1695 = vld [vmem:[%s1687 + $0x1c] sm:$0xf]
        %v1696 = vld [vmem:[%s1687 + $0x20] sm:$0xf]
        %v1697 = vld [vmem:[%s1687 + $0x24] sm:$0xf]
        %v1698 = vld [vmem:[%s1687 + $0x28] sm:$0xf]
        %v1699 = vld [vmem:[%s1687 + $0x2c] sm:$0xf]
        %v1700 = vld [vmem:[%s1687 + $0x30] sm:$0xf]
        %v1701 = vld [vmem:[%s1687 + $0x34] sm:$0xf]
        %v1702 = vld [vmem:[%s1687 + $0x38] sm:$0xf]
        %v1703 = vld [vmem:[%s1687 + $0x3c] sm:$0xf]
        %v1720 = vunpack.c.l.b16 %v1688
        %v1721 = vunpack.c.l.b16 %v1689
        %v1722 = vunpack.c.l.b16 %v1690
        %v1723 = vunpack.c.l.b16 %v1691
        %v1724 = vunpack.c.l.b16 %v1692
        %v1725 = vunpack.c.l.b16 %v1693
        %v1726 = vunpack.c.l.b16 %v1694
        %v1727 = vunpack.c.l.b16 %v1695
        %v1728 = vunpack.c.l.b16 %v1696
        %v1729 = vunpack.c.l.b16 %v1697
        %v1730 = vunpack.c.l.b16 %v1698
        %v1731 = vunpack.c.l.b16 %v1699
        %v1732 = vunpack.c.l.b16 %v1700
        %v1733 = vunpack.c.l.b16 %v1701
        %v1734 = vunpack.c.l.b16 %v1702
        %v1735 = vunpack.c.l.b16 %v1703
        %v1736 = vpack.c.b16 %v1721, %v1720
        %v1737 = vpack.c.b16 %v1723, %v1722
        %v1738 = vpack.c.b16 %v1725, %v1724
        %v1739 = vpack.c.b16 %v1727, %v1726
        %v1740 = vpack.c.b16 %v1729, %v1728
        %v1741 = vpack.c.b16 %v1731, %v1730
        %v1742 = vpack.c.b16 %v1733, %v1732
        %v1743 = vpack.c.b16 %v1735, %v1734
        %1752 = vmatprep.subr.bf16.mxu0 0
        %1753 = vmatpush1.bf16.msra.mxu0 %v1736
        %1754 = vmatprep.subr.bf16.mxu0 0
        %1755 = vmatpush1.bf16.msra.mxu0 %v1737
        %1756 = vmatprep.subr.bf16.mxu0 0
        %1757 = vmatpush1.bf16.msra.mxu0 %v1738
        %1758 = vmatprep.subr.bf16.mxu0 0
        %1759 = vmatpush1.bf16.msra.mxu0 %v1739
        %1760 = vmatprep.subr.bf16.mxu0 0
        %1761 = vmatpush1.bf16.msra.mxu0 %v1740
        %1762 = vmatprep.subr.bf16.mxu0 0
        %1763 = vmatpush1.bf16.msra.mxu0 %v1741
        %1764 = vmatprep.subr.bf16.mxu0 0
        %1765 = vmatpush1.bf16.msra.mxu0 %v1742
        %1766 = vmatprep.subr.bf16.mxu0 0
        %1767 = vmatpush1.bf16.msra.mxu0 %v1743
        %1768 = vmatprep.subr.bf16.mxu0 0
        %1769 = vmatpush1.bf16.msra.mxu0 0
        %1770 = vmatprep.subr.bf16.mxu0 0
        %1771 = vmatpush1.bf16.msra.mxu0 0
        %1772 = vmatprep.subr.bf16.mxu0 0
        %1773 = vmatpush1.bf16.msra.mxu0 0
        %1774 = vmatprep.subr.bf16.mxu0 0
        %1775 = vmatpush1.bf16.msra.mxu0 0
        %1776 = vmatprep.subr.bf16.mxu0 0
        %1777 = vmatpush1.bf16.msra.mxu0 0
        %1778 = vmatprep.subr.bf16.mxu0 0
        %1779 = vmatpush1.bf16.msra.mxu0 0
        %1780 = vmatprep.subr.bf16.mxu0 0
        %1781 = vmatpush1.bf16.msra.mxu0 0
        %1782 = vmatprep.subr.bf16.mxu0 0
        %1783 = vmatpush1.bf16.msra.mxu0 0
        %1784 = vmatprep.mubr.bf16.mxu0 0
        %1785 = vmatmul.mubr.bf16.gmra.mrb[0].mxu0 %v1671
        %v1786 = vpop.f32.mrb[0].mxu0
        %v1787 = vadd.f32 0.0, %v1786
        %v1788 = vpop.f32.mrb[0].mxu0
        %v1789 = vpop.f32.mrb[0].mxu0
        %v1790 = vadd.f32 0.0, %v1789
        %v1791 = vpop.f32.mrb[0].mxu0
        %1792 = vmatprep.mubr.bf16.mxu0 0
        %1793 = vmatmul.mubr.bf16.gmra.mrb[0].mxu0 %v1672
        %v1794 = vpop.f32.mrb[0].mxu0
        %v1795 = vadd.f32 0.0, %v1794
        %v1796 = vpop.f32.mrb[0].mxu0
        %v1797 = vpop.f32.mrb[0].mxu0
        %v1798 = vadd.f32 0.0, %v1797
        %v1799 = vpop.f32.mrb[0].mxu0
        %1800 = vmatprep.mubr.bf16.mxu0 0
        %1801 = vmatmul.mubr.bf16.gmra.mrb[0].mxu0 %v1673
        %v1802 = vpop.f32.mrb[0].mxu0
        %v1803 = vadd.f32 0.0, %v1802
        %v1804 = vpop.f32.mrb[0].mxu0
        %v1805 = vpop.f32.mrb[0].mxu0
        %v1806 = vadd.f32 0.0, %v1805
        %v1807 = vpop.f32.mrb[0].mxu0
        %1808 = vmatprep.mubr.bf16.mxu0 0
        %1809 = vmatmul.mubr.bf16.gmra.mrb[0].mxu0 %v1674
        %v1810 = vpop.f32.mrb[0].mxu0
        %v1811 = vadd.f32 0.0, %v1810
        %v1812 = vpop.f32.mrb[0].mxu0
        %v1813 = vpop.f32.mrb[0].mxu0
        %v1814 = vadd.f32 0.0, %v1813
        %v1815 = vpop.f32.mrb[0].mxu0
        %1816 = vmatprep.mubr.bf16.mxu0 0
        %1817 = vmatmul.mubr.bf16.gmra.mrb[0].mxu0 %v1675
        %v1818 = vpop.f32.mrb[0].mxu0
        %v1819 = vadd.f32 0.0, %v1818
        %v1820 = vpop.f32.mrb[0].mxu0
        %v1821 = vpop.f32.mrb[0].mxu0
        %v1822 = vadd.f32 0.0, %v1821
        %v1823 = vpop.f32.mrb[0].mxu0
        %1824 = vmatprep.mubr.bf16.mxu0 0
        %1825 = vmatmul.mubr.bf16.gmra.mrb[0].mxu0 %v1676
        %v1826 = vpop.f32.mrb[0].mxu0
        %v1827 = vadd.f32 0.0, %v1826
        %v1828 = vpop.f32.mrb[0].mxu0
        %v1829 = vpop.f32.mrb[0].mxu0
        %v1830 = vadd.f32 0.0, %v1829
        %v1831 = vpop.f32.mrb[0].mxu0
        %1832 = vmatprep.mubr.bf16.mxu0 0
        %1833 = vmatmul.mubr.bf16.gmra.mrb[0].mxu0 %v1677
        %v1834 = vpop.f32.mrb[0].mxu0
        %v1835 = vadd.f32 0.0, %v1834
        %v1836 = vpop.f32.mrb[0].mxu0
        %v1837 = vpop.f32.mrb[0].mxu0
        %v1838 = vadd.f32 0.0, %v1837
        %v1839 = vpop.f32.mrb[0].mxu0
        %1840 = vmatprep.mubr.bf16.mxu0 0
        %1841 = vmatmul.mubr.bf16.gmra.mrb[0].mxu0 %v1678
        %v1842 = vpop.f32.mrb[0].mxu0
        %v1843 = vadd.f32 0.0, %v1842
        %v1844 = vpop.f32.mrb[0].mxu0
        %v1845 = vpop.f32.mrb[0].mxu0
        %v1846 = vadd.f32 0.0, %v1845
        %v1847 = vpop.f32.mrb[0].mxu0
        %1848 = vmatprep.mubr.bf16.mxu0 0
        %1849 = vmatmul.mubr.bf16.gmra.mrb[0].mxu0 %v1679
        %v1850 = vpop.f32.mrb[0].mxu0
        %v1851 = vadd.f32 0.0, %v1850
        %v1852 = vpop.f32.mrb[0].mxu0
        %v1853 = vpop.f32.mrb[0].mxu0
        %v1854 = vadd.f32 0.0, %v1853
        %v1855 = vpop.f32.mrb[0].mxu0
        %1856 = vmatprep.mubr.bf16.mxu0 0
        %1857 = vmatmul.mubr.bf16.gmra.mrb[0].mxu0 %v1680
        %v1858 = vpop.f32.mrb[0].mxu0
        %v1859 = vadd.f32 0.0, %v1858
        %v1860 = vpop.f32.mrb[0].mxu0
        %v1861 = vpop.f32.mrb[0].mxu0
        %v1862 = vadd.f32 0.0, %v1861
        %v1863 = vpop.f32.mrb[0].mxu0
        %1864 = vmatprep.mubr.bf16.mxu0 0
        %1865 = vmatmul.mubr.bf16.gmra.mrb[0].mxu0 %v1681
        %v1866 = vpop.f32.mrb[0].mxu0
        %v1867 = vadd.f32 0.0, %v1866
        %v1868 = vpop.f32.mrb[0].mxu0
        %v1869 = vpop.f32.mrb[0].mxu0
        %v1870 = vadd.f32 0.0, %v1869
        %v1871 = vpop.f32.mrb[0].mxu0
        %1872 = vmatprep.mubr.bf16.mxu0 0
        %1873 = vmatmul.mubr.bf16.gmra.mrb[0].mxu0 %v1682
        %v1874 = vpop.f32.mrb[0].mxu0
        %v1875 = vadd.f32 0.0, %v1874
        %v1876 = vpop.f32.mrb[0].mxu0
        %v1877 = vpop.f32.mrb[0].mxu0
        %v1878 = vadd.f32 0.0, %v1877
        %v1879 = vpop.f32.mrb[0].mxu0
        %1880 = vmatprep.mubr.bf16.mxu0 0
        %1881 = vmatmul.mubr.bf16.gmra.mrb[0].mxu0 %v1683
        %v1882 = vpop.f32.mrb[0].mxu0
        %v1883 = vadd.f32 0.0, %v1882
        %v1884 = vpop.f32.mrb[0].mxu0
        %v1885 = vpop.f32.mrb[0].mxu0
        %v1886 = vadd.f32 0.0, %v1885
        %v1887 = vpop.f32.mrb[0].mxu0
        %1888 = vmatprep.mubr.bf16.mxu0 0
        %1889 = vmatmul.mubr.bf16.gmra.mrb[0].mxu0 %v1684
        %v1890 = vpop.f32.mrb[0].mxu0
        %v1891 = vadd.f32 0.0, %v1890
        %v1892 = vpop.f32.mrb[0].mxu0
        %v1893 = vpop.f32.mrb[0].mxu0
        %v1894 = vadd.f32 0.0, %v1893
        %v1895 = vpop.f32.mrb[0].mxu0
        %1896 = vmatprep.mubr.bf16.mxu0 0
        %1897 = vmatmul.mubr.bf16.gmra.mrb[0].mxu0 %v1685
        %v1898 = vpop.f32.mrb[0].mxu0
        %v1899 = vadd.f32 0.0, %v1898
        %v1900 = vpop.f32.mrb[0].mxu0
        %v1901 = vpop.f32.mrb[0].mxu0
        %v1902 = vadd.f32 0.0, %v1901
        %v1903 = vpop.f32.mrb[0].mxu0
        %1904 = vmatprep.mubr.bf16.mxu0 0
        %1905 = vmatmul.mubr.bf16.gmra.mrb[0].mxu0 %v1686
        %v1906 = vpop.f32.mrb[0].mxu0
        %v1907 = vadd.f32 0.0, %v1906
        %v1908 = vpop.f32.mrb[0].mxu0
        %v1909 = vpop.f32.mrb[0].mxu0
        %v1910 = vadd.f32 0.0, %v1909
        %v1911 = vpop.f32.mrb[0].mxu0
        %1912 = vdwg.mxu0
        %v1913 = vadd.f32 %v1639, %v1787
        %v1914 = vadd.f32 %v1640, %v1790
        %v1915 = vadd.f32 %v1641, %v1795
        %v1916 = vadd.f32 %v1642, %v1798
        %v1917 = vadd.f32 %v1643, %v1803
        %v1918 = vadd.f32 %v1644, %v1806
        %v1919 = vadd.f32 %v1645, %v1811
        %v1920 = vadd.f32 %v1646, %v1814
        %v1921 = vadd.f32 %v1647, %v1819
        %v1922 = vadd.f32 %v1648, %v1822
        %v1923 = vadd.f32 %v1649, %v1827
        %v1924 = vadd.f32 %v1650, %v1830
        %v1925 = vadd.f32 %v1651, %v1835
        %v1926 = vadd.f32 %v1652, %v1838
        %v1927 = vadd.f32 %v1653, %v1843
        %v1928 = vadd.f32 %v1654, %v1846
        %v1929 = vadd.f32 %v1655, %v1851
        %v1930 = vadd.f32 %v1656, %v1854
        %v1931 = vadd.f32 %v1657, %v1859
        %v1932 = vadd.f32 %v1658, %v1862
        %v1933 = vadd.f32 %v1659, %v1867
        %v1934 = vadd.f32 %v1660, %v1870
        %v1935 = vadd.f32 %v1661, %v1875
        %v1936 = vadd.f32 %v1662, %v1878
        %v1937 = vadd.f32 %v1663, %v1883
        %v1938 = vadd.f32 %v1664, %v1886
        %v1939 = vadd.f32 %v1665, %v1891
        %v1940 = vadd.f32 %v1666, %v1894
        %v1941 = vadd.f32 %v1667, %v1899
        %v1942 = vadd.f32 %v1668, %v1902
        %v1943 = vadd.f32 %v1669, %v1907
        %v1944 = vadd.f32 %v1670, %v1910
        %v1945 = vrot.slane %v1269, 1
        %v1946 = vrot.slane %v1270, 1
        %v1947 = vrot.slane %v1271, 1
        %v1948 = vrot.slane %v1272, 1
        %v1949 = vrot.slane %v1273, 1
        %v1950 = vrot.slane %v1274, 1
        %v1951 = vrot.slane %v1275, 1
        %v1952 = vrot.slane %v1276, 1
        %v1953 = vrot.slane %v1277, 1
        %v1954 = vrot.slane %v1278, 1
        %v1955 = vrot.slane %v1279, 1
        %v1956 = vrot.slane %v1280, 1
        %v1957 = vrot.slane %v1281, 1
        %v1958 = vrot.slane %v1282, 1
        %v1959 = vrot.slane %v1283, 1
        %v1960 = vrot.slane %v1284, 1
        %v1961 = vrot.slane %v1285, 1
        %v1962 = vrot.slane %v1286, 1
        %v1963 = vrot.slane %v1287, 1
        %v1964 = vrot.slane %v1288, 1
        %v1965 = vrot.slane %v1289, 1
        %v1966 = vrot.slane %v1290, 1
        %v1967 = vrot.slane %v1291, 1
        %v1968 = vrot.slane %v1292, 1
        %v1969 = vrot.slane %v1293, 1
        %v1970 = vrot.slane %v1294, 1
        %v1971 = vrot.slane %v1295, 1
        %v1972 = vrot.slane %v1296, 1
        %v1973 = vrot.slane %v1297, 1
        %v1974 = vrot.slane %v1298, 1
        %v1975 = vrot.slane %v1299, 1
        %v1976 = vrot.slane %v1300, 1
        %v1977 = vsel %vm930, %v1975, %v1976
        %v1978 = vsel %vm930, %v1974, %v1975
        %v1979 = vsel %vm930, %v1973, %v1974
        %v1980 = vsel %vm930, %v1972, %v1973
        %v1981 = vsel %vm930, %v1971, %v1972
        %v1982 = vsel %vm930, %v1970, %v1971
        %v1983 = vsel %vm930, %v1969, %v1970
        %v1984 = vsel %vm930, %v1968, %v1969
        %v1985 = vsel %vm930, %v1967, %v1968
        %v1986 = vsel %vm930, %v1966, %v1967
        %v1987 = vsel %vm930, %v1965, %v1966
        %v1988 = vsel %vm930, %v1964, %v1965
        %v1989 = vsel %vm930, %v1963, %v1964
        %v1990 = vsel %vm930, %v1962, %v1963
        %v1991 = vsel %vm930, %v1961, %v1962
        %v1992 = vsel %vm930, %v1960, %v1961
        %v1993 = vsel %vm930, %v1959, %v1960
        %v1994 = vsel %vm930, %v1958, %v1959
        %v1995 = vsel %vm930, %v1957, %v1958
        %v1996 = vsel %vm930, %v1956, %v1957
        %v1997 = vsel %vm930, %v1955, %v1956
        %v1998 = vsel %vm930, %v1954, %v1955
        %v1999 = vsel %vm930, %v1953, %v1954
        %v2000 = vsel %vm930, %v1952, %v1953
        %v2001 = vsel %vm930, %v1951, %v1952
        %v2002 = vsel %vm930, %v1950, %v1951
        %v2003 = vsel %vm930, %v1949, %v1950
        %v2004 = vsel %vm930, %v1948, %v1949
        %v2005 = vsel %vm930, %v1947, %v1948
        %v2006 = vsel %vm930, %v1946, %v1947
        %v2007 = vsel %vm930, %v1945, %v1946
        %v2008 = vsel %vm930, %v1976, %v1945
        %v2009 = vmul.f32 %v2007, %v219
        %v2010 = vmul.f32 %v2006, %v220
        %v2011 = vmul.f32 %v2005, %v219
        %v2012 = vmul.f32 %v2004, %v220
        %v2013 = vmul.f32 %v2003, %v219
        %v2014 = vmul.f32 %v2002, %v220
        %v2015 = vmul.f32 %v2001, %v219
        %v2016 = vmul.f32 %v2000, %v220
        %v2017 = vmul.f32 %v1999, %v219
        %v2018 = vmul.f32 %v1998, %v220
        %v2019 = vmul.f32 %v1997, %v219
        %v2020 = vmul.f32 %v1996, %v220
        %v2021 = vmul.f32 %v1995, %v219
        %v2022 = vmul.f32 %v1994, %v220
        %v2023 = vmul.f32 %v1993, %v219
        %v2024 = vmul.f32 %v1992, %v220
        %v2025 = vmul.f32 %v1991, %v219
        %v2026 = vmul.f32 %v1990, %v220
        %v2027 = vmul.f32 %v1989, %v219
        %v2028 = vmul.f32 %v1988, %v220
        %v2029 = vmul.f32 %v1987, %v219
        %v2030 = vmul.f32 %v1986, %v220
        %v2031 = vmul.f32 %v1985, %v219
        %v2032 = vmul.f32 %v1984, %v220
        %v2033 = vmul.f32 %v1983, %v219
        %v2034 = vmul.f32 %v1982, %v220
        %v2035 = vmul.f32 %v1981, %v219
        %v2036 = vmul.f32 %v1980, %v220
        %v2037 = vmul.f32 %v1979, %v219
        %v2038 = vmul.f32 %v1978, %v220
        %v2039 = vmul.f32 %v1977, %v219
        %v2040 = vmul.f32 %v2008, %v220
        %v2041 = vpack.c.bf16 %v2010, %v2009
        %v2042 = vpack.c.bf16 %v2012, %v2011
        %v2043 = vpack.c.bf16 %v2014, %v2013
        %v2044 = vpack.c.bf16 %v2016, %v2015
        %v2045 = vpack.c.bf16 %v2018, %v2017
        %v2046 = vpack.c.bf16 %v2020, %v2019
        %v2047 = vpack.c.bf16 %v2022, %v2021
        %v2048 = vpack.c.bf16 %v2024, %v2023
        %v2049 = vpack.c.bf16 %v2026, %v2025
        %v2050 = vpack.c.bf16 %v2028, %v2027
        %v2051 = vpack.c.bf16 %v2030, %v2029
        %v2052 = vpack.c.bf16 %v2032, %v2031
        %v2053 = vpack.c.bf16 %v2034, %v2033
        %v2054 = vpack.c.bf16 %v2036, %v2035
        %v2055 = vpack.c.bf16 %v2038, %v2037
        %v2056 = vpack.c.bf16 %v2040, %v2039
        %s2057 = scalar_lea.vmem [#allocation6], 320
        %v2058 = vld [vmem:[%s2057] sm:$0xf]
        %v2059 = vld [vmem:[%s2057 + $0x4] sm:$0xf]
        %v2060 = vld [vmem:[%s2057 + $0x8] sm:$0xf]
        %v2061 = vld [vmem:[%s2057 + $0xc] sm:$0xf]
        %v2062 = vld [vmem:[%s2057 + $0x10] sm:$0xf]
        %v2063 = vld [vmem:[%s2057 + $0x14] sm:$0xf]
        %v2064 = vld [vmem:[%s2057 + $0x18] sm:$0xf]
        %v2065 = vld [vmem:[%s2057 + $0x1c] sm:$0xf]
        %v2066 = vld [vmem:[%s2057 + $0x20] sm:$0xf]
        %v2067 = vld [vmem:[%s2057 + $0x24] sm:$0xf]
        %v2068 = vld [vmem:[%s2057 + $0x28] sm:$0xf]
        %v2069 = vld [vmem:[%s2057 + $0x2c] sm:$0xf]
        %v2070 = vld [vmem:[%s2057 + $0x30] sm:$0xf]
        %v2071 = vld [vmem:[%s2057 + $0x34] sm:$0xf]
        %v2072 = vld [vmem:[%s2057 + $0x38] sm:$0xf]
        %v2073 = vld [vmem:[%s2057 + $0x3c] sm:$0xf]
        %v2090 = vunpack.c.l.b16 %v2058
        %v2091 = vunpack.c.l.b16 %v2059
        %v2092 = vunpack.c.l.b16 %v2060
        %v2093 = vunpack.c.l.b16 %v2061
        %v2094 = vunpack.c.l.b16 %v2062
        %v2095 = vunpack.c.l.b16 %v2063
        %v2096 = vunpack.c.l.b16 %v2064
        %v2097 = vunpack.c.l.b16 %v2065
        %v2098 = vunpack.c.l.b16 %v2066
        %v2099 = vunpack.c.l.b16 %v2067
        %v2100 = vunpack.c.l.b16 %v2068
        %v2101 = vunpack.c.l.b16 %v2069
        %v2102 = vunpack.c.l.b16 %v2070
        %v2103 = vunpack.c.l.b16 %v2071
        %v2104 = vunpack.c.l.b16 %v2072
        %v2105 = vunpack.c.l.b16 %v2073
        %v2106 = vpack.c.b16 %v2091, %v2090
        %v2107 = vpack.c.b16 %v2093, %v2092
        %v2108 = vpack.c.b16 %v2095, %v2094
        %v2109 = vpack.c.b16 %v2097, %v2096
        %v2110 = vpack.c.b16 %v2099, %v2098
        %v2111 = vpack.c.b16 %v2101, %v2100
        %v2112 = vpack.c.b16 %v2103, %v2102
        %v2113 = vpack.c.b16 %v2105, %v2104
        %2122 = vmatprep.subr.bf16.mxu0 0
        %2123 = vmatpush1.bf16.msra.mxu0 %v2106
        %2124 = vmatprep.subr.bf16.mxu0 0
        %2125 = vmatpush1.bf16.msra.mxu0 %v2107
        %2126 = vmatprep.subr.bf16.mxu0 0
        %2127 = vmatpush1.bf16.msra.mxu0 %v2108
        %2128 = vmatprep.subr.bf16.mxu0 0
        %2129 = vmatpush1.bf16.msra.mxu0 %v2109
        %2130 = vmatprep.subr.bf16.mxu0 0
        %2131 = vmatpush1.bf16.msra.mxu0 %v2110
        %2132 = vmatprep.subr.bf16.mxu0 0
        %2133 = vmatpush1.bf16.msra.mxu0 %v2111
        %2134 = vmatprep.subr.bf16.mxu0 0
        %2135 = vmatpush1.bf16.msra.mxu0 %v2112
        %2136 = vmatprep.subr.bf16.mxu0 0
        %2137 = vmatpush1.bf16.msra.mxu0 %v2113
        %2138 = vmatprep.subr.bf16.mxu0 0
        %2139 = vmatpush1.bf16.msra.mxu0 0
        %2140 = vmatprep.subr.bf16.mxu0 0
        %2141 = vmatpush1.bf16.msra.mxu0 0
        %2142 = vmatprep.subr.bf16.mxu0 0
        %2143 = vmatpush1.bf16.msra.mxu0 0
        %2144 = vmatprep.subr.bf16.mxu0 0
        %2145 = vmatpush1.bf16.msra.mxu0 0
        %2146 = vmatprep.subr.bf16.mxu0 0
        %2147 = vmatpush1.bf16.msra.mxu0 0
        %2148 = vmatprep.subr.bf16.mxu0 0
        %2149 = vmatpush1.bf16.msra.mxu0 0
        %2150 = vmatprep.subr.bf16.mxu0 0
        %2151 = vmatpush1.bf16.msra.mxu0 0
        %2152 = vmatprep.subr.bf16.mxu0 0
        %2153 = vmatpush1.bf16.msra.mxu0 0
        %2154 = vmatprep.mubr.bf16.mxu0 0
        %2155 = vmatmul.mubr.bf16.gmra.mrb[0].mxu0 %v2041
        %v2156 = vpop.f32.mrb[0].mxu0
        %v2157 = vadd.f32 0.0, %v2156
        %v2158 = vpop.f32.mrb[0].mxu0
        %v2159 = vpop.f32.mrb[0].mxu0
        %v2160 = vadd.f32 0.0, %v2159
        %v2161 = vpop.f32.mrb[0].mxu0
        %2162 = vmatprep.mubr.bf16.mxu0 0
        %2163 = vmatmul.mubr.bf16.gmra.mrb[0].mxu0 %v2042
        %v2164 = vpop.f32.mrb[0].mxu0
        %v2165 = vadd.f32 0.0, %v2164
        %v2166 = vpop.f32.mrb[0].mxu0
        %v2167 = vpop.f32.mrb[0].mxu0
        %v2168 = vadd.f32 0.0, %v2167
        %v2169 = vpop.f32.mrb[0].mxu0
        %2170 = vmatprep.mubr.bf16.mxu0 0
        %2171 = vmatmul.mubr.bf16.gmra.mrb[0].mxu0 %v2043
        %v2172 = vpop.f32.mrb[0].mxu0
        %v2173 = vadd.f32 0.0, %v2172
        %v2174 = vpop.f32.mrb[0].mxu0
        %v2175 = vpop.f32.mrb[0].mxu0
        %v2176 = vadd.f32 0.0, %v2175
        %v2177 = vpop.f32.mrb[0].mxu0
        %2178 = vmatprep.mubr.bf16.mxu0 0
        %2179 = vmatmul.mubr.bf16.gmra.mrb[0].mxu0 %v2044
        %v2180 = vpop.f32.mrb[0].mxu0
        %v2181 = vadd.f32 0.0, %v2180
        %v2182 = vpop.f32.mrb[0].mxu0
        %v2183 = vpop.f32.mrb[0].mxu0
        %v2184 = vadd.f32 0.0, %v2183
        %v2185 = vpop.f32.mrb[0].mxu0
        %2186 = vmatprep.mubr.bf16.mxu0 0
        %2187 = vmatmul.mubr.bf16.gmra.mrb[0].mxu0 %v2045
        %v2188 = vpop.f32.mrb[0].mxu0
        %v2189 = vadd.f32 0.0, %v2188
        %v2190 = vpop.f32.mrb[0].mxu0
        %v2191 = vpop.f32.mrb[0].mxu0
        %v2192 = vadd.f32 0.0, %v2191
        %v2193 = vpop.f32.mrb[0].mxu0
        %2194 = vmatprep.mubr.bf16.mxu0 0
        %2195 = vmatmul.mubr.bf16.gmra.mrb[0].mxu0 %v2046
        %v2196 = vpop.f32.mrb[0].mxu0
        %v2197 = vadd.f32 0.0, %v2196
        %v2198 = vpop.f32.mrb[0].mxu0
        %v2199 = vpop.f32.mrb[0].mxu0
        %v2200 = vadd.f32 0.0, %v2199
        %v2201 = vpop.f32.mrb[0].mxu0
        %2202 = vmatprep.mubr.bf16.mxu0 0
        %2203 = vmatmul.mubr.bf16.gmra.mrb[0].mxu0 %v2047
        %v2204 = vpop.f32.mrb[0].mxu0
        %v2205 = vadd.f32 0.0, %v2204
        %v2206 = vpop.f32.mrb[0].mxu0
        %v2207 = vpop.f32.mrb[0].mxu0
        %v2208 = vadd.f32 0.0, %v2207
        %v2209 = vpop.f32.mrb[0].mxu0
        %2210 = vmatprep.mubr.bf16.mxu0 0
        %2211 = vmatmul.mubr.bf16.gmra.mrb[0].mxu0 %v2048
        %v2212 = vpop.f32.mrb[0].mxu0
        %v2213 = vadd.f32 0.0, %v2212
        %v2214 = vpop.f32.mrb[0].mxu0
        %v2215 = vpop.f32.mrb[0].mxu0
        %v2216 = vadd.f32 0.0, %v2215
        %v2217 = vpop.f32.mrb[0].mxu0
        %2218 = vmatprep.mubr.bf16.mxu0 0
        %2219 = vmatmul.mubr.bf16.gmra.mrb[0].mxu0 %v2049
        %v2220 = vpop.f32.mrb[0].mxu0
        %v2221 = vadd.f32 0.0, %v2220
        %v2222 = vpop.f32.mrb[0].mxu0
        %v2223 = vpop.f32.mrb[0].mxu0
        %v2224 = vadd.f32 0.0, %v2223
        %v2225 = vpop.f32.mrb[0].mxu0
        %2226 = vmatprep.mubr.bf16.mxu0 0
        %2227 = vmatmul.mubr.bf16.gmra.mrb[0].mxu0 %v2050
        %v2228 = vpop.f32.mrb[0].mxu0
        %v2229 = vadd.f32 0.0, %v2228
        %v2230 = vpop.f32.mrb[0].mxu0
        %v2231 = vpop.f32.mrb[0].mxu0
        %v2232 = vadd.f32 0.0, %v2231
        %v2233 = vpop.f32.mrb[0].mxu0
        %2234 = vmatprep.mubr.bf16.mxu0 0
        %2235 = vmatmul.mubr.bf16.gmra.mrb[0].mxu0 %v2051
        %v2236 = vpop.f32.mrb[0].mxu0
        %v2237 = vadd.f32 0.0, %v2236
        %v2238 = vpop.f32.mrb[0].mxu0
        %v2239 = vpop.f32.mrb[0].mxu0
        %v2240 = vadd.f32 0.0, %v2239
        %v2241 = vpop.f32.mrb[0].mxu0
        %2242 = vmatprep.mubr.bf16.mxu0 0
        %2243 = vmatmul.mubr.bf16.gmra.mrb[0].mxu0 %v2052
        %v2244 = vpop.f32.mrb[0].mxu0
        %v2245 = vadd.f32 0.0, %v2244
        %v2246 = vpop.f32.mrb[0].mxu0
        %v2247 = vpop.f32.mrb[0].mxu0
        %v2248 = vadd.f32 0.0, %v2247
        %v2249 = vpop.f32.mrb[0].mxu0
        %2250 = vmatprep.mubr.bf16.mxu0 0
        %2251 = vmatmul.mubr.bf16.gmra.mrb[0].mxu0 %v2053
        %v2252 = vpop.f32.mrb[0].mxu0
        %v2253 = vadd.f32 0.0, %v2252
        %v2254 = vpop.f32.mrb[0].mxu0
        %v2255 = vpop.f32.mrb[0].mxu0
        %v2256 = vadd.f32 0.0, %v2255
        %v2257 = vpop.f32.mrb[0].mxu0
        %2258 = vmatprep.mubr.bf16.mxu0 0
        %2259 = vmatmul.mubr.bf16.gmra.mrb[0].mxu0 %v2054
        %v2260 = vpop.f32.mrb[0].mxu0
        %v2261 = vadd.f32 0.0, %v2260
        %v2262 = vpop.f32.mrb[0].mxu0
        %v2263 = vpop.f32.mrb[0].mxu0
        %v2264 = vadd.f32 0.0, %v2263
        %v2265 = vpop.f32.mrb[0].mxu0
        %2266 = vmatprep.mubr.bf16.mxu0 0
        %2267 = vmatmul.mubr.bf16.gmra.mrb[0].mxu0 %v2055
        %v2268 = vpop.f32.mrb[0].mxu0
        %v2269 = vadd.f32 0.0, %v2268
        %v2270 = vpop.f32.mrb[0].mxu0
        %v2271 = vpop.f32.mrb[0].mxu0
        %v2272 = vadd.f32 0.0, %v2271
        %v2273 = vpop.f32.mrb[0].mxu0
        %2274 = vmatprep.mubr.bf16.mxu0 0
        %2275 = vmatmul.mubr.bf16.gmra.mrb[0].mxu0 %v2056
        %v2276 = vpop.f32.mrb[0].mxu0
        %v2277 = vadd.f32 0.0, %v2276
        %v2278 = vpop.f32.mrb[0].mxu0
        %v2279 = vpop.f32.mrb[0].mxu0
        %v2280 = vadd.f32 0.0, %v2279
        %v2281 = vpop.f32.mrb[0].mxu0
        %2282 = vdwg.mxu0
        %v2283 = vadd.f32 %v1913, %v2157
        %v2284 = vadd.f32 %v1914, %v2160
        %v2285 = vadd.f32 %v1915, %v2165
        %v2286 = vadd.f32 %v1916, %v2168
        %v2287 = vadd.f32 %v1917, %v2173
        %v2288 = vadd.f32 %v1918, %v2176
        %v2289 = vadd.f32 %v1919, %v2181
        %v2290 = vadd.f32 %v1920, %v2184
        %v2291 = vadd.f32 %v1921, %v2189
        %v2292 = vadd.f32 %v1922, %v2192
        %v2293 = vadd.f32 %v1923, %v2197
        %v2294 = vadd.f32 %v1924, %v2200
        %v2295 = vadd.f32 %v1925, %v2205
        %v2296 = vadd.f32 %v1926, %v2208
        %v2297 = vadd.f32 %v1927, %v2213
        %v2298 = vadd.f32 %v1928, %v2216
        %v2299 = vadd.f32 %v1929, %v2221
        %v2300 = vadd.f32 %v1930, %v2224
        %v2301 = vadd.f32 %v1931, %v2229
        %v2302 = vadd.f32 %v1932, %v2232
        %v2303 = vadd.f32 %v1933, %v2237
        %v2304 = vadd.f32 %v1934, %v2240
        %v2305 = vadd.f32 %v1935, %v2245
        %v2306 = vadd.f32 %v1936, %v2248
        %v2307 = vadd.f32 %v1937, %v2253
        %v2308 = vadd.f32 %v1938, %v2256
        %v2309 = vadd.f32 %v1939, %v2261
        %v2310 = vadd.f32 %v1940, %v2264
        %v2311 = vadd.f32 %v1941, %v2269
        %v2312 = vadd.f32 %v1942, %v2272
        %v2313 = vadd.f32 %v1943, %v2277
        %v2314 = vadd.f32 %v1944, %v2280
        %s2315 = scalar_lea.vmem [#allocation2], 32
        %v2316 = vld [vmem:[%s2315] sm:$0xff]
        %v2317 = vld [vmem:[%s2315 + $0x8] sm:$0xff]
        %v2318 = vld [vmem:[%s2315 + $0x10] sm:$0xff]
        %v2319 = vld [vmem:[%s2315 + $0x18] sm:$0xff]
        %v2320 = vld [vmem:[%s2315 + $0x20] sm:$0xff]
        %v2321 = vld [vmem:[%s2315 + $0x28] sm:$0xff]
        %v2322 = vld [vmem:[%s2315 + $0x30] sm:$0xff]
        %v2323 = vld [vmem:[%s2315 + $0x38] sm:$0xff]
        %v2324 = vld [vmem:[%s2315 + $0x40] sm:$0xff]
        %v2325 = vld [vmem:[%s2315 + $0x48] sm:$0xff]
        %v2326 = vld [vmem:[%s2315 + $0x50] sm:$0xff]
        %v2327 = vld [vmem:[%s2315 + $0x58] sm:$0xff]
        %v2328 = vld [vmem:[%s2315 + $0x60] sm:$0xff]
        %v2329 = vld [vmem:[%s2315 + $0x68] sm:$0xff]
        %v2330 = vld [vmem:[%s2315 + $0x70] sm:$0xff]
        %v2331 = vld [vmem:[%s2315 + $0x78] sm:$0xff]
        %v2332 = vld [vmem:[%s2315 + $0x80] sm:$0xff]
        %v2333 = vld [vmem:[%s2315 + $0x88] sm:$0xff]
        %v2334 = vld [vmem:[%s2315 + $0x90] sm:$0xff]
        %v2335 = vld [vmem:[%s2315 + $0x98] sm:$0xff]
        %v2336 = vld [vmem:[%s2315 + $0xa0] sm:$0xff]
        %v2337 = vld [vmem:[%s2315 + $0xa8] sm:$0xff]
        %v2338 = vld [vmem:[%s2315 + $0xb0] sm:$0xff]
        %v2339 = vld [vmem:[%s2315 + $0xb8] sm:$0xff]
        %v2340 = vld [vmem:[%s2315 + $0xc0] sm:$0xff]
        %v2341 = vld [vmem:[%s2315 + $0xc8] sm:$0xff]
        %v2342 = vld [vmem:[%s2315 + $0xd0] sm:$0xff]
        %v2343 = vld [vmem:[%s2315 + $0xd8] sm:$0xff]
        %v2344 = vld [vmem:[%s2315 + $0xe0] sm:$0xff]
        %v2345 = vld [vmem:[%s2315 + $0xe8] sm:$0xff]
        %v2346 = vld [vmem:[%s2315 + $0xf0] sm:$0xff]
        %v2347 = vld [vmem:[%s2315 + $0xf8] sm:$0xff]
        %v2348 = vrot.slane %v2316, 7
        %v2349 = vrot.slane %v2317, 7
        %v2350 = vrot.slane %v2318, 7
        %v2351 = vrot.slane %v2319, 7
        %v2352 = vrot.slane %v2320, 7
        %v2353 = vrot.slane %v2321, 7
        %v2354 = vrot.slane %v2322, 7
        %v2355 = vrot.slane %v2323, 7
        %v2356 = vrot.slane %v2324, 7
        %v2357 = vrot.slane %v2325, 7
        %v2358 = vrot.slane %v2326, 7
        %v2359 = vrot.slane %v2327, 7
        %v2360 = vrot.slane %v2328, 7
        %v2361 = vrot.slane %v2329, 7
        %v2362 = vrot.slane %v2330, 7
        %v2363 = vrot.slane %v2331, 7
        %v2364 = vrot.slane %v2332, 7
        %v2365 = vrot.slane %v2333, 7
        %v2366 = vrot.slane %v2334, 7
        %v2367 = vrot.slane %v2335, 7
        %v2368 = vrot.slane %v2336, 7
        %v2369 = vrot.slane %v2337, 7
        %v2370 = vrot.slane %v2338, 7
        %v2371 = vrot.slane %v2339, 7
        %v2372 = vrot.slane %v2340, 7
        %v2373 = vrot.slane %v2341, 7
        %v2374 = vrot.slane %v2342, 7
        %v2375 = vrot.slane %v2343, 7
        %v2376 = vrot.slane %v2344, 7
        %v2377 = vrot.slane %v2345, 7
        %v2378 = vrot.slane %v2346, 7
        %v2379 = vrot.slane %v2347, 7
        %v2380 = vsel %vm350, %v2378, %v2379
        %v2381 = vsel %vm350, %v2377, %v2378
        %v2382 = vsel %vm350, %v2376, %v2377
        %v2383 = vsel %vm350, %v2375, %v2376
        %v2384 = vsel %vm350, %v2374, %v2375
        %v2385 = vsel %vm350, %v2373, %v2374
        %v2386 = vsel %vm350, %v2372, %v2373
        %v2387 = vsel %vm350, %v2371, %v2372
        %v2388 = vsel %vm350, %v2370, %v2371
        %v2389 = vsel %vm350, %v2369, %v2370
        %v2390 = vsel %vm350, %v2368, %v2369
        %v2391 = vsel %vm350, %v2367, %v2368
        %v2392 = vsel %vm350, %v2366, %v2367
        %v2393 = vsel %vm350, %v2365, %v2366
        %v2394 = vsel %vm350, %v2364, %v2365
        %v2395 = vsel %vm350, %v2363, %v2364
        %v2396 = vsel %vm350, %v2362, %v2363
        %v2397 = vsel %vm350, %v2361, %v2362
        %v2398 = vsel %vm350, %v2360, %v2361
        %v2399 = vsel %vm350, %v2359, %v2360
        %v2400 = vsel %vm350, %v2358, %v2359
        %v2401 = vsel %vm350, %v2357, %v2358
        %v2402 = vsel %vm350, %v2356, %v2357
        %v2403 = vsel %vm350, %v2355, %v2356
        %v2404 = vsel %vm350, %v2354, %v2355
        %v2405 = vsel %vm350, %v2353, %v2354
        %v2406 = vsel %vm350, %v2352, %v2353
        %v2407 = vsel %vm350, %v2351, %v2352
        %v2408 = vsel %vm350, %v2350, %v2351
        %v2409 = vsel %vm350, %v2349, %v2350
        %v2410 = vsel %vm350, %v2348, %v2349
        %v2411 = vsel %vm350, %v2379, %v2348
        %v2412 = vmul.f32 %v2411, %v215
        %v2413 = vmul.f32 %v2410, %v216
        %v2414 = vmul.f32 %v2409, %v215
        %v2415 = vmul.f32 %v2408, %v216
        %v2416 = vmul.f32 %v2407, %v215
        %v2417 = vmul.f32 %v2406, %v216
        %v2418 = vmul.f32 %v2405, %v215
        %v2419 = vmul.f32 %v2404, %v216
        %v2420 = vmul.f32 %v2403, %v215
        %v2421 = vmul.f32 %v2402, %v216
        %v2422 = vmul.f32 %v2401, %v215
        %v2423 = vmul.f32 %v2400, %v216
        %v2424 = vmul.f32 %v2399, %v215
        %v2425 = vmul.f32 %v2398, %v216
        %v2426 = vmul.f32 %v2397, %v215
        %v2427 = vmul.f32 %v2396, %v216
        %v2428 = vmul.f32 %v2395, %v215
        %v2429 = vmul.f32 %v2394, %v216
        %v2430 = vmul.f32 %v2393, %v215
        %v2431 = vmul.f32 %v2392, %v216
        %v2432 = vmul.f32 %v2391, %v215
        %v2433 = vmul.f32 %v2390, %v216
        %v2434 = vmul.f32 %v2389, %v215
        %v2435 = vmul.f32 %v2388, %v216
        %v2436 = vmul.f32 %v2387, %v215
        %v2437 = vmul.f32 %v2386, %v216
        %v2438 = vmul.f32 %v2385, %v215
        %v2439 = vmul.f32 %v2384, %v216
        %v2440 = vmul.f32 %v2383, %v215
        %v2441 = vmul.f32 %v2382, %v216
        %v2442 = vmul.f32 %v2381, %v215
        %v2443 = vmul.f32 %v2380, %v216
        %v2444 = vpack.c.bf16 %v2413, %v2412
        %v2445 = vpack.c.bf16 %v2415, %v2414
        %v2446 = vpack.c.bf16 %v2417, %v2416
        %v2447 = vpack.c.bf16 %v2419, %v2418
        %v2448 = vpack.c.bf16 %v2421, %v2420
        %v2449 = vpack.c.bf16 %v2423, %v2422
        %v2450 = vpack.c.bf16 %v2425, %v2424
        %v2451 = vpack.c.bf16 %v2427, %v2426
        %v2452 = vpack.c.bf16 %v2429, %v2428
        %v2453 = vpack.c.bf16 %v2431, %v2430
        %v2454 = vpack.c.bf16 %v2433, %v2432
        %v2455 = vpack.c.bf16 %v2435, %v2434
        %v2456 = vpack.c.bf16 %v2437, %v2436
        %v2457 = vpack.c.bf16 %v2439, %v2438
        %v2458 = vpack.c.bf16 %v2441, %v2440
        %v2459 = vpack.c.bf16 %v2443, %v2442
        %s2460 = scalar_lea.vmem [#allocation6], 384
        %v2461 = vld [vmem:[%s2460] sm:$0xf]
        %v2462 = vld [vmem:[%s2460 + $0x4] sm:$0xf]
        %v2463 = vld [vmem:[%s2460 + $0x8] sm:$0xf]
        %v2464 = vld [vmem:[%s2460 + $0xc] sm:$0xf]
        %v2465 = vld [vmem:[%s2460 + $0x10] sm:$0xf]
        %v2466 = vld [vmem:[%s2460 + $0x14] sm:$0xf]
        %v2467 = vld [vmem:[%s2460 + $0x18] sm:$0xf]
        %v2468 = vld [vmem:[%s2460 + $0x1c] sm:$0xf]
        %v2469 = vld [vmem:[%s2460 + $0x20] sm:$0xf]
        %v2470 = vld [vmem:[%s2460 + $0x24] sm:$0xf]
        %v2471 = vld [vmem:[%s2460 + $0x28] sm:$0xf]
        %v2472 = vld [vmem:[%s2460 + $0x2c] sm:$0xf]
        %v2473 = vld [vmem:[%s2460 + $0x30] sm:$0xf]
        %v2474 = vld [vmem:[%s2460 + $0x34] sm:$0xf]
        %v2475 = vld [vmem:[%s2460 + $0x38] sm:$0xf]
        %v2476 = vld [vmem:[%s2460 + $0x3c] sm:$0xf]
        %v2493 = vunpack.c.l.b16 %v2461
        %v2494 = vunpack.c.l.b16 %v2462
        %v2495 = vunpack.c.l.b16 %v2463
        %v2496 = vunpack.c.l.b16 %v2464
        %v2497 = vunpack.c.l.b16 %v2465
        %v2498 = vunpack.c.l.b16 %v2466
        %v2499 = vunpack.c.l.b16 %v2467
        %v2500 = vunpack.c.l.b16 %v2468
        %v2501 = vunpack.c.l.b16 %v2469
        %v2502 = vunpack.c.l.b16 %v2470
        %v2503 = vunpack.c.l.b16 %v2471
        %v2504 = vunpack.c.l.b16 %v2472
        %v2505 = vunpack.c.l.b16 %v2473
        %v2506 = vunpack.c.l.b16 %v2474
        %v2507 = vunpack.c.l.b16 %v2475
        %v2508 = vunpack.c.l.b16 %v2476
        %v2509 = vpack.c.b16 %v2494, %v2493
        %v2510 = vpack.c.b16 %v2496, %v2495
        %v2511 = vpack.c.b16 %v2498, %v2497
        %v2512 = vpack.c.b16 %v2500, %v2499
        %v2513 = vpack.c.b16 %v2502, %v2501
        %v2514 = vpack.c.b16 %v2504, %v2503
        %v2515 = vpack.c.b16 %v2506, %v2505
        %v2516 = vpack.c.b16 %v2508, %v2507
        %2525 = vmatprep.subr.bf16.mxu0 0
        %2526 = vmatpush1.bf16.msra.mxu0 %v2509
        %2527 = vmatprep.subr.bf16.mxu0 0
        %2528 = vmatpush1.bf16.msra.mxu0 %v2510
        %2529 = vmatprep.subr.bf16.mxu0 0
        %2530 = vmatpush1.bf16.msra.mxu0 %v2511
        %2531 = vmatprep.subr.bf16.mxu0 0
        %2532 = vmatpush1.bf16.msra.mxu0 %v2512
        %2533 = vmatprep.subr.bf16.mxu0 0
        %2534 = vmatpush1.bf16.msra.mxu0 %v2513
        %2535 = vmatprep.subr.bf16.mxu0 0
        %2536 = vmatpush1.bf16.msra.mxu0 %v2514
        %2537 = vmatprep.subr.bf16.mxu0 0
        %2538 = vmatpush1.bf16.msra.mxu0 %v2515
        %2539 = vmatprep.subr.bf16.mxu0 0
        %2540 = vmatpush1.bf16.msra.mxu0 %v2516
        %2541 = vmatprep.subr.bf16.mxu0 0
        %2542 = vmatpush1.bf16.msra.mxu0 0
        %2543 = vmatprep.subr.bf16.mxu0 0
        %2544 = vmatpush1.bf16.msra.mxu0 0
        %2545 = vmatprep.subr.bf16.mxu0 0
        %2546 = vmatpush1.bf16.msra.mxu0 0
        %2547 = vmatprep.subr.bf16.mxu0 0
        %2548 = vmatpush1.bf16.msra.mxu0 0
        %2549 = vmatprep.subr.bf16.mxu0 0
        %2550 = vmatpush1.bf16.msra.mxu0 0
        %2551 = vmatprep.subr.bf16.mxu0 0
        %2552 = vmatpush1.bf16.msra.mxu0 0
        %2553 = vmatprep.subr.bf16.mxu0 0
        %2554 = vmatpush1.bf16.msra.mxu0 0
        %2555 = vmatprep.subr.bf16.mxu0 0
        %2556 = vmatpush1.bf16.msra.mxu0 0
        %2557 = vmatprep.mubr.bf16.mxu0 0
        %2558 = vmatmul.mubr.bf16.gmra.mrb[0].mxu0 %v2444
        %v2559 = vpop.f32.mrb[0].mxu0
        %v2560 = vadd.f32 0.0, %v2559
        %v2561 = vpop.f32.mrb[0].mxu0
        %v2562 = vpop.f32.mrb[0].mxu0
        %v2563 = vadd.f32 0.0, %v2562
        %v2564 = vpop.f32.mrb[0].mxu0
        %2565 = vmatprep.mubr.bf16.mxu0 0
        %2566 = vmatmul.mubr.bf16.gmra.mrb[0].mxu0 %v2445
        %v2567 = vpop.f32.mrb[0].mxu0
        %v2568 = vadd.f32 0.0, %v2567
        %v2569 = vpop.f32.mrb[0].mxu0
        %v2570 = vpop.f32.mrb[0].mxu0
        %v2571 = vadd.f32 0.0, %v2570
        %v2572 = vpop.f32.mrb[0].mxu0
        %2573 = vmatprep.mubr.bf16.mxu0 0
        %2574 = vmatmul.mubr.bf16.gmra.mrb[0].mxu0 %v2446
        %v2575 = vpop.f32.mrb[0].mxu0
        %v2576 = vadd.f32 0.0, %v2575
        %v2577 = vpop.f32.mrb[0].mxu0
        %v2578 = vpop.f32.mrb[0].mxu0
        %v2579 = vadd.f32 0.0, %v2578
        %v2580 = vpop.f32.mrb[0].mxu0
        %2581 = vmatprep.mubr.bf16.mxu0 0
        %2582 = vmatmul.mubr.bf16.gmra.mrb[0].mxu0 %v2447
        %v2583 = vpop.f32.mrb[0].mxu0
        %v2584 = vadd.f32 0.0, %v2583
        %v2585 = vpop.f32.mrb[0].mxu0
        %v2586 = vpop.f32.mrb[0].mxu0
        %v2587 = vadd.f32 0.0, %v2586
        %v2588 = vpop.f32.mrb[0].mxu0
        %2589 = vmatprep.mubr.bf16.mxu0 0
        %2590 = vmatmul.mubr.bf16.gmra.mrb[0].mxu0 %v2448
        %v2591 = vpop.f32.mrb[0].mxu0
        %v2592 = vadd.f32 0.0, %v2591
        %v2593 = vpop.f32.mrb[0].mxu0
        %v2594 = vpop.f32.mrb[0].mxu0
        %v2595 = vadd.f32 0.0, %v2594
        %v2596 = vpop.f32.mrb[0].mxu0
        %2597 = vmatprep.mubr.bf16.mxu0 0
        %2598 = vmatmul.mubr.bf16.gmra.mrb[0].mxu0 %v2449
        %v2599 = vpop.f32.mrb[0].mxu0
        %v2600 = vadd.f32 0.0, %v2599
        %v2601 = vpop.f32.mrb[0].mxu0
        %v2602 = vpop.f32.mrb[0].mxu0
        %v2603 = vadd.f32 0.0, %v2602
        %v2604 = vpop.f32.mrb[0].mxu0
        %2605 = vmatprep.mubr.bf16.mxu0 0
        %2606 = vmatmul.mubr.bf16.gmra.mrb[0].mxu0 %v2450
        %v2607 = vpop.f32.mrb[0].mxu0
        %v2608 = vadd.f32 0.0, %v2607
        %v2609 = vpop.f32.mrb[0].mxu0
        %v2610 = vpop.f32.mrb[0].mxu0
        %v2611 = vadd.f32 0.0, %v2610
        %v2612 = vpop.f32.mrb[0].mxu0
        %2613 = vmatprep.mubr.bf16.mxu0 0
        %2614 = vmatmul.mubr.bf16.gmra.mrb[0].mxu0 %v2451
        %v2615 = vpop.f32.mrb[0].mxu0
        %v2616 = vadd.f32 0.0, %v2615
        %v2617 = vpop.f32.mrb[0].mxu0
        %v2618 = vpop.f32.mrb[0].mxu0
        %v2619 = vadd.f32 0.0, %v2618
        %v2620 = vpop.f32.mrb[0].mxu0
        %2621 = vmatprep.mubr.bf16.mxu0 0
        %2622 = vmatmul.mubr.bf16.gmra.mrb[0].mxu0 %v2452
        %v2623 = vpop.f32.mrb[0].mxu0
        %v2624 = vadd.f32 0.0, %v2623
        %v2625 = vpop.f32.mrb[0].mxu0
        %v2626 = vpop.f32.mrb[0].mxu0
        %v2627 = vadd.f32 0.0, %v2626
        %v2628 = vpop.f32.mrb[0].mxu0
        %2629 = vmatprep.mubr.bf16.mxu0 0
        %2630 = vmatmul.mubr.bf16.gmra.mrb[0].mxu0 %v2453
        %v2631 = vpop.f32.mrb[0].mxu0
        %v2632 = vadd.f32 0.0, %v2631
        %v2633 = vpop.f32.mrb[0].mxu0
        %v2634 = vpop.f32.mrb[0].mxu0
        %v2635 = vadd.f32 0.0, %v2634
        %v2636 = vpop.f32.mrb[0].mxu0
        %2637 = vmatprep.mubr.bf16.mxu0 0
        %2638 = vmatmul.mubr.bf16.gmra.mrb[0].mxu0 %v2454
        %v2639 = vpop.f32.mrb[0].mxu0
        %v2640 = vadd.f32 0.0, %v2639
        %v2641 = vpop.f32.mrb[0].mxu0
        %v2642 = vpop.f32.mrb[0].mxu0
        %v2643 = vadd.f32 0.0, %v2642
        %v2644 = vpop.f32.mrb[0].mxu0
        %2645 = vmatprep.mubr.bf16.mxu0 0
        %2646 = vmatmul.mubr.bf16.gmra.mrb[0].mxu0 %v2455
        %v2647 = vpop.f32.mrb[0].mxu0
        %v2648 = vadd.f32 0.0, %v2647
        %v2649 = vpop.f32.mrb[0].mxu0
        %v2650 = vpop.f32.mrb[0].mxu0
        %v2651 = vadd.f32 0.0, %v2650
        %v2652 = vpop.f32.mrb[0].mxu0
        %2653 = vmatprep.mubr.bf16.mxu0 0
        %2654 = vmatmul.mubr.bf16.gmra.mrb[0].mxu0 %v2456
        %v2655 = vpop.f32.mrb[0].mxu0
        %v2656 = vadd.f32 0.0, %v2655
        %v2657 = vpop.f32.mrb[0].mxu0
        %v2658 = vpop.f32.mrb[0].mxu0
        %v2659 = vadd.f32 0.0, %v2658
        %v2660 = vpop.f32.mrb[0].mxu0
        %2661 = vmatprep.mubr.bf16.mxu0 0
        %2662 = vmatmul.mubr.bf16.gmra.mrb[0].mxu0 %v2457
        %v2663 = vpop.f32.mrb[0].mxu0
        %v2664 = vadd.f32 0.0, %v2663
        %v2665 = vpop.f32.mrb[0].mxu0
        %v2666 = vpop.f32.mrb[0].mxu0
        %v2667 = vadd.f32 0.0, %v2666
        %v2668 = vpop.f32.mrb[0].mxu0
        %2669 = vmatprep.mubr.bf16.mxu0 0
        %2670 = vmatmul.mubr.bf16.gmra.mrb[0].mxu0 %v2458
        %v2671 = vpop.f32.mrb[0].mxu0
        %v2672 = vadd.f32 0.0, %v2671
        %v2673 = vpop.f32.mrb[0].mxu0
        %v2674 = vpop.f32.mrb[0].mxu0
        %v2675 = vadd.f32 0.0, %v2674
        %v2676 = vpop.f32.mrb[0].mxu0
        %2677 = vmatprep.mubr.bf16.mxu0 0
        %2678 = vmatmul.mubr.bf16.gmra.mrb[0].mxu0 %v2459
        %v2679 = vpop.f32.mrb[0].mxu0
        %v2680 = vadd.f32 0.0, %v2679
        %v2681 = vpop.f32.mrb[0].mxu0
        %v2682 = vpop.f32.mrb[0].mxu0
        %v2683 = vadd.f32 0.0, %v2682
        %v2684 = vpop.f32.mrb[0].mxu0
        %2685 = vdwg.mxu0
        %v2686 = vadd.f32 %v2283, %v2560
        %v2687 = vadd.f32 %v2284, %v2563
        %v2688 = vadd.f32 %v2285, %v2568
        %v2689 = vadd.f32 %v2286, %v2571
        %v2690 = vadd.f32 %v2287, %v2576
        %v2691 = vadd.f32 %v2288, %v2579
        %v2692 = vadd.f32 %v2289, %v2584
        %v2693 = vadd.f32 %v2290, %v2587
        %v2694 = vadd.f32 %v2291, %v2592
        %v2695 = vadd.f32 %v2292, %v2595
        %v2696 = vadd.f32 %v2293, %v2600
        %v2697 = vadd.f32 %v2294, %v2603
        %v2698 = vadd.f32 %v2295, %v2608
        %v2699 = vadd.f32 %v2296, %v2611
        %v2700 = vadd.f32 %v2297, %v2616
        %v2701 = vadd.f32 %v2298, %v2619
        %v2702 = vadd.f32 %v2299, %v2624
        %v2703 = vadd.f32 %v2300, %v2627
        %v2704 = vadd.f32 %v2301, %v2632
        %v2705 = vadd.f32 %v2302, %v2635
        %v2706 = vadd.f32 %v2303, %v2640
        %v2707 = vadd.f32 %v2304, %v2643
        %v2708 = vadd.f32 %v2305, %v2648
        %v2709 = vadd.f32 %v2306, %v2651
        %v2710 = vadd.f32 %v2307, %v2656
        %v2711 = vadd.f32 %v2308, %v2659
        %v2712 = vadd.f32 %v2309, %v2664
        %v2713 = vadd.f32 %v2310, %v2667
        %v2714 = vadd.f32 %v2311, %v2672
        %v2715 = vadd.f32 %v2312, %v2675
        %v2716 = vadd.f32 %v2313, %v2680
        %v2717 = vadd.f32 %v2314, %v2683
        %v2718 = vpack.c.bf16 %v2317, %v2316
        %v2719 = vpack.c.bf16 %v2319, %v2318
        %v2720 = vpack.c.bf16 %v2321, %v2320
        %v2721 = vpack.c.bf16 %v2323, %v2322
        %v2722 = vpack.c.bf16 %v2325, %v2324
        %v2723 = vpack.c.bf16 %v2327, %v2326
        %v2724 = vpack.c.bf16 %v2329, %v2328
        %v2725 = vpack.c.bf16 %v2331, %v2330
        %v2726 = vpack.c.bf16 %v2333, %v2332
        %v2727 = vpack.c.bf16 %v2335, %v2334
        %v2728 = vpack.c.bf16 %v2337, %v2336
        %v2729 = vpack.c.bf16 %v2339, %v2338
        %v2730 = vpack.c.bf16 %v2341, %v2340
        %v2731 = vpack.c.bf16 %v2343, %v2342
        %v2732 = vpack.c.bf16 %v2345, %v2344
        %v2733 = vpack.c.bf16 %v2347, %v2346
        %s2734 = scalar_lea.vmem [#allocation6], 448
        %v2735 = vld [vmem:[%s2734] sm:$0xf]
        %v2736 = vld [vmem:[%s2734 + $0x4] sm:$0xf]
        %v2737 = vld [vmem:[%s2734 + $0x8] sm:$0xf]
        %v2738 = vld [vmem:[%s2734 + $0xc] sm:$0xf]
        %v2739 = vld [vmem:[%s2734 + $0x10] sm:$0xf]
        %v2740 = vld [vmem:[%s2734 + $0x14] sm:$0xf]
        %v2741 = vld [vmem:[%s2734 + $0x18] sm:$0xf]
        %v2742 = vld [vmem:[%s2734 + $0x1c] sm:$0xf]
        %v2743 = vld [vmem:[%s2734 + $0x20] sm:$0xf]
        %v2744 = vld [vmem:[%s2734 + $0x24] sm:$0xf]
        %v2745 = vld [vmem:[%s2734 + $0x28] sm:$0xf]
        %v2746 = vld [vmem:[%s2734 + $0x2c] sm:$0xf]
        %v2747 = vld [vmem:[%s2734 + $0x30] sm:$0xf]
        %v2748 = vld [vmem:[%s2734 + $0x34] sm:$0xf]
        %v2749 = vld [vmem:[%s2734 + $0x38] sm:$0xf]
        %v2750 = vld [vmem:[%s2734 + $0x3c] sm:$0xf]
        %v2767 = vunpack.c.l.b16 %v2735
        %v2768 = vunpack.c.l.b16 %v2736
        %v2769 = vunpack.c.l.b16 %v2737
        %v2770 = vunpack.c.l.b16 %v2738
        %v2771 = vunpack.c.l.b16 %v2739
        %v2772 = vunpack.c.l.b16 %v2740
        %v2773 = vunpack.c.l.b16 %v2741
        %v2774 = vunpack.c.l.b16 %v2742
        %v2775 = vunpack.c.l.b16 %v2743
        %v2776 = vunpack.c.l.b16 %v2744
        %v2777 = vunpack.c.l.b16 %v2745
        %v2778 = vunpack.c.l.b16 %v2746
        %v2779 = vunpack.c.l.b16 %v2747
        %v2780 = vunpack.c.l.b16 %v2748
        %v2781 = vunpack.c.l.b16 %v2749
        %v2782 = vunpack.c.l.b16 %v2750
        %v2783 = vpack.c.b16 %v2768, %v2767
        %v2784 = vpack.c.b16 %v2770, %v2769
        %v2785 = vpack.c.b16 %v2772, %v2771
        %v2786 = vpack.c.b16 %v2774, %v2773
        %v2787 = vpack.c.b16 %v2776, %v2775
        %v2788 = vpack.c.b16 %v2778, %v2777
        %v2789 = vpack.c.b16 %v2780, %v2779
        %v2790 = vpack.c.b16 %v2782, %v2781
        %2799 = vmatprep.subr.bf16.mxu0 0
        %2800 = vmatpush1.bf16.msra.mxu0 %v2783
        %2801 = vmatprep.subr.bf16.mxu0 0
        %2802 = vmatpush1.bf16.msra.mxu0 %v2784
        %2803 = vmatprep.subr.bf16.mxu0 0
        %2804 = vmatpush1.bf16.msra.mxu0 %v2785
        %2805 = vmatprep.subr.bf16.mxu0 0
        %2806 = vmatpush1.bf16.msra.mxu0 %v2786
        %2807 = vmatprep.subr.bf16.mxu0 0
        %2808 = vmatpush1.bf16.msra.mxu0 %v2787
        %2809 = vmatprep.subr.bf16.mxu0 0
        %2810 = vmatpush1.bf16.msra.mxu0 %v2788
        %2811 = vmatprep.subr.bf16.mxu0 0
        %2812 = vmatpush1.bf16.msra.mxu0 %v2789
        %2813 = vmatprep.subr.bf16.mxu0 0
        %2814 = vmatpush1.bf16.msra.mxu0 %v2790
        %2815 = vmatprep.subr.bf16.mxu0 0
        %2816 = vmatpush1.bf16.msra.mxu0 0
        %2817 = vmatprep.subr.bf16.mxu0 0
        %2818 = vmatpush1.bf16.msra.mxu0 0
        %2819 = vmatprep.subr.bf16.mxu0 0
        %2820 = vmatpush1.bf16.msra.mxu0 0
        %2821 = vmatprep.subr.bf16.mxu0 0
        %2822 = vmatpush1.bf16.msra.mxu0 0
        %2823 = vmatprep.subr.bf16.mxu0 0
        %2824 = vmatpush1.bf16.msra.mxu0 0
        %2825 = vmatprep.subr.bf16.mxu0 0
        %2826 = vmatpush1.bf16.msra.mxu0 0
        %2827 = vmatprep.subr.bf16.mxu0 0
        %2828 = vmatpush1.bf16.msra.mxu0 0
        %2829 = vmatprep.subr.bf16.mxu0 0
        %2830 = vmatpush1.bf16.msra.mxu0 0
        %2831 = vmatprep.mubr.bf16.mxu0 0
        %2832 = vmatmul.mubr.bf16.gmra.mrb[0].mxu0 %v2718
        %v2833 = vpop.f32.mrb[0].mxu0
        %v2834 = vadd.f32 0.0, %v2833
        %v2835 = vpop.f32.mrb[0].mxu0
        %v2836 = vpop.f32.mrb[0].mxu0
        %v2837 = vadd.f32 0.0, %v2836
        %v2838 = vpop.f32.mrb[0].mxu0
        %2839 = vmatprep.mubr.bf16.mxu0 0
        %2840 = vmatmul.mubr.bf16.gmra.mrb[0].mxu0 %v2719
        %v2841 = vpop.f32.mrb[0].mxu0
        %v2842 = vadd.f32 0.0, %v2841
        %v2843 = vpop.f32.mrb[0].mxu0
        %v2844 = vpop.f32.mrb[0].mxu0
        %v2845 = vadd.f32 0.0, %v2844
        %v2846 = vpop.f32.mrb[0].mxu0
        %2847 = vmatprep.mubr.bf16.mxu0 0
        %2848 = vmatmul.mubr.bf16.gmra.mrb[0].mxu0 %v2720
        %v2849 = vpop.f32.mrb[0].mxu0
        %v2850 = vadd.f32 0.0, %v2849
        %v2851 = vpop.f32.mrb[0].mxu0
        %v2852 = vpop.f32.mrb[0].mxu0
        %v2853 = vadd.f32 0.0, %v2852
        %v2854 = vpop.f32.mrb[0].mxu0
        %2855 = vmatprep.mubr.bf16.mxu0 0
        %2856 = vmatmul.mubr.bf16.gmra.mrb[0].mxu0 %v2721
        %v2857 = vpop.f32.mrb[0].mxu0
        %v2858 = vadd.f32 0.0, %v2857
        %v2859 = vpop.f32.mrb[0].mxu0
        %v2860 = vpop.f32.mrb[0].mxu0
        %v2861 = vadd.f32 0.0, %v2860
        %v2862 = vpop.f32.mrb[0].mxu0
        %2863 = vmatprep.mubr.bf16.mxu0 0
        %2864 = vmatmul.mubr.bf16.gmra.mrb[0].mxu0 %v2722
        %v2865 = vpop.f32.mrb[0].mxu0
        %v2866 = vadd.f32 0.0, %v2865
        %v2867 = vpop.f32.mrb[0].mxu0
        %v2868 = vpop.f32.mrb[0].mxu0
        %v2869 = vadd.f32 0.0, %v2868
        %v2870 = vpop.f32.mrb[0].mxu0
        %2871 = vmatprep.mubr.bf16.mxu0 0
        %2872 = vmatmul.mubr.bf16.gmra.mrb[0].mxu0 %v2723
        %v2873 = vpop.f32.mrb[0].mxu0
        %v2874 = vadd.f32 0.0, %v2873
        %v2875 = vpop.f32.mrb[0].mxu0
        %v2876 = vpop.f32.mrb[0].mxu0
        %v2877 = vadd.f32 0.0, %v2876
        %v2878 = vpop.f32.mrb[0].mxu0
        %2879 = vmatprep.mubr.bf16.mxu0 0
        %2880 = vmatmul.mubr.bf16.gmra.mrb[0].mxu0 %v2724
        %v2881 = vpop.f32.mrb[0].mxu0
        %v2882 = vadd.f32 0.0, %v2881
        %v2883 = vpop.f32.mrb[0].mxu0
        %v2884 = vpop.f32.mrb[0].mxu0
        %v2885 = vadd.f32 0.0, %v2884
        %v2886 = vpop.f32.mrb[0].mxu0
        %2887 = vmatprep.mubr.bf16.mxu0 0
        %2888 = vmatmul.mubr.bf16.gmra.mrb[0].mxu0 %v2725
        %v2889 = vpop.f32.mrb[0].mxu0
        %v2890 = vadd.f32 0.0, %v2889
        %v2891 = vpop.f32.mrb[0].mxu0
        %v2892 = vpop.f32.mrb[0].mxu0
        %v2893 = vadd.f32 0.0, %v2892
        %v2894 = vpop.f32.mrb[0].mxu0
        %2895 = vmatprep.mubr.bf16.mxu0 0
        %2896 = vmatmul.mubr.bf16.gmra.mrb[0].mxu0 %v2726
        %v2897 = vpop.f32.mrb[0].mxu0
        %v2898 = vadd.f32 0.0, %v2897
        %v2899 = vpop.f32.mrb[0].mxu0
        %v2900 = vpop.f32.mrb[0].mxu0
        %v2901 = vadd.f32 0.0, %v2900
        %v2902 = vpop.f32.mrb[0].mxu0
        %2903 = vmatprep.mubr.bf16.mxu0 0
        %2904 = vmatmul.mubr.bf16.gmra.mrb[0].mxu0 %v2727
        %v2905 = vpop.f32.mrb[0].mxu0
        %v2906 = vadd.f32 0.0, %v2905
        %v2907 = vpop.f32.mrb[0].mxu0
        %v2908 = vpop.f32.mrb[0].mxu0
        %v2909 = vadd.f32 0.0, %v2908
        %v2910 = vpop.f32.mrb[0].mxu0
        %2911 = vmatprep.mubr.bf16.mxu0 0
        %2912 = vmatmul.mubr.bf16.gmra.mrb[0].mxu0 %v2728
        %v2913 = vpop.f32.mrb[0].mxu0
        %v2914 = vadd.f32 0.0, %v2913
        %v2915 = vpop.f32.mrb[0].mxu0
        %v2916 = vpop.f32.mrb[0].mxu0
        %v2917 = vadd.f32 0.0, %v2916
        %v2918 = vpop.f32.mrb[0].mxu0
        %2919 = vmatprep.mubr.bf16.mxu0 0
        %2920 = vmatmul.mubr.bf16.gmra.mrb[0].mxu0 %v2729
        %v2921 = vpop.f32.mrb[0].mxu0
        %v2922 = vadd.f32 0.0, %v2921
        %v2923 = vpop.f32.mrb[0].mxu0
        %v2924 = vpop.f32.mrb[0].mxu0
        %v2925 = vadd.f32 0.0, %v2924
        %v2926 = vpop.f32.mrb[0].mxu0
        %2927 = vmatprep.mubr.bf16.mxu0 0
        %2928 = vmatmul.mubr.bf16.gmra.mrb[0].mxu0 %v2730
        %v2929 = vpop.f32.mrb[0].mxu0
        %v2930 = vadd.f32 0.0, %v2929
        %v2931 = vpop.f32.mrb[0].mxu0
        %v2932 = vpop.f32.mrb[0].mxu0
        %v2933 = vadd.f32 0.0, %v2932
        %v2934 = vpop.f32.mrb[0].mxu0
        %2935 = vmatprep.mubr.bf16.mxu0 0
        %2936 = vmatmul.mubr.bf16.gmra.mrb[0].mxu0 %v2731
        %v2937 = vpop.f32.mrb[0].mxu0
        %v2938 = vadd.f32 0.0, %v2937
        %v2939 = vpop.f32.mrb[0].mxu0
        %v2940 = vpop.f32.mrb[0].mxu0
        %v2941 = vadd.f32 0.0, %v2940
        %v2942 = vpop.f32.mrb[0].mxu0
        %2943 = vmatprep.mubr.bf16.mxu0 0
        %2944 = vmatmul.mubr.bf16.gmra.mrb[0].mxu0 %v2732
        %v2945 = vpop.f32.mrb[0].mxu0
        %v2946 = vadd.f32 0.0, %v2945
        %v2947 = vpop.f32.mrb[0].mxu0
        %v2948 = vpop.f32.mrb[0].mxu0
        %v2949 = vadd.f32 0.0, %v2948
        %v2950 = vpop.f32.mrb[0].mxu0
        %2951 = vmatprep.mubr.bf16.mxu0 0
        %2952 = vmatmul.mubr.bf16.gmra.mrb[0].mxu0 %v2733
        %v2953 = vpop.f32.mrb[0].mxu0
        %v2954 = vadd.f32 0.0, %v2953
        %v2955 = vpop.f32.mrb[0].mxu0
        %v2956 = vpop.f32.mrb[0].mxu0
        %v2957 = vadd.f32 0.0, %v2956
        %v2958 = vpop.f32.mrb[0].mxu0
        %2959 = vdwg.mxu0
        %v2960 = vadd.f32 %v2686, %v2834
        %v2961 = vadd.f32 %v2687, %v2837
        %v2962 = vadd.f32 %v2688, %v2842
        %v2963 = vadd.f32 %v2689, %v2845
        %v2964 = vadd.f32 %v2690, %v2850
        %v2965 = vadd.f32 %v2691, %v2853
        %v2966 = vadd.f32 %v2692, %v2858
        %v2967 = vadd.f32 %v2693, %v2861
        %v2968 = vadd.f32 %v2694, %v2866
        %v2969 = vadd.f32 %v2695, %v2869
        %v2970 = vadd.f32 %v2696, %v2874
        %v2971 = vadd.f32 %v2697, %v2877
        %v2972 = vadd.f32 %v2698, %v2882
        %v2973 = vadd.f32 %v2699, %v2885
        %v2974 = vadd.f32 %v2700, %v2890
        %v2975 = vadd.f32 %v2701, %v2893
        %v2976 = vadd.f32 %v2702, %v2898
        %v2977 = vadd.f32 %v2703, %v2901
        %v2978 = vadd.f32 %v2704, %v2906
        %v2979 = vadd.f32 %v2705, %v2909
        %v2980 = vadd.f32 %v2706, %v2914
        %v2981 = vadd.f32 %v2707, %v2917
        %v2982 = vadd.f32 %v2708, %v2922
        %v2983 = vadd.f32 %v2709, %v2925
        %v2984 = vadd.f32 %v2710, %v2930
        %v2985 = vadd.f32 %v2711, %v2933
        %v2986 = vadd.f32 %v2712, %v2938
        %v2987 = vadd.f32 %v2713, %v2941
        %v2988 = vadd.f32 %v2714, %v2946
        %v2989 = vadd.f32 %v2715, %v2949
        %v2990 = vadd.f32 %v2716, %v2954
        %v2991 = vadd.f32 %v2717, %v2957
        %v2992 = vrot.slane %v2316, 1
        %v2993 = vrot.slane %v2317, 1
        %v2994 = vrot.slane %v2318, 1
        %v2995 = vrot.slane %v2319, 1
        %v2996 = vrot.slane %v2320, 1
        %v2997 = vrot.slane %v2321, 1
        %v2998 = vrot.slane %v2322, 1
        %v2999 = vrot.slane %v2323, 1
        %v3000 = vrot.slane %v2324, 1
        %v3001 = vrot.slane %v2325, 1
        %v3002 = vrot.slane %v2326, 1
        %v3003 = vrot.slane %v2327, 1
        %v3004 = vrot.slane %v2328, 1
        %v3005 = vrot.slane %v2329, 1
        %v3006 = vrot.slane %v2330, 1
        %v3007 = vrot.slane %v2331, 1
        %v3008 = vrot.slane %v2332, 1
        %v3009 = vrot.slane %v2333, 1
        %v3010 = vrot.slane %v2334, 1
        %v3011 = vrot.slane %v2335, 1
        %v3012 = vrot.slane %v2336, 1
        %v3013 = vrot.slane %v2337, 1
        %v3014 = vrot.slane %v2338, 1
        %v3015 = vrot.slane %v2339, 1
        %v3016 = vrot.slane %v2340, 1
        %v3017 = vrot.slane %v2341, 1
        %v3018 = vrot.slane %v2342, 1
        %v3019 = vrot.slane %v2343, 1
        %v3020 = vrot.slane %v2344, 1
        %v3021 = vrot.slane %v2345, 1
        %v3022 = vrot.slane %v2346, 1
        %v3023 = vrot.slane %v2347, 1
        %v3024 = vsel %vm930, %v3022, %v3023
        %v3025 = vsel %vm930, %v3021, %v3022
        %v3026 = vsel %vm930, %v3020, %v3021
        %v3027 = vsel %vm930, %v3019, %v3020
        %v3028 = vsel %vm930, %v3018, %v3019
        %v3029 = vsel %vm930, %v3017, %v3018
        %v3030 = vsel %vm930, %v3016, %v3017
        %v3031 = vsel %vm930, %v3015, %v3016
        %v3032 = vsel %vm930, %v3014, %v3015
        %v3033 = vsel %vm930, %v3013, %v3014
        %v3034 = vsel %vm930, %v3012, %v3013
        %v3035 = vsel %vm930, %v3011, %v3012
        %v3036 = vsel %vm930, %v3010, %v3011
        %v3037 = vsel %vm930, %v3009, %v3010
        %v3038 = vsel %vm930, %v3008, %v3009
        %v3039 = vsel %vm930, %v3007, %v3008
        %v3040 = vsel %vm930, %v3006, %v3007
        %v3041 = vsel %vm930, %v3005, %v3006
        %v3042 = vsel %vm930, %v3004, %v3005
        %v3043 = vsel %vm930, %v3003, %v3004
        %v3044 = vsel %vm930, %v3002, %v3003
        %v3045 = vsel %vm930, %v3001, %v3002
        %v3046 = vsel %vm930, %v3000, %v3001
        %v3047 = vsel %vm930, %v2999, %v3000
        %v3048 = vsel %vm930, %v2998, %v2999
        %v3049 = vsel %vm930, %v2997, %v2998
        %v3050 = vsel %vm930, %v2996, %v2997
        %v3051 = vsel %vm930, %v2995, %v2996
        %v3052 = vsel %vm930, %v2994, %v2995
        %v3053 = vsel %vm930, %v2993, %v2994
        %v3054 = vsel %vm930, %v2992, %v2993
        %v3055 = vsel %vm930, %v3023, %v2992
        %v3056 = vmul.f32 %v3054, %v219
        %v3057 = vmul.f32 %v3053, %v220
        %v3058 = vmul.f32 %v3052, %v219
        %v3059 = vmul.f32 %v3051, %v220
        %v3060 = vmul.f32 %v3050, %v219
        %v3061 = vmul.f32 %v3049, %v220
        %v3062 = vmul.f32 %v3048, %v219
        %v3063 = vmul.f32 %v3047, %v220
        %v3064 = vmul.f32 %v3046, %v219
        %v3065 = vmul.f32 %v3045, %v220
        %v3066 = vmul.f32 %v3044, %v219
        %v3067 = vmul.f32 %v3043, %v220
        %v3068 = vmul.f32 %v3042, %v219
        %v3069 = vmul.f32 %v3041, %v220
        %v3070 = vmul.f32 %v3040, %v219
        %v3071 = vmul.f32 %v3039, %v220
        %v3072 = vmul.f32 %v3038, %v219
        %v3073 = vmul.f32 %v3037, %v220
        %v3074 = vmul.f32 %v3036, %v219
        %v3075 = vmul.f32 %v3035, %v220
        %v3076 = vmul.f32 %v3034, %v219
        %v3077 = vmul.f32 %v3033, %v220
        %v3078 = vmul.f32 %v3032, %v219
        %v3079 = vmul.f32 %v3031, %v220
        %v3080 = vmul.f32 %v3030, %v219
        %v3081 = vmul.f32 %v3029, %v220
        %v3082 = vmul.f32 %v3028, %v219
        %v3083 = vmul.f32 %v3027, %v220
        %v3084 = vmul.f32 %v3026, %v219
        %v3085 = vmul.f32 %v3025, %v220
        %v3086 = vmul.f32 %v3024, %v219
        %v3087 = vmul.f32 %v3055, %v220
        %v3088 = vpack.c.bf16 %v3057, %v3056
        %v3089 = vpack.c.bf16 %v3059, %v3058
        %v3090 = vpack.c.bf16 %v3061, %v3060
        %v3091 = vpack.c.bf16 %v3063, %v3062
        %v3092 = vpack.c.bf16 %v3065, %v3064
        %v3093 = vpack.c.bf16 %v3067, %v3066
        %v3094 = vpack.c.bf16 %v3069, %v3068
        %v3095 = vpack.c.bf16 %v3071, %v3070
        %v3096 = vpack.c.bf16 %v3073, %v3072
        %v3097 = vpack.c.bf16 %v3075, %v3074
        %v3098 = vpack.c.bf16 %v3077, %v3076
        %v3099 = vpack.c.bf16 %v3079, %v3078
        %v3100 = vpack.c.bf16 %v3081, %v3080
        %v3101 = vpack.c.bf16 %v3083, %v3082
        %v3102 = vpack.c.bf16 %v3085, %v3084
        %v3103 = vpack.c.bf16 %v3087, %v3086
        %s3104 = scalar_lea.vmem [#allocation6], 512
        %v3105 = vld [vmem:[%s3104] sm:$0xf]
        %v3106 = vld [vmem:[%s3104 + $0x4] sm:$0xf]
        %v3107 = vld [vmem:[%s3104 + $0x8] sm:$0xf]
        %v3108 = vld [vmem:[%s3104 + $0xc] sm:$0xf]
        %v3109 = vld [vmem:[%s3104 + $0x10] sm:$0xf]
        %v3110 = vld [vmem:[%s3104 + $0x14] sm:$0xf]
        %v3111 = vld [vmem:[%s3104 + $0x18] sm:$0xf]
        %v3112 = vld [vmem:[%s3104 + $0x1c] sm:$0xf]
        %v3113 = vld [vmem:[%s3104 + $0x20] sm:$0xf]
        %v3114 = vld [vmem:[%s3104 + $0x24] sm:$0xf]
        %v3115 = vld [vmem:[%s3104 + $0x28] sm:$0xf]
        %v3116 = vld [vmem:[%s3104 + $0x2c] sm:$0xf]
        %v3117 = vld [vmem:[%s3104 + $0x30] sm:$0xf]
        %v3118 = vld [vmem:[%s3104 + $0x34] sm:$0xf]
        %v3119 = vld [vmem:[%s3104 + $0x38] sm:$0xf]
        %v3120 = vld [vmem:[%s3104 + $0x3c] sm:$0xf]
        %v3137 = vunpack.c.l.b16 %v3105
        %v3138 = vunpack.c.l.b16 %v3106
        %v3139 = vunpack.c.l.b16 %v3107
        %v3140 = vunpack.c.l.b16 %v3108
        %v3141 = vunpack.c.l.b16 %v3109
        %v3142 = vunpack.c.l.b16 %v3110
        %v3143 = vunpack.c.l.b16 %v3111
        %v3144 = vunpack.c.l.b16 %v3112
        %v3145 = vunpack.c.l.b16 %v3113
        %v3146 = vunpack.c.l.b16 %v3114
        %v3147 = vunpack.c.l.b16 %v3115
        %v3148 = vunpack.c.l.b16 %v3116
        %v3149 = vunpack.c.l.b16 %v3117
        %v3150 = vunpack.c.l.b16 %v3118
        %v3151 = vunpack.c.l.b16 %v3119
        %v3152 = vunpack.c.l.b16 %v3120
        %v3153 = vpack.c.b16 %v3138, %v3137
        %v3154 = vpack.c.b16 %v3140, %v3139
        %v3155 = vpack.c.b16 %v3142, %v3141
        %v3156 = vpack.c.b16 %v3144, %v3143
        %v3157 = vpack.c.b16 %v3146, %v3145
        %v3158 = vpack.c.b16 %v3148, %v3147
        %v3159 = vpack.c.b16 %v3150, %v3149
        %v3160 = vpack.c.b16 %v3152, %v3151
        %3169 = vmatprep.subr.bf16.mxu0 0
        %3170 = vmatpush1.bf16.msra.mxu0 %v3153
        %3171 = vmatprep.subr.bf16.mxu0 0
        %3172 = vmatpush1.bf16.msra.mxu0 %v3154
        %3173 = vmatprep.subr.bf16.mxu0 0
        %3174 = vmatpush1.bf16.msra.mxu0 %v3155
        %3175 = vmatprep.subr.bf16.mxu0 0
        %3176 = vmatpush1.bf16.msra.mxu0 %v3156
        %3177 = vmatprep.subr.bf16.mxu0 0
        %3178 = vmatpush1.bf16.msra.mxu0 %v3157
        %3179 = vmatprep.subr.bf16.mxu0 0
        %3180 = vmatpush1.bf16.msra.mxu0 %v3158
        %3181 = vmatprep.subr.bf16.mxu0 0
        %3182 = vmatpush1.bf16.msra.mxu0 %v3159
        %3183 = vmatprep.subr.bf16.mxu0 0
        %3184 = vmatpush1.bf16.msra.mxu0 %v3160
        %3185 = vmatprep.subr.bf16.mxu0 0
        %3186 = vmatpush1.bf16.msra.mxu0 0
        %3187 = vmatprep.subr.bf16.mxu0 0
        %3188 = vmatpush1.bf16.msra.mxu0 0
        %3189 = vmatprep.subr.bf16.mxu0 0
        %3190 = vmatpush1.bf16.msra.mxu0 0
        %3191 = vmatprep.subr.bf16.mxu0 0
        %3192 = vmatpush1.bf16.msra.mxu0 0
        %3193 = vmatprep.subr.bf16.mxu0 0
        %3194 = vmatpush1.bf16.msra.mxu0 0
        %3195 = vmatprep.subr.bf16.mxu0 0
        %3196 = vmatpush1.bf16.msra.mxu0 0
        %3197 = vmatprep.subr.bf16.mxu0 0
        %3198 = vmatpush1.bf16.msra.mxu0 0
        %3199 = vmatprep.subr.bf16.mxu0 0
        %3200 = vmatpush1.bf16.msra.mxu0 0
        %3201 = vmatprep.mubr.bf16.mxu0 0
        %3202 = vmatmul.mubr.bf16.gmra.mrb[0].mxu0 %v3088
        %v3203 = vpop.f32.mrb[0].mxu0
        %v3204 = vadd.f32 0.0, %v3203
        %v3205 = vpop.f32.mrb[0].mxu0
        %v3206 = vpop.f32.mrb[0].mxu0
        %v3207 = vadd.f32 0.0, %v3206
        %v3208 = vpop.f32.mrb[0].mxu0
        %3209 = vmatprep.mubr.bf16.mxu0 0
        %3210 = vmatmul.mubr.bf16.gmra.mrb[0].mxu0 %v3089
        %v3211 = vpop.f32.mrb[0].mxu0
        %v3212 = vadd.f32 0.0, %v3211
        %v3213 = vpop.f32.mrb[0].mxu0
        %v3214 = vpop.f32.mrb[0].mxu0
        %v3215 = vadd.f32 0.0, %v3214
        %v3216 = vpop.f32.mrb[0].mxu0
        %3217 = vmatprep.mubr.bf16.mxu0 0
        %3218 = vmatmul.mubr.bf16.gmra.mrb[0].mxu0 %v3090
        %v3219 = vpop.f32.mrb[0].mxu0
        %v3220 = vadd.f32 0.0, %v3219
        %v3221 = vpop.f32.mrb[0].mxu0
        %v3222 = vpop.f32.mrb[0].mxu0
        %v3223 = vadd.f32 0.0, %v3222
        %v3224 = vpop.f32.mrb[0].mxu0
        %3225 = vmatprep.mubr.bf16.mxu0 0
        %3226 = vmatmul.mubr.bf16.gmra.mrb[0].mxu0 %v3091
        %v3227 = vpop.f32.mrb[0].mxu0
        %v3228 = vadd.f32 0.0, %v3227
        %v3229 = vpop.f32.mrb[0].mxu0
        %v3230 = vpop.f32.mrb[0].mxu0
        %v3231 = vadd.f32 0.0, %v3230
        %v3232 = vpop.f32.mrb[0].mxu0
        %3233 = vmatprep.mubr.bf16.mxu0 0
        %3234 = vmatmul.mubr.bf16.gmra.mrb[0].mxu0 %v3092
        %v3235 = vpop.f32.mrb[0].mxu0
        %v3236 = vadd.f32 0.0, %v3235
        %v3237 = vpop.f32.mrb[0].mxu0
        %v3238 = vpop.f32.mrb[0].mxu0
        %v3239 = vadd.f32 0.0, %v3238
        %v3240 = vpop.f32.mrb[0].mxu0
        %3241 = vmatprep.mubr.bf16.mxu0 0
        %3242 = vmatmul.mubr.bf16.gmra.mrb[0].mxu0 %v3093
        %v3243 = vpop.f32.mrb[0].mxu0
        %v3244 = vadd.f32 0.0, %v3243
        %v3245 = vpop.f32.mrb[0].mxu0
        %v3246 = vpop.f32.mrb[0].mxu0
        %v3247 = vadd.f32 0.0, %v3246
        %v3248 = vpop.f32.mrb[0].mxu0
        %3249 = vmatprep.mubr.bf16.mxu0 0
        %3250 = vmatmul.mubr.bf16.gmra.mrb[0].mxu0 %v3094
        %v3251 = vpop.f32.mrb[0].mxu0
        %v3252 = vadd.f32 0.0, %v3251
        %v3253 = vpop.f32.mrb[0].mxu0
        %v3254 = vpop.f32.mrb[0].mxu0
        %v3255 = vadd.f32 0.0, %v3254
        %v3256 = vpop.f32.mrb[0].mxu0
        %3257 = vmatprep.mubr.bf16.mxu0 0
        %3258 = vmatmul.mubr.bf16.gmra.mrb[0].mxu0 %v3095
        %v3259 = vpop.f32.mrb[0].mxu0
        %v3260 = vadd.f32 0.0, %v3259
        %v3261 = vpop.f32.mrb[0].mxu0
        %v3262 = vpop.f32.mrb[0].mxu0
        %v3263 = vadd.f32 0.0, %v3262
        %v3264 = vpop.f32.mrb[0].mxu0
        %3265 = vmatprep.mubr.bf16.mxu0 0
        %3266 = vmatmul.mubr.bf16.gmra.mrb[0].mxu0 %v3096
        %v3267 = vpop.f32.mrb[0].mxu0
        %v3268 = vadd.f32 0.0, %v3267
        %v3269 = vpop.f32.mrb[0].mxu0
        %v3270 = vpop.f32.mrb[0].mxu0
        %v3271 = vadd.f32 0.0, %v3270
        %v3272 = vpop.f32.mrb[0].mxu0
        %3273 = vmatprep.mubr.bf16.mxu0 0
        %3274 = vmatmul.mubr.bf16.gmra.mrb[0].mxu0 %v3097
        %v3275 = vpop.f32.mrb[0].mxu0
        %v3276 = vadd.f32 0.0, %v3275
        %v3277 = vpop.f32.mrb[0].mxu0
        %v3278 = vpop.f32.mrb[0].mxu0
        %v3279 = vadd.f32 0.0, %v3278
        %v3280 = vpop.f32.mrb[0].mxu0
        %3281 = vmatprep.mubr.bf16.mxu0 0
        %3282 = vmatmul.mubr.bf16.gmra.mrb[0].mxu0 %v3098
        %v3283 = vpop.f32.mrb[0].mxu0
        %v3284 = vadd.f32 0.0, %v3283
        %v3285 = vpop.f32.mrb[0].mxu0
        %v3286 = vpop.f32.mrb[0].mxu0
        %v3287 = vadd.f32 0.0, %v3286
        %v3288 = vpop.f32.mrb[0].mxu0
        %3289 = vmatprep.mubr.bf16.mxu0 0
        %3290 = vmatmul.mubr.bf16.gmra.mrb[0].mxu0 %v3099
        %v3291 = vpop.f32.mrb[0].mxu0
        %v3292 = vadd.f32 0.0, %v3291
        %v3293 = vpop.f32.mrb[0].mxu0
        %v3294 = vpop.f32.mrb[0].mxu0
        %v3295 = vadd.f32 0.0, %v3294
        %v3296 = vpop.f32.mrb[0].mxu0
        %3297 = vmatprep.mubr.bf16.mxu0 0
        %3298 = vmatmul.mubr.bf16.gmra.mrb[0].mxu0 %v3100
        %v3299 = vpop.f32.mrb[0].mxu0
        %v3300 = vadd.f32 0.0, %v3299
        %v3301 = vpop.f32.mrb[0].mxu0
        %v3302 = vpop.f32.mrb[0].mxu0
        %v3303 = vadd.f32 0.0, %v3302
        %v3304 = vpop.f32.mrb[0].mxu0
        %3305 = vmatprep.mubr.bf16.mxu0 0
        %3306 = vmatmul.mubr.bf16.gmra.mrb[0].mxu0 %v3101
        %v3307 = vpop.f32.mrb[0].mxu0
        %v3308 = vadd.f32 0.0, %v3307
        %v3309 = vpop.f32.mrb[0].mxu0
        %v3310 = vpop.f32.mrb[0].mxu0
        %v3311 = vadd.f32 0.0, %v3310
        %v3312 = vpop.f32.mrb[0].mxu0
        %3313 = vmatprep.mubr.bf16.mxu0 0
        %3314 = vmatmul.mubr.bf16.gmra.mrb[0].mxu0 %v3102
        %v3315 = vpop.f32.mrb[0].mxu0
        %v3316 = vadd.f32 0.0, %v3315
        %v3317 = vpop.f32.mrb[0].mxu0
        %v3318 = vpop.f32.mrb[0].mxu0
        %v3319 = vadd.f32 0.0, %v3318
        %v3320 = vpop.f32.mrb[0].mxu0
        %3321 = vmatprep.mubr.bf16.mxu0 0
        %3322 = vmatmul.mubr.bf16.gmra.mrb[0].mxu0 %v3103
        %v3323 = vpop.f32.mrb[0].mxu0
        %v3324 = vadd.f32 0.0, %v3323
        %v3325 = vpop.f32.mrb[0].mxu0
        %v3326 = vpop.f32.mrb[0].mxu0
        %v3327 = vadd.f32 0.0, %v3326
        %v3328 = vpop.f32.mrb[0].mxu0
        %3329 = vdwg.mxu0
        %v3330 = vadd.f32 %v2960, %v3204
        %v3331 = vadd.f32 %v2961, %v3207
        %v3332 = vadd.f32 %v2962, %v3212
        %v3333 = vadd.f32 %v2963, %v3215
        %v3334 = vadd.f32 %v2964, %v3220
        %v3335 = vadd.f32 %v2965, %v3223
        %v3336 = vadd.f32 %v2966, %v3228
        %v3337 = vadd.f32 %v2967, %v3231
        %v3338 = vadd.f32 %v2968, %v3236
        %v3339 = vadd.f32 %v2969, %v3239
        %v3340 = vadd.f32 %v2970, %v3244
        %v3341 = vadd.f32 %v2971, %v3247
        %v3342 = vadd.f32 %v2972, %v3252
        %v3343 = vadd.f32 %v2973, %v3255
        %v3344 = vadd.f32 %v2974, %v3260
        %v3345 = vadd.f32 %v2975, %v3263
        %v3346 = vadd.f32 %v2976, %v3268
        %v3347 = vadd.f32 %v2977, %v3271
        %v3348 = vadd.f32 %v2978, %v3276
        %v3349 = vadd.f32 %v2979, %v3279
        %v3350 = vadd.f32 %v2980, %v3284
        %v3351 = vadd.f32 %v2981, %v3287
        %v3352 = vadd.f32 %v2982, %v3292
        %v3353 = vadd.f32 %v2983, %v3295
        %v3354 = vadd.f32 %v2984, %v3300
        %v3355 = vadd.f32 %v2985, %v3303
        %v3356 = vadd.f32 %v2986, %v3308
        %v3357 = vadd.f32 %v2987, %v3311
        %v3358 = vadd.f32 %v2988, %v3316
        %v3359 = vadd.f32 %v2989, %v3319
        %v3360 = vadd.f32 %v2990, %v3324
        %v3361 = vadd.f32 %v2991, %v3327
        %v3362 = vld [vmem:[%s2] sm:$0x1]
        %v3364 = vlaneseq
        %v3365 = vshrl.u32 %v3364, 7
        %v3366 = vsub.s32 0, %v3365
        %v3367 = vrot.slane %v3362, %v3366
        %v3369 = vadd.f32 %v3330, %v3367
        %v3370 = vadd.f32 %v3331, %v3367
        %v3371 = vadd.f32 %v3332, %v3367
        %v3372 = vadd.f32 %v3333, %v3367
        %v3373 = vadd.f32 %v3334, %v3367
        %v3374 = vadd.f32 %v3335, %v3367
        %v3375 = vadd.f32 %v3336, %v3367
        %v3376 = vadd.f32 %v3337, %v3367
        %v3377 = vadd.f32 %v3338, %v3367
        %v3378 = vadd.f32 %v3339, %v3367
        %v3379 = vadd.f32 %v3340, %v3367
        %v3380 = vadd.f32 %v3341, %v3367
        %v3381 = vadd.f32 %v3342, %v3367
        %v3382 = vadd.f32 %v3343, %v3367
        %v3383 = vadd.f32 %v3344, %v3367
        %v3384 = vadd.f32 %v3345, %v3367
        %v3385 = vadd.f32 %v3346, %v3367
        %v3386 = vadd.f32 %v3347, %v3367
        %v3387 = vadd.f32 %v3348, %v3367
        %v3388 = vadd.f32 %v3349, %v3367
        %v3389 = vadd.f32 %v3350, %v3367
        %v3390 = vadd.f32 %v3351, %v3367
        %v3391 = vadd.f32 %v3352, %v3367
        %v3392 = vadd.f32 %v3353, %v3367
        %v3393 = vadd.f32 %v3354, %v3367
        %v3394 = vadd.f32 %v3355, %v3367
        %v3395 = vadd.f32 %v3356, %v3367
        %v3396 = vadd.f32 %v3357, %v3367
        %v3397 = vadd.f32 %v3358, %v3367
        %v3398 = vadd.f32 %v3359, %v3367
        %v3399 = vadd.f32 %v3360, %v3367
        %v3400 = vadd.f32 %v3361, %v3367
        %v3401 = vmul.f32 %v3369, 0.1
        %v3402 = vmul.f32 %v3370, 0.1
        %v3403 = vmul.f32 %v3371, 0.1
        %v3404 = vmul.f32 %v3372, 0.1
        %v3405 = vmul.f32 %v3373, 0.1
        %v3406 = vmul.f32 %v3374, 0.1
        %v3407 = vmul.f32 %v3375, 0.1
        %v3408 = vmul.f32 %v3376, 0.1
        %v3409 = vmul.f32 %v3377, 0.1
        %v3410 = vmul.f32 %v3378, 0.1
        %v3411 = vmul.f32 %v3379, 0.1
        %v3412 = vmul.f32 %v3380, 0.1
        %v3413 = vmul.f32 %v3381, 0.1
        %v3414 = vmul.f32 %v3382, 0.1
        %v3415 = vmul.f32 %v3383, 0.1
        %v3416 = vmul.f32 %v3384, 0.1
        %v3417 = vmul.f32 %v3385, 0.1
        %v3418 = vmul.f32 %v3386, 0.1
        %v3419 = vmul.f32 %v3387, 0.1
        %v3420 = vmul.f32 %v3388, 0.1
        %v3421 = vmul.f32 %v3389, 0.1
        %v3422 = vmul.f32 %v3390, 0.1
        %v3423 = vmul.f32 %v3391, 0.1
        %v3424 = vmul.f32 %v3392, 0.1
        %v3425 = vmul.f32 %v3393, 0.1
        %v3426 = vmul.f32 %v3394, 0.1
        %v3427 = vmul.f32 %v3395, 0.1
        %v3428 = vmul.f32 %v3396, 0.1
        %v3429 = vmul.f32 %v3397, 0.1
        %v3430 = vmul.f32 %v3398, 0.1
        %v3431 = vmul.f32 %v3399, 0.1
        %v3432 = vmul.f32 %v3400, 0.1
        %v3433 = vmax.f32 %v3369, %v3401
        %v3434 = vmax.f32 %v3370, %v3402
        %v3435 = vmax.f32 %v3371, %v3403
        %v3436 = vmax.f32 %v3372, %v3404
        %v3437 = vmax.f32 %v3373, %v3405
        %v3438 = vmax.f32 %v3374, %v3406
        %v3439 = vmax.f32 %v3375, %v3407
        %v3440 = vmax.f32 %v3376, %v3408
        %v3441 = vmax.f32 %v3377, %v3409
        %v3442 = vmax.f32 %v3378, %v3410
        %v3443 = vmax.f32 %v3379, %v3411
        %v3444 = vmax.f32 %v3380, %v3412
        %v3445 = vmax.f32 %v3381, %v3413
        %v3446 = vmax.f32 %v3382, %v3414
        %v3447 = vmax.f32 %v3383, %v3415
        %v3448 = vmax.f32 %v3384, %v3416
        %v3449 = vmax.f32 %v3385, %v3417
        %v3450 = vmax.f32 %v3386, %v3418
        %v3451 = vmax.f32 %v3387, %v3419
        %v3452 = vmax.f32 %v3388, %v3420
        %v3453 = vmax.f32 %v3389, %v3421
        %v3454 = vmax.f32 %v3390, %v3422
        %v3455 = vmax.f32 %v3391, %v3423
        %v3456 = vmax.f32 %v3392, %v3424
        %v3457 = vmax.f32 %v3393, %v3425
        %v3458 = vmax.f32 %v3394, %v3426
        %v3459 = vmax.f32 %v3395, %v3427
        %v3460 = vmax.f32 %v3396, %v3428
        %v3461 = vmax.f32 %v3397, %v3429
        %v3462 = vmax.f32 %v3398, %v3430
        %v3463 = vmax.f32 %v3399, %v3431
        %v3464 = vmax.f32 %v3400, %v3432
        %3465 = vst [vmem:[%s253] sm:$0xff] %v3433
        %3466 = vst [vmem:[%s253 + $0x8] sm:$0xff] %v3434
        %3467 = vst [vmem:[%s253 + $0x10] sm:$0xff] %v3435
        %3468 = vst [vmem:[%s253 + $0x18] sm:$0xff] %v3436
        %3469 = vst [vmem:[%s253 + $0x20] sm:$0xff] %v3437
        %3470 = vst [vmem:[%s253 + $0x28] sm:$0xff] %v3438
        %3471 = vst [vmem:[%s253 + $0x30] sm:$0xff] %v3439
        %3472 = vst [vmem:[%s253 + $0x38] sm:$0xff] %v3440
        %3473 = vst [vmem:[%s253 + $0x40] sm:$0xff] %v3441
        %3474 = vst [vmem:[%s253 + $0x48] sm:$0xff] %v3442
        %3475 = vst [vmem:[%s253 + $0x50] sm:$0xff] %v3443
        %3476 = vst [vmem:[%s253 + $0x58] sm:$0xff] %v3444
        %3477 = vst [vmem:[%s253 + $0x60] sm:$0xff] %v3445
        %3478 = vst [vmem:[%s253 + $0x68] sm:$0xff] %v3446
        %3479 = vst [vmem:[%s253 + $0x70] sm:$0xff] %v3447
        %3480 = vst [vmem:[%s253 + $0x78] sm:$0xff] %v3448
        %3481 = vst [vmem:[%s253 + $0x80] sm:$0xff] %v3449
        %3482 = vst [vmem:[%s253 + $0x88] sm:$0xff] %v3450
        %3483 = vst [vmem:[%s253 + $0x90] sm:$0xff] %v3451
        %3484 = vst [vmem:[%s253 + $0x98] sm:$0xff] %v3452
        %3485 = vst [vmem:[%s253 + $0xa0] sm:$0xff] %v3453
        %3486 = vst [vmem:[%s253 + $0xa8] sm:$0xff] %v3454
        %3487 = vst [vmem:[%s253 + $0xb0] sm:$0xff] %v3455
        %3488 = vst [vmem:[%s253 + $0xb8] sm:$0xff] %v3456
        %3489 = vst [vmem:[%s253 + $0xc0] sm:$0xff] %v3457
        %3490 = vst [vmem:[%s253 + $0xc8] sm:$0xff] %v3458
        %3491 = vst [vmem:[%s253 + $0xd0] sm:$0xff] %v3459
        %3492 = vst [vmem:[%s253 + $0xd8] sm:$0xff] %v3460
        %3493 = vst [vmem:[%s253 + $0xe0] sm:$0xff] %v3461
        %3494 = vst [vmem:[%s253 + $0xe8] sm:$0xff] %v3462
        %3495 = vst [vmem:[%s253 + $0xf0] sm:$0xff] %v3463
        %3496 = vst [vmem:[%s253 + $0xf8] sm:$0xff] %v3464
        %v3497 = vld [vmem:[#allocation2] sm:$0xff]
        %v3498 = vld [vmem:[#allocation2 + $0x8] sm:$0xff]
        %v3499 = vld [vmem:[#allocation2 + $0x10] sm:$0xff]
        %v3500 = vld [vmem:[#allocation2 + $0x18] sm:$0xff]
        %v3501 = vld [vmem:[#allocation2 + $0x20] sm:$0xff]
        %v3502 = vld [vmem:[#allocation2 + $0x28] sm:$0xff]
        %v3503 = vld [vmem:[#allocation2 + $0x30] sm:$0xff]
        %v3504 = vld [vmem:[#allocation2 + $0x38] sm:$0xff]
        %v3505 = vld [vmem:[#allocation2 + $0x40] sm:$0xff]
        %v3506 = vld [vmem:[#allocation2 + $0x48] sm:$0xff]
        %v3507 = vld [vmem:[#allocation2 + $0x50] sm:$0xff]
        %v3508 = vld [vmem:[#allocation2 + $0x58] sm:$0xff]
        %v3509 = vld [vmem:[#allocation2 + $0x60] sm:$0xff]
        %v3510 = vld [vmem:[#allocation2 + $0x68] sm:$0xff]
        %v3511 = vld [vmem:[#allocation2 + $0x70] sm:$0xff]
        %v3512 = vld [vmem:[#allocation2 + $0x78] sm:$0xff]
        %v3513 = vld [vmem:[#allocation2 + $0x80] sm:$0xff]
        %v3514 = vld [vmem:[#allocation2 + $0x88] sm:$0xff]
        %v3515 = vld [vmem:[#allocation2 + $0x90] sm:$0xff]
        %v3516 = vld [vmem:[#allocation2 + $0x98] sm:$0xff]
        %v3517 = vld [vmem:[#allocation2 + $0xa0] sm:$0xff]
        %v3518 = vld [vmem:[#allocation2 + $0xa8] sm:$0xff]
        %v3519 = vld [vmem:[#allocation2 + $0xb0] sm:$0xff]
        %v3520 = vld [vmem:[#allocation2 + $0xb8] sm:$0xff]
        %v3521 = vld [vmem:[#allocation2 + $0xc0] sm:$0xff]
        %v3522 = vld [vmem:[#allocation2 + $0xc8] sm:$0xff]
        %v3523 = vld [vmem:[#allocation2 + $0xd0] sm:$0xff]
        %v3524 = vld [vmem:[#allocation2 + $0xd8] sm:$0xff]
        %v3525 = vld [vmem:[#allocation2 + $0xe0] sm:$0xff]
        %v3526 = vld [vmem:[#allocation2 + $0xe8] sm:$0xff]
        %v3527 = vld [vmem:[#allocation2 + $0xf0] sm:$0xff]
        %v3528 = vld [vmem:[#allocation2 + $0xf8] sm:$0xff]
        %v3529 = vrot.slane %v3497, 7
        %v3530 = vrot.slane %v3498, 7
        %v3531 = vrot.slane %v3499, 7
        %v3532 = vrot.slane %v3500, 7
        %v3533 = vrot.slane %v3501, 7
        %v3534 = vrot.slane %v3502, 7
        %v3535 = vrot.slane %v3503, 7
        %v3536 = vrot.slane %v3504, 7
        %v3537 = vrot.slane %v3505, 7
        %v3538 = vrot.slane %v3506, 7
        %v3539 = vrot.slane %v3507, 7
        %v3540 = vrot.slane %v3508, 7
        %v3541 = vrot.slane %v3509, 7
        %v3542 = vrot.slane %v3510, 7
        %v3543 = vrot.slane %v3511, 7
        %v3544 = vrot.slane %v3512, 7
        %v3545 = vrot.slane %v3513, 7
        %v3546 = vrot.slane %v3514, 7
        %v3547 = vrot.slane %v3515, 7
        %v3548 = vrot.slane %v3516, 7
        %v3549 = vrot.slane %v3517, 7
        %v3550 = vrot.slane %v3518, 7
        %v3551 = vrot.slane %v3519, 7
        %v3552 = vrot.slane %v3520, 7
        %v3553 = vrot.slane %v3521, 7
        %v3554 = vrot.slane %v3522, 7
        %v3555 = vrot.slane %v3523, 7
        %v3556 = vrot.slane %v3524, 7
        %v3557 = vrot.slane %v3525, 7
        %v3558 = vrot.slane %v3526, 7
        %v3559 = vrot.slane %v3527, 7
        %v3560 = vrot.slane %v3528, 7
        %v3561 = vsel %vm350, %v3559, %v3560
        %v3562 = vsel %vm350, %v3558, %v3559
        %v3563 = vsel %vm350, %v3557, %v3558
        %v3564 = vsel %vm350, %v3556, %v3557
        %v3565 = vsel %vm350, %v3555, %v3556
        %v3566 = vsel %vm350, %v3554, %v3555
        %v3567 = vsel %vm350, %v3553, %v3554
        %v3568 = vsel %vm350, %v3552, %v3553
        %v3569 = vsel %vm350, %v3551, %v3552
        %v3570 = vsel %vm350, %v3550, %v3551
        %v3571 = vsel %vm350, %v3549, %v3550
        %v3572 = vsel %vm350, %v3548, %v3549
        %v3573 = vsel %vm350, %v3547, %v3548
        %v3574 = vsel %vm350, %v3546, %v3547
        %v3575 = vsel %vm350, %v3545, %v3546
        %v3576 = vsel %vm350, %v3544, %v3545
        %v3577 = vsel %vm350, %v3543, %v3544
        %v3578 = vsel %vm350, %v3542, %v3543
        %v3579 = vsel %vm350, %v3541, %v3542
        %v3580 = vsel %vm350, %v3540, %v3541
        %v3581 = vsel %vm350, %v3539, %v3540
        %v3582 = vsel %vm350, %v3538, %v3539
        %v3583 = vsel %vm350, %v3537, %v3538
        %v3584 = vsel %vm350, %v3536, %v3537
        %v3585 = vsel %vm350, %v3535, %v3536
        %v3586 = vsel %vm350, %v3534, %v3535
        %v3587 = vsel %vm350, %v3533, %v3534
        %v3588 = vsel %vm350, %v3532, %v3533
        %v3589 = vsel %vm350, %v3531, %v3532
        %v3590 = vsel %vm350, %v3530, %v3531
        %v3591 = vsel %vm350, %v3529, %v3530
        %v3592 = vsel %vm350, %v3560, %v3529
        %v3593 = vmul.f32 %v3592, %v215
        %v3594 = vmul.f32 %v3591, %v216
        %v3595 = vmul.f32 %v3590, %v215
        %v3596 = vmul.f32 %v3589, %v216
        %v3597 = vmul.f32 %v3588, %v215
        %v3598 = vmul.f32 %v3587, %v216
        %v3599 = vmul.f32 %v3586, %v215
        %v3600 = vmul.f32 %v3585, %v216
        %v3601 = vmul.f32 %v3584, %v215
        %v3602 = vmul.f32 %v3583, %v216
        %v3603 = vmul.f32 %v3582, %v215
        %v3604 = vmul.f32 %v3581, %v216
        %v3605 = vmul.f32 %v3580, %v215
        %v3606 = vmul.f32 %v3579, %v216
        %v3607 = vmul.f32 %v3578, %v215
        %v3608 = vmul.f32 %v3577, %v216
        %v3609 = vmul.f32 %v3576, %v215
        %v3610 = vmul.f32 %v3575, %v216
        %v3611 = vmul.f32 %v3574, %v215
        %v3612 = vmul.f32 %v3573, %v216
        %v3613 = vmul.f32 %v3572, %v215
        %v3614 = vmul.f32 %v3571, %v216
        %v3615 = vmul.f32 %v3570, %v215
        %v3616 = vmul.f32 %v3569, %v216
        %v3617 = vmul.f32 %v3568, %v215
        %v3618 = vmul.f32 %v3567, %v216
        %v3619 = vmul.f32 %v3566, %v215
        %v3620 = vmul.f32 %v3565, %v216
        %v3621 = vmul.f32 %v3564, %v215
        %v3622 = vmul.f32 %v3563, %v216
        %v3623 = vmul.f32 %v3562, %v215
        %v3624 = vmul.f32 %v3561, %v216
        %v3625 = vpack.c.bf16 %v3594, %v3593
        %v3626 = vpack.c.bf16 %v3596, %v3595
        %v3627 = vpack.c.bf16 %v3598, %v3597
        %v3628 = vpack.c.bf16 %v3600, %v3599
        %v3629 = vpack.c.bf16 %v3602, %v3601
        %v3630 = vpack.c.bf16 %v3604, %v3603
        %v3631 = vpack.c.bf16 %v3606, %v3605
        %v3632 = vpack.c.bf16 %v3608, %v3607
        %v3633 = vpack.c.bf16 %v3610, %v3609
        %v3634 = vpack.c.bf16 %v3612, %v3611
        %v3635 = vpack.c.bf16 %v3614, %v3613
        %v3636 = vpack.c.bf16 %v3616, %v3615
        %v3637 = vpack.c.bf16 %v3618, %v3617
        %v3638 = vpack.c.bf16 %v3620, %v3619
        %v3639 = vpack.c.bf16 %v3622, %v3621
        %v3640 = vpack.c.bf16 %v3624, %v3623
        %s3641 = scalar_lea.vmem [#allocation6], 576
        %v3642 = vld [vmem:[%s3641] sm:$0xf]
        %v3643 = vld [vmem:[%s3641 + $0x4] sm:$0xf]
        %v3644 = vld [vmem:[%s3641 + $0x8] sm:$0xf]
        %v3645 = vld [vmem:[%s3641 + $0xc] sm:$0xf]
        %v3646 = vld [vmem:[%s3641 + $0x10] sm:$0xf]
        %v3647 = vld [vmem:[%s3641 + $0x14] sm:$0xf]
        %v3648 = vld [vmem:[%s3641 + $0x18] sm:$0xf]
        %v3649 = vld [vmem:[%s3641 + $0x1c] sm:$0xf]
        %v3650 = vld [vmem:[%s3641 + $0x20] sm:$0xf]
        %v3651 = vld [vmem:[%s3641 + $0x24] sm:$0xf]
        %v3652 = vld [vmem:[%s3641 + $0x28] sm:$0xf]
        %v3653 = vld [vmem:[%s3641 + $0x2c] sm:$0xf]
        %v3654 = vld [vmem:[%s3641 + $0x30] sm:$0xf]
        %v3655 = vld [vmem:[%s3641 + $0x34] sm:$0xf]
        %v3656 = vld [vmem:[%s3641 + $0x38] sm:$0xf]
        %v3657 = vld [vmem:[%s3641 + $0x3c] sm:$0xf]
        %v3658 = vpack.c.bf16 %v3498, %v3497
        %v3659 = vpack.c.bf16 %v3500, %v3499
        %v3660 = vpack.c.bf16 %v3502, %v3501
        %v3661 = vpack.c.bf16 %v3504, %v3503
        %v3662 = vpack.c.bf16 %v3506, %v3505
        %v3663 = vpack.c.bf16 %v3508, %v3507
        %v3664 = vpack.c.bf16 %v3510, %v3509
        %v3665 = vpack.c.bf16 %v3512, %v3511
        %v3666 = vpack.c.bf16 %v3514, %v3513
        %v3667 = vpack.c.bf16 %v3516, %v3515
        %v3668 = vpack.c.bf16 %v3518, %v3517
        %v3669 = vpack.c.bf16 %v3520, %v3519
        %v3670 = vpack.c.bf16 %v3522, %v3521
        %v3671 = vpack.c.bf16 %v3524, %v3523
        %v3672 = vpack.c.bf16 %v3526, %v3525
        %v3673 = vpack.c.bf16 %v3528, %v3527
        %s3674 = scalar_lea.vmem [#allocation6], 640
        %v3675 = vld [vmem:[%s3674] sm:$0xf]
        %v3676 = vld [vmem:[%s3674 + $0x4] sm:$0xf]
        %v3677 = vld [vmem:[%s3674 + $0x8] sm:$0xf]
        %v3678 = vld [vmem:[%s3674 + $0xc] sm:$0xf]
        %v3679 = vld [vmem:[%s3674 + $0x10] sm:$0xf]
        %v3680 = vld [vmem:[%s3674 + $0x14] sm:$0xf]
        %v3681 = vld [vmem:[%s3674 + $0x18] sm:$0xf]
        %v3682 = vld [vmem:[%s3674 + $0x1c] sm:$0xf]
        %v3683 = vld [vmem:[%s3674 + $0x20] sm:$0xf]
        %v3684 = vld [vmem:[%s3674 + $0x24] sm:$0xf]
        %v3685 = vld [vmem:[%s3674 + $0x28] sm:$0xf]
        %v3686 = vld [vmem:[%s3674 + $0x2c] sm:$0xf]
        %v3687 = vld [vmem:[%s3674 + $0x30] sm:$0xf]
        %v3688 = vld [vmem:[%s3674 + $0x34] sm:$0xf]
        %v3689 = vld [vmem:[%s3674 + $0x38] sm:$0xf]
        %v3690 = vld [vmem:[%s3674 + $0x3c] sm:$0xf]
        %v3707 = vunpack.c.l.b16 %v3675
        %v3708 = vunpack.c.l.b16 %v3676
        %v3709 = vunpack.c.l.b16 %v3677
        %v3710 = vunpack.c.l.b16 %v3678
        %v3711 = vunpack.c.l.b16 %v3679
        %v3712 = vunpack.c.l.b16 %v3680
        %v3713 = vunpack.c.l.b16 %v3681
        %v3714 = vunpack.c.l.b16 %v3682
        %v3715 = vunpack.c.l.b16 %v3683
        %v3716 = vunpack.c.l.b16 %v3684
        %v3717 = vunpack.c.l.b16 %v3685
        %v3718 = vunpack.c.l.b16 %v3686
        %v3719 = vunpack.c.l.b16 %v3687
        %v3720 = vunpack.c.l.b16 %v3688
        %v3721 = vunpack.c.l.b16 %v3689
        %v3722 = vunpack.c.l.b16 %v3690
        %v3723 = vpack.c.b16 %v3708, %v3707
        %v3724 = vpack.c.b16 %v3710, %v3709
        %v3725 = vpack.c.b16 %v3712, %v3711
        %v3726 = vpack.c.b16 %v3714, %v3713
        %v3727 = vpack.c.b16 %v3716, %v3715
        %v3728 = vpack.c.b16 %v3718, %v3717
        %v3729 = vpack.c.b16 %v3720, %v3719
        %v3730 = vpack.c.b16 %v3722, %v3721
        %3739 = vmatprep.subr.bf16.mxu0 0
        %3740 = vmatpush1.bf16.msra.mxu0 %v3723
        %3741 = vmatprep.subr.bf16.mxu0 0
        %3742 = vmatpush1.bf16.msra.mxu0 %v3724
        %3743 = vmatprep.subr.bf16.mxu0 0
        %3744 = vmatpush1.bf16.msra.mxu0 %v3725
        %3745 = vmatprep.subr.bf16.mxu0 0
        %3746 = vmatpush1.bf16.msra.mxu0 %v3726
        %3747 = vmatprep.subr.bf16.mxu0 0
        %3748 = vmatpush1.bf16.msra.mxu0 %v3727
        %3749 = vmatprep.subr.bf16.mxu0 0
        %3750 = vmatpush1.bf16.msra.mxu0 %v3728
        %3751 = vmatprep.subr.bf16.mxu0 0
        %3752 = vmatpush1.bf16.msra.mxu0 %v3729
        %3753 = vmatprep.subr.bf16.mxu0 0
        %3754 = vmatpush1.bf16.msra.mxu0 %v3730
        %3755 = vmatprep.subr.bf16.mxu0 0
        %3756 = vmatpush1.bf16.msra.mxu0 0
        %3757 = vmatprep.subr.bf16.mxu0 0
        %3758 = vmatpush1.bf16.msra.mxu0 0
        %3759 = vmatprep.subr.bf16.mxu0 0
        %3760 = vmatpush1.bf16.msra.mxu0 0
        %3761 = vmatprep.subr.bf16.mxu0 0
        %3762 = vmatpush1.bf16.msra.mxu0 0
        %3763 = vmatprep.subr.bf16.mxu0 0
        %3764 = vmatpush1.bf16.msra.mxu0 0
        %3765 = vmatprep.subr.bf16.mxu0 0
        %3766 = vmatpush1.bf16.msra.mxu0 0
        %3767 = vmatprep.subr.bf16.mxu0 0
        %3768 = vmatpush1.bf16.msra.mxu0 0
        %3769 = vmatprep.subr.bf16.mxu0 0
        %3770 = vmatpush1.bf16.msra.mxu0 0
        %3771 = vmatprep.mubr.bf16.mxu0 0
        %3772 = vmatmul.mubr.bf16.gmra.mrb[0].mxu0 %v3658
        %v3773 = vpop.f32.mrb[0].mxu0
        %v3774 = vadd.f32 0.0, %v3773
        %v3775 = vpop.f32.mrb[0].mxu0
        %v3776 = vpop.f32.mrb[0].mxu0
        %v3777 = vadd.f32 0.0, %v3776
        %v3778 = vpop.f32.mrb[0].mxu0
        %3779 = vmatprep.mubr.bf16.mxu0 0
        %3780 = vmatmul.mubr.bf16.gmra.mrb[0].mxu0 %v3659
        %v3781 = vpop.f32.mrb[0].mxu0
        %v3782 = vadd.f32 0.0, %v3781
        %v3783 = vpop.f32.mrb[0].mxu0
        %v3784 = vpop.f32.mrb[0].mxu0
        %v3785 = vadd.f32 0.0, %v3784
        %v3786 = vpop.f32.mrb[0].mxu0
        %3787 = vmatprep.mubr.bf16.mxu0 0
        %3788 = vmatmul.mubr.bf16.gmra.mrb[0].mxu0 %v3660
        %v3789 = vpop.f32.mrb[0].mxu0
        %v3790 = vadd.f32 0.0, %v3789
        %v3791 = vpop.f32.mrb[0].mxu0
        %v3792 = vpop.f32.mrb[0].mxu0
        %v3793 = vadd.f32 0.0, %v3792
        %v3794 = vpop.f32.mrb[0].mxu0
        %3795 = vmatprep.mubr.bf16.mxu0 0
        %3796 = vmatmul.mubr.bf16.gmra.mrb[0].mxu0 %v3661
        %v3797 = vpop.f32.mrb[0].mxu0
        %v3798 = vadd.f32 0.0, %v3797
        %v3799 = vpop.f32.mrb[0].mxu0
        %v3800 = vpop.f32.mrb[0].mxu0
        %v3801 = vadd.f32 0.0, %v3800
        %v3802 = vpop.f32.mrb[0].mxu0
        %3803 = vmatprep.mubr.bf16.mxu0 0
        %3804 = vmatmul.mubr.bf16.gmra.mrb[0].mxu0 %v3662
        %v3805 = vpop.f32.mrb[0].mxu0
        %v3806 = vadd.f32 0.0, %v3805
        %v3807 = vpop.f32.mrb[0].mxu0
        %v3808 = vpop.f32.mrb[0].mxu0
        %v3809 = vadd.f32 0.0, %v3808
        %v3810 = vpop.f32.mrb[0].mxu0
        %3811 = vmatprep.mubr.bf16.mxu0 0
        %3812 = vmatmul.mubr.bf16.gmra.mrb[0].mxu0 %v3663
        %v3813 = vpop.f32.mrb[0].mxu0
        %v3814 = vadd.f32 0.0, %v3813
        %v3815 = vpop.f32.mrb[0].mxu0
        %v3816 = vpop.f32.mrb[0].mxu0
        %v3817 = vadd.f32 0.0, %v3816
        %v3818 = vpop.f32.mrb[0].mxu0
        %3819 = vmatprep.mubr.bf16.mxu0 0
        %3820 = vmatmul.mubr.bf16.gmra.mrb[0].mxu0 %v3664
        %v3821 = vpop.f32.mrb[0].mxu0
        %v3822 = vadd.f32 0.0, %v3821
        %v3823 = vpop.f32.mrb[0].mxu0
        %v3824 = vpop.f32.mrb[0].mxu0
        %v3825 = vadd.f32 0.0, %v3824
        %v3826 = vpop.f32.mrb[0].mxu0
        %3827 = vmatprep.mubr.bf16.mxu0 0
        %3828 = vmatmul.mubr.bf16.gmra.mrb[0].mxu0 %v3665
        %v3829 = vpop.f32.mrb[0].mxu0
        %v3830 = vadd.f32 0.0, %v3829
        %v3831 = vpop.f32.mrb[0].mxu0
        %v3832 = vpop.f32.mrb[0].mxu0
        %v3833 = vadd.f32 0.0, %v3832
        %v3834 = vpop.f32.mrb[0].mxu0
        %3835 = vmatprep.mubr.bf16.mxu0 0
        %3836 = vmatmul.mubr.bf16.gmra.mrb[0].mxu0 %v3666
        %v3837 = vpop.f32.mrb[0].mxu0
        %v3838 = vadd.f32 0.0, %v3837
        %v3839 = vpop.f32.mrb[0].mxu0
        %v3840 = vpop.f32.mrb[0].mxu0
        %v3841 = vadd.f32 0.0, %v3840
        %v3842 = vpop.f32.mrb[0].mxu0
        %3843 = vmatprep.mubr.bf16.mxu0 0
        %3844 = vmatmul.mubr.bf16.gmra.mrb[0].mxu0 %v3667
        %v3845 = vpop.f32.mrb[0].mxu0
        %v3846 = vadd.f32 0.0, %v3845
        %v3847 = vpop.f32.mrb[0].mxu0
        %v3848 = vpop.f32.mrb[0].mxu0
        %v3849 = vadd.f32 0.0, %v3848
        %v3850 = vpop.f32.mrb[0].mxu0
        %3851 = vmatprep.mubr.bf16.mxu0 0
        %3852 = vmatmul.mubr.bf16.gmra.mrb[0].mxu0 %v3668
        %v3853 = vpop.f32.mrb[0].mxu0
        %v3854 = vadd.f32 0.0, %v3853
        %v3855 = vpop.f32.mrb[0].mxu0
        %v3856 = vpop.f32.mrb[0].mxu0
        %v3857 = vadd.f32 0.0, %v3856
        %v3858 = vpop.f32.mrb[0].mxu0
        %3859 = vmatprep.mubr.bf16.mxu0 0
        %3860 = vmatmul.mubr.bf16.gmra.mrb[0].mxu0 %v3669
        %v3861 = vpop.f32.mrb[0].mxu0
        %v3862 = vadd.f32 0.0, %v3861
        %v3863 = vpop.f32.mrb[0].mxu0
        %v3864 = vpop.f32.mrb[0].mxu0
        %v3865 = vadd.f32 0.0, %v3864
        %v3866 = vpop.f32.mrb[0].mxu0
        %3867 = vmatprep.mubr.bf16.mxu0 0
        %3868 = vmatmul.mubr.bf16.gmra.mrb[0].mxu0 %v3670
        %v3869 = vpop.f32.mrb[0].mxu0
        %v3870 = vadd.f32 0.0, %v3869
        %v3871 = vpop.f32.mrb[0].mxu0
        %v3872 = vpop.f32.mrb[0].mxu0
        %v3873 = vadd.f32 0.0, %v3872
        %v3874 = vpop.f32.mrb[0].mxu0
        %3875 = vmatprep.mubr.bf16.mxu0 0
        %3876 = vmatmul.mubr.bf16.gmra.mrb[0].mxu0 %v3671
        %v3877 = vpop.f32.mrb[0].mxu0
        %v3878 = vadd.f32 0.0, %v3877
        %v3879 = vpop.f32.mrb[0].mxu0
        %v3880 = vpop.f32.mrb[0].mxu0
        %v3881 = vadd.f32 0.0, %v3880
        %v3882 = vpop.f32.mrb[0].mxu0
        %3883 = vmatprep.mubr.bf16.mxu0 0
        %3884 = vmatmul.mubr.bf16.gmra.mrb[0].mxu0 %v3672
        %v3885 = vpop.f32.mrb[0].mxu0
        %v3886 = vadd.f32 0.0, %v3885
        %v3887 = vpop.f32.mrb[0].mxu0
        %v3888 = vpop.f32.mrb[0].mxu0
        %v3889 = vadd.f32 0.0, %v3888
        %v3890 = vpop.f32.mrb[0].mxu0
        %3891 = vmatprep.mubr.bf16.mxu0 0
        %3892 = vmatmul.mubr.bf16.gmra.mrb[0].mxu0 %v3673
        %v3893 = vpop.f32.mrb[0].mxu0
        %v3894 = vadd.f32 0.0, %v3893
        %v3895 = vpop.f32.mrb[0].mxu0
        %v3896 = vpop.f32.mrb[0].mxu0
        %v3897 = vadd.f32 0.0, %v3896
        %v3898 = vpop.f32.mrb[0].mxu0
        %3899 = vdwg.mxu0
        %v3916 = vunpack.c.l.b16 %v3642
        %v3917 = vunpack.c.l.b16 %v3643
        %v3918 = vunpack.c.l.b16 %v3644
        %v3919 = vunpack.c.l.b16 %v3645
        %v3920 = vunpack.c.l.b16 %v3646
        %v3921 = vunpack.c.l.b16 %v3647
        %v3922 = vunpack.c.l.b16 %v3648
        %v3923 = vunpack.c.l.b16 %v3649
        %v3924 = vunpack.c.l.b16 %v3650
        %v3925 = vunpack.c.l.b16 %v3651
        %v3926 = vunpack.c.l.b16 %v3652
        %v3927 = vunpack.c.l.b16 %v3653
        %v3928 = vunpack.c.l.b16 %v3654
        %v3929 = vunpack.c.l.b16 %v3655
        %v3930 = vunpack.c.l.b16 %v3656
        %v3931 = vunpack.c.l.b16 %v3657
        %v3932 = vpack.c.b16 %v3917, %v3916
        %v3933 = vpack.c.b16 %v3919, %v3918
        %v3934 = vpack.c.b16 %v3921, %v3920
        %v3935 = vpack.c.b16 %v3923, %v3922
        %v3936 = vpack.c.b16 %v3925, %v3924
        %v3937 = vpack.c.b16 %v3927, %v3926
        %v3938 = vpack.c.b16 %v3929, %v3928
        %v3939 = vpack.c.b16 %v3931, %v3930
        %3948 = vmatprep.subr.bf16.mxu0 0
        %3949 = vmatpush1.bf16.msra.mxu0 %v3932
        %3950 = vmatprep.subr.bf16.mxu0 0
        %3951 = vmatpush1.bf16.msra.mxu0 %v3933
        %3952 = vmatprep.subr.bf16.mxu0 0
        %3953 = vmatpush1.bf16.msra.mxu0 %v3934
        %3954 = vmatprep.subr.bf16.mxu0 0
        %3955 = vmatpush1.bf16.msra.mxu0 %v3935
        %3956 = vmatprep.subr.bf16.mxu0 0
        %3957 = vmatpush1.bf16.msra.mxu0 %v3936
        %3958 = vmatprep.subr.bf16.mxu0 0
        %3959 = vmatpush1.bf16.msra.mxu0 %v3937
        %3960 = vmatprep.subr.bf16.mxu0 0
        %3961 = vmatpush1.bf16.msra.mxu0 %v3938
        %3962 = vmatprep.subr.bf16.mxu0 0
        %3963 = vmatpush1.bf16.msra.mxu0 %v3939
        %3964 = vmatprep.subr.bf16.mxu0 0
        %3965 = vmatpush1.bf16.msra.mxu0 0
        %3966 = vmatprep.subr.bf16.mxu0 0
        %3967 = vmatpush1.bf16.msra.mxu0 0
        %3968 = vmatprep.subr.bf16.mxu0 0
        %3969 = vmatpush1.bf16.msra.mxu0 0
        %3970 = vmatprep.subr.bf16.mxu0 0
        %3971 = vmatpush1.bf16.msra.mxu0 0
        %3972 = vmatprep.subr.bf16.mxu0 0
        %3973 = vmatpush1.bf16.msra.mxu0 0
        %3974 = vmatprep.subr.bf16.mxu0 0
        %3975 = vmatpush1.bf16.msra.mxu0 0
        %3976 = vmatprep.subr.bf16.mxu0 0
        %3977 = vmatpush1.bf16.msra.mxu0 0
        %3978 = vmatprep.subr.bf16.mxu0 0
        %3979 = vmatpush1.bf16.msra.mxu0 0
        %3980 = vmatprep.mubr.bf16.mxu0 0
        %3981 = vmatmul.mubr.bf16.gmra.mrb[0].mxu0 %v3625
        %v3982 = vpop.f32.mrb[0].mxu0
        %v3983 = vadd.f32 %v3774, %v3982
        %v3984 = vpop.f32.mrb[0].mxu0
        %v3985 = vpop.f32.mrb[0].mxu0
        %v3986 = vadd.f32 %v3777, %v3985
        %v3987 = vpop.f32.mrb[0].mxu0
        %3988 = vmatprep.mubr.bf16.mxu0 0
        %3989 = vmatmul.mubr.bf16.gmra.mrb[0].mxu0 %v3626
        %v3990 = vpop.f32.mrb[0].mxu0
        %v3991 = vadd.f32 %v3782, %v3990
        %v3992 = vpop.f32.mrb[0].mxu0
        %v3993 = vpop.f32.mrb[0].mxu0
        %v3994 = vadd.f32 %v3785, %v3993
        %v3995 = vpop.f32.mrb[0].mxu0
        %3996 = vmatprep.mubr.bf16.mxu0 0
        %3997 = vmatmul.mubr.bf16.gmra.mrb[0].mxu0 %v3627
        %v3998 = vpop.f32.mrb[0].mxu0
        %v3999 = vadd.f32 %v3790, %v3998
        %v4000 = vpop.f32.mrb[0].mxu0
        %v4001 = vpop.f32.mrb[0].mxu0
        %v4002 = vadd.f32 %v3793, %v4001
        %v4003 = vpop.f32.mrb[0].mxu0
        %4004 = vmatprep.mubr.bf16.mxu0 0
        %4005 = vmatmul.mubr.bf16.gmra.mrb[0].mxu0 %v3628
        %v4006 = vpop.f32.mrb[0].mxu0
        %v4007 = vadd.f32 %v3798, %v4006
        %v4008 = vpop.f32.mrb[0].mxu0
        %v4009 = vpop.f32.mrb[0].mxu0
        %v4010 = vadd.f32 %v3801, %v4009
        %v4011 = vpop.f32.mrb[0].mxu0
        %4012 = vmatprep.mubr.bf16.mxu0 0
        %4013 = vmatmul.mubr.bf16.gmra.mrb[0].mxu0 %v3629
        %v4014 = vpop.f32.mrb[0].mxu0
        %v4015 = vadd.f32 %v3806, %v4014
        %v4016 = vpop.f32.mrb[0].mxu0
        %v4017 = vpop.f32.mrb[0].mxu0
        %v4018 = vadd.f32 %v3809, %v4017
        %v4019 = vpop.f32.mrb[0].mxu0
        %4020 = vmatprep.mubr.bf16.mxu0 0
        %4021 = vmatmul.mubr.bf16.gmra.mrb[0].mxu0 %v3630
        %v4022 = vpop.f32.mrb[0].mxu0
        %v4023 = vadd.f32 %v3814, %v4022
        %v4024 = vpop.f32.mrb[0].mxu0
        %v4025 = vpop.f32.mrb[0].mxu0
        %v4026 = vadd.f32 %v3817, %v4025
        %v4027 = vpop.f32.mrb[0].mxu0
        %4028 = vmatprep.mubr.bf16.mxu0 0
        %4029 = vmatmul.mubr.bf16.gmra.mrb[0].mxu0 %v3631
        %v4030 = vpop.f32.mrb[0].mxu0
        %v4031 = vadd.f32 %v3822, %v4030
        %v4032 = vpop.f32.mrb[0].mxu0
        %v4033 = vpop.f32.mrb[0].mxu0
        %v4034 = vadd.f32 %v3825, %v4033
        %v4035 = vpop.f32.mrb[0].mxu0
        %4036 = vmatprep.mubr.bf16.mxu0 0
        %4037 = vmatmul.mubr.bf16.gmra.mrb[0].mxu0 %v3632
        %v4038 = vpop.f32.mrb[0].mxu0
        %v4039 = vadd.f32 %v3830, %v4038
        %v4040 = vpop.f32.mrb[0].mxu0
        %v4041 = vpop.f32.mrb[0].mxu0
        %v4042 = vadd.f32 %v3833, %v4041
        %v4043 = vpop.f32.mrb[0].mxu0
        %4044 = vmatprep.mubr.bf16.mxu0 0
        %4045 = vmatmul.mubr.bf16.gmra.mrb[0].mxu0 %v3633
        %v4046 = vpop.f32.mrb[0].mxu0
        %v4047 = vadd.f32 %v3838, %v4046
        %v4048 = vpop.f32.mrb[0].mxu0
        %v4049 = vpop.f32.mrb[0].mxu0
        %v4050 = vadd.f32 %v3841, %v4049
        %v4051 = vpop.f32.mrb[0].mxu0
        %4052 = vmatprep.mubr.bf16.mxu0 0
        %4053 = vmatmul.mubr.bf16.gmra.mrb[0].mxu0 %v3634
        %v4054 = vpop.f32.mrb[0].mxu0
        %v4055 = vadd.f32 %v3846, %v4054
        %v4056 = vpop.f32.mrb[0].mxu0
        %v4057 = vpop.f32.mrb[0].mxu0
        %v4058 = vadd.f32 %v3849, %v4057
        %v4059 = vpop.f32.mrb[0].mxu0
        %4060 = vmatprep.mubr.bf16.mxu0 0
        %4061 = vmatmul.mubr.bf16.gmra.mrb[0].mxu0 %v3635
        %v4062 = vpop.f32.mrb[0].mxu0
        %v4063 = vadd.f32 %v3854, %v4062
        %v4064 = vpop.f32.mrb[0].mxu0
        %v4065 = vpop.f32.mrb[0].mxu0
        %v4066 = vadd.f32 %v3857, %v4065
        %v4067 = vpop.f32.mrb[0].mxu0
        %4068 = vmatprep.mubr.bf16.mxu0 0
        %4069 = vmatmul.mubr.bf16.gmra.mrb[0].mxu0 %v3636
        %v4070 = vpop.f32.mrb[0].mxu0
        %v4071 = vadd.f32 %v3862, %v4070
        %v4072 = vpop.f32.mrb[0].mxu0
        %v4073 = vpop.f32.mrb[0].mxu0
        %v4074 = vadd.f32 %v3865, %v4073
        %v4075 = vpop.f32.mrb[0].mxu0
        %4076 = vmatprep.mubr.bf16.mxu0 0
        %4077 = vmatmul.mubr.bf16.gmra.mrb[0].mxu0 %v3637
        %v4078 = vpop.f32.mrb[0].mxu0
        %v4079 = vadd.f32 %v3870, %v4078
        %v4080 = vpop.f32.mrb[0].mxu0
        %v4081 = vpop.f32.mrb[0].mxu0
        %v4082 = vadd.f32 %v3873, %v4081
        %v4083 = vpop.f32.mrb[0].mxu0
        %4084 = vmatprep.mubr.bf16.mxu0 0
        %4085 = vmatmul.mubr.bf16.gmra.mrb[0].mxu0 %v3638
        %v4086 = vpop.f32.mrb[0].mxu0
        %v4087 = vadd.f32 %v3878, %v4086
        %v4088 = vpop.f32.mrb[0].mxu0
        %v4089 = vpop.f32.mrb[0].mxu0
        %v4090 = vadd.f32 %v3881, %v4089
        %v4091 = vpop.f32.mrb[0].mxu0
        %4092 = vmatprep.mubr.bf16.mxu0 0
        %4093 = vmatmul.mubr.bf16.gmra.mrb[0].mxu0 %v3639
        %v4094 = vpop.f32.mrb[0].mxu0
        %v4095 = vadd.f32 %v3886, %v4094
        %v4096 = vpop.f32.mrb[0].mxu0
        %v4097 = vpop.f32.mrb[0].mxu0
        %v4098 = vadd.f32 %v3889, %v4097
        %v4099 = vpop.f32.mrb[0].mxu0
        %4100 = vmatprep.mubr.bf16.mxu0 0
        %4101 = vmatmul.mubr.bf16.gmra.mrb[0].mxu0 %v3640
        %v4102 = vpop.f32.mrb[0].mxu0
        %v4103 = vadd.f32 %v3894, %v4102
        %v4104 = vpop.f32.mrb[0].mxu0
        %v4105 = vpop.f32.mrb[0].mxu0
        %v4106 = vadd.f32 %v3897, %v4105
        %v4107 = vpop.f32.mrb[0].mxu0
        %4108 = vdwg.mxu0
        %v4109 = vrot.slane %v3497, 1
        %v4110 = vrot.slane %v3498, 1
        %v4111 = vrot.slane %v3499, 1
        %v4112 = vrot.slane %v3500, 1
        %v4113 = vrot.slane %v3501, 1
        %v4114 = vrot.slane %v3502, 1
        %v4115 = vrot.slane %v3503, 1
        %v4116 = vrot.slane %v3504, 1
        %v4117 = vrot.slane %v3505, 1
        %v4118 = vrot.slane %v3506, 1
        %v4119 = vrot.slane %v3507, 1
        %v4120 = vrot.slane %v3508, 1
        %v4121 = vrot.slane %v3509, 1
        %v4122 = vrot.slane %v3510, 1
        %v4123 = vrot.slane %v3511, 1
        %v4124 = vrot.slane %v3512, 1
        %v4125 = vrot.slane %v3513, 1
        %v4126 = vrot.slane %v3514, 1
        %v4127 = vrot.slane %v3515, 1
        %v4128 = vrot.slane %v3516, 1
        %v4129 = vrot.slane %v3517, 1
        %v4130 = vrot.slane %v3518, 1
        %v4131 = vrot.slane %v3519, 1
        %v4132 = vrot.slane %v3520, 1
        %v4133 = vrot.slane %v3521, 1
        %v4134 = vrot.slane %v3522, 1
        %v4135 = vrot.slane %v3523, 1
        %v4136 = vrot.slane %v3524, 1
        %v4137 = vrot.slane %v3525, 1
        %v4138 = vrot.slane %v3526, 1
        %v4139 = vrot.slane %v3527, 1
        %v4140 = vrot.slane %v3528, 1
        %v4141 = vsel %vm930, %v4139, %v4140
        %v4142 = vsel %vm930, %v4138, %v4139
        %v4143 = vsel %vm930, %v4137, %v4138
        %v4144 = vsel %vm930, %v4136, %v4137
        %v4145 = vsel %vm930, %v4135, %v4136
        %v4146 = vsel %vm930, %v4134, %v4135
        %v4147 = vsel %vm930, %v4133, %v4134
        %v4148 = vsel %vm930, %v4132, %v4133
        %v4149 = vsel %vm930, %v4131, %v4132
        %v4150 = vsel %vm930, %v4130, %v4131
        %v4151 = vsel %vm930, %v4129, %v4130
        %v4152 = vsel %vm930, %v4128, %v4129
        %v4153 = vsel %vm930, %v4127, %v4128
        %v4154 = vsel %vm930, %v4126, %v4127
        %v4155 = vsel %vm930, %v4125, %v4126
        %v4156 = vsel %vm930, %v4124, %v4125
        %v4157 = vsel %vm930, %v4123, %v4124
        %v4158 = vsel %vm930, %v4122, %v4123
        %v4159 = vsel %vm930, %v4121, %v4122
        %v4160 = vsel %vm930, %v4120, %v4121
        %v4161 = vsel %vm930, %v4119, %v4120
        %v4162 = vsel %vm930, %v4118, %v4119
        %v4163 = vsel %vm930, %v4117, %v4118
        %v4164 = vsel %vm930, %v4116, %v4117
        %v4165 = vsel %vm930, %v4115, %v4116
        %v4166 = vsel %vm930, %v4114, %v4115
        %v4167 = vsel %vm930, %v4113, %v4114
        %v4168 = vsel %vm930, %v4112, %v4113
        %v4169 = vsel %vm930, %v4111, %v4112
        %v4170 = vsel %vm930, %v4110, %v4111
        %v4171 = vsel %vm930, %v4109, %v4110
        %v4172 = vsel %vm930, %v4140, %v4109
        %v4173 = vmul.f32 %v4171, %v219
        %v4174 = vmul.f32 %v4170, %v220
        %v4175 = vmul.f32 %v4169, %v219
        %v4176 = vmul.f32 %v4168, %v220
        %v4177 = vmul.f32 %v4167, %v219
        %v4178 = vmul.f32 %v4166, %v220
        %v4179 = vmul.f32 %v4165, %v219
        %v4180 = vmul.f32 %v4164, %v220
        %v4181 = vmul.f32 %v4163, %v219
        %v4182 = vmul.f32 %v4162, %v220
        %v4183 = vmul.f32 %v4161, %v219
        %v4184 = vmul.f32 %v4160, %v220
        %v4185 = vmul.f32 %v4159, %v219
        %v4186 = vmul.f32 %v4158, %v220
        %v4187 = vmul.f32 %v4157, %v219
        %v4188 = vmul.f32 %v4156, %v220
        %v4189 = vmul.f32 %v4155, %v219
        %v4190 = vmul.f32 %v4154, %v220
        %v4191 = vmul.f32 %v4153, %v219
        %v4192 = vmul.f32 %v4152, %v220
        %v4193 = vmul.f32 %v4151, %v219
        %v4194 = vmul.f32 %v4150, %v220
        %v4195 = vmul.f32 %v4149, %v219
        %v4196 = vmul.f32 %v4148, %v220
        %v4197 = vmul.f32 %v4147, %v219
        %v4198 = vmul.f32 %v4146, %v220
        %v4199 = vmul.f32 %v4145, %v219
        %v4200 = vmul.f32 %v4144, %v220
        %v4201 = vmul.f32 %v4143, %v219
        %v4202 = vmul.f32 %v4142, %v220
        %v4203 = vmul.f32 %v4141, %v219
        %v4204 = vmul.f32 %v4172, %v220
        %v4205 = vpack.c.bf16 %v4174, %v4173
        %v4206 = vpack.c.bf16 %v4176, %v4175
        %v4207 = vpack.c.bf16 %v4178, %v4177
        %v4208 = vpack.c.bf16 %v4180, %v4179
        %v4209 = vpack.c.bf16 %v4182, %v4181
        %v4210 = vpack.c.bf16 %v4184, %v4183
        %v4211 = vpack.c.bf16 %v4186, %v4185
        %v4212 = vpack.c.bf16 %v4188, %v4187
        %v4213 = vpack.c.bf16 %v4190, %v4189
        %v4214 = vpack.c.bf16 %v4192, %v4191
        %v4215 = vpack.c.bf16 %v4194, %v4193
        %v4216 = vpack.c.bf16 %v4196, %v4195
        %v4217 = vpack.c.bf16 %v4198, %v4197
        %v4218 = vpack.c.bf16 %v4200, %v4199
        %v4219 = vpack.c.bf16 %v4202, %v4201
        %v4220 = vpack.c.bf16 %v4204, %v4203
        %s4221 = scalar_lea.vmem [#allocation6], 704
        %v4222 = vld [vmem:[%s4221] sm:$0xf]
        %v4223 = vld [vmem:[%s4221 + $0x4] sm:$0xf]
        %v4224 = vld [vmem:[%s4221 + $0x8] sm:$0xf]
        %v4225 = vld [vmem:[%s4221 + $0xc] sm:$0xf]
        %v4226 = vld [vmem:[%s4221 + $0x10] sm:$0xf]
        %v4227 = vld [vmem:[%s4221 + $0x14] sm:$0xf]
        %v4228 = vld [vmem:[%s4221 + $0x18] sm:$0xf]
        %v4229 = vld [vmem:[%s4221 + $0x1c] sm:$0xf]
        %v4230 = vld [vmem:[%s4221 + $0x20] sm:$0xf]
        %v4231 = vld [vmem:[%s4221 + $0x24] sm:$0xf]
        %v4232 = vld [vmem:[%s4221 + $0x28] sm:$0xf]
        %v4233 = vld [vmem:[%s4221 + $0x2c] sm:$0xf]
        %v4234 = vld [vmem:[%s4221 + $0x30] sm:$0xf]
        %v4235 = vld [vmem:[%s4221 + $0x34] sm:$0xf]
        %v4236 = vld [vmem:[%s4221 + $0x38] sm:$0xf]
        %v4237 = vld [vmem:[%s4221 + $0x3c] sm:$0xf]
        %v4254 = vunpack.c.l.b16 %v4222
        %v4255 = vunpack.c.l.b16 %v4223
        %v4256 = vunpack.c.l.b16 %v4224
        %v4257 = vunpack.c.l.b16 %v4225
        %v4258 = vunpack.c.l.b16 %v4226
        %v4259 = vunpack.c.l.b16 %v4227
        %v4260 = vunpack.c.l.b16 %v4228
        %v4261 = vunpack.c.l.b16 %v4229
        %v4262 = vunpack.c.l.b16 %v4230
        %v4263 = vunpack.c.l.b16 %v4231
        %v4264 = vunpack.c.l.b16 %v4232
        %v4265 = vunpack.c.l.b16 %v4233
        %v4266 = vunpack.c.l.b16 %v4234
        %v4267 = vunpack.c.l.b16 %v4235
        %v4268 = vunpack.c.l.b16 %v4236
        %v4269 = vunpack.c.l.b16 %v4237
        %v4270 = vpack.c.b16 %v4255, %v4254
        %v4271 = vpack.c.b16 %v4257, %v4256
        %v4272 = vpack.c.b16 %v4259, %v4258
        %v4273 = vpack.c.b16 %v4261, %v4260
        %v4274 = vpack.c.b16 %v4263, %v4262
        %v4275 = vpack.c.b16 %v4265, %v4264
        %v4276 = vpack.c.b16 %v4267, %v4266
        %v4277 = vpack.c.b16 %v4269, %v4268
        %4286 = vmatprep.subr.bf16.mxu0 0
        %4287 = vmatpush1.bf16.msra.mxu0 %v4270
        %4288 = vmatprep.subr.bf16.mxu0 0
        %4289 = vmatpush1.bf16.msra.mxu0 %v4271
        %4290 = vmatprep.subr.bf16.mxu0 0
        %4291 = vmatpush1.bf16.msra.mxu0 %v4272
        %4292 = vmatprep.subr.bf16.mxu0 0
        %4293 = vmatpush1.bf16.msra.mxu0 %v4273
        %4294 = vmatprep.subr.bf16.mxu0 0
        %4295 = vmatpush1.bf16.msra.mxu0 %v4274
        %4296 = vmatprep.subr.bf16.mxu0 0
        %4297 = vmatpush1.bf16.msra.mxu0 %v4275
        %4298 = vmatprep.subr.bf16.mxu0 0
        %4299 = vmatpush1.bf16.msra.mxu0 %v4276
        %4300 = vmatprep.subr.bf16.mxu0 0
        %4301 = vmatpush1.bf16.msra.mxu0 %v4277
        %4302 = vmatprep.subr.bf16.mxu0 0
        %4303 = vmatpush1.bf16.msra.mxu0 0
        %4304 = vmatprep.subr.bf16.mxu0 0
        %4305 = vmatpush1.bf16.msra.mxu0 0
        %4306 = vmatprep.subr.bf16.mxu0 0
        %4307 = vmatpush1.bf16.msra.mxu0 0
        %4308 = vmatprep.subr.bf16.mxu0 0
        %4309 = vmatpush1.bf16.msra.mxu0 0
        %4310 = vmatprep.subr.bf16.mxu0 0
        %4311 = vmatpush1.bf16.msra.mxu0 0
        %4312 = vmatprep.subr.bf16.mxu0 0
        %4313 = vmatpush1.bf16.msra.mxu0 0
        %4314 = vmatprep.subr.bf16.mxu0 0
        %4315 = vmatpush1.bf16.msra.mxu0 0
        %4316 = vmatprep.subr.bf16.mxu0 0
        %4317 = vmatpush1.bf16.msra.mxu0 0
        %4318 = vmatprep.mubr.bf16.mxu0 0
        %4319 = vmatmul.mubr.bf16.gmra.mrb[0].mxu0 %v4205
        %v4320 = vpop.f32.mrb[0].mxu0
        %v4321 = vadd.f32 0.0, %v4320
        %v4322 = vpop.f32.mrb[0].mxu0
        %v4323 = vpop.f32.mrb[0].mxu0
        %v4324 = vadd.f32 0.0, %v4323
        %v4325 = vpop.f32.mrb[0].mxu0
        %4326 = vmatprep.mubr.bf16.mxu0 0
        %4327 = vmatmul.mubr.bf16.gmra.mrb[0].mxu0 %v4206
        %v4328 = vpop.f32.mrb[0].mxu0
        %v4329 = vadd.f32 0.0, %v4328
        %v4330 = vpop.f32.mrb[0].mxu0
        %v4331 = vpop.f32.mrb[0].mxu0
        %v4332 = vadd.f32 0.0, %v4331
        %v4333 = vpop.f32.mrb[0].mxu0
        %4334 = vmatprep.mubr.bf16.mxu0 0
        %4335 = vmatmul.mubr.bf16.gmra.mrb[0].mxu0 %v4207
        %v4336 = vpop.f32.mrb[0].mxu0
        %v4337 = vadd.f32 0.0, %v4336
        %v4338 = vpop.f32.mrb[0].mxu0
        %v4339 = vpop.f32.mrb[0].mxu0
        %v4340 = vadd.f32 0.0, %v4339
        %v4341 = vpop.f32.mrb[0].mxu0
        %4342 = vmatprep.mubr.bf16.mxu0 0
        %4343 = vmatmul.mubr.bf16.gmra.mrb[0].mxu0 %v4208
        %v4344 = vpop.f32.mrb[0].mxu0
        %v4345 = vadd.f32 0.0, %v4344
        %v4346 = vpop.f32.mrb[0].mxu0
        %v4347 = vpop.f32.mrb[0].mxu0
        %v4348 = vadd.f32 0.0, %v4347
        %v4349 = vpop.f32.mrb[0].mxu0
        %4350 = vmatprep.mubr.bf16.mxu0 0
        %4351 = vmatmul.mubr.bf16.gmra.mrb[0].mxu0 %v4209
        %v4352 = vpop.f32.mrb[0].mxu0
        %v4353 = vadd.f32 0.0, %v4352
        %v4354 = vpop.f32.mrb[0].mxu0
        %v4355 = vpop.f32.mrb[0].mxu0
        %v4356 = vadd.f32 0.0, %v4355
        %v4357 = vpop.f32.mrb[0].mxu0
        %4358 = vmatprep.mubr.bf16.mxu0 0
        %4359 = vmatmul.mubr.bf16.gmra.mrb[0].mxu0 %v4210
        %v4360 = vpop.f32.mrb[0].mxu0
        %v4361 = vadd.f32 0.0, %v4360
        %v4362 = vpop.f32.mrb[0].mxu0
        %v4363 = vpop.f32.mrb[0].mxu0
        %v4364 = vadd.f32 0.0, %v4363
        %v4365 = vpop.f32.mrb[0].mxu0
        %4366 = vmatprep.mubr.bf16.mxu0 0
        %4367 = vmatmul.mubr.bf16.gmra.mrb[0].mxu0 %v4211
        %v4368 = vpop.f32.mrb[0].mxu0
        %v4369 = vadd.f32 0.0, %v4368
        %v4370 = vpop.f32.mrb[0].mxu0
        %v4371 = vpop.f32.mrb[0].mxu0
        %v4372 = vadd.f32 0.0, %v4371
        %v4373 = vpop.f32.mrb[0].mxu0
        %4374 = vmatprep.mubr.bf16.mxu0 0
        %4375 = vmatmul.mubr.bf16.gmra.mrb[0].mxu0 %v4212
        %v4376 = vpop.f32.mrb[0].mxu0
        %v4377 = vadd.f32 0.0, %v4376
        %v4378 = vpop.f32.mrb[0].mxu0
        %v4379 = vpop.f32.mrb[0].mxu0
        %v4380 = vadd.f32 0.0, %v4379
        %v4381 = vpop.f32.mrb[0].mxu0
        %4382 = vmatprep.mubr.bf16.mxu0 0
        %4383 = vmatmul.mubr.bf16.gmra.mrb[0].mxu0 %v4213
        %v4384 = vpop.f32.mrb[0].mxu0
        %v4385 = vadd.f32 0.0, %v4384
        %v4386 = vpop.f32.mrb[0].mxu0
        %v4387 = vpop.f32.mrb[0].mxu0
        %v4388 = vadd.f32 0.0, %v4387
        %v4389 = vpop.f32.mrb[0].mxu0
        %4390 = vmatprep.mubr.bf16.mxu0 0
        %4391 = vmatmul.mubr.bf16.gmra.mrb[0].mxu0 %v4214
        %v4392 = vpop.f32.mrb[0].mxu0
        %v4393 = vadd.f32 0.0, %v4392
        %v4394 = vpop.f32.mrb[0].mxu0
        %v4395 = vpop.f32.mrb[0].mxu0
        %v4396 = vadd.f32 0.0, %v4395
        %v4397 = vpop.f32.mrb[0].mxu0
        %4398 = vmatprep.mubr.bf16.mxu0 0
        %4399 = vmatmul.mubr.bf16.gmra.mrb[0].mxu0 %v4215
        %v4400 = vpop.f32.mrb[0].mxu0
        %v4401 = vadd.f32 0.0, %v4400
        %v4402 = vpop.f32.mrb[0].mxu0
        %v4403 = vpop.f32.mrb[0].mxu0
        %v4404 = vadd.f32 0.0, %v4403
        %v4405 = vpop.f32.mrb[0].mxu0
        %4406 = vmatprep.mubr.bf16.mxu0 0
        %4407 = vmatmul.mubr.bf16.gmra.mrb[0].mxu0 %v4216
        %v4408 = vpop.f32.mrb[0].mxu0
        %v4409 = vadd.f32 0.0, %v4408
        %v4410 = vpop.f32.mrb[0].mxu0
        %v4411 = vpop.f32.mrb[0].mxu0
        %v4412 = vadd.f32 0.0, %v4411
        %v4413 = vpop.f32.mrb[0].mxu0
        %4414 = vmatprep.mubr.bf16.mxu0 0
        %4415 = vmatmul.mubr.bf16.gmra.mrb[0].mxu0 %v4217
        %v4416 = vpop.f32.mrb[0].mxu0
        %v4417 = vadd.f32 0.0, %v4416
        %v4418 = vpop.f32.mrb[0].mxu0
        %v4419 = vpop.f32.mrb[0].mxu0
        %v4420 = vadd.f32 0.0, %v4419
        %v4421 = vpop.f32.mrb[0].mxu0
        %4422 = vmatprep.mubr.bf16.mxu0 0
        %4423 = vmatmul.mubr.bf16.gmra.mrb[0].mxu0 %v4218
        %v4424 = vpop.f32.mrb[0].mxu0
        %v4425 = vadd.f32 0.0, %v4424
        %v4426 = vpop.f32.mrb[0].mxu0
        %v4427 = vpop.f32.mrb[0].mxu0
        %v4428 = vadd.f32 0.0, %v4427
        %v4429 = vpop.f32.mrb[0].mxu0
        %4430 = vmatprep.mubr.bf16.mxu0 0
        %4431 = vmatmul.mubr.bf16.gmra.mrb[0].mxu0 %v4219
        %v4432 = vpop.f32.mrb[0].mxu0
        %v4433 = vadd.f32 0.0, %v4432
        %v4434 = vpop.f32.mrb[0].mxu0
        %v4435 = vpop.f32.mrb[0].mxu0
        %v4436 = vadd.f32 0.0, %v4435
        %v4437 = vpop.f32.mrb[0].mxu0
        %4438 = vmatprep.mubr.bf16.mxu0 0
        %4439 = vmatmul.mubr.bf16.gmra.mrb[0].mxu0 %v4220
        %v4440 = vpop.f32.mrb[0].mxu0
        %v4441 = vadd.f32 0.0, %v4440
        %v4442 = vpop.f32.mrb[0].mxu0
        %v4443 = vpop.f32.mrb[0].mxu0
        %v4444 = vadd.f32 0.0, %v4443
        %v4445 = vpop.f32.mrb[0].mxu0
        %4446 = vdwg.mxu0
        %v4447 = vadd.f32 %v3983, %v4321
        %v4448 = vadd.f32 %v3986, %v4324
        %v4449 = vadd.f32 %v3991, %v4329
        %v4450 = vadd.f32 %v3994, %v4332
        %v4451 = vadd.f32 %v3999, %v4337
        %v4452 = vadd.f32 %v4002, %v4340
        %v4453 = vadd.f32 %v4007, %v4345
        %v4454 = vadd.f32 %v4010, %v4348
        %v4455 = vadd.f32 %v4015, %v4353
        %v4456 = vadd.f32 %v4018, %v4356
        %v4457 = vadd.f32 %v4023, %v4361
        %v4458 = vadd.f32 %v4026, %v4364
        %v4459 = vadd.f32 %v4031, %v4369
        %v4460 = vadd.f32 %v4034, %v4372
        %v4461 = vadd.f32 %v4039, %v4377
        %v4462 = vadd.f32 %v4042, %v4380
        %v4463 = vadd.f32 %v4047, %v4385
        %v4464 = vadd.f32 %v4050, %v4388
        %v4465 = vadd.f32 %v4055, %v4393
        %v4466 = vadd.f32 %v4058, %v4396
        %v4467 = vadd.f32 %v4063, %v4401
        %v4468 = vadd.f32 %v4066, %v4404
        %v4469 = vadd.f32 %v4071, %v4409
        %v4470 = vadd.f32 %v4074, %v4412
        %v4471 = vadd.f32 %v4079, %v4417
        %v4472 = vadd.f32 %v4082, %v4420
        %v4473 = vadd.f32 %v4087, %v4425
        %v4474 = vadd.f32 %v4090, %v4428
        %v4475 = vadd.f32 %v4095, %v4433
        %v4476 = vadd.f32 %v4098, %v4436
        %v4477 = vadd.f32 %v4103, %v4441
        %v4478 = vadd.f32 %v4106, %v4444
        %v4479 = vld [vmem:[%s253] sm:$0xff]
        %v4480 = vld [vmem:[%s253 + $0x8] sm:$0xff]
        %v4481 = vld [vmem:[%s253 + $0x10] sm:$0xff]
        %v4482 = vld [vmem:[%s253 + $0x18] sm:$0xff]
        %v4483 = vld [vmem:[%s253 + $0x20] sm:$0xff]
        %v4484 = vld [vmem:[%s253 + $0x28] sm:$0xff]
        %v4485 = vld [vmem:[%s253 + $0x30] sm:$0xff]
        %v4486 = vld [vmem:[%s253 + $0x38] sm:$0xff]
        %v4487 = vld [vmem:[%s253 + $0x40] sm:$0xff]
        %v4488 = vld [vmem:[%s253 + $0x48] sm:$0xff]
        %v4489 = vld [vmem:[%s253 + $0x50] sm:$0xff]
        %v4490 = vld [vmem:[%s253 + $0x58] sm:$0xff]
        %v4491 = vld [vmem:[%s253 + $0x60] sm:$0xff]
        %v4492 = vld [vmem:[%s253 + $0x68] sm:$0xff]
        %v4493 = vld [vmem:[%s253 + $0x70] sm:$0xff]
        %v4494 = vld [vmem:[%s253 + $0x78] sm:$0xff]
        %v4495 = vld [vmem:[%s253 + $0x80] sm:$0xff]
        %v4496 = vld [vmem:[%s253 + $0x88] sm:$0xff]
        %v4497 = vld [vmem:[%s253 + $0x90] sm:$0xff]
        %v4498 = vld [vmem:[%s253 + $0x98] sm:$0xff]
        %v4499 = vld [vmem:[%s253 + $0xa0] sm:$0xff]
        %v4500 = vld [vmem:[%s253 + $0xa8] sm:$0xff]
        %v4501 = vld [vmem:[%s253 + $0xb0] sm:$0xff]
        %v4502 = vld [vmem:[%s253 + $0xb8] sm:$0xff]
        %v4503 = vld [vmem:[%s253 + $0xc0] sm:$0xff]
        %v4504 = vld [vmem:[%s253 + $0xc8] sm:$0xff]
        %v4505 = vld [vmem:[%s253 + $0xd0] sm:$0xff]
        %v4506 = vld [vmem:[%s253 + $0xd8] sm:$0xff]
        %v4507 = vld [vmem:[%s253 + $0xe0] sm:$0xff]
        %v4508 = vld [vmem:[%s253 + $0xe8] sm:$0xff]
        %v4509 = vld [vmem:[%s253 + $0xf0] sm:$0xff]
        %v4510 = vld [vmem:[%s253 + $0xf8] sm:$0xff]
        %v4511 = vrot.slane %v4479, 7
        %v4512 = vrot.slane %v4480, 7
        %v4513 = vrot.slane %v4481, 7
        %v4514 = vrot.slane %v4482, 7
        %v4515 = vrot.slane %v4483, 7
        %v4516 = vrot.slane %v4484, 7
        %v4517 = vrot.slane %v4485, 7
        %v4518 = vrot.slane %v4486, 7
        %v4519 = vrot.slane %v4487, 7
        %v4520 = vrot.slane %v4488, 7
        %v4521 = vrot.slane %v4489, 7
        %v4522 = vrot.slane %v4490, 7
        %v4523 = vrot.slane %v4491, 7
        %v4524 = vrot.slane %v4492, 7
        %v4525 = vrot.slane %v4493, 7
        %v4526 = vrot.slane %v4494, 7
        %v4527 = vrot.slane %v4495, 7
        %v4528 = vrot.slane %v4496, 7
        %v4529 = vrot.slane %v4497, 7
        %v4530 = vrot.slane %v4498, 7
        %v4531 = vrot.slane %v4499, 7
        %v4532 = vrot.slane %v4500, 7
        %v4533 = vrot.slane %v4501, 7
        %v4534 = vrot.slane %v4502, 7
        %v4535 = vrot.slane %v4503, 7
        %v4536 = vrot.slane %v4504, 7
        %v4537 = vrot.slane %v4505, 7
        %v4538 = vrot.slane %v4506, 7
        %v4539 = vrot.slane %v4507, 7
        %v4540 = vrot.slane %v4508, 7
        %v4541 = vrot.slane %v4509, 7
        %v4542 = vrot.slane %v4510, 7
        %v4543 = vsel %vm350, %v4541, %v4542
        %v4544 = vsel %vm350, %v4540, %v4541
        %v4545 = vsel %vm350, %v4539, %v4540
        %v4546 = vsel %vm350, %v4538, %v4539
        %v4547 = vsel %vm350, %v4537, %v4538
        %v4548 = vsel %vm350, %v4536, %v4537
        %v4549 = vsel %vm350, %v4535, %v4536
        %v4550 = vsel %vm350, %v4534, %v4535
        %v4551 = vsel %vm350, %v4533, %v4534
        %v4552 = vsel %vm350, %v4532, %v4533
        %v4553 = vsel %vm350, %v4531, %v4532
        %v4554 = vsel %vm350, %v4530, %v4531
        %v4555 = vsel %vm350, %v4529, %v4530
        %v4556 = vsel %vm350, %v4528, %v4529
        %v4557 = vsel %vm350, %v4527, %v4528
        %v4558 = vsel %vm350, %v4526, %v4527
        %v4559 = vsel %vm350, %v4525, %v4526
        %v4560 = vsel %vm350, %v4524, %v4525
        %v4561 = vsel %vm350, %v4523, %v4524
        %v4562 = vsel %vm350, %v4522, %v4523
        %v4563 = vsel %vm350, %v4521, %v4522
        %v4564 = vsel %vm350, %v4520, %v4521
        %v4565 = vsel %vm350, %v4519, %v4520
        %v4566 = vsel %vm350, %v4518, %v4519
        %v4567 = vsel %vm350, %v4517, %v4518
        %v4568 = vsel %vm350, %v4516, %v4517
        %v4569 = vsel %vm350, %v4515, %v4516
        %v4570 = vsel %vm350, %v4514, %v4515
        %v4571 = vsel %vm350, %v4513, %v4514
        %v4572 = vsel %vm350, %v4512, %v4513
        %v4573 = vsel %vm350, %v4511, %v4512
        %v4574 = vsel %vm350, %v4542, %v4511
        %v4575 = vmul.f32 %v4574, %v215
        %v4576 = vmul.f32 %v4573, %v216
        %v4577 = vmul.f32 %v4572, %v215
        %v4578 = vmul.f32 %v4571, %v216
        %v4579 = vmul.f32 %v4570, %v215
        %v4580 = vmul.f32 %v4569, %v216
        %v4581 = vmul.f32 %v4568, %v215
        %v4582 = vmul.f32 %v4567, %v216
        %v4583 = vmul.f32 %v4566, %v215
        %v4584 = vmul.f32 %v4565, %v216
        %v4585 = vmul.f32 %v4564, %v215
        %v4586 = vmul.f32 %v4563, %v216
        %v4587 = vmul.f32 %v4562, %v215
        %v4588 = vmul.f32 %v4561, %v216
        %v4589 = vmul.f32 %v4560, %v215
        %v4590 = vmul.f32 %v4559, %v216
        %v4591 = vmul.f32 %v4558, %v215
        %v4592 = vmul.f32 %v4557, %v216
        %v4593 = vmul.f32 %v4556, %v215
        %v4594 = vmul.f32 %v4555, %v216
        %v4595 = vmul.f32 %v4554, %v215
        %v4596 = vmul.f32 %v4553, %v216
        %v4597 = vmul.f32 %v4552, %v215
        %v4598 = vmul.f32 %v4551, %v216
        %v4599 = vmul.f32 %v4550, %v215
        %v4600 = vmul.f32 %v4549, %v216
        %v4601 = vmul.f32 %v4548, %v215
        %v4602 = vmul.f32 %v4547, %v216
        %v4603 = vmul.f32 %v4546, %v215
        %v4604 = vmul.f32 %v4545, %v216
        %v4605 = vmul.f32 %v4544, %v215
        %v4606 = vmul.f32 %v4543, %v216
        %v4607 = vpack.c.bf16 %v4576, %v4575
        %v4608 = vpack.c.bf16 %v4578, %v4577
        %v4609 = vpack.c.bf16 %v4580, %v4579
        %v4610 = vpack.c.bf16 %v4582, %v4581
        %v4611 = vpack.c.bf16 %v4584, %v4583
        %v4612 = vpack.c.bf16 %v4586, %v4585
        %v4613 = vpack.c.bf16 %v4588, %v4587
        %v4614 = vpack.c.bf16 %v4590, %v4589
        %v4615 = vpack.c.bf16 %v4592, %v4591
        %v4616 = vpack.c.bf16 %v4594, %v4593
        %v4617 = vpack.c.bf16 %v4596, %v4595
        %v4618 = vpack.c.bf16 %v4598, %v4597
        %v4619 = vpack.c.bf16 %v4600, %v4599
        %v4620 = vpack.c.bf16 %v4602, %v4601
        %v4621 = vpack.c.bf16 %v4604, %v4603
        %v4622 = vpack.c.bf16 %v4606, %v4605
        %s4623 = scalar_lea.vmem [#allocation6], 768
        %v4624 = vld [vmem:[%s4623] sm:$0xf]
        %v4625 = vld [vmem:[%s4623 + $0x4] sm:$0xf]
        %v4626 = vld [vmem:[%s4623 + $0x8] sm:$0xf]
        %v4627 = vld [vmem:[%s4623 + $0xc] sm:$0xf]
        %v4628 = vld [vmem:[%s4623 + $0x10] sm:$0xf]
        %v4629 = vld [vmem:[%s4623 + $0x14] sm:$0xf]
        %v4630 = vld [vmem:[%s4623 + $0x18] sm:$0xf]
        %v4631 = vld [vmem:[%s4623 + $0x1c] sm:$0xf]
        %v4632 = vld [vmem:[%s4623 + $0x20] sm:$0xf]
        %v4633 = vld [vmem:[%s4623 + $0x24] sm:$0xf]
        %v4634 = vld [vmem:[%s4623 + $0x28] sm:$0xf]
        %v4635 = vld [vmem:[%s4623 + $0x2c] sm:$0xf]
        %v4636 = vld [vmem:[%s4623 + $0x30] sm:$0xf]
        %v4637 = vld [vmem:[%s4623 + $0x34] sm:$0xf]
        %v4638 = vld [vmem:[%s4623 + $0x38] sm:$0xf]
        %v4639 = vld [vmem:[%s4623 + $0x3c] sm:$0xf]
        %v4656 = vunpack.c.l.b16 %v4624
        %v4657 = vunpack.c.l.b16 %v4625
        %v4658 = vunpack.c.l.b16 %v4626
        %v4659 = vunpack.c.l.b16 %v4627
        %v4660 = vunpack.c.l.b16 %v4628
        %v4661 = vunpack.c.l.b16 %v4629
        %v4662 = vunpack.c.l.b16 %v4630
        %v4663 = vunpack.c.l.b16 %v4631
        %v4664 = vunpack.c.l.b16 %v4632
        %v4665 = vunpack.c.l.b16 %v4633
        %v4666 = vunpack.c.l.b16 %v4634
        %v4667 = vunpack.c.l.b16 %v4635
        %v4668 = vunpack.c.l.b16 %v4636
        %v4669 = vunpack.c.l.b16 %v4637
        %v4670 = vunpack.c.l.b16 %v4638
        %v4671 = vunpack.c.l.b16 %v4639
        %v4672 = vpack.c.b16 %v4657, %v4656
        %v4673 = vpack.c.b16 %v4659, %v4658
        %v4674 = vpack.c.b16 %v4661, %v4660
        %v4675 = vpack.c.b16 %v4663, %v4662
        %v4676 = vpack.c.b16 %v4665, %v4664
        %v4677 = vpack.c.b16 %v4667, %v4666
        %v4678 = vpack.c.b16 %v4669, %v4668
        %v4679 = vpack.c.b16 %v4671, %v4670
        %4688 = vmatprep.subr.bf16.mxu0 0
        %4689 = vmatpush1.bf16.msra.mxu0 %v4672
        %4690 = vmatprep.subr.bf16.mxu0 0
        %4691 = vmatpush1.bf16.msra.mxu0 %v4673
        %4692 = vmatprep.subr.bf16.mxu0 0
        %4693 = vmatpush1.bf16.msra.mxu0 %v4674
        %4694 = vmatprep.subr.bf16.mxu0 0
        %4695 = vmatpush1.bf16.msra.mxu0 %v4675
        %4696 = vmatprep.subr.bf16.mxu0 0
        %4697 = vmatpush1.bf16.msra.mxu0 %v4676
        %4698 = vmatprep.subr.bf16.mxu0 0
        %4699 = vmatpush1.bf16.msra.mxu0 %v4677
        %4700 = vmatprep.subr.bf16.mxu0 0
        %4701 = vmatpush1.bf16.msra.mxu0 %v4678
        %4702 = vmatprep.subr.bf16.mxu0 0
        %4703 = vmatpush1.bf16.msra.mxu0 %v4679
        %4704 = vmatprep.subr.bf16.mxu0 0
        %4705 = vmatpush1.bf16.msra.mxu0 0
        %4706 = vmatprep.subr.bf16.mxu0 0
        %4707 = vmatpush1.bf16.msra.mxu0 0
        %4708 = vmatprep.subr.bf16.mxu0 0
        %4709 = vmatpush1.bf16.msra.mxu0 0
        %4710 = vmatprep.subr.bf16.mxu0 0
        %4711 = vmatpush1.bf16.msra.mxu0 0
        %4712 = vmatprep.subr.bf16.mxu0 0
        %4713 = vmatpush1.bf16.msra.mxu0 0
        %4714 = vmatprep.subr.bf16.mxu0 0
        %4715 = vmatpush1.bf16.msra.mxu0 0
        %4716 = vmatprep.subr.bf16.mxu0 0
        %4717 = vmatpush1.bf16.msra.mxu0 0
        %4718 = vmatprep.subr.bf16.mxu0 0
        %4719 = vmatpush1.bf16.msra.mxu0 0
        %4720 = vmatprep.mubr.bf16.mxu0 0
        %4721 = vmatmul.mubr.bf16.gmra.mrb[0].mxu0 %v4607
        %v4722 = vpop.f32.mrb[0].mxu0
        %v4723 = vadd.f32 0.0, %v4722
        %v4724 = vpop.f32.mrb[0].mxu0
        %v4725 = vpop.f32.mrb[0].mxu0
        %v4726 = vadd.f32 0.0, %v4725
        %v4727 = vpop.f32.mrb[0].mxu0
        %4728 = vmatprep.mubr.bf16.mxu0 0
        %4729 = vmatmul.mubr.bf16.gmra.mrb[0].mxu0 %v4608
        %v4730 = vpop.f32.mrb[0].mxu0
        %v4731 = vadd.f32 0.0, %v4730
        %v4732 = vpop.f32.mrb[0].mxu0
        %v4733 = vpop.f32.mrb[0].mxu0
        %v4734 = vadd.f32 0.0, %v4733
        %v4735 = vpop.f32.mrb[0].mxu0
        %4736 = vmatprep.mubr.bf16.mxu0 0
        %4737 = vmatmul.mubr.bf16.gmra.mrb[0].mxu0 %v4609
        %v4738 = vpop.f32.mrb[0].mxu0
        %v4739 = vadd.f32 0.0, %v4738
        %v4740 = vpop.f32.mrb[0].mxu0
        %v4741 = vpop.f32.mrb[0].mxu0
        %v4742 = vadd.f32 0.0, %v4741
        %v4743 = vpop.f32.mrb[0].mxu0
        %4744 = vmatprep.mubr.bf16.mxu0 0
        %4745 = vmatmul.mubr.bf16.gmra.mrb[0].mxu0 %v4610
        %v4746 = vpop.f32.mrb[0].mxu0
        %v4747 = vadd.f32 0.0, %v4746
        %v4748 = vpop.f32.mrb[0].mxu0
        %v4749 = vpop.f32.mrb[0].mxu0
        %v4750 = vadd.f32 0.0, %v4749
        %v4751 = vpop.f32.mrb[0].mxu0
        %4752 = vmatprep.mubr.bf16.mxu0 0
        %4753 = vmatmul.mubr.bf16.gmra.mrb[0].mxu0 %v4611
        %v4754 = vpop.f32.mrb[0].mxu0
        %v4755 = vadd.f32 0.0, %v4754
        %v4756 = vpop.f32.mrb[0].mxu0
        %v4757 = vpop.f32.mrb[0].mxu0
        %v4758 = vadd.f32 0.0, %v4757
        %v4759 = vpop.f32.mrb[0].mxu0
        %4760 = vmatprep.mubr.bf16.mxu0 0
        %4761 = vmatmul.mubr.bf16.gmra.mrb[0].mxu0 %v4612
        %v4762 = vpop.f32.mrb[0].mxu0
        %v4763 = vadd.f32 0.0, %v4762
        %v4764 = vpop.f32.mrb[0].mxu0
        %v4765 = vpop.f32.mrb[0].mxu0
        %v4766 = vadd.f32 0.0, %v4765
        %v4767 = vpop.f32.mrb[0].mxu0
        %4768 = vmatprep.mubr.bf16.mxu0 0
        %4769 = vmatmul.mubr.bf16.gmra.mrb[0].mxu0 %v4613
        %v4770 = vpop.f32.mrb[0].mxu0
        %v4771 = vadd.f32 0.0, %v4770
        %v4772 = vpop.f32.mrb[0].mxu0
        %v4773 = vpop.f32.mrb[0].mxu0
        %v4774 = vadd.f32 0.0, %v4773
        %v4775 = vpop.f32.mrb[0].mxu0
        %4776 = vmatprep.mubr.bf16.mxu0 0
        %4777 = vmatmul.mubr.bf16.gmra.mrb[0].mxu0 %v4614
        %v4778 = vpop.f32.mrb[0].mxu0
        %v4779 = vadd.f32 0.0, %v4778
        %v4780 = vpop.f32.mrb[0].mxu0
        %v4781 = vpop.f32.mrb[0].mxu0
        %v4782 = vadd.f32 0.0, %v4781
        %v4783 = vpop.f32.mrb[0].mxu0
        %4784 = vmatprep.mubr.bf16.mxu0 0
        %4785 = vmatmul.mubr.bf16.gmra.mrb[0].mxu0 %v4615
        %v4786 = vpop.f32.mrb[0].mxu0
        %v4787 = vadd.f32 0.0, %v4786
        %v4788 = vpop.f32.mrb[0].mxu0
        %v4789 = vpop.f32.mrb[0].mxu0
        %v4790 = vadd.f32 0.0, %v4789
        %v4791 = vpop.f32.mrb[0].mxu0
        %4792 = vmatprep.mubr.bf16.mxu0 0
        %4793 = vmatmul.mubr.bf16.gmra.mrb[0].mxu0 %v4616
        %v4794 = vpop.f32.mrb[0].mxu0
        %v4795 = vadd.f32 0.0, %v4794
        %v4796 = vpop.f32.mrb[0].mxu0
        %v4797 = vpop.f32.mrb[0].mxu0
        %v4798 = vadd.f32 0.0, %v4797
        %v4799 = vpop.f32.mrb[0].mxu0
        %4800 = vmatprep.mubr.bf16.mxu0 0
        %4801 = vmatmul.mubr.bf16.gmra.mrb[0].mxu0 %v4617
        %v4802 = vpop.f32.mrb[0].mxu0
        %v4803 = vadd.f32 0.0, %v4802
        %v4804 = vpop.f32.mrb[0].mxu0
        %v4805 = vpop.f32.mrb[0].mxu0
        %v4806 = vadd.f32 0.0, %v4805
        %v4807 = vpop.f32.mrb[0].mxu0
        %4808 = vmatprep.mubr.bf16.mxu0 0
        %4809 = vmatmul.mubr.bf16.gmra.mrb[0].mxu0 %v4618
        %v4810 = vpop.f32.mrb[0].mxu0
        %v4811 = vadd.f32 0.0, %v4810
        %v4812 = vpop.f32.mrb[0].mxu0
        %v4813 = vpop.f32.mrb[0].mxu0
        %v4814 = vadd.f32 0.0, %v4813
        %v4815 = vpop.f32.mrb[0].mxu0
        %4816 = vmatprep.mubr.bf16.mxu0 0
        %4817 = vmatmul.mubr.bf16.gmra.mrb[0].mxu0 %v4619
        %v4818 = vpop.f32.mrb[0].mxu0
        %v4819 = vadd.f32 0.0, %v4818
        %v4820 = vpop.f32.mrb[0].mxu0
        %v4821 = vpop.f32.mrb[0].mxu0
        %v4822 = vadd.f32 0.0, %v4821
        %v4823 = vpop.f32.mrb[0].mxu0
        %4824 = vmatprep.mubr.bf16.mxu0 0
        %4825 = vmatmul.mubr.bf16.gmra.mrb[0].mxu0 %v4620
        %v4826 = vpop.f32.mrb[0].mxu0
        %v4827 = vadd.f32 0.0, %v4826
        %v4828 = vpop.f32.mrb[0].mxu0
        %v4829 = vpop.f32.mrb[0].mxu0
        %v4830 = vadd.f32 0.0, %v4829
        %v4831 = vpop.f32.mrb[0].mxu0
        %4832 = vmatprep.mubr.bf16.mxu0 0
        %4833 = vmatmul.mubr.bf16.gmra.mrb[0].mxu0 %v4621
        %v4834 = vpop.f32.mrb[0].mxu0
        %v4835 = vadd.f32 0.0, %v4834
        %v4836 = vpop.f32.mrb[0].mxu0
        %v4837 = vpop.f32.mrb[0].mxu0
        %v4838 = vadd.f32 0.0, %v4837
        %v4839 = vpop.f32.mrb[0].mxu0
        %4840 = vmatprep.mubr.bf16.mxu0 0
        %4841 = vmatmul.mubr.bf16.gmra.mrb[0].mxu0 %v4622
        %v4842 = vpop.f32.mrb[0].mxu0
        %v4843 = vadd.f32 0.0, %v4842
        %v4844 = vpop.f32.mrb[0].mxu0
        %v4845 = vpop.f32.mrb[0].mxu0
        %v4846 = vadd.f32 0.0, %v4845
        %v4847 = vpop.f32.mrb[0].mxu0
        %4848 = vdwg.mxu0
        %v4849 = vadd.f32 %v4447, %v4723
        %v4850 = vadd.f32 %v4448, %v4726
        %v4851 = vadd.f32 %v4449, %v4731
        %v4852 = vadd.f32 %v4450, %v4734
        %v4853 = vadd.f32 %v4451, %v4739
        %v4854 = vadd.f32 %v4452, %v4742
        %v4855 = vadd.f32 %v4453, %v4747
        %v4856 = vadd.f32 %v4454, %v4750
        %v4857 = vadd.f32 %v4455, %v4755
        %v4858 = vadd.f32 %v4456, %v4758
        %v4859 = vadd.f32 %v4457, %v4763
        %v4860 = vadd.f32 %v4458, %v4766
        %v4861 = vadd.f32 %v4459, %v4771
        %v4862 = vadd.f32 %v4460, %v4774
        %v4863 = vadd.f32 %v4461, %v4779
        %v4864 = vadd.f32 %v4462, %v4782
        %v4865 = vadd.f32 %v4463, %v4787
        %v4866 = vadd.f32 %v4464, %v4790
        %v4867 = vadd.f32 %v4465, %v4795
        %v4868 = vadd.f32 %v4466, %v4798
        %v4869 = vadd.f32 %v4467, %v4803
        %v4870 = vadd.f32 %v4468, %v4806
        %v4871 = vadd.f32 %v4469, %v4811
        %v4872 = vadd.f32 %v4470, %v4814
        %v4873 = vadd.f32 %v4471, %v4819
        %v4874 = vadd.f32 %v4472, %v4822
        %v4875 = vadd.f32 %v4473, %v4827
        %v4876 = vadd.f32 %v4474, %v4830
        %v4877 = vadd.f32 %v4475, %v4835
        %v4878 = vadd.f32 %v4476, %v4838
        %v4879 = vadd.f32 %v4477, %v4843
        %v4880 = vadd.f32 %v4478, %v4846
        %v4881 = vpack.c.bf16 %v4480, %v4479
        %v4882 = vpack.c.bf16 %v4482, %v4481
        %v4883 = vpack.c.bf16 %v4484, %v4483
        %v4884 = vpack.c.bf16 %v4486, %v4485
        %v4885 = vpack.c.bf16 %v4488, %v4487
        %v4886 = vpack.c.bf16 %v4490, %v4489
        %v4887 = vpack.c.bf16 %v4492, %v4491
        %v4888 = vpack.c.bf16 %v4494, %v4493
        %v4889 = vpack.c.bf16 %v4496, %v4495
        %v4890 = vpack.c.bf16 %v4498, %v4497
        %v4891 = vpack.c.bf16 %v4500, %v4499
        %v4892 = vpack.c.bf16 %v4502, %v4501
        %v4893 = vpack.c.bf16 %v4504, %v4503
        %v4894 = vpack.c.bf16 %v4506, %v4505
        %v4895 = vpack.c.bf16 %v4508, %v4507
        %v4896 = vpack.c.bf16 %v4510, %v4509
        %s4897 = scalar_lea.vmem [#allocation6], 832
        %v4898 = vld [vmem:[%s4897] sm:$0xf]
        %v4899 = vld [vmem:[%s4897 + $0x4] sm:$0xf]
        %v4900 = vld [vmem:[%s4897 + $0x8] sm:$0xf]
        %v4901 = vld [vmem:[%s4897 + $0xc] sm:$0xf]
        %v4902 = vld [vmem:[%s4897 + $0x10] sm:$0xf]
        %v4903 = vld [vmem:[%s4897 + $0x14] sm:$0xf]
        %v4904 = vld [vmem:[%s4897 + $0x18] sm:$0xf]
        %v4905 = vld [vmem:[%s4897 + $0x1c] sm:$0xf]
        %v4906 = vld [vmem:[%s4897 + $0x20] sm:$0xf]
        %v4907 = vld [vmem:[%s4897 + $0x24] sm:$0xf]
        %v4908 = vld [vmem:[%s4897 + $0x28] sm:$0xf]
        %v4909 = vld [vmem:[%s4897 + $0x2c] sm:$0xf]
        %v4910 = vld [vmem:[%s4897 + $0x30] sm:$0xf]
        %v4911 = vld [vmem:[%s4897 + $0x34] sm:$0xf]
        %v4912 = vld [vmem:[%s4897 + $0x38] sm:$0xf]
        %v4913 = vld [vmem:[%s4897 + $0x3c] sm:$0xf]
        %v4930 = vunpack.c.l.b16 %v4898
        %v4931 = vunpack.c.l.b16 %v4899
        %v4932 = vunpack.c.l.b16 %v4900
        %v4933 = vunpack.c.l.b16 %v4901
        %v4934 = vunpack.c.l.b16 %v4902
        %v4935 = vunpack.c.l.b16 %v4903
        %v4936 = vunpack.c.l.b16 %v4904
        %v4937 = vunpack.c.l.b16 %v4905
        %v4938 = vunpack.c.l.b16 %v4906
        %v4939 = vunpack.c.l.b16 %v4907
        %v4940 = vunpack.c.l.b16 %v4908
        %v4941 = vunpack.c.l.b16 %v4909
        %v4942 = vunpack.c.l.b16 %v4910
        %v4943 = vunpack.c.l.b16 %v4911
        %v4944 = vunpack.c.l.b16 %v4912
        %v4945 = vunpack.c.l.b16 %v4913
        %v4946 = vpack.c.b16 %v4931, %v4930
        %v4947 = vpack.c.b16 %v4933, %v4932
        %v4948 = vpack.c.b16 %v4935, %v4934
        %v4949 = vpack.c.b16 %v4937, %v4936
        %v4950 = vpack.c.b16 %v4939, %v4938
        %v4951 = vpack.c.b16 %v4941, %v4940
        %v4952 = vpack.c.b16 %v4943, %v4942
        %v4953 = vpack.c.b16 %v4945, %v4944
        %4962 = vmatprep.subr.bf16.mxu0 0
        %4963 = vmatpush1.bf16.msra.mxu0 %v4946
        %4964 = vmatprep.subr.bf16.mxu0 0
        %4965 = vmatpush1.bf16.msra.mxu0 %v4947
        %4966 = vmatprep.subr.bf16.mxu0 0
        %4967 = vmatpush1.bf16.msra.mxu0 %v4948
        %4968 = vmatprep.subr.bf16.mxu0 0
        %4969 = vmatpush1.bf16.msra.mxu0 %v4949
        %4970 = vmatprep.subr.bf16.mxu0 0
        %4971 = vmatpush1.bf16.msra.mxu0 %v4950
        %4972 = vmatprep.subr.bf16.mxu0 0
        %4973 = vmatpush1.bf16.msra.mxu0 %v4951
        %4974 = vmatprep.subr.bf16.mxu0 0
        %4975 = vmatpush1.bf16.msra.mxu0 %v4952
        %4976 = vmatprep.subr.bf16.mxu0 0
        %4977 = vmatpush1.bf16.msra.mxu0 %v4953
        %4978 = vmatprep.subr.bf16.mxu0 0
        %4979 = vmatpush1.bf16.msra.mxu0 0
        %4980 = vmatprep.subr.bf16.mxu0 0
        %4981 = vmatpush1.bf16.msra.mxu0 0
        %4982 = vmatprep.subr.bf16.mxu0 0
        %4983 = vmatpush1.bf16.msra.mxu0 0
        %4984 = vmatprep.subr.bf16.mxu0 0
        %4985 = vmatpush1.bf16.msra.mxu0 0
        %4986 = vmatprep.subr.bf16.mxu0 0
        %4987 = vmatpush1.bf16.msra.mxu0 0
        %4988 = vmatprep.subr.bf16.mxu0 0
        %4989 = vmatpush1.bf16.msra.mxu0 0
        %4990 = vmatprep.subr.bf16.mxu0 0
        %4991 = vmatpush1.bf16.msra.mxu0 0
        %4992 = vmatprep.subr.bf16.mxu0 0
        %4993 = vmatpush1.bf16.msra.mxu0 0
        %4994 = vmatprep.mubr.bf16.mxu0 0
        %4995 = vmatmul.mubr.bf16.gmra.mrb[0].mxu0 %v4881
        %v4996 = vpop.f32.mrb[0].mxu0
        %v4997 = vadd.f32 0.0, %v4996
        %v4998 = vpop.f32.mrb[0].mxu0
        %v4999 = vpop.f32.mrb[0].mxu0
        %v5000 = vadd.f32 0.0, %v4999
        %v5001 = vpop.f32.mrb[0].mxu0
        %5002 = vmatprep.mubr.bf16.mxu0 0
        %5003 = vmatmul.mubr.bf16.gmra.mrb[0].mxu0 %v4882
        %v5004 = vpop.f32.mrb[0].mxu0
        %v5005 = vadd.f32 0.0, %v5004
        %v5006 = vpop.f32.mrb[0].mxu0
        %v5007 = vpop.f32.mrb[0].mxu0
        %v5008 = vadd.f32 0.0, %v5007
        %v5009 = vpop.f32.mrb[0].mxu0
        %5010 = vmatprep.mubr.bf16.mxu0 0
        %5011 = vmatmul.mubr.bf16.gmra.mrb[0].mxu0 %v4883
        %v5012 = vpop.f32.mrb[0].mxu0
        %v5013 = vadd.f32 0.0, %v5012
        %v5014 = vpop.f32.mrb[0].mxu0
        %v5015 = vpop.f32.mrb[0].mxu0
        %v5016 = vadd.f32 0.0, %v5015
        %v5017 = vpop.f32.mrb[0].mxu0
        %5018 = vmatprep.mubr.bf16.mxu0 0
        %5019 = vmatmul.mubr.bf16.gmra.mrb[0].mxu0 %v4884
        %v5020 = vpop.f32.mrb[0].mxu0
        %v5021 = vadd.f32 0.0, %v5020
        %v5022 = vpop.f32.mrb[0].mxu0
        %v5023 = vpop.f32.mrb[0].mxu0
        %v5024 = vadd.f32 0.0, %v5023
        %v5025 = vpop.f32.mrb[0].mxu0
        %5026 = vmatprep.mubr.bf16.mxu0 0
        %5027 = vmatmul.mubr.bf16.gmra.mrb[0].mxu0 %v4885
        %v5028 = vpop.f32.mrb[0].mxu0
        %v5029 = vadd.f32 0.0, %v5028
        %v5030 = vpop.f32.mrb[0].mxu0
        %v5031 = vpop.f32.mrb[0].mxu0
        %v5032 = vadd.f32 0.0, %v5031
        %v5033 = vpop.f32.mrb[0].mxu0
        %5034 = vmatprep.mubr.bf16.mxu0 0
        %5035 = vmatmul.mubr.bf16.gmra.mrb[0].mxu0 %v4886
        %v5036 = vpop.f32.mrb[0].mxu0
        %v5037 = vadd.f32 0.0, %v5036
        %v5038 = vpop.f32.mrb[0].mxu0
        %v5039 = vpop.f32.mrb[0].mxu0
        %v5040 = vadd.f32 0.0, %v5039
        %v5041 = vpop.f32.mrb[0].mxu0
        %5042 = vmatprep.mubr.bf16.mxu0 0
        %5043 = vmatmul.mubr.bf16.gmra.mrb[0].mxu0 %v4887
        %v5044 = vpop.f32.mrb[0].mxu0
        %v5045 = vadd.f32 0.0, %v5044
        %v5046 = vpop.f32.mrb[0].mxu0
        %v5047 = vpop.f32.mrb[0].mxu0
        %v5048 = vadd.f32 0.0, %v5047
        %v5049 = vpop.f32.mrb[0].mxu0
        %5050 = vmatprep.mubr.bf16.mxu0 0
        %5051 = vmatmul.mubr.bf16.gmra.mrb[0].mxu0 %v4888
        %v5052 = vpop.f32.mrb[0].mxu0
        %v5053 = vadd.f32 0.0, %v5052
        %v5054 = vpop.f32.mrb[0].mxu0
        %v5055 = vpop.f32.mrb[0].mxu0
        %v5056 = vadd.f32 0.0, %v5055
        %v5057 = vpop.f32.mrb[0].mxu0
        %5058 = vmatprep.mubr.bf16.mxu0 0
        %5059 = vmatmul.mubr.bf16.gmra.mrb[0].mxu0 %v4889
        %v5060 = vpop.f32.mrb[0].mxu0
        %v5061 = vadd.f32 0.0, %v5060
        %v5062 = vpop.f32.mrb[0].mxu0
        %v5063 = vpop.f32.mrb[0].mxu0
        %v5064 = vadd.f32 0.0, %v5063
        %v5065 = vpop.f32.mrb[0].mxu0
        %5066 = vmatprep.mubr.bf16.mxu0 0
        %5067 = vmatmul.mubr.bf16.gmra.mrb[0].mxu0 %v4890
        %v5068 = vpop.f32.mrb[0].mxu0
        %v5069 = vadd.f32 0.0, %v5068
        %v5070 = vpop.f32.mrb[0].mxu0
        %v5071 = vpop.f32.mrb[0].mxu0
        %v5072 = vadd.f32 0.0, %v5071
        %v5073 = vpop.f32.mrb[0].mxu0
        %5074 = vmatprep.mubr.bf16.mxu0 0
        %5075 = vmatmul.mubr.bf16.gmra.mrb[0].mxu0 %v4891
        %v5076 = vpop.f32.mrb[0].mxu0
        %v5077 = vadd.f32 0.0, %v5076
        %v5078 = vpop.f32.mrb[0].mxu0
        %v5079 = vpop.f32.mrb[0].mxu0
        %v5080 = vadd.f32 0.0, %v5079
        %v5081 = vpop.f32.mrb[0].mxu0
        %5082 = vmatprep.mubr.bf16.mxu0 0
        %5083 = vmatmul.mubr.bf16.gmra.mrb[0].mxu0 %v4892
        %v5084 = vpop.f32.mrb[0].mxu0
        %v5085 = vadd.f32 0.0, %v5084
        %v5086 = vpop.f32.mrb[0].mxu0
        %v5087 = vpop.f32.mrb[0].mxu0
        %v5088 = vadd.f32 0.0, %v5087
        %v5089 = vpop.f32.mrb[0].mxu0
        %5090 = vmatprep.mubr.bf16.mxu0 0
        %5091 = vmatmul.mubr.bf16.gmra.mrb[0].mxu0 %v4893
        %v5092 = vpop.f32.mrb[0].mxu0
        %v5093 = vadd.f32 0.0, %v5092
        %v5094 = vpop.f32.mrb[0].mxu0
        %v5095 = vpop.f32.mrb[0].mxu0
        %v5096 = vadd.f32 0.0, %v5095
        %v5097 = vpop.f32.mrb[0].mxu0
        %5098 = vmatprep.mubr.bf16.mxu0 0
        %5099 = vmatmul.mubr.bf16.gmra.mrb[0].mxu0 %v4894
        %v5100 = vpop.f32.mrb[0].mxu0
        %v5101 = vadd.f32 0.0, %v5100
        %v5102 = vpop.f32.mrb[0].mxu0
        %v5103 = vpop.f32.mrb[0].mxu0
        %v5104 = vadd.f32 0.0, %v5103
        %v5105 = vpop.f32.mrb[0].mxu0
        %5106 = vmatprep.mubr.bf16.mxu0 0
        %5107 = vmatmul.mubr.bf16.gmra.mrb[0].mxu0 %v4895
        %v5108 = vpop.f32.mrb[0].mxu0
        %v5109 = vadd.f32 0.0, %v5108
        %v5110 = vpop.f32.mrb[0].mxu0
        %v5111 = vpop.f32.mrb[0].mxu0
        %v5112 = vadd.f32 0.0, %v5111
        %v5113 = vpop.f32.mrb[0].mxu0
        %5114 = vmatprep.mubr.bf16.mxu0 0
        %5115 = vmatmul.mubr.bf16.gmra.mrb[0].mxu0 %v4896
        %v5116 = vpop.f32.mrb[0].mxu0
        %v5117 = vadd.f32 0.0, %v5116
        %v5118 = vpop.f32.mrb[0].mxu0
        %v5119 = vpop.f32.mrb[0].mxu0
        %v5120 = vadd.f32 0.0, %v5119
        %v5121 = vpop.f32.mrb[0].mxu0
        %5122 = vdwg.mxu0
        %v5123 = vadd.f32 %v4849, %v4997
        %v5124 = vadd.f32 %v4850, %v5000
        %v5125 = vadd.f32 %v4851, %v5005
        %v5126 = vadd.f32 %v4852, %v5008
        %v5127 = vadd.f32 %v4853, %v5013
        %v5128 = vadd.f32 %v4854, %v5016
        %v5129 = vadd.f32 %v4855, %v5021
        %v5130 = vadd.f32 %v4856, %v5024
        %v5131 = vadd.f32 %v4857, %v5029
        %v5132 = vadd.f32 %v4858, %v5032
        %v5133 = vadd.f32 %v4859, %v5037
        %v5134 = vadd.f32 %v4860, %v5040
        %v5135 = vadd.f32 %v4861, %v5045
        %v5136 = vadd.f32 %v4862, %v5048
        %v5137 = vadd.f32 %v4863, %v5053
        %v5138 = vadd.f32 %v4864, %v5056
        %v5139 = vadd.f32 %v4865, %v5061
        %v5140 = vadd.f32 %v4866, %v5064
        %v5141 = vadd.f32 %v4867, %v5069
        %v5142 = vadd.f32 %v4868, %v5072
        %v5143 = vadd.f32 %v4869, %v5077
        %v5144 = vadd.f32 %v4870, %v5080
        %v5145 = vadd.f32 %v4871, %v5085
        %v5146 = vadd.f32 %v4872, %v5088
        %v5147 = vadd.f32 %v4873, %v5093
        %v5148 = vadd.f32 %v4874, %v5096
        %v5149 = vadd.f32 %v4875, %v5101
        %v5150 = vadd.f32 %v4876, %v5104
        %v5151 = vadd.f32 %v4877, %v5109
        %v5152 = vadd.f32 %v4878, %v5112
        %v5153 = vadd.f32 %v4879, %v5117
        %v5154 = vadd.f32 %v4880, %v5120
        %v5155 = vrot.slane %v4479, 1
        %v5156 = vrot.slane %v4480, 1
        %v5157 = vrot.slane %v4481, 1
        %v5158 = vrot.slane %v4482, 1
        %v5159 = vrot.slane %v4483, 1
        %v5160 = vrot.slane %v4484, 1
        %v5161 = vrot.slane %v4485, 1
        %v5162 = vrot.slane %v4486, 1
        %v5163 = vrot.slane %v4487, 1
        %v5164 = vrot.slane %v4488, 1
        %v5165 = vrot.slane %v4489, 1
        %v5166 = vrot.slane %v4490, 1
        %v5167 = vrot.slane %v4491, 1
        %v5168 = vrot.slane %v4492, 1
        %v5169 = vrot.slane %v4493, 1
        %v5170 = vrot.slane %v4494, 1
        %v5171 = vrot.slane %v4495, 1
        %v5172 = vrot.slane %v4496, 1
        %v5173 = vrot.slane %v4497, 1
        %v5174 = vrot.slane %v4498, 1
        %v5175 = vrot.slane %v4499, 1
        %v5176 = vrot.slane %v4500, 1
        %v5177 = vrot.slane %v4501, 1
        %v5178 = vrot.slane %v4502, 1
        %v5179 = vrot.slane %v4503, 1
        %v5180 = vrot.slane %v4504, 1
        %v5181 = vrot.slane %v4505, 1
        %v5182 = vrot.slane %v4506, 1
        %v5183 = vrot.slane %v4507, 1
        %v5184 = vrot.slane %v4508, 1
        %v5185 = vrot.slane %v4509, 1
        %v5186 = vrot.slane %v4510, 1
        %v5187 = vsel %vm930, %v5185, %v5186
        %v5188 = vsel %vm930, %v5184, %v5185
        %v5189 = vsel %vm930, %v5183, %v5184
        %v5190 = vsel %vm930, %v5182, %v5183
        %v5191 = vsel %vm930, %v5181, %v5182
        %v5192 = vsel %vm930, %v5180, %v5181
        %v5193 = vsel %vm930, %v5179, %v5180
        %v5194 = vsel %vm930, %v5178, %v5179
        %v5195 = vsel %vm930, %v5177, %v5178
        %v5196 = vsel %vm930, %v5176, %v5177
        %v5197 = vsel %vm930, %v5175, %v5176
        %v5198 = vsel %vm930, %v5174, %v5175
        %v5199 = vsel %vm930, %v5173, %v5174
        %v5200 = vsel %vm930, %v5172, %v5173
        %v5201 = vsel %vm930, %v5171, %v5172
        %v5202 = vsel %vm930, %v5170, %v5171
        %v5203 = vsel %vm930, %v5169, %v5170
        %v5204 = vsel %vm930, %v5168, %v5169
        %v5205 = vsel %vm930, %v5167, %v5168
        %v5206 = vsel %vm930, %v5166, %v5167
        %v5207 = vsel %vm930, %v5165, %v5166
        %v5208 = vsel %vm930, %v5164, %v5165
        %v5209 = vsel %vm930, %v5163, %v5164
        %v5210 = vsel %vm930, %v5162, %v5163
        %v5211 = vsel %vm930, %v5161, %v5162
        %v5212 = vsel %vm930, %v5160, %v5161
        %v5213 = vsel %vm930, %v5159, %v5160
        %v5214 = vsel %vm930, %v5158, %v5159
        %v5215 = vsel %vm930, %v5157, %v5158
        %v5216 = vsel %vm930, %v5156, %v5157
        %v5217 = vsel %vm930, %v5155, %v5156
        %v5218 = vsel %vm930, %v5186, %v5155
        %v5219 = vmul.f32 %v5217, %v219
        %v5220 = vmul.f32 %v5216, %v220
        %v5221 = vmul.f32 %v5215, %v219
        %v5222 = vmul.f32 %v5214, %v220
        %v5223 = vmul.f32 %v5213, %v219
        %v5224 = vmul.f32 %v5212, %v220
        %v5225 = vmul.f32 %v5211, %v219
        %v5226 = vmul.f32 %v5210, %v220
        %v5227 = vmul.f32 %v5209, %v219
        %v5228 = vmul.f32 %v5208, %v220
        %v5229 = vmul.f32 %v5207, %v219
        %v5230 = vmul.f32 %v5206, %v220
        %v5231 = vmul.f32 %v5205, %v219
        %v5232 = vmul.f32 %v5204, %v220
        %v5233 = vmul.f32 %v5203, %v219
        %v5234 = vmul.f32 %v5202, %v220
        %v5235 = vmul.f32 %v5201, %v219
        %v5236 = vmul.f32 %v5200, %v220
        %v5237 = vmul.f32 %v5199, %v219
        %v5238 = vmul.f32 %v5198, %v220
        %v5239 = vmul.f32 %v5197, %v219
        %v5240 = vmul.f32 %v5196, %v220
        %v5241 = vmul.f32 %v5195, %v219
        %v5242 = vmul.f32 %v5194, %v220
        %v5243 = vmul.f32 %v5193, %v219
        %v5244 = vmul.f32 %v5192, %v220
        %v5245 = vmul.f32 %v5191, %v219
        %v5246 = vmul.f32 %v5190, %v220
        %v5247 = vmul.f32 %v5189, %v219
        %v5248 = vmul.f32 %v5188, %v220
        %v5249 = vmul.f32 %v5187, %v219
        %v5250 = vmul.f32 %v5218, %v220
        %v5251 = vpack.c.bf16 %v5220, %v5219
        %v5252 = vpack.c.bf16 %v5222, %v5221
        %v5253 = vpack.c.bf16 %v5224, %v5223
        %v5254 = vpack.c.bf16 %v5226, %v5225
        %v5255 = vpack.c.bf16 %v5228, %v5227
        %v5256 = vpack.c.bf16 %v5230, %v5229
        %v5257 = vpack.c.bf16 %v5232, %v5231
        %v5258 = vpack.c.bf16 %v5234, %v5233
        %v5259 = vpack.c.bf16 %v5236, %v5235
        %v5260 = vpack.c.bf16 %v5238, %v5237
        %v5261 = vpack.c.bf16 %v5240, %v5239
        %v5262 = vpack.c.bf16 %v5242, %v5241
        %v5263 = vpack.c.bf16 %v5244, %v5243
        %v5264 = vpack.c.bf16 %v5246, %v5245
        %v5265 = vpack.c.bf16 %v5248, %v5247
        %v5266 = vpack.c.bf16 %v5250, %v5249
        %s5267 = scalar_lea.vmem [#allocation6], 896
        %v5268 = vld [vmem:[%s5267] sm:$0xf]
        %v5269 = vld [vmem:[%s5267 + $0x4] sm:$0xf]
        %v5270 = vld [vmem:[%s5267 + $0x8] sm:$0xf]
        %v5271 = vld [vmem:[%s5267 + $0xc] sm:$0xf]
        %v5272 = vld [vmem:[%s5267 + $0x10] sm:$0xf]
        %v5273 = vld [vmem:[%s5267 + $0x14] sm:$0xf]
        %v5274 = vld [vmem:[%s5267 + $0x18] sm:$0xf]
        %v5275 = vld [vmem:[%s5267 + $0x1c] sm:$0xf]
        %v5276 = vld [vmem:[%s5267 + $0x20] sm:$0xf]
        %v5277 = vld [vmem:[%s5267 + $0x24] sm:$0xf]
        %v5278 = vld [vmem:[%s5267 + $0x28] sm:$0xf]
        %v5279 = vld [vmem:[%s5267 + $0x2c] sm:$0xf]
        %v5280 = vld [vmem:[%s5267 + $0x30] sm:$0xf]
        %v5281 = vld [vmem:[%s5267 + $0x34] sm:$0xf]
        %v5282 = vld [vmem:[%s5267 + $0x38] sm:$0xf]
        %v5283 = vld [vmem:[%s5267 + $0x3c] sm:$0xf]
        %v5300 = vunpack.c.l.b16 %v5268
        %v5301 = vunpack.c.l.b16 %v5269
        %v5302 = vunpack.c.l.b16 %v5270
        %v5303 = vunpack.c.l.b16 %v5271
        %v5304 = vunpack.c.l.b16 %v5272
        %v5305 = vunpack.c.l.b16 %v5273
        %v5306 = vunpack.c.l.b16 %v5274
        %v5307 = vunpack.c.l.b16 %v5275
        %v5308 = vunpack.c.l.b16 %v5276
        %v5309 = vunpack.c.l.b16 %v5277
        %v5310 = vunpack.c.l.b16 %v5278
        %v5311 = vunpack.c.l.b16 %v5279
        %v5312 = vunpack.c.l.b16 %v5280
        %v5313 = vunpack.c.l.b16 %v5281
        %v5314 = vunpack.c.l.b16 %v5282
        %v5315 = vunpack.c.l.b16 %v5283
        %v5316 = vpack.c.b16 %v5301, %v5300
        %v5317 = vpack.c.b16 %v5303, %v5302
        %v5318 = vpack.c.b16 %v5305, %v5304
        %v5319 = vpack.c.b16 %v5307, %v5306
        %v5320 = vpack.c.b16 %v5309, %v5308
        %v5321 = vpack.c.b16 %v5311, %v5310
        %v5322 = vpack.c.b16 %v5313, %v5312
        %v5323 = vpack.c.b16 %v5315, %v5314
        %5332 = vmatprep.subr.bf16.mxu0 0
        %5333 = vmatpush1.bf16.msra.mxu0 %v5316
        %5334 = vmatprep.subr.bf16.mxu0 0
        %5335 = vmatpush1.bf16.msra.mxu0 %v5317
        %5336 = vmatprep.subr.bf16.mxu0 0
        %5337 = vmatpush1.bf16.msra.mxu0 %v5318
        %5338 = vmatprep.subr.bf16.mxu0 0
        %5339 = vmatpush1.bf16.msra.mxu0 %v5319
        %5340 = vmatprep.subr.bf16.mxu0 0
        %5341 = vmatpush1.bf16.msra.mxu0 %v5320
        %5342 = vmatprep.subr.bf16.mxu0 0
        %5343 = vmatpush1.bf16.msra.mxu0 %v5321
        %5344 = vmatprep.subr.bf16.mxu0 0
        %5345 = vmatpush1.bf16.msra.mxu0 %v5322
        %5346 = vmatprep.subr.bf16.mxu0 0
        %5347 = vmatpush1.bf16.msra.mxu0 %v5323
        %5348 = vmatprep.subr.bf16.mxu0 0
        %5349 = vmatpush1.bf16.msra.mxu0 0
        %5350 = vmatprep.subr.bf16.mxu0 0
        %5351 = vmatpush1.bf16.msra.mxu0 0
        %5352 = vmatprep.subr.bf16.mxu0 0
        %5353 = vmatpush1.bf16.msra.mxu0 0
        %5354 = vmatprep.subr.bf16.mxu0 0
        %5355 = vmatpush1.bf16.msra.mxu0 0
        %5356 = vmatprep.subr.bf16.mxu0 0
        %5357 = vmatpush1.bf16.msra.mxu0 0
        %5358 = vmatprep.subr.bf16.mxu0 0
        %5359 = vmatpush1.bf16.msra.mxu0 0
        %5360 = vmatprep.subr.bf16.mxu0 0
        %5361 = vmatpush1.bf16.msra.mxu0 0
        %5362 = vmatprep.subr.bf16.mxu0 0
        %5363 = vmatpush1.bf16.msra.mxu0 0
        %5364 = vmatprep.mubr.bf16.mxu0 0
        %5365 = vmatmul.mubr.bf16.gmra.mrb[0].mxu0 %v5251
        %v5366 = vpop.f32.mrb[0].mxu0
        %v5367 = vadd.f32 0.0, %v5366
        %v5368 = vpop.f32.mrb[0].mxu0
        %v5369 = vpop.f32.mrb[0].mxu0
        %v5370 = vadd.f32 0.0, %v5369
        %v5371 = vpop.f32.mrb[0].mxu0
        %5372 = vmatprep.mubr.bf16.mxu0 0
        %5373 = vmatmul.mubr.bf16.gmra.mrb[0].mxu0 %v5252
        %v5374 = vpop.f32.mrb[0].mxu0
        %v5375 = vadd.f32 0.0, %v5374
        %v5376 = vpop.f32.mrb[0].mxu0
        %v5377 = vpop.f32.mrb[0].mxu0
        %v5378 = vadd.f32 0.0, %v5377
        %v5379 = vpop.f32.mrb[0].mxu0
        %5380 = vmatprep.mubr.bf16.mxu0 0
        %5381 = vmatmul.mubr.bf16.gmra.mrb[0].mxu0 %v5253
        %v5382 = vpop.f32.mrb[0].mxu0
        %v5383 = vadd.f32 0.0, %v5382
        %v5384 = vpop.f32.mrb[0].mxu0
        %v5385 = vpop.f32.mrb[0].mxu0
        %v5386 = vadd.f32 0.0, %v5385
        %v5387 = vpop.f32.mrb[0].mxu0
        %5388 = vmatprep.mubr.bf16.mxu0 0
        %5389 = vmatmul.mubr.bf16.gmra.mrb[0].mxu0 %v5254
        %v5390 = vpop.f32.mrb[0].mxu0
        %v5391 = vadd.f32 0.0, %v5390
        %v5392 = vpop.f32.mrb[0].mxu0
        %v5393 = vpop.f32.mrb[0].mxu0
        %v5394 = vadd.f32 0.0, %v5393
        %v5395 = vpop.f32.mrb[0].mxu0
        %5396 = vmatprep.mubr.bf16.mxu0 0
        %5397 = vmatmul.mubr.bf16.gmra.mrb[0].mxu0 %v5255
        %v5398 = vpop.f32.mrb[0].mxu0
        %v5399 = vadd.f32 0.0, %v5398
        %v5400 = vpop.f32.mrb[0].mxu0
        %v5401 = vpop.f32.mrb[0].mxu0
        %v5402 = vadd.f32 0.0, %v5401
        %v5403 = vpop.f32.mrb[0].mxu0
        %5404 = vmatprep.mubr.bf16.mxu0 0
        %5405 = vmatmul.mubr.bf16.gmra.mrb[0].mxu0 %v5256
        %v5406 = vpop.f32.mrb[0].mxu0
        %v5407 = vadd.f32 0.0, %v5406
        %v5408 = vpop.f32.mrb[0].mxu0
        %v5409 = vpop.f32.mrb[0].mxu0
        %v5410 = vadd.f32 0.0, %v5409
        %v5411 = vpop.f32.mrb[0].mxu0
        %5412 = vmatprep.mubr.bf16.mxu0 0
        %5413 = vmatmul.mubr.bf16.gmra.mrb[0].mxu0 %v5257
        %v5414 = vpop.f32.mrb[0].mxu0
        %v5415 = vadd.f32 0.0, %v5414
        %v5416 = vpop.f32.mrb[0].mxu0
        %v5417 = vpop.f32.mrb[0].mxu0
        %v5418 = vadd.f32 0.0, %v5417
        %v5419 = vpop.f32.mrb[0].mxu0
        %5420 = vmatprep.mubr.bf16.mxu0 0
        %5421 = vmatmul.mubr.bf16.gmra.mrb[0].mxu0 %v5258
        %v5422 = vpop.f32.mrb[0].mxu0
        %v5423 = vadd.f32 0.0, %v5422
        %v5424 = vpop.f32.mrb[0].mxu0
        %v5425 = vpop.f32.mrb[0].mxu0
        %v5426 = vadd.f32 0.0, %v5425
        %v5427 = vpop.f32.mrb[0].mxu0
        %5428 = vmatprep.mubr.bf16.mxu0 0
        %5429 = vmatmul.mubr.bf16.gmra.mrb[0].mxu0 %v5259
        %v5430 = vpop.f32.mrb[0].mxu0
        %v5431 = vadd.f32 0.0, %v5430
        %v5432 = vpop.f32.mrb[0].mxu0
        %v5433 = vpop.f32.mrb[0].mxu0
        %v5434 = vadd.f32 0.0, %v5433
        %v5435 = vpop.f32.mrb[0].mxu0
        %5436 = vmatprep.mubr.bf16.mxu0 0
        %5437 = vmatmul.mubr.bf16.gmra.mrb[0].mxu0 %v5260
        %v5438 = vpop.f32.mrb[0].mxu0
        %v5439 = vadd.f32 0.0, %v5438
        %v5440 = vpop.f32.mrb[0].mxu0
        %v5441 = vpop.f32.mrb[0].mxu0
        %v5442 = vadd.f32 0.0, %v5441
        %v5443 = vpop.f32.mrb[0].mxu0
        %5444 = vmatprep.mubr.bf16.mxu0 0
        %5445 = vmatmul.mubr.bf16.gmra.mrb[0].mxu0 %v5261
        %v5446 = vpop.f32.mrb[0].mxu0
        %v5447 = vadd.f32 0.0, %v5446
        %v5448 = vpop.f32.mrb[0].mxu0
        %v5449 = vpop.f32.mrb[0].mxu0
        %v5450 = vadd.f32 0.0, %v5449
        %v5451 = vpop.f32.mrb[0].mxu0
        %5452 = vmatprep.mubr.bf16.mxu0 0
        %5453 = vmatmul.mubr.bf16.gmra.mrb[0].mxu0 %v5262
        %v5454 = vpop.f32.mrb[0].mxu0
        %v5455 = vadd.f32 0.0, %v5454
        %v5456 = vpop.f32.mrb[0].mxu0
        %v5457 = vpop.f32.mrb[0].mxu0
        %v5458 = vadd.f32 0.0, %v5457
        %v5459 = vpop.f32.mrb[0].mxu0
        %5460 = vmatprep.mubr.bf16.mxu0 0
        %5461 = vmatmul.mubr.bf16.gmra.mrb[0].mxu0 %v5263
        %v5462 = vpop.f32.mrb[0].mxu0
        %v5463 = vadd.f32 0.0, %v5462
        %v5464 = vpop.f32.mrb[0].mxu0
        %v5465 = vpop.f32.mrb[0].mxu0
        %v5466 = vadd.f32 0.0, %v5465
        %v5467 = vpop.f32.mrb[0].mxu0
        %5468 = vmatprep.mubr.bf16.mxu0 0
        %5469 = vmatmul.mubr.bf16.gmra.mrb[0].mxu0 %v5264
        %v5470 = vpop.f32.mrb[0].mxu0
        %v5471 = vadd.f32 0.0, %v5470
        %v5472 = vpop.f32.mrb[0].mxu0
        %v5473 = vpop.f32.mrb[0].mxu0
        %v5474 = vadd.f32 0.0, %v5473
        %v5475 = vpop.f32.mrb[0].mxu0
        %5476 = vmatprep.mubr.bf16.mxu0 0
        %5477 = vmatmul.mubr.bf16.gmra.mrb[0].mxu0 %v5265
        %v5478 = vpop.f32.mrb[0].mxu0
        %v5479 = vadd.f32 0.0, %v5478
        %v5480 = vpop.f32.mrb[0].mxu0
        %v5481 = vpop.f32.mrb[0].mxu0
        %v5482 = vadd.f32 0.0, %v5481
        %v5483 = vpop.f32.mrb[0].mxu0
        %5484 = vmatprep.mubr.bf16.mxu0 0
        %5485 = vmatmul.mubr.bf16.gmra.mrb[0].mxu0 %v5266
        %v5486 = vpop.f32.mrb[0].mxu0
        %v5487 = vadd.f32 0.0, %v5486
        %v5488 = vpop.f32.mrb[0].mxu0
        %v5489 = vpop.f32.mrb[0].mxu0
        %v5490 = vadd.f32 0.0, %v5489
        %v5491 = vpop.f32.mrb[0].mxu0
        %5492 = vdwg.mxu0
        %v5493 = vadd.f32 %v5123, %v5367
        %v5494 = vadd.f32 %v5124, %v5370
        %v5495 = vadd.f32 %v5125, %v5375
        %v5496 = vadd.f32 %v5126, %v5378
        %v5497 = vadd.f32 %v5127, %v5383
        %v5498 = vadd.f32 %v5128, %v5386
        %v5499 = vadd.f32 %v5129, %v5391
        %v5500 = vadd.f32 %v5130, %v5394
        %v5501 = vadd.f32 %v5131, %v5399
        %v5502 = vadd.f32 %v5132, %v5402
        %v5503 = vadd.f32 %v5133, %v5407
        %v5504 = vadd.f32 %v5134, %v5410
        %v5505 = vadd.f32 %v5135, %v5415
        %v5506 = vadd.f32 %v5136, %v5418
        %v5507 = vadd.f32 %v5137, %v5423
        %v5508 = vadd.f32 %v5138, %v5426
        %v5509 = vadd.f32 %v5139, %v5431
        %v5510 = vadd.f32 %v5140, %v5434
        %v5511 = vadd.f32 %v5141, %v5439
        %v5512 = vadd.f32 %v5142, %v5442
        %v5513 = vadd.f32 %v5143, %v5447
        %v5514 = vadd.f32 %v5144, %v5450
        %v5515 = vadd.f32 %v5145, %v5455
        %v5516 = vadd.f32 %v5146, %v5458
        %v5517 = vadd.f32 %v5147, %v5463
        %v5518 = vadd.f32 %v5148, %v5466
        %v5519 = vadd.f32 %v5149, %v5471
        %v5520 = vadd.f32 %v5150, %v5474
        %v5521 = vadd.f32 %v5151, %v5479
        %v5522 = vadd.f32 %v5152, %v5482
        %v5523 = vadd.f32 %v5153, %v5487
        %v5524 = vadd.f32 %v5154, %v5490
        %v5525 = vld [vmem:[%s2315] sm:$0xff]
        %v5526 = vld [vmem:[%s2315 + $0x8] sm:$0xff]
        %v5527 = vld [vmem:[%s2315 + $0x10] sm:$0xff]
        %v5528 = vld [vmem:[%s2315 + $0x18] sm:$0xff]
        %v5529 = vld [vmem:[%s2315 + $0x20] sm:$0xff]
        %v5530 = vld [vmem:[%s2315 + $0x28] sm:$0xff]
        %v5531 = vld [vmem:[%s2315 + $0x30] sm:$0xff]
        %v5532 = vld [vmem:[%s2315 + $0x38] sm:$0xff]
        %v5533 = vld [vmem:[%s2315 + $0x40] sm:$0xff]
        %v5534 = vld [vmem:[%s2315 + $0x48] sm:$0xff]
        %v5535 = vld [vmem:[%s2315 + $0x50] sm:$0xff]
        %v5536 = vld [vmem:[%s2315 + $0x58] sm:$0xff]
        %v5537 = vld [vmem:[%s2315 + $0x60] sm:$0xff]
        %v5538 = vld [vmem:[%s2315 + $0x68] sm:$0xff]
        %v5539 = vld [vmem:[%s2315 + $0x70] sm:$0xff]
        %v5540 = vld [vmem:[%s2315 + $0x78] sm:$0xff]
        %v5541 = vld [vmem:[%s2315 + $0x80] sm:$0xff]
        %v5542 = vld [vmem:[%s2315 + $0x88] sm:$0xff]
        %v5543 = vld [vmem:[%s2315 + $0x90] sm:$0xff]
        %v5544 = vld [vmem:[%s2315 + $0x98] sm:$0xff]
        %v5545 = vld [vmem:[%s2315 + $0xa0] sm:$0xff]
        %v5546 = vld [vmem:[%s2315 + $0xa8] sm:$0xff]
        %v5547 = vld [vmem:[%s2315 + $0xb0] sm:$0xff]
        %v5548 = vld [vmem:[%s2315 + $0xb8] sm:$0xff]
        %v5549 = vld [vmem:[%s2315 + $0xc0] sm:$0xff]
        %v5550 = vld [vmem:[%s2315 + $0xc8] sm:$0xff]
        %v5551 = vld [vmem:[%s2315 + $0xd0] sm:$0xff]
        %v5552 = vld [vmem:[%s2315 + $0xd8] sm:$0xff]
        %v5553 = vld [vmem:[%s2315 + $0xe0] sm:$0xff]
        %v5554 = vld [vmem:[%s2315 + $0xe8] sm:$0xff]
        %v5555 = vld [vmem:[%s2315 + $0xf0] sm:$0xff]
        %v5556 = vld [vmem:[%s2315 + $0xf8] sm:$0xff]
        %v5557 = vrot.slane %v5525, 7
        %v5558 = vrot.slane %v5526, 7
        %v5559 = vrot.slane %v5527, 7
        %v5560 = vrot.slane %v5528, 7
        %v5561 = vrot.slane %v5529, 7
        %v5562 = vrot.slane %v5530, 7
        %v5563 = vrot.slane %v5531, 7
        %v5564 = vrot.slane %v5532, 7
        %v5565 = vrot.slane %v5533, 7
        %v5566 = vrot.slane %v5534, 7
        %v5567 = vrot.slane %v5535, 7
        %v5568 = vrot.slane %v5536, 7
        %v5569 = vrot.slane %v5537, 7
        %v5570 = vrot.slane %v5538, 7
        %v5571 = vrot.slane %v5539, 7
        %v5572 = vrot.slane %v5540, 7
        %v5573 = vrot.slane %v5541, 7
        %v5574 = vrot.slane %v5542, 7
        %v5575 = vrot.slane %v5543, 7
        %v5576 = vrot.slane %v5544, 7
        %v5577 = vrot.slane %v5545, 7
        %v5578 = vrot.slane %v5546, 7
        %v5579 = vrot.slane %v5547, 7
        %v5580 = vrot.slane %v5548, 7
        %v5581 = vrot.slane %v5549, 7
        %v5582 = vrot.slane %v5550, 7
        %v5583 = vrot.slane %v5551, 7
        %v5584 = vrot.slane %v5552, 7
        %v5585 = vrot.slane %v5553, 7
        %v5586 = vrot.slane %v5554, 7
        %v5587 = vrot.slane %v5555, 7
        %v5588 = vrot.slane %v5556, 7
        %v5589 = vsel %vm350, %v5587, %v5588
        %v5590 = vsel %vm350, %v5586, %v5587
        %v5591 = vsel %vm350, %v5585, %v5586
        %v5592 = vsel %vm350, %v5584, %v5585
        %v5593 = vsel %vm350, %v5583, %v5584
        %v5594 = vsel %vm350, %v5582, %v5583
        %v5595 = vsel %vm350, %v5581, %v5582
        %v5596 = vsel %vm350, %v5580, %v5581
        %v5597 = vsel %vm350, %v5579, %v5580
        %v5598 = vsel %vm350, %v5578, %v5579
        %v5599 = vsel %vm350, %v5577, %v5578
        %v5600 = vsel %vm350, %v5576, %v5577
        %v5601 = vsel %vm350, %v5575, %v5576
        %v5602 = vsel %vm350, %v5574, %v5575
        %v5603 = vsel %vm350, %v5573, %v5574
        %v5604 = vsel %vm350, %v5572, %v5573
        %v5605 = vsel %vm350, %v5571, %v5572
        %v5606 = vsel %vm350, %v5570, %v5571
        %v5607 = vsel %vm350, %v5569, %v5570
        %v5608 = vsel %vm350, %v5568, %v5569
        %v5609 = vsel %vm350, %v5567, %v5568
        %v5610 = vsel %vm350, %v5566, %v5567
        %v5611 = vsel %vm350, %v5565, %v5566
        %v5612 = vsel %vm350, %v5564, %v5565
        %v5613 = vsel %vm350, %v5563, %v5564
        %v5614 = vsel %vm350, %v5562, %v5563
        %v5615 = vsel %vm350, %v5561, %v5562
        %v5616 = vsel %vm350, %v5560, %v5561
        %v5617 = vsel %vm350, %v5559, %v5560
        %v5618 = vsel %vm350, %v5558, %v5559
        %v5619 = vsel %vm350, %v5557, %v5558
        %v5620 = vsel %vm350, %v5588, %v5557
        %v5621 = vmul.f32 %v5620, %v215
        %v5622 = vmul.f32 %v5619, %v216
        %v5623 = vmul.f32 %v5618, %v215
        %v5624 = vmul.f32 %v5617, %v216
        %v5625 = vmul.f32 %v5616, %v215
        %v5626 = vmul.f32 %v5615, %v216
        %v5627 = vmul.f32 %v5614, %v215
        %v5628 = vmul.f32 %v5613, %v216
        %v5629 = vmul.f32 %v5612, %v215
        %v5630 = vmul.f32 %v5611, %v216
        %v5631 = vmul.f32 %v5610, %v215
        %v5632 = vmul.f32 %v5609, %v216
        %v5633 = vmul.f32 %v5608, %v215
        %v5634 = vmul.f32 %v5607, %v216
        %v5635 = vmul.f32 %v5606, %v215
        %v5636 = vmul.f32 %v5605, %v216
        %v5637 = vmul.f32 %v5604, %v215
        %v5638 = vmul.f32 %v5603, %v216
        %v5639 = vmul.f32 %v5602, %v215
        %v5640 = vmul.f32 %v5601, %v216
        %v5641 = vmul.f32 %v5600, %v215
        %v5642 = vmul.f32 %v5599, %v216
        %v5643 = vmul.f32 %v5598, %v215
        %v5644 = vmul.f32 %v5597, %v216
        %v5645 = vmul.f32 %v5596, %v215
        %v5646 = vmul.f32 %v5595, %v216
        %v5647 = vmul.f32 %v5594, %v215
        %v5648 = vmul.f32 %v5593, %v216
        %v5649 = vmul.f32 %v5592, %v215
        %v5650 = vmul.f32 %v5591, %v216
        %v5651 = vmul.f32 %v5590, %v215
        %v5652 = vmul.f32 %v5589, %v216
        %v5653 = vpack.c.bf16 %v5622, %v5621
        %v5654 = vpack.c.bf16 %v5624, %v5623
        %v5655 = vpack.c.bf16 %v5626, %v5625
        %v5656 = vpack.c.bf16 %v5628, %v5627
        %v5657 = vpack.c.bf16 %v5630, %v5629
        %v5658 = vpack.c.bf16 %v5632, %v5631
        %v5659 = vpack.c.bf16 %v5634, %v5633
        %v5660 = vpack.c.bf16 %v5636, %v5635
        %v5661 = vpack.c.bf16 %v5638, %v5637
        %v5662 = vpack.c.bf16 %v5640, %v5639
        %v5663 = vpack.c.bf16 %v5642, %v5641
        %v5664 = vpack.c.bf16 %v5644, %v5643
        %v5665 = vpack.c.bf16 %v5646, %v5645
        %v5666 = vpack.c.bf16 %v5648, %v5647
        %v5667 = vpack.c.bf16 %v5650, %v5649
        %v5668 = vpack.c.bf16 %v5652, %v5651
        %s5669 = scalar_lea.vmem [#allocation6], 960
        %v5670 = vld [vmem:[%s5669] sm:$0xf]
        %v5671 = vld [vmem:[%s5669 + $0x4] sm:$0xf]
        %v5672 = vld [vmem:[%s5669 + $0x8] sm:$0xf]
        %v5673 = vld [vmem:[%s5669 + $0xc] sm:$0xf]
        %v5674 = vld [vmem:[%s5669 + $0x10] sm:$0xf]
        %v5675 = vld [vmem:[%s5669 + $0x14] sm:$0xf]
        %v5676 = vld [vmem:[%s5669 + $0x18] sm:$0xf]
        %v5677 = vld [vmem:[%s5669 + $0x1c] sm:$0xf]
        %v5678 = vld [vmem:[%s5669 + $0x20] sm:$0xf]
        %v5679 = vld [vmem:[%s5669 + $0x24] sm:$0xf]
        %v5680 = vld [vmem:[%s5669 + $0x28] sm:$0xf]
        %v5681 = vld [vmem:[%s5669 + $0x2c] sm:$0xf]
        %v5682 = vld [vmem:[%s5669 + $0x30] sm:$0xf]
        %v5683 = vld [vmem:[%s5669 + $0x34] sm:$0xf]
        %v5684 = vld [vmem:[%s5669 + $0x38] sm:$0xf]
        %v5685 = vld [vmem:[%s5669 + $0x3c] sm:$0xf]
        %v5702 = vunpack.c.l.b16 %v5670
        %v5703 = vunpack.c.l.b16 %v5671
        %v5704 = vunpack.c.l.b16 %v5672
        %v5705 = vunpack.c.l.b16 %v5673
        %v5706 = vunpack.c.l.b16 %v5674
        %v5707 = vunpack.c.l.b16 %v5675
        %v5708 = vunpack.c.l.b16 %v5676
        %v5709 = vunpack.c.l.b16 %v5677
        %v5710 = vunpack.c.l.b16 %v5678
        %v5711 = vunpack.c.l.b16 %v5679
        %v5712 = vunpack.c.l.b16 %v5680
        %v5713 = vunpack.c.l.b16 %v5681
        %v5714 = vunpack.c.l.b16 %v5682
        %v5715 = vunpack.c.l.b16 %v5683
        %v5716 = vunpack.c.l.b16 %v5684
        %v5717 = vunpack.c.l.b16 %v5685
        %v5718 = vpack.c.b16 %v5703, %v5702
        %v5719 = vpack.c.b16 %v5705, %v5704
        %v5720 = vpack.c.b16 %v5707, %v5706
        %v5721 = vpack.c.b16 %v5709, %v5708
        %v5722 = vpack.c.b16 %v5711, %v5710
        %v5723 = vpack.c.b16 %v5713, %v5712
        %v5724 = vpack.c.b16 %v5715, %v5714
        %v5725 = vpack.c.b16 %v5717, %v5716
        %5734 = vmatprep.subr.bf16.mxu0 0
        %5735 = vmatpush1.bf16.msra.mxu0 %v5718
        %5736 = vmatprep.subr.bf16.mxu0 0
        %5737 = vmatpush1.bf16.msra.mxu0 %v5719
        %5738 = vmatprep.subr.bf16.mxu0 0
        %5739 = vmatpush1.bf16.msra.mxu0 %v5720
        %5740 = vmatprep.subr.bf16.mxu0 0
        %5741 = vmatpush1.bf16.msra.mxu0 %v5721
        %5742 = vmatprep.subr.bf16.mxu0 0
        %5743 = vmatpush1.bf16.msra.mxu0 %v5722
        %5744 = vmatprep.subr.bf16.mxu0 0
        %5745 = vmatpush1.bf16.msra.mxu0 %v5723
        %5746 = vmatprep.subr.bf16.mxu0 0
        %5747 = vmatpush1.bf16.msra.mxu0 %v5724
        %5748 = vmatprep.subr.bf16.mxu0 0
        %5749 = vmatpush1.bf16.msra.mxu0 %v5725
        %5750 = vmatprep.subr.bf16.mxu0 0
        %5751 = vmatpush1.bf16.msra.mxu0 0
        %5752 = vmatprep.subr.bf16.mxu0 0
        %5753 = vmatpush1.bf16.msra.mxu0 0
        %5754 = vmatprep.subr.bf16.mxu0 0
        %5755 = vmatpush1.bf16.msra.mxu0 0
        %5756 = vmatprep.subr.bf16.mxu0 0
        %5757 = vmatpush1.bf16.msra.mxu0 0
        %5758 = vmatprep.subr.bf16.mxu0 0
        %5759 = vmatpush1.bf16.msra.mxu0 0
        %5760 = vmatprep.subr.bf16.mxu0 0
        %5761 = vmatpush1.bf16.msra.mxu0 0
        %5762 = vmatprep.subr.bf16.mxu0 0
        %5763 = vmatpush1.bf16.msra.mxu0 0
        %5764 = vmatprep.subr.bf16.mxu0 0
        %5765 = vmatpush1.bf16.msra.mxu0 0
        %5766 = vmatprep.mubr.bf16.mxu0 0
        %5767 = vmatmul.mubr.bf16.gmra.mrb[0].mxu0 %v5653
        %v5768 = vpop.f32.mrb[0].mxu0
        %v5769 = vadd.f32 0.0, %v5768
        %v5770 = vpop.f32.mrb[0].mxu0
        %v5771 = vpop.f32.mrb[0].mxu0
        %v5772 = vadd.f32 0.0, %v5771
        %v5773 = vpop.f32.mrb[0].mxu0
        %5774 = vmatprep.mubr.bf16.mxu0 0
        %5775 = vmatmul.mubr.bf16.gmra.mrb[0].mxu0 %v5654
        %v5776 = vpop.f32.mrb[0].mxu0
        %v5777 = vadd.f32 0.0, %v5776
        %v5778 = vpop.f32.mrb[0].mxu0
        %v5779 = vpop.f32.mrb[0].mxu0
        %v5780 = vadd.f32 0.0, %v5779
        %v5781 = vpop.f32.mrb[0].mxu0
        %5782 = vmatprep.mubr.bf16.mxu0 0
        %5783 = vmatmul.mubr.bf16.gmra.mrb[0].mxu0 %v5655
        %v5784 = vpop.f32.mrb[0].mxu0
        %v5785 = vadd.f32 0.0, %v5784
        %v5786 = vpop.f32.mrb[0].mxu0
        %v5787 = vpop.f32.mrb[0].mxu0
        %v5788 = vadd.f32 0.0, %v5787
        %v5789 = vpop.f32.mrb[0].mxu0
        %5790 = vmatprep.mubr.bf16.mxu0 0
        %5791 = vmatmul.mubr.bf16.gmra.mrb[0].mxu0 %v5656
        %v5792 = vpop.f32.mrb[0].mxu0
        %v5793 = vadd.f32 0.0, %v5792
        %v5794 = vpop.f32.mrb[0].mxu0
        %v5795 = vpop.f32.mrb[0].mxu0
        %v5796 = vadd.f32 0.0, %v5795
        %v5797 = vpop.f32.mrb[0].mxu0
        %5798 = vmatprep.mubr.bf16.mxu0 0
        %5799 = vmatmul.mubr.bf16.gmra.mrb[0].mxu0 %v5657
        %v5800 = vpop.f32.mrb[0].mxu0
        %v5801 = vadd.f32 0.0, %v5800
        %v5802 = vpop.f32.mrb[0].mxu0
        %v5803 = vpop.f32.mrb[0].mxu0
        %v5804 = vadd.f32 0.0, %v5803
        %v5805 = vpop.f32.mrb[0].mxu0
        %5806 = vmatprep.mubr.bf16.mxu0 0
        %5807 = vmatmul.mubr.bf16.gmra.mrb[0].mxu0 %v5658
        %v5808 = vpop.f32.mrb[0].mxu0
        %v5809 = vadd.f32 0.0, %v5808
        %v5810 = vpop.f32.mrb[0].mxu0
        %v5811 = vpop.f32.mrb[0].mxu0
        %v5812 = vadd.f32 0.0, %v5811
        %v5813 = vpop.f32.mrb[0].mxu0
        %5814 = vmatprep.mubr.bf16.mxu0 0
        %5815 = vmatmul.mubr.bf16.gmra.mrb[0].mxu0 %v5659
        %v5816 = vpop.f32.mrb[0].mxu0
        %v5817 = vadd.f32 0.0, %v5816
        %v5818 = vpop.f32.mrb[0].mxu0
        %v5819 = vpop.f32.mrb[0].mxu0
        %v5820 = vadd.f32 0.0, %v5819
        %v5821 = vpop.f32.mrb[0].mxu0
        %5822 = vmatprep.mubr.bf16.mxu0 0
        %5823 = vmatmul.mubr.bf16.gmra.mrb[0].mxu0 %v5660
        %v5824 = vpop.f32.mrb[0].mxu0
        %v5825 = vadd.f32 0.0, %v5824
        %v5826 = vpop.f32.mrb[0].mxu0
        %v5827 = vpop.f32.mrb[0].mxu0
        %v5828 = vadd.f32 0.0, %v5827
        %v5829 = vpop.f32.mrb[0].mxu0
        %5830 = vmatprep.mubr.bf16.mxu0 0
        %5831 = vmatmul.mubr.bf16.gmra.mrb[0].mxu0 %v5661
        %v5832 = vpop.f32.mrb[0].mxu0
        %v5833 = vadd.f32 0.0, %v5832
        %v5834 = vpop.f32.mrb[0].mxu0
        %v5835 = vpop.f32.mrb[0].mxu0
        %v5836 = vadd.f32 0.0, %v5835
        %v5837 = vpop.f32.mrb[0].mxu0
        %5838 = vmatprep.mubr.bf16.mxu0 0
        %5839 = vmatmul.mubr.bf16.gmra.mrb[0].mxu0 %v5662
        %v5840 = vpop.f32.mrb[0].mxu0
        %v5841 = vadd.f32 0.0, %v5840
        %v5842 = vpop.f32.mrb[0].mxu0
        %v5843 = vpop.f32.mrb[0].mxu0
        %v5844 = vadd.f32 0.0, %v5843
        %v5845 = vpop.f32.mrb[0].mxu0
        %5846 = vmatprep.mubr.bf16.mxu0 0
        %5847 = vmatmul.mubr.bf16.gmra.mrb[0].mxu0 %v5663
        %v5848 = vpop.f32.mrb[0].mxu0
        %v5849 = vadd.f32 0.0, %v5848
        %v5850 = vpop.f32.mrb[0].mxu0
        %v5851 = vpop.f32.mrb[0].mxu0
        %v5852 = vadd.f32 0.0, %v5851
        %v5853 = vpop.f32.mrb[0].mxu0
        %5854 = vmatprep.mubr.bf16.mxu0 0
        %5855 = vmatmul.mubr.bf16.gmra.mrb[0].mxu0 %v5664
        %v5856 = vpop.f32.mrb[0].mxu0
        %v5857 = vadd.f32 0.0, %v5856
        %v5858 = vpop.f32.mrb[0].mxu0
        %v5859 = vpop.f32.mrb[0].mxu0
        %v5860 = vadd.f32 0.0, %v5859
        %v5861 = vpop.f32.mrb[0].mxu0
        %5862 = vmatprep.mubr.bf16.mxu0 0
        %5863 = vmatmul.mubr.bf16.gmra.mrb[0].mxu0 %v5665
        %v5864 = vpop.f32.mrb[0].mxu0
        %v5865 = vadd.f32 0.0, %v5864
        %v5866 = vpop.f32.mrb[0].mxu0
        %v5867 = vpop.f32.mrb[0].mxu0
        %v5868 = vadd.f32 0.0, %v5867
        %v5869 = vpop.f32.mrb[0].mxu0
        %5870 = vmatprep.mubr.bf16.mxu0 0
        %5871 = vmatmul.mubr.bf16.gmra.mrb[0].mxu0 %v5666
        %v5872 = vpop.f32.mrb[0].mxu0
        %v5873 = vadd.f32 0.0, %v5872
        %v5874 = vpop.f32.mrb[0].mxu0
        %v5875 = vpop.f32.mrb[0].mxu0
        %v5876 = vadd.f32 0.0, %v5875
        %v5877 = vpop.f32.mrb[0].mxu0
        %5878 = vmatprep.mubr.bf16.mxu0 0
        %5879 = vmatmul.mubr.bf16.gmra.mrb[0].mxu0 %v5667
        %v5880 = vpop.f32.mrb[0].mxu0
        %v5881 = vadd.f32 0.0, %v5880
        %v5882 = vpop.f32.mrb[0].mxu0
        %v5883 = vpop.f32.mrb[0].mxu0
        %v5884 = vadd.f32 0.0, %v5883
        %v5885 = vpop.f32.mrb[0].mxu0
        %5886 = vmatprep.mubr.bf16.mxu0 0
        %5887 = vmatmul.mubr.bf16.gmra.mrb[0].mxu0 %v5668
        %v5888 = vpop.f32.mrb[0].mxu0
        %v5889 = vadd.f32 0.0, %v5888
        %v5890 = vpop.f32.mrb[0].mxu0
        %v5891 = vpop.f32.mrb[0].mxu0
        %v5892 = vadd.f32 0.0, %v5891
        %v5893 = vpop.f32.mrb[0].mxu0
        %5894 = vdwg.mxu0
        %v5895 = vadd.f32 %v5493, %v5769
        %v5896 = vadd.f32 %v5494, %v5772
        %v5897 = vadd.f32 %v5495, %v5777
        %v5898 = vadd.f32 %v5496, %v5780
        %v5899 = vadd.f32 %v5497, %v5785
        %v5900 = vadd.f32 %v5498, %v5788
        %v5901 = vadd.f32 %v5499, %v5793
        %v5902 = vadd.f32 %v5500, %v5796
        %v5903 = vadd.f32 %v5501, %v5801
        %v5904 = vadd.f32 %v5502, %v5804
        %v5905 = vadd.f32 %v5503, %v5809
        %v5906 = vadd.f32 %v5504, %v5812
        %v5907 = vadd.f32 %v5505, %v5817
        %v5908 = vadd.f32 %v5506, %v5820
        %v5909 = vadd.f32 %v5507, %v5825
        %v5910 = vadd.f32 %v5508, %v5828
        %v5911 = vadd.f32 %v5509, %v5833
        %v5912 = vadd.f32 %v5510, %v5836
        %v5913 = vadd.f32 %v5511, %v5841
        %v5914 = vadd.f32 %v5512, %v5844
        %v5915 = vadd.f32 %v5513, %v5849
        %v5916 = vadd.f32 %v5514, %v5852
        %v5917 = vadd.f32 %v5515, %v5857
        %v5918 = vadd.f32 %v5516, %v5860
        %v5919 = vadd.f32 %v5517, %v5865
        %v5920 = vadd.f32 %v5518, %v5868
        %v5921 = vadd.f32 %v5519, %v5873
        %v5922 = vadd.f32 %v5520, %v5876
        %v5923 = vadd.f32 %v5521, %v5881
        %v5924 = vadd.f32 %v5522, %v5884
        %v5925 = vadd.f32 %v5523, %v5889
        %v5926 = vadd.f32 %v5524, %v5892
        %v5927 = vpack.c.bf16 %v5526, %v5525
        %v5928 = vpack.c.bf16 %v5528, %v5527
        %v5929 = vpack.c.bf16 %v5530, %v5529
        %v5930 = vpack.c.bf16 %v5532, %v5531
        %v5931 = vpack.c.bf16 %v5534, %v5533
        %v5932 = vpack.c.bf16 %v5536, %v5535
        %v5933 = vpack.c.bf16 %v5538, %v5537
        %v5934 = vpack.c.bf16 %v5540, %v5539
        %v5935 = vpack.c.bf16 %v5542, %v5541
        %v5936 = vpack.c.bf16 %v5544, %v5543
        %v5937 = vpack.c.bf16 %v5546, %v5545
        %v5938 = vpack.c.bf16 %v5548, %v5547
        %v5939 = vpack.c.bf16 %v5550, %v5549
        %v5940 = vpack.c.bf16 %v5552, %v5551
        %v5941 = vpack.c.bf16 %v5554, %v5553
        %v5942 = vpack.c.bf16 %v5556, %v5555
        %s5943 = scalar_lea.vmem [#allocation6], 1024
        %v5944 = vld [vmem:[%s5943] sm:$0xf]
        %v5945 = vld [vmem:[%s5943 + $0x4] sm:$0xf]
        %v5946 = vld [vmem:[%s5943 + $0x8] sm:$0xf]
        %v5947 = vld [vmem:[%s5943 + $0xc] sm:$0xf]
        %v5948 = vld [vmem:[%s5943 + $0x10] sm:$0xf]
        %v5949 = vld [vmem:[%s5943 + $0x14] sm:$0xf]
        %v5950 = vld [vmem:[%s5943 + $0x18] sm:$0xf]
        %v5951 = vld [vmem:[%s5943 + $0x1c] sm:$0xf]
        %v5952 = vld [vmem:[%s5943 + $0x20] sm:$0xf]
        %v5953 = vld [vmem:[%s5943 + $0x24] sm:$0xf]
        %v5954 = vld [vmem:[%s5943 + $0x28] sm:$0xf]
        %v5955 = vld [vmem:[%s5943 + $0x2c] sm:$0xf]
        %v5956 = vld [vmem:[%s5943 + $0x30] sm:$0xf]
        %v5957 = vld [vmem:[%s5943 + $0x34] sm:$0xf]
        %v5958 = vld [vmem:[%s5943 + $0x38] sm:$0xf]
        %v5959 = vld [vmem:[%s5943 + $0x3c] sm:$0xf]
        %v5976 = vunpack.c.l.b16 %v5944
        %v5977 = vunpack.c.l.b16 %v5945
        %v5978 = vunpack.c.l.b16 %v5946
        %v5979 = vunpack.c.l.b16 %v5947
        %v5980 = vunpack.c.l.b16 %v5948
        %v5981 = vunpack.c.l.b16 %v5949
        %v5982 = vunpack.c.l.b16 %v5950
        %v5983 = vunpack.c.l.b16 %v5951
        %v5984 = vunpack.c.l.b16 %v5952
        %v5985 = vunpack.c.l.b16 %v5953
        %v5986 = vunpack.c.l.b16 %v5954
        %v5987 = vunpack.c.l.b16 %v5955
        %v5988 = vunpack.c.l.b16 %v5956
        %v5989 = vunpack.c.l.b16 %v5957
        %v5990 = vunpack.c.l.b16 %v5958
        %v5991 = vunpack.c.l.b16 %v5959
        %v5992 = vpack.c.b16 %v5977, %v5976
        %v5993 = vpack.c.b16 %v5979, %v5978
        %v5994 = vpack.c.b16 %v5981, %v5980
        %v5995 = vpack.c.b16 %v5983, %v5982
        %v5996 = vpack.c.b16 %v5985, %v5984
        %v5997 = vpack.c.b16 %v5987, %v5986
        %v5998 = vpack.c.b16 %v5989, %v5988
        %v5999 = vpack.c.b16 %v5991, %v5990
        %6008 = vmatprep.subr.bf16.mxu0 0
        %6009 = vmatpush1.bf16.msra.mxu0 %v5992
        %6010 = vmatprep.subr.bf16.mxu0 0
        %6011 = vmatpush1.bf16.msra.mxu0 %v5993
        %6012 = vmatprep.subr.bf16.mxu0 0
        %6013 = vmatpush1.bf16.msra.mxu0 %v5994
        %6014 = vmatprep.subr.bf16.mxu0 0
        %6015 = vmatpush1.bf16.msra.mxu0 %v5995
        %6016 = vmatprep.subr.bf16.mxu0 0
        %6017 = vmatpush1.bf16.msra.mxu0 %v5996
        %6018 = vmatprep.subr.bf16.mxu0 0
        %6019 = vmatpush1.bf16.msra.mxu0 %v5997
        %6020 = vmatprep.subr.bf16.mxu0 0
        %6021 = vmatpush1.bf16.msra.mxu0 %v5998
        %6022 = vmatprep.subr.bf16.mxu0 0
        %6023 = vmatpush1.bf16.msra.mxu0 %v5999
        %6024 = vmatprep.subr.bf16.mxu0 0
        %6025 = vmatpush1.bf16.msra.mxu0 0
        %6026 = vmatprep.subr.bf16.mxu0 0
        %6027 = vmatpush1.bf16.msra.mxu0 0
        %6028 = vmatprep.subr.bf16.mxu0 0
        %6029 = vmatpush1.bf16.msra.mxu0 0
        %6030 = vmatprep.subr.bf16.mxu0 0
        %6031 = vmatpush1.bf16.msra.mxu0 0
        %6032 = vmatprep.subr.bf16.mxu0 0
        %6033 = vmatpush1.bf16.msra.mxu0 0
        %6034 = vmatprep.subr.bf16.mxu0 0
        %6035 = vmatpush1.bf16.msra.mxu0 0
        %6036 = vmatprep.subr.bf16.mxu0 0
        %6037 = vmatpush1.bf16.msra.mxu0 0
        %6038 = vmatprep.subr.bf16.mxu0 0
        %6039 = vmatpush1.bf16.msra.mxu0 0
        %6040 = vmatprep.mubr.bf16.mxu0 0
        %6041 = vmatmul.mubr.bf16.gmra.mrb[0].mxu0 %v5927
        %v6042 = vpop.f32.mrb[0].mxu0
        %v6043 = vadd.f32 0.0, %v6042
        %v6044 = vpop.f32.mrb[0].mxu0
        %v6045 = vpop.f32.mrb[0].mxu0
        %v6046 = vadd.f32 0.0, %v6045
        %v6047 = vpop.f32.mrb[0].mxu0
        %6048 = vmatprep.mubr.bf16.mxu0 0
        %6049 = vmatmul.mubr.bf16.gmra.mrb[0].mxu0 %v5928
        %v6050 = vpop.f32.mrb[0].mxu0
        %v6051 = vadd.f32 0.0, %v6050
        %v6052 = vpop.f32.mrb[0].mxu0
        %v6053 = vpop.f32.mrb[0].mxu0
        %v6054 = vadd.f32 0.0, %v6053
        %v6055 = vpop.f32.mrb[0].mxu0
        %6056 = vmatprep.mubr.bf16.mxu0 0
        %6057 = vmatmul.mubr.bf16.gmra.mrb[0].mxu0 %v5929
        %v6058 = vpop.f32.mrb[0].mxu0
        %v6059 = vadd.f32 0.0, %v6058
        %v6060 = vpop.f32.mrb[0].mxu0
        %v6061 = vpop.f32.mrb[0].mxu0
        %v6062 = vadd.f32 0.0, %v6061
        %v6063 = vpop.f32.mrb[0].mxu0
        %6064 = vmatprep.mubr.bf16.mxu0 0
        %6065 = vmatmul.mubr.bf16.gmra.mrb[0].mxu0 %v5930
        %v6066 = vpop.f32.mrb[0].mxu0
        %v6067 = vadd.f32 0.0, %v6066
        %v6068 = vpop.f32.mrb[0].mxu0
        %v6069 = vpop.f32.mrb[0].mxu0
        %v6070 = vadd.f32 0.0, %v6069
        %v6071 = vpop.f32.mrb[0].mxu0
        %6072 = vmatprep.mubr.bf16.mxu0 0
        %6073 = vmatmul.mubr.bf16.gmra.mrb[0].mxu0 %v5931
        %v6074 = vpop.f32.mrb[0].mxu0
        %v6075 = vadd.f32 0.0, %v6074
        %v6076 = vpop.f32.mrb[0].mxu0
        %v6077 = vpop.f32.mrb[0].mxu0
        %v6078 = vadd.f32 0.0, %v6077
        %v6079 = vpop.f32.mrb[0].mxu0
        %6080 = vmatprep.mubr.bf16.mxu0 0
        %6081 = vmatmul.mubr.bf16.gmra.mrb[0].mxu0 %v5932
        %v6082 = vpop.f32.mrb[0].mxu0
        %v6083 = vadd.f32 0.0, %v6082
        %v6084 = vpop.f32.mrb[0].mxu0
        %v6085 = vpop.f32.mrb[0].mxu0
        %v6086 = vadd.f32 0.0, %v6085
        %v6087 = vpop.f32.mrb[0].mxu0
        %6088 = vmatprep.mubr.bf16.mxu0 0
        %6089 = vmatmul.mubr.bf16.gmra.mrb[0].mxu0 %v5933
        %v6090 = vpop.f32.mrb[0].mxu0
        %v6091 = vadd.f32 0.0, %v6090
        %v6092 = vpop.f32.mrb[0].mxu0
        %v6093 = vpop.f32.mrb[0].mxu0
        %v6094 = vadd.f32 0.0, %v6093
        %v6095 = vpop.f32.mrb[0].mxu0
        %6096 = vmatprep.mubr.bf16.mxu0 0
        %6097 = vmatmul.mubr.bf16.gmra.mrb[0].mxu0 %v5934
        %v6098 = vpop.f32.mrb[0].mxu0
        %v6099 = vadd.f32 0.0, %v6098
        %v6100 = vpop.f32.mrb[0].mxu0
        %v6101 = vpop.f32.mrb[0].mxu0
        %v6102 = vadd.f32 0.0, %v6101
        %v6103 = vpop.f32.mrb[0].mxu0
        %6104 = vmatprep.mubr.bf16.mxu0 0
        %6105 = vmatmul.mubr.bf16.gmra.mrb[0].mxu0 %v5935
        %v6106 = vpop.f32.mrb[0].mxu0
        %v6107 = vadd.f32 0.0, %v6106
        %v6108 = vpop.f32.mrb[0].mxu0
        %v6109 = vpop.f32.mrb[0].mxu0
        %v6110 = vadd.f32 0.0, %v6109
        %v6111 = vpop.f32.mrb[0].mxu0
        %6112 = vmatprep.mubr.bf16.mxu0 0
        %6113 = vmatmul.mubr.bf16.gmra.mrb[0].mxu0 %v5936
        %v6114 = vpop.f32.mrb[0].mxu0
        %v6115 = vadd.f32 0.0, %v6114
        %v6116 = vpop.f32.mrb[0].mxu0
        %v6117 = vpop.f32.mrb[0].mxu0
        %v6118 = vadd.f32 0.0, %v6117
        %v6119 = vpop.f32.mrb[0].mxu0
        %6120 = vmatprep.mubr.bf16.mxu0 0
        %6121 = vmatmul.mubr.bf16.gmra.mrb[0].mxu0 %v5937
        %v6122 = vpop.f32.mrb[0].mxu0
        %v6123 = vadd.f32 0.0, %v6122
        %v6124 = vpop.f32.mrb[0].mxu0
        %v6125 = vpop.f32.mrb[0].mxu0
        %v6126 = vadd.f32 0.0, %v6125
        %v6127 = vpop.f32.mrb[0].mxu0
        %6128 = vmatprep.mubr.bf16.mxu0 0
        %6129 = vmatmul.mubr.bf16.gmra.mrb[0].mxu0 %v5938
        %v6130 = vpop.f32.mrb[0].mxu0
        %v6131 = vadd.f32 0.0, %v6130
        %v6132 = vpop.f32.mrb[0].mxu0
        %v6133 = vpop.f32.mrb[0].mxu0
        %v6134 = vadd.f32 0.0, %v6133
        %v6135 = vpop.f32.mrb[0].mxu0
        %6136 = vmatprep.mubr.bf16.mxu0 0
        %6137 = vmatmul.mubr.bf16.gmra.mrb[0].mxu0 %v5939
        %v6138 = vpop.f32.mrb[0].mxu0
        %v6139 = vadd.f32 0.0, %v6138
        %v6140 = vpop.f32.mrb[0].mxu0
        %v6141 = vpop.f32.mrb[0].mxu0
        %v6142 = vadd.f32 0.0, %v6141
        %v6143 = vpop.f32.mrb[0].mxu0
        %6144 = vmatprep.mubr.bf16.mxu0 0
        %6145 = vmatmul.mubr.bf16.gmra.mrb[0].mxu0 %v5940
        %v6146 = vpop.f32.mrb[0].mxu0
        %v6147 = vadd.f32 0.0, %v6146
        %v6148 = vpop.f32.mrb[0].mxu0
        %v6149 = vpop.f32.mrb[0].mxu0
        %v6150 = vadd.f32 0.0, %v6149
        %v6151 = vpop.f32.mrb[0].mxu0
        %6152 = vmatprep.mubr.bf16.mxu0 0
        %6153 = vmatmul.mubr.bf16.gmra.mrb[0].mxu0 %v5941
        %v6154 = vpop.f32.mrb[0].mxu0
        %v6155 = vadd.f32 0.0, %v6154
        %v6156 = vpop.f32.mrb[0].mxu0
        %v6157 = vpop.f32.mrb[0].mxu0
        %v6158 = vadd.f32 0.0, %v6157
        %v6159 = vpop.f32.mrb[0].mxu0
        %6160 = vmatprep.mubr.bf16.mxu0 0
        %6161 = vmatmul.mubr.bf16.gmra.mrb[0].mxu0 %v5942
        %v6162 = vpop.f32.mrb[0].mxu0
        %v6163 = vadd.f32 0.0, %v6162
        %v6164 = vpop.f32.mrb[0].mxu0
        %v6165 = vpop.f32.mrb[0].mxu0
        %v6166 = vadd.f32 0.0, %v6165
        %v6167 = vpop.f32.mrb[0].mxu0
        %6168 = vdwg.mxu0
        %v6169 = vadd.f32 %v5895, %v6043
        %v6170 = vadd.f32 %v5896, %v6046
        %v6171 = vadd.f32 %v5897, %v6051
        %v6172 = vadd.f32 %v5898, %v6054
        %v6173 = vadd.f32 %v5899, %v6059
        %v6174 = vadd.f32 %v5900, %v6062
        %v6175 = vadd.f32 %v5901, %v6067
        %v6176 = vadd.f32 %v5902, %v6070
        %v6177 = vadd.f32 %v5903, %v6075
        %v6178 = vadd.f32 %v5904, %v6078
        %v6179 = vadd.f32 %v5905, %v6083
        %v6180 = vadd.f32 %v5906, %v6086
        %v6181 = vadd.f32 %v5907, %v6091
        %v6182 = vadd.f32 %v5908, %v6094
        %v6183 = vadd.f32 %v5909, %v6099
        %v6184 = vadd.f32 %v5910, %v6102
        %v6185 = vadd.f32 %v5911, %v6107
        %v6186 = vadd.f32 %v5912, %v6110
        %v6187 = vadd.f32 %v5913, %v6115
        %v6188 = vadd.f32 %v5914, %v6118
        %v6189 = vadd.f32 %v5915, %v6123
        %v6190 = vadd.f32 %v5916, %v6126
        %v6191 = vadd.f32 %v5917, %v6131
        %v6192 = vadd.f32 %v5918, %v6134
        %v6193 = vadd.f32 %v5919, %v6139
        %v6194 = vadd.f32 %v5920, %v6142
        %v6195 = vadd.f32 %v5921, %v6147
        %v6196 = vadd.f32 %v5922, %v6150
        %v6197 = vadd.f32 %v5923, %v6155
        %v6198 = vadd.f32 %v5924, %v6158
        %v6199 = vadd.f32 %v5925, %v6163
        %v6200 = vadd.f32 %v5926, %v6166
        %v6201 = vrot.slane %v5525, 1
        %v6202 = vrot.slane %v5526, 1
        %v6203 = vrot.slane %v5527, 1
        %v6204 = vrot.slane %v5528, 1
        %v6205 = vrot.slane %v5529, 1
        %v6206 = vrot.slane %v5530, 1
        %v6207 = vrot.slane %v5531, 1
        %v6208 = vrot.slane %v5532, 1
        %v6209 = vrot.slane %v5533, 1
        %v6210 = vrot.slane %v5534, 1
        %v6211 = vrot.slane %v5535, 1
        %v6212 = vrot.slane %v5536, 1
        %v6213 = vrot.slane %v5537, 1
        %v6214 = vrot.slane %v5538, 1
        %v6215 = vrot.slane %v5539, 1
        %v6216 = vrot.slane %v5540, 1
        %v6217 = vrot.slane %v5541, 1
        %v6218 = vrot.slane %v5542, 1
        %v6219 = vrot.slane %v5543, 1
        %v6220 = vrot.slane %v5544, 1
        %v6221 = vrot.slane %v5545, 1
        %v6222 = vrot.slane %v5546, 1
        %v6223 = vrot.slane %v5547, 1
        %v6224 = vrot.slane %v5548, 1
        %v6225 = vrot.slane %v5549, 1
        %v6226 = vrot.slane %v5550, 1
        %v6227 = vrot.slane %v5551, 1
        %v6228 = vrot.slane %v5552, 1
        %v6229 = vrot.slane %v5553, 1
        %v6230 = vrot.slane %v5554, 1
        %v6231 = vrot.slane %v5555, 1
        %v6232 = vrot.slane %v5556, 1
        %v6233 = vsel %vm930, %v6231, %v6232
        %v6234 = vsel %vm930, %v6230, %v6231
        %v6235 = vsel %vm930, %v6229, %v6230
        %v6236 = vsel %vm930, %v6228, %v6229
        %v6237 = vsel %vm930, %v6227, %v6228
        %v6238 = vsel %vm930, %v6226, %v6227
        %v6239 = vsel %vm930, %v6225, %v6226
        %v6240 = vsel %vm930, %v6224, %v6225
        %v6241 = vsel %vm930, %v6223, %v6224
        %v6242 = vsel %vm930, %v6222, %v6223
        %v6243 = vsel %vm930, %v6221, %v6222
        %v6244 = vsel %vm930, %v6220, %v6221
        %v6245 = vsel %vm930, %v6219, %v6220
        %v6246 = vsel %vm930, %v6218, %v6219
        %v6247 = vsel %vm930, %v6217, %v6218
        %v6248 = vsel %vm930, %v6216, %v6217
        %v6249 = vsel %vm930, %v6215, %v6216
        %v6250 = vsel %vm930, %v6214, %v6215
        %v6251 = vsel %vm930, %v6213, %v6214
        %v6252 = vsel %vm930, %v6212, %v6213
        %v6253 = vsel %vm930, %v6211, %v6212
        %v6254 = vsel %vm930, %v6210, %v6211
        %v6255 = vsel %vm930, %v6209, %v6210
        %v6256 = vsel %vm930, %v6208, %v6209
        %v6257 = vsel %vm930, %v6207, %v6208
        %v6258 = vsel %vm930, %v6206, %v6207
        %v6259 = vsel %vm930, %v6205, %v6206
        %v6260 = vsel %vm930, %v6204, %v6205
        %v6261 = vsel %vm930, %v6203, %v6204
        %v6262 = vsel %vm930, %v6202, %v6203
        %v6263 = vsel %vm930, %v6201, %v6202
        %v6264 = vsel %vm930, %v6232, %v6201
        %v6265 = vmul.f32 %v6263, %v219
        %v6266 = vmul.f32 %v6262, %v220
        %v6267 = vmul.f32 %v6261, %v219
        %v6268 = vmul.f32 %v6260, %v220
        %v6269 = vmul.f32 %v6259, %v219
        %v6270 = vmul.f32 %v6258, %v220
        %v6271 = vmul.f32 %v6257, %v219
        %v6272 = vmul.f32 %v6256, %v220
        %v6273 = vmul.f32 %v6255, %v219
        %v6274 = vmul.f32 %v6254, %v220
        %v6275 = vmul.f32 %v6253, %v219
        %v6276 = vmul.f32 %v6252, %v220
        %v6277 = vmul.f32 %v6251, %v219
        %v6278 = vmul.f32 %v6250, %v220
        %v6279 = vmul.f32 %v6249, %v219
        %v6280 = vmul.f32 %v6248, %v220
        %v6281 = vmul.f32 %v6247, %v219
        %v6282 = vmul.f32 %v6246, %v220
        %v6283 = vmul.f32 %v6245, %v219
        %v6284 = vmul.f32 %v6244, %v220
        %v6285 = vmul.f32 %v6243, %v219
        %v6286 = vmul.f32 %v6242, %v220
        %v6287 = vmul.f32 %v6241, %v219
        %v6288 = vmul.f32 %v6240, %v220
        %v6289 = vmul.f32 %v6239, %v219
        %v6290 = vmul.f32 %v6238, %v220
        %v6291 = vmul.f32 %v6237, %v219
        %v6292 = vmul.f32 %v6236, %v220
        %v6293 = vmul.f32 %v6235, %v219
        %v6294 = vmul.f32 %v6234, %v220
        %v6295 = vmul.f32 %v6233, %v219
        %v6296 = vmul.f32 %v6264, %v220
        %v6297 = vpack.c.bf16 %v6266, %v6265
        %v6298 = vpack.c.bf16 %v6268, %v6267
        %v6299 = vpack.c.bf16 %v6270, %v6269
        %v6300 = vpack.c.bf16 %v6272, %v6271
        %v6301 = vpack.c.bf16 %v6274, %v6273
        %v6302 = vpack.c.bf16 %v6276, %v6275
        %v6303 = vpack.c.bf16 %v6278, %v6277
        %v6304 = vpack.c.bf16 %v6280, %v6279
        %v6305 = vpack.c.bf16 %v6282, %v6281
        %v6306 = vpack.c.bf16 %v6284, %v6283
        %v6307 = vpack.c.bf16 %v6286, %v6285
        %v6308 = vpack.c.bf16 %v6288, %v6287
        %v6309 = vpack.c.bf16 %v6290, %v6289
        %v6310 = vpack.c.bf16 %v6292, %v6291
        %v6311 = vpack.c.bf16 %v6294, %v6293
        %v6312 = vpack.c.bf16 %v6296, %v6295
        %s6313 = scalar_lea.vmem [#allocation6], 1088
        %v6314 = vld [vmem:[%s6313] sm:$0xf]
        %v6315 = vld [vmem:[%s6313 + $0x4] sm:$0xf]
        %v6316 = vld [vmem:[%s6313 + $0x8] sm:$0xf]
        %v6317 = vld [vmem:[%s6313 + $0xc] sm:$0xf]
        %v6318 = vld [vmem:[%s6313 + $0x10] sm:$0xf]
        %v6319 = vld [vmem:[%s6313 + $0x14] sm:$0xf]
        %v6320 = vld [vmem:[%s6313 + $0x18] sm:$0xf]
        %v6321 = vld [vmem:[%s6313 + $0x1c] sm:$0xf]
        %v6322 = vld [vmem:[%s6313 + $0x20] sm:$0xf]
        %v6323 = vld [vmem:[%s6313 + $0x24] sm:$0xf]
        %v6324 = vld [vmem:[%s6313 + $0x28] sm:$0xf]
        %v6325 = vld [vmem:[%s6313 + $0x2c] sm:$0xf]
        %v6326 = vld [vmem:[%s6313 + $0x30] sm:$0xf]
        %v6327 = vld [vmem:[%s6313 + $0x34] sm:$0xf]
        %v6328 = vld [vmem:[%s6313 + $0x38] sm:$0xf]
        %v6329 = vld [vmem:[%s6313 + $0x3c] sm:$0xf]
        %v6346 = vunpack.c.l.b16 %v6314
        %v6347 = vunpack.c.l.b16 %v6315
        %v6348 = vunpack.c.l.b16 %v6316
        %v6349 = vunpack.c.l.b16 %v6317
        %v6350 = vunpack.c.l.b16 %v6318
        %v6351 = vunpack.c.l.b16 %v6319
        %v6352 = vunpack.c.l.b16 %v6320
        %v6353 = vunpack.c.l.b16 %v6321
        %v6354 = vunpack.c.l.b16 %v6322
        %v6355 = vunpack.c.l.b16 %v6323
        %v6356 = vunpack.c.l.b16 %v6324
        %v6357 = vunpack.c.l.b16 %v6325
        %v6358 = vunpack.c.l.b16 %v6326
        %v6359 = vunpack.c.l.b16 %v6327
        %v6360 = vunpack.c.l.b16 %v6328
        %v6361 = vunpack.c.l.b16 %v6329
        %v6362 = vpack.c.b16 %v6347, %v6346
        %v6363 = vpack.c.b16 %v6349, %v6348
        %v6364 = vpack.c.b16 %v6351, %v6350
        %v6365 = vpack.c.b16 %v6353, %v6352
        %v6366 = vpack.c.b16 %v6355, %v6354
        %v6367 = vpack.c.b16 %v6357, %v6356
        %v6368 = vpack.c.b16 %v6359, %v6358
        %v6369 = vpack.c.b16 %v6361, %v6360
        %6378 = vmatprep.subr.bf16.mxu0 0
        %6379 = vmatpush1.bf16.msra.mxu0 %v6362
        %6380 = vmatprep.subr.bf16.mxu0 0
        %6381 = vmatpush1.bf16.msra.mxu0 %v6363
        %6382 = vmatprep.subr.bf16.mxu0 0
        %6383 = vmatpush1.bf16.msra.mxu0 %v6364
        %6384 = vmatprep.subr.bf16.mxu0 0
        %6385 = vmatpush1.bf16.msra.mxu0 %v6365
        %6386 = vmatprep.subr.bf16.mxu0 0
        %6387 = vmatpush1.bf16.msra.mxu0 %v6366
        %6388 = vmatprep.subr.bf16.mxu0 0
        %6389 = vmatpush1.bf16.msra.mxu0 %v6367
        %6390 = vmatprep.subr.bf16.mxu0 0
        %6391 = vmatpush1.bf16.msra.mxu0 %v6368
        %6392 = vmatprep.subr.bf16.mxu0 0
        %6393 = vmatpush1.bf16.msra.mxu0 %v6369
        %6394 = vmatprep.subr.bf16.mxu0 0
        %6395 = vmatpush1.bf16.msra.mxu0 0
        %6396 = vmatprep.subr.bf16.mxu0 0
        %6397 = vmatpush1.bf16.msra.mxu0 0
        %6398 = vmatprep.subr.bf16.mxu0 0
        %6399 = vmatpush1.bf16.msra.mxu0 0
        %6400 = vmatprep.subr.bf16.mxu0 0
        %6401 = vmatpush1.bf16.msra.mxu0 0
        %6402 = vmatprep.subr.bf16.mxu0 0
        %6403 = vmatpush1.bf16.msra.mxu0 0
        %6404 = vmatprep.subr.bf16.mxu0 0
        %6405 = vmatpush1.bf16.msra.mxu0 0
        %6406 = vmatprep.subr.bf16.mxu0 0
        %6407 = vmatpush1.bf16.msra.mxu0 0
        %6408 = vmatprep.subr.bf16.mxu0 0
        %6409 = vmatpush1.bf16.msra.mxu0 0
        %6410 = vmatprep.mubr.bf16.mxu0 0
        %6411 = vmatmul.mubr.bf16.gmra.mrb[0].mxu0 %v6297
        %v6412 = vpop.f32.mrb[0].mxu0
        %v6413 = vadd.f32 0.0, %v6412
        %v6414 = vpop.f32.mrb[0].mxu0
        %v6415 = vpop.f32.mrb[0].mxu0
        %v6416 = vadd.f32 0.0, %v6415
        %v6417 = vpop.f32.mrb[0].mxu0
        %6418 = vmatprep.mubr.bf16.mxu0 0
        %6419 = vmatmul.mubr.bf16.gmra.mrb[0].mxu0 %v6298
        %v6420 = vpop.f32.mrb[0].mxu0
        %v6421 = vadd.f32 0.0, %v6420
        %v6422 = vpop.f32.mrb[0].mxu0
        %v6423 = vpop.f32.mrb[0].mxu0
        %v6424 = vadd.f32 0.0, %v6423
        %v6425 = vpop.f32.mrb[0].mxu0
        %6426 = vmatprep.mubr.bf16.mxu0 0
        %6427 = vmatmul.mubr.bf16.gmra.mrb[0].mxu0 %v6299
        %v6428 = vpop.f32.mrb[0].mxu0
        %v6429 = vadd.f32 0.0, %v6428
        %v6430 = vpop.f32.mrb[0].mxu0
        %v6431 = vpop.f32.mrb[0].mxu0
        %v6432 = vadd.f32 0.0, %v6431
        %v6433 = vpop.f32.mrb[0].mxu0
        %6434 = vmatprep.mubr.bf16.mxu0 0
        %6435 = vmatmul.mubr.bf16.gmra.mrb[0].mxu0 %v6300
        %v6436 = vpop.f32.mrb[0].mxu0
        %v6437 = vadd.f32 0.0, %v6436
        %v6438 = vpop.f32.mrb[0].mxu0
        %v6439 = vpop.f32.mrb[0].mxu0
        %v6440 = vadd.f32 0.0, %v6439
        %v6441 = vpop.f32.mrb[0].mxu0
        %6442 = vmatprep.mubr.bf16.mxu0 0
        %6443 = vmatmul.mubr.bf16.gmra.mrb[0].mxu0 %v6301
        %v6444 = vpop.f32.mrb[0].mxu0
        %v6445 = vadd.f32 0.0, %v6444
        %v6446 = vpop.f32.mrb[0].mxu0
        %v6447 = vpop.f32.mrb[0].mxu0
        %v6448 = vadd.f32 0.0, %v6447
        %v6449 = vpop.f32.mrb[0].mxu0
        %6450 = vmatprep.mubr.bf16.mxu0 0
        %6451 = vmatmul.mubr.bf16.gmra.mrb[0].mxu0 %v6302
        %v6452 = vpop.f32.mrb[0].mxu0
        %v6453 = vadd.f32 0.0, %v6452
        %v6454 = vpop.f32.mrb[0].mxu0
        %v6455 = vpop.f32.mrb[0].mxu0
        %v6456 = vadd.f32 0.0, %v6455
        %v6457 = vpop.f32.mrb[0].mxu0
        %6458 = vmatprep.mubr.bf16.mxu0 0
        %6459 = vmatmul.mubr.bf16.gmra.mrb[0].mxu0 %v6303
        %v6460 = vpop.f32.mrb[0].mxu0
        %v6461 = vadd.f32 0.0, %v6460
        %v6462 = vpop.f32.mrb[0].mxu0
        %v6463 = vpop.f32.mrb[0].mxu0
        %v6464 = vadd.f32 0.0, %v6463
        %v6465 = vpop.f32.mrb[0].mxu0
        %6466 = vmatprep.mubr.bf16.mxu0 0
        %6467 = vmatmul.mubr.bf16.gmra.mrb[0].mxu0 %v6304
        %v6468 = vpop.f32.mrb[0].mxu0
        %v6469 = vadd.f32 0.0, %v6468
        %v6470 = vpop.f32.mrb[0].mxu0
        %v6471 = vpop.f32.mrb[0].mxu0
        %v6472 = vadd.f32 0.0, %v6471
        %v6473 = vpop.f32.mrb[0].mxu0
        %6474 = vmatprep.mubr.bf16.mxu0 0
        %6475 = vmatmul.mubr.bf16.gmra.mrb[0].mxu0 %v6305
        %v6476 = vpop.f32.mrb[0].mxu0
        %v6477 = vadd.f32 0.0, %v6476
        %v6478 = vpop.f32.mrb[0].mxu0
        %v6479 = vpop.f32.mrb[0].mxu0
        %v6480 = vadd.f32 0.0, %v6479
        %v6481 = vpop.f32.mrb[0].mxu0
        %6482 = vmatprep.mubr.bf16.mxu0 0
        %6483 = vmatmul.mubr.bf16.gmra.mrb[0].mxu0 %v6306
        %v6484 = vpop.f32.mrb[0].mxu0
        %v6485 = vadd.f32 0.0, %v6484
        %v6486 = vpop.f32.mrb[0].mxu0
        %v6487 = vpop.f32.mrb[0].mxu0
        %v6488 = vadd.f32 0.0, %v6487
        %v6489 = vpop.f32.mrb[0].mxu0
        %6490 = vmatprep.mubr.bf16.mxu0 0
        %6491 = vmatmul.mubr.bf16.gmra.mrb[0].mxu0 %v6307
        %v6492 = vpop.f32.mrb[0].mxu0
        %v6493 = vadd.f32 0.0, %v6492
        %v6494 = vpop.f32.mrb[0].mxu0
        %v6495 = vpop.f32.mrb[0].mxu0
        %v6496 = vadd.f32 0.0, %v6495
        %v6497 = vpop.f32.mrb[0].mxu0
        %6498 = vmatprep.mubr.bf16.mxu0 0
        %6499 = vmatmul.mubr.bf16.gmra.mrb[0].mxu0 %v6308
        %v6500 = vpop.f32.mrb[0].mxu0
        %v6501 = vadd.f32 0.0, %v6500
        %v6502 = vpop.f32.mrb[0].mxu0
        %v6503 = vpop.f32.mrb[0].mxu0
        %v6504 = vadd.f32 0.0, %v6503
        %v6505 = vpop.f32.mrb[0].mxu0
        %6506 = vmatprep.mubr.bf16.mxu0 0
        %6507 = vmatmul.mubr.bf16.gmra.mrb[0].mxu0 %v6309
        %v6508 = vpop.f32.mrb[0].mxu0
        %v6509 = vadd.f32 0.0, %v6508
        %v6510 = vpop.f32.mrb[0].mxu0
        %v6511 = vpop.f32.mrb[0].mxu0
        %v6512 = vadd.f32 0.0, %v6511
        %v6513 = vpop.f32.mrb[0].mxu0
        %6514 = vmatprep.mubr.bf16.mxu0 0
        %6515 = vmatmul.mubr.bf16.gmra.mrb[0].mxu0 %v6310
        %v6516 = vpop.f32.mrb[0].mxu0
        %v6517 = vadd.f32 0.0, %v6516
        %v6518 = vpop.f32.mrb[0].mxu0
        %v6519 = vpop.f32.mrb[0].mxu0
        %v6520 = vadd.f32 0.0, %v6519
        %v6521 = vpop.f32.mrb[0].mxu0
        %6522 = vmatprep.mubr.bf16.mxu0 0
        %6523 = vmatmul.mubr.bf16.gmra.mrb[0].mxu0 %v6311
        %v6524 = vpop.f32.mrb[0].mxu0
        %v6525 = vadd.f32 0.0, %v6524
        %v6526 = vpop.f32.mrb[0].mxu0
        %v6527 = vpop.f32.mrb[0].mxu0
        %v6528 = vadd.f32 0.0, %v6527
        %v6529 = vpop.f32.mrb[0].mxu0
        %6530 = vmatprep.mubr.bf16.mxu0 0
        %6531 = vmatmul.mubr.bf16.gmra.mrb[0].mxu0 %v6312
        %v6532 = vpop.f32.mrb[0].mxu0
        %v6533 = vadd.f32 0.0, %v6532
        %v6534 = vpop.f32.mrb[0].mxu0
        %v6535 = vpop.f32.mrb[0].mxu0
        %v6536 = vadd.f32 0.0, %v6535
        %v6537 = vpop.f32.mrb[0].mxu0
        %6538 = vdwg.mxu0
        %v6539 = vadd.f32 %v6169, %v6413
        %v6540 = vadd.f32 %v6170, %v6416
        %v6541 = vadd.f32 %v6171, %v6421
        %v6542 = vadd.f32 %v6172, %v6424
        %v6543 = vadd.f32 %v6173, %v6429
        %v6544 = vadd.f32 %v6174, %v6432
        %v6545 = vadd.f32 %v6175, %v6437
        %v6546 = vadd.f32 %v6176, %v6440
        %v6547 = vadd.f32 %v6177, %v6445
        %v6548 = vadd.f32 %v6178, %v6448
        %v6549 = vadd.f32 %v6179, %v6453
        %v6550 = vadd.f32 %v6180, %v6456
        %v6551 = vadd.f32 %v6181, %v6461
        %v6552 = vadd.f32 %v6182, %v6464
        %v6553 = vadd.f32 %v6183, %v6469
        %v6554 = vadd.f32 %v6184, %v6472
        %v6555 = vadd.f32 %v6185, %v6477
        %v6556 = vadd.f32 %v6186, %v6480
        %v6557 = vadd.f32 %v6187, %v6485
        %v6558 = vadd.f32 %v6188, %v6488
        %v6559 = vadd.f32 %v6189, %v6493
        %v6560 = vadd.f32 %v6190, %v6496
        %v6561 = vadd.f32 %v6191, %v6501
        %v6562 = vadd.f32 %v6192, %v6504
        %v6563 = vadd.f32 %v6193, %v6509
        %v6564 = vadd.f32 %v6194, %v6512
        %v6565 = vadd.f32 %v6195, %v6517
        %v6566 = vadd.f32 %v6196, %v6520
        %v6567 = vadd.f32 %v6197, %v6525
        %v6568 = vadd.f32 %v6198, %v6528
        %v6569 = vadd.f32 %v6199, %v6533
        %v6570 = vadd.f32 %v6200, %v6536
        %s6571 = scalar_lea.vmem %s2, 1
        %v6572 = vld [vmem:[%s6571] sm:$0x1]
        %v6574 = vlaneseq
        %v6575 = vshrl.u32 %v6574, 7
        %v6576 = vsub.s32 0, %v6575
        %v6577 = vrot.slane %v6572, %v6576
        %v6579 = vadd.f32 %v6539, %v6577
        %v6580 = vadd.f32 %v6540, %v6577
        %v6581 = vadd.f32 %v6541, %v6577
        %v6582 = vadd.f32 %v6542, %v6577
        %v6583 = vadd.f32 %v6543, %v6577
        %v6584 = vadd.f32 %v6544, %v6577
        %v6585 = vadd.f32 %v6545, %v6577
        %v6586 = vadd.f32 %v6546, %v6577
        %v6587 = vadd.f32 %v6547, %v6577
        %v6588 = vadd.f32 %v6548, %v6577
        %v6589 = vadd.f32 %v6549, %v6577
        %v6590 = vadd.f32 %v6550, %v6577
        %v6591 = vadd.f32 %v6551, %v6577
        %v6592 = vadd.f32 %v6552, %v6577
        %v6593 = vadd.f32 %v6553, %v6577
        %v6594 = vadd.f32 %v6554, %v6577
        %v6595 = vadd.f32 %v6555, %v6577
        %v6596 = vadd.f32 %v6556, %v6577
        %v6597 = vadd.f32 %v6557, %v6577
        %v6598 = vadd.f32 %v6558, %v6577
        %v6599 = vadd.f32 %v6559, %v6577
        %v6600 = vadd.f32 %v6560, %v6577
        %v6601 = vadd.f32 %v6561, %v6577
        %v6602 = vadd.f32 %v6562, %v6577
        %v6603 = vadd.f32 %v6563, %v6577
        %v6604 = vadd.f32 %v6564, %v6577
        %v6605 = vadd.f32 %v6565, %v6577
        %v6606 = vadd.f32 %v6566, %v6577
        %v6607 = vadd.f32 %v6567, %v6577
        %v6608 = vadd.f32 %v6568, %v6577
        %v6609 = vadd.f32 %v6569, %v6577
        %v6610 = vadd.f32 %v6570, %v6577
        %v6611 = vadd.f32 %v6579, %v221
        %v6612 = vadd.f32 %v6580, %v222
        %v6613 = vadd.f32 %v6581, %v223
        %v6614 = vadd.f32 %v6582, %v224
        %v6615 = vadd.f32 %v6583, %v225
        %v6616 = vadd.f32 %v6584, %v226
        %v6617 = vadd.f32 %v6585, %v227
        %v6618 = vadd.f32 %v6586, %v228
        %v6619 = vadd.f32 %v6587, %v229
        %v6620 = vadd.f32 %v6588, %v230
        %v6621 = vadd.f32 %v6589, %v231
        %v6622 = vadd.f32 %v6590, %v232
        %v6623 = vadd.f32 %v6591, %v233
        %v6624 = vadd.f32 %v6592, %v234
        %v6625 = vadd.f32 %v6593, %v235
        %v6626 = vadd.f32 %v6594, %v236
        %v6627 = vadd.f32 %v6595, %v237
        %v6628 = vadd.f32 %v6596, %v238
        %v6629 = vadd.f32 %v6597, %v239
        %v6630 = vadd.f32 %v6598, %v240
        %v6631 = vadd.f32 %v6599, %v241
        %v6632 = vadd.f32 %v6600, %v242
        %v6633 = vadd.f32 %v6601, %v243
        %v6634 = vadd.f32 %v6602, %v244
        %v6635 = vadd.f32 %v6603, %v245
        %v6636 = vadd.f32 %v6604, %v246
        %v6637 = vadd.f32 %v6605, %v247
        %v6638 = vadd.f32 %v6606, %v248
        %v6639 = vadd.f32 %v6607, %v249
        %v6640 = vadd.f32 %v6608, %v250
        %v6641 = vadd.f32 %v6609, %v251
        %v6642 = vadd.f32 %v6610, %v252
        %6643 = vst [vmem:[%s203] sm:$0xff] %v6611
        %6644 = vst [vmem:[%s203 + $0x8] sm:$0xff] %v6612
        %6645 = vst [vmem:[%s203 + $0x10] sm:$0xff] %v6613
        %6646 = vst [vmem:[%s203 + $0x18] sm:$0xff] %v6614
        %6647 = vst [vmem:[%s203 + $0x20] sm:$0xff] %v6615
        %6648 = vst [vmem:[%s203 + $0x28] sm:$0xff] %v6616
        %6649 = vst [vmem:[%s203 + $0x30] sm:$0xff] %v6617
        %6650 = vst [vmem:[%s203 + $0x38] sm:$0xff] %v6618
        %6651 = vst [vmem:[%s203 + $0x40] sm:$0xff] %v6619
        %6652 = vst [vmem:[%s203 + $0x48] sm:$0xff] %v6620
        %6653 = vst [vmem:[%s203 + $0x50] sm:$0xff] %v6621
        %6654 = vst [vmem:[%s203 + $0x58] sm:$0xff] %v6622
        %6655 = vst [vmem:[%s203 + $0x60] sm:$0xff] %v6623
        %6656 = vst [vmem:[%s203 + $0x68] sm:$0xff] %v6624
        %6657 = vst [vmem:[%s203 + $0x70] sm:$0xff] %v6625
        %6658 = vst [vmem:[%s203 + $0x78] sm:$0xff] %v6626
        %6659 = vst [vmem:[%s203 + $0x80] sm:$0xff] %v6627
        %6660 = vst [vmem:[%s203 + $0x88] sm:$0xff] %v6628
        %6661 = vst [vmem:[%s203 + $0x90] sm:$0xff] %v6629
        %6662 = vst [vmem:[%s203 + $0x98] sm:$0xff] %v6630
        %6663 = vst [vmem:[%s203 + $0xa0] sm:$0xff] %v6631
        %6664 = vst [vmem:[%s203 + $0xa8] sm:$0xff] %v6632
        %6665 = vst [vmem:[%s203 + $0xb0] sm:$0xff] %v6633
        %6666 = vst [vmem:[%s203 + $0xb8] sm:$0xff] %v6634
        %6667 = vst [vmem:[%s203 + $0xc0] sm:$0xff] %v6635
        %6668 = vst [vmem:[%s203 + $0xc8] sm:$0xff] %v6636
        %6669 = vst [vmem:[%s203 + $0xd0] sm:$0xff] %v6637
        %6670 = vst [vmem:[%s203 + $0xd8] sm:$0xff] %v6638
        %6671 = vst [vmem:[%s203 + $0xe0] sm:$0xff] %v6639
        %6672 = vst [vmem:[%s203 + $0xe8] sm:$0xff] %v6640
        %6673 = vst [vmem:[%s203 + $0xf0] sm:$0xff] %v6641
        %6674 = vst [vmem:[%s203 + $0xf8] sm:$0xff] %v6642
        %s6675 = sand.u32 %s97, 1
        %s6676 = scalar_lea.sflag [#allocation5], %s6675
        %s6677 = sand.u32 %s97, 1
        %s6678 = smul.addr %s6677, 256
        %s6679 = scalar_lea.vmem [#allocation8], %s6678
        // Predicated region
        $region41: #{tpu_custom_call.1} parent=31 // pred_check
          %p6680 = pneg %p107
        $region42: #{tpu_custom_call.1} parent=31 // pred_check_branch
          %6682 = sbr.rel (%p6680) target = $region44
        $region43: #{tpu_custom_call.1} parent=31 // pred_region
          %s6684 = ssub.s32 4096, 4096
          %6685 = vsyncadd %s6676, %s6684
          %s6686 = smul.addr %s21, 32
          %s6687 = smul.addr %s6686, 128
          %s6688 = scalar_lea.hbm %s3, %s6687
          %s6689 = sshll.u32 %s6679, 4
          %s6690 = int_to_ptr.vmem [resolvable:$true] %s6689
          %6695 = dma.vmem_to_hbm [thread:$0]  %s6690, 4096, %s6688, %s6676, 128, 128, 8
        $region44: #{tpu_custom_call.1} parent=31 // pred_fallthru
          _
      $region32: #{tpu_custom_call.1} parent=5 // pred_fallthru
        _
      %p6696 = scmp.le.s32.totalorder 2, %s16
      // Predicated region
      $region45: #{tpu_custom_call.1} parent=5 // pred_check
        %p6697 = pneg %p6696
      $region46: #{tpu_custom_call.1} parent=5 // pred_check_branch
        %6699 = sbr.rel (%p6697) target = $region48
      $region47: #{tpu_custom_call.1} parent=5 // pred_region
        %s6700 = ssub.s32 %s16, 2
        // Predicated region
        $region49: #{tpu_custom_call.1} parent=47 // pred_check
          %p6701 = pneg %p113
        $region50: #{tpu_custom_call.1} parent=47 // pred_check_branch
          %6703 = sbr.rel (%p6701) target = $region52
        $region51: #{tpu_custom_call.1} parent=47 // pred_region
          %s6704 = sand.u32 %s98, 1
          %s6705 = scalar_lea.sflag [#allocation5], %s6704
          %s6706 = sand.u32 %s98, 1
          %s6707 = smul.addr %s6706, 256
          %s6708 = scalar_lea.vmem [#allocation8], %s6707
          %6709 = dma.done %s6705, 4096
        $region52: #{tpu_custom_call.1} parent=47 // pred_fallthru
          _
      $region48: #{tpu_custom_call.1} parent=5 // pred_fallthru
        _
    $region6: #{tpu_custom_call.1} parent=1 // loop_footer
      %s20 = sadd.s32 1, %s16
    $region7: #{tpu_custom_call.1} parent=1 // loop_footer_branch
      %15 = sbr.rel target = $region3
    $region8: #{tpu_custom_call.1} parent=1 // loop_exit
      _
    %6710 = vsyncpa [#allocation4], 1
    %s6711 = scalar_lea.sflag [#allocation4], 1
    %6712 = vsyncpa %s6711, 1
    %6713 = vsyncpa [#allocation7], 1
    %6714 = vsyncpa [#allocation5], 1
    %s6715 = scalar_lea.sflag [#allocation5], 1
    %6716 = vsyncpa %s6715, 1

</llo_original>
